<compile_context>
chip_gen: v7x
topology: tpu7x:2x2x1
jax: 0.10.0
libtpu: 0.0.40
codegen_flags: <defaults>
</compile_context>

<pallas_src>
import functools
import math

import jax
import jax.numpy as jnp
from jax import lax
from jax.experimental import pallas as pl
from jax.experimental.pallas import tpu as pltpu


def _gelu_tanh(x):
    # TODO(synk): torch nn.GELU() default is exact-erf GELU; the tanh approximation differs by
    # <~1e-3 abs but runs on the EUP instead of a ~10-op VALU erf polynomial.
    c = 0.7978845608028654  # sqrt(2/pi)
    return 0.5 * x * (1.0 + jnp.tanh(c * (x + 0.044715 * x * x * x)))


def _layernorm(x, gamma, beta, eps=1e-5):
    mu = jnp.mean(x, axis=-1, keepdims=True)
    d = x - mu
    var = jnp.mean(d * d, axis=-1, keepdims=True)
    return d * lax.rsqrt(var + eps) * gamma + beta


def _vit_encoder_kernel(
    x_ref, pos_ref,
    wcc_ref, bcc_ref,
    wqkv_ref, bqkv_ref, wo_ref, bo_ref,
    g1_ref, be1_ref, w1_ref, bm1_ref, w2_ref, bm2_ref, g2_ref, be2_ref,
    out_ref,
    ctx_ref,
    *, E, H, num_layers,
):
    """One batch element (grid over batch): patch embedding + pos-enc + all transformer blocks."""
    f32 = jnp.float32
    hd = E // H

    # channel_change + positional encoding (one pe row per batch element, broadcast over patches)
    x = jnp.dot(x_ref[0], wcc_ref[...], preferred_element_type=f32) + bcc_ref[...]   # (P, E)
    x = x + pos_ref[0]

    for l in range(num_layers):                       # static unroll over transformer blocks
        # fused QKV projection; softmax scale already folded into the Q third of wqkv/bqkv
        qkv = jnp.dot(x, wqkv_ref[l], preferred_element_type=f32) + bqkv_ref[l]      # (P, 3E)
        q = qkv[:, 0 * E:1 * E]
        k = qkv[:, 1 * E:2 * E]
        v = qkv[:, 2 * E:3 * E]

        # multi-head attention; mask is None in the ViT blocks -> dense softmax over all patches
        for h in range(H):
            sl = slice(h * hd, (h + 1) * hd)
            qh, kh, vh = q[:, sl], k[:, sl], v[:, sl]
            e = lax.dot_general(qh, kh, (((1,), (1,)), ((), ())),
                                preferred_element_type=f32)                          # (P, P)
            e = e - jnp.max(e, axis=-1, keepdims=True)
            p = jnp.exp(e)
            a = p * pl.reciprocal(jnp.sum(p, axis=-1, keepdims=True), approx=True)
            ctx_ref[:, sl] = jnp.dot(a, vh, preferred_element_type=f32)
        ctx = ctx_ref[...]                                                           # (P, E)

        attn = jnp.dot(ctx, wo_ref[l], preferred_element_type=f32) + bo_ref[l]
        h1 = _layernorm(attn + x, g1_ref[l], be1_ref[l])          # norm1(attention + query)

        m = jnp.dot(h1, w1_ref[l], preferred_element_type=f32) + bm1_ref[l]
        m = _gelu_tanh(m)
        m = jnp.dot(m, w2_ref[l], preferred_element_type=f32) + bm2_ref[l]
        x = _layernorm(m + h1, g2_ref[l], be2_ref[l])             # norm2(forward + x)

    out_ref[0] = x


def _classifier_kernel(x_ref, w_ref, b_ref, o_ref):
    o_ref[...] = (jnp.dot(x_ref[...], w_ref[...], preferred_element_type=jnp.float32)
                  + b_ref[...])


def vit_classifier_forward(x_img, params, *, patch_size):
    N, C, Hi, Wi = x_img.shape
    ph, pw = patch_size
    d0, d1 = Hi // ph, Wi // pw
    P, Din = d0 * d1, C * ph * pw
    E = params["wcc"].shape[1]
    H = int(params["heads"])
    num_layers = params["wqkv"].shape[0]
    num_classes = params["wcls"].shape[1]

    # nn.Unfold(kernel=stride=patch_size) followed by swapaxes(-1, -2): pure layout plumbing.
    patches = (x_img.reshape(N, C, d0, ph, d1, pw)
               .transpose(0, 2, 4, 1, 3, 5)
               .reshape(N, P, Din))

    # PositionalEncoding as written in the module: pe[:batch] has shape (batch, 1, d_model)
    # against a (batch, patches, d_model) activation, so each batch element gets ONE pe row
    # broadcast over all of its patches.
    pos = jnp.arange(N, dtype=jnp.float32)[:, None]
    div = jnp.exp(jnp.arange(0, E, 2, dtype=jnp.float32) * (-math.log(10000.0) / E))
    pe = jnp.stack([jnp.sin(pos * div), jnp.cos(pos * div)], axis=-1).reshape(N, 1, E)

    def resident(shape):      # full-extent, VMEM-resident weight block (constant index map)
        if len(shape) == 2:
            return pl.BlockSpec(shape, lambda b: (0, 0))
        return pl.BlockSpec(shape, lambda b: (0, 0, 0))

    kernel = functools.partial(_vit_encoder_kernel, E=E, H=H, num_layers=num_layers)
    tokens = pl.pallas_call(
        kernel,
        out_shape=jax.ShapeDtypeStruct((N, P, E), jnp.float32),
        grid=(N,),
        in_specs=[
            pl.BlockSpec((1, P, Din), lambda b: (b, 0, 0)),    # patches of this batch element
            pl.BlockSpec((1, 1, E), lambda b: (b, 0, 0)),      # its positional-encoding row
            resident(params["wcc"].shape), resident(params["bcc"].shape),
            resident(params["wqkv"].shape), resident(params["bqkv"].shape),
            resident(params["wo"].shape), resident(params["bo"].shape),
            resident(params["g1"].shape), resident(params["b1"].shape),
            resident(params["w1"].shape), resident(params["bm1"].shape),
            resident(params["w2"].shape), resident(params["bm2"].shape),
            resident(params["g2"].shape), resident(params["b2"].shape),
        ],
        out_specs=pl.BlockSpec((1, P, E), lambda b: (b, 0, 0)),
        scratch_shapes=[pltpu.VMEM((P, E), jnp.float32)],
        compiler_params=pltpu.CompilerParams(dimension_semantics=("parallel",)),
    )(patches, pe,
      params["wcc"], params["bcc"],
      params["wqkv"], params["bqkv"], params["wo"], params["bo"],
      params["g1"], params["b1"], params["w1"], params["bm1"],
      params["w2"], params["bm2"], params["g2"], params["b2"])

    # classifier head on x.view(bs, -1); the flatten is a free host-side reshape
    flat = tokens.reshape(N, P * E)
    logits = pl.pallas_call(
        _classifier_kernel,
        out_shape=jax.ShapeDtypeStruct((N, num_classes), jnp.float32),
        in_specs=[pl.BlockSpec(memory_space=pltpu.MemorySpace.VMEM)] * 3,
        out_specs=pl.BlockSpec(memory_space=pltpu.MemorySpace.VMEM),
    )(flat, params["wcls"], params["bcls"])
    return logits


def _init_linear(key, fan_in, fan_out):
    kw, kb = jax.random.split(key)
    bound = 1.0 / math.sqrt(fan_in)
    w = jax.random.uniform(kw, (fan_in, fan_out), jnp.float32, -bound, bound)
    b = jax.random.uniform(kb, (1, fan_out), jnp.float32, -bound, bound)
    return w, b


def init_vit_params(key, *, init_dim, embed, heads, num_blocks, forward_expansion,
                    patch_dim, num_classes):
    hid = int(forward_expansion * embed)
    scale = 1.0 / math.sqrt(embed)   # torch: softmax(energy / sqrt(embed_size)) -> fold into Wq
    keys = jax.random.split(key, 2 + num_blocks)
    wcc, bcc = _init_linear(keys[0], init_dim, embed)
    wcls, bcls = _init_linear(keys[1], patch_dim * embed, num_classes)

    names = ("wqkv", "bqkv", "wo", "bo", "g1", "b1", "w1", "bm1", "w2", "bm2", "g2", "b2")
    per_layer = {n: [] for n in names}
    ones = jnp.ones((1, embed), jnp.float32)
    zeros = jnp.zeros((1, embed), jnp.float32)
    for lk in keys[2:]:
        ks = jax.random.split(lk, 6)
        wq, bq = _init_linear(ks[0], embed, embed)
        wk, bk = _init_linear(ks[1], embed, embed)
        wv, bv = _init_linear(ks[2], embed, embed)
        wo, bo = _init_linear(ks[3], embed, embed)
        w1, bm1 = _init_linear(ks[4], embed, hid)
        w2, bm2 = _init_linear(ks[5], hid, embed)
        per_layer["wqkv"].append(jnp.concatenate([wq * scale, wk, wv], axis=1))
        per_layer["bqkv"].append(jnp.concatenate([bq * scale, bk, bv], axis=1))
        per_layer["wo"].append(wo); per_layer["bo"].append(bo)
        per_layer["w1"].append(w1); per_layer["bm1"].append(bm1)
        per_layer["w2"].append(w2); per_layer["bm2"].append(bm2)
        per_layer["g1"].append(ones); per_layer["b1"].append(zeros)
        per_layer["g2"].append(ones); per_layer["b2"].append(zeros)

    params = {n: jnp.stack(v, axis=0) for n, v in per_layer.items()}
    params.update(heads=heads, wcc=wcc, bcc=bcc, wcls=wcls, bcls=bcls)
    return params


if __name__ == "__main__":
    # ViT_Classifier(image_dim=(4, 16, 16), patch_size=(4, 4), hidden_expansion=2.0,
    #                num_blocks=2, num_classes=10, pos_emb=True)
    N = 2
    image_dim = (4, 16, 16)
    patch_size = (4, 4)
    hidden_expansion = 2.0
    num_blocks = 2
    num_classes = 10

    C, Hi, Wi = image_dim
    d0, d1 = Hi // patch_size[0], Wi // patch_size[1]
    init_dim = C * patch_size[0] * patch_size[1]              # 64
    channel_dim = int(init_dim * hidden_expansion / 2) * 2    # 128
    patch_dim = d0 * d1                                       # 16 patches (sequence length)
    # heads = factor of channel_dim closest to sqrt(channel_dim) (mirrors get_factors + argmin)
    facts = [i for i in range(2, channel_dim + 1) if channel_dim % i == 0]
    heads = min(facts, key=lambda f: abs(f - math.sqrt(channel_dim)))   # -> 8, head_dim = 16

    key = jax.random.PRNGKey(0)
    kx, kp = jax.random.split(key)
    x = jax.random.normal(kx, (N,) + image_dim, jnp.float32)
    params = init_vit_params(kp, init_dim=init_dim, embed=channel_dim, heads=heads,
                             num_blocks=num_blocks, forward_expansion=2,
                             patch_dim=patch_dim, num_classes=num_classes)

    logits = vit_classifier_forward(x, params, patch_size=patch_size)
    jax.block_until_ready(logits)
    assert logits.shape == (N, num_classes)
    assert bool(jnp.all(jnp.isfinite(logits)))
    print("KERNEL_OK")
</pallas_src>

<mosaic_0001>
module attributes {stable_mosaic.version = 11 : i64} {
  func.func @_vit_encoder_kernel(%arg0: i32, %arg1: memref<1x16x64xf32, #tpu.memory_space<vmem>>, %arg2: memref<1x1x128xf32, #tpu.memory_space<vmem>>, %arg3: memref<64x128xf32, #tpu.memory_space<vmem>>, %arg4: memref<1x128xf32, #tpu.memory_space<vmem>>, %arg5: memref<2x128x384xf32, #tpu.memory_space<vmem>>, %arg6: memref<2x1x384xf32, #tpu.memory_space<vmem>>, %arg7: memref<2x128x128xf32, #tpu.memory_space<vmem>>, %arg8: memref<2x1x128xf32, #tpu.memory_space<vmem>>, %arg9: memref<2x1x128xf32, #tpu.memory_space<vmem>>, %arg10: memref<2x1x128xf32, #tpu.memory_space<vmem>>, %arg11: memref<2x128x256xf32, #tpu.memory_space<vmem>>, %arg12: memref<2x1x256xf32, #tpu.memory_space<vmem>>, %arg13: memref<2x256x128xf32, #tpu.memory_space<vmem>>, %arg14: memref<2x1x128xf32, #tpu.memory_space<vmem>>, %arg15: memref<2x1x128xf32, #tpu.memory_space<vmem>>, %arg16: memref<2x1x128xf32, #tpu.memory_space<vmem>>, %arg17: memref<1x16x128xf32, #tpu.memory_space<vmem>>, %arg18: memref<16x128xf32, #tpu.memory_space<vmem>>) attributes {dimension_semantics = [#tpu.dimension_semantics<parallel>], iteration_bounds = array<i64: 2>, scalar_prefetch = 0 : i64, scratch_operands = 1 : i64, tpu.core_type = #tpu.core_type<tc>, window_params = [{transform_indices = @transform_0, window_bounds = array<i64: 1, 16, 64>}, {transform_indices = @transform_1, window_bounds = array<i64: 1, 1, 128>}, {pipeline_mode = #tpu.pipeline_mode<synchronous>, transform_indices = @transform_2, window_bounds = array<i64: 64, 128>}, {pipeline_mode = #tpu.pipeline_mode<synchronous>, transform_indices = @transform_3, window_bounds = array<i64: 1, 128>}, {pipeline_mode = #tpu.pipeline_mode<synchronous>, transform_indices = @transform_4, window_bounds = array<i64: 2, 128, 384>}, {pipeline_mode = #tpu.pipeline_mode<synchronous>, transform_indices = @transform_5, window_bounds = array<i64: 2, 1, 384>}, {pipeline_mode = #tpu.pipeline_mode<synchronous>, transform_indices = @transform_6, window_bounds = array<i64: 2, 128, 128>}, {pipeline_mode = #tpu.pipeline_mode<synchronous>, transform_indices = @transform_7, window_bounds = array<i64: 2, 1, 128>}, {pipeline_mode = #tpu.pipeline_mode<synchronous>, transform_indices = @transform_8, window_bounds = array<i64: 2, 1, 128>}, {pipeline_mode = #tpu.pipeline_mode<synchronous>, transform_indices = @transform_9, window_bounds = array<i64: 2, 1, 128>}, {pipeline_mode = #tpu.pipeline_mode<synchronous>, transform_indices = @transform_10, window_bounds = array<i64: 2, 128, 256>}, {pipeline_mode = #tpu.pipeline_mode<synchronous>, transform_indices = @transform_11, window_bounds = array<i64: 2, 1, 256>}, {pipeline_mode = #tpu.pipeline_mode<synchronous>, transform_indices = @transform_12, window_bounds = array<i64: 2, 256, 128>}, {pipeline_mode = #tpu.pipeline_mode<synchronous>, transform_indices = @transform_13, window_bounds = array<i64: 2, 1, 128>}, {pipeline_mode = #tpu.pipeline_mode<synchronous>, transform_indices = @transform_14, window_bounds = array<i64: 2, 1, 128>}, {pipeline_mode = #tpu.pipeline_mode<synchronous>, transform_indices = @transform_15, window_bounds = array<i64: 2, 1, 128>}, {transform_indices = @transform_16, window_bounds = array<i64: 1, 16, 128>}]} {
    %c0 = arith.constant 0 : index
    %c0_0 = arith.constant 0 : index
    %c0_1 = arith.constant 0 : index
    %0 = vector.load %arg1[%c0, %c0_0, %c0_1] : memref<1x16x64xf32, #tpu.memory_space<vmem>>, vector<1x16x64xf32>
    %1 = vector.shape_cast %0 : vector<1x16x64xf32> to vector<16x64xf32>
    %c0_2 = arith.constant 0 : index
    %c0_3 = arith.constant 0 : index
    %2 = vector.load %arg3[%c0_2, %c0_3] : memref<64x128xf32, #tpu.memory_space<vmem>>, vector<64x128xf32>
    %cst = arith.constant dense<0.000000e+00> : vector<16x128xf32>
    %3 = tpu.matmul %1, %2, %cst {dimension_numbers = #tpu.dot_dimension_numbers<[1], [0], [0], [1], [0, 0, 1, 1], [], []>} : vector<16x64xf32>, vector<64x128xf32>, vector<16x128xf32> -> vector<16x128xf32>
    %c0_4 = arith.constant 0 : index
    %c0_5 = arith.constant 0 : index
    %4 = vector.load %arg4[%c0_4, %c0_5] : memref<1x128xf32, #tpu.memory_space<vmem>>, vector<1x128xf32>
    %5 = vector.broadcast %4 : vector<1x128xf32> to vector<16x128xf32>
    %6 = arith.addf %3, %5 : vector<16x128xf32>
    %c0_6 = arith.constant 0 : index
    %c0_7 = arith.constant 0 : index
    %c0_8 = arith.constant 0 : index
    %7 = vector.load %arg2[%c0_6, %c0_7, %c0_8] : memref<1x1x128xf32, #tpu.memory_space<vmem>>, vector<1x1x128xf32>
    %8 = vector.shape_cast %7 : vector<1x1x128xf32> to vector<1x128xf32>
    %9 = vector.broadcast %8 : vector<1x128xf32> to vector<16x128xf32>
    %10 = arith.addf %6, %9 : vector<16x128xf32>
    %c0_9 = arith.constant 0 : index
    %c0_10 = arith.constant 0 : index
    %c0_11 = arith.constant 0 : index
    %11 = vector.load %arg5[%c0_9, %c0_10, %c0_11] : memref<2x128x384xf32, #tpu.memory_space<vmem>>, vector<1x128x384xf32>
    %12 = vector.shape_cast %11 : vector<1x128x384xf32> to vector<128x384xf32>
    %cst_12 = arith.constant dense<0.000000e+00> : vector<16x384xf32>
    %13 = tpu.matmul %10, %12, %cst_12 {dimension_numbers = #tpu.dot_dimension_numbers<[1], [0], [0], [1], [0, 0, 1, 1], [], []>} : vector<16x128xf32>, vector<128x384xf32>, vector<16x384xf32> -> vector<16x384xf32>
    %c0_13 = arith.constant 0 : index
    %c0_14 = arith.constant 0 : index
    %c0_15 = arith.constant 0 : index
    %14 = vector.load %arg6[%c0_13, %c0_14, %c0_15] : memref<2x1x384xf32, #tpu.memory_space<vmem>>, vector<1x1x384xf32>
    %15 = vector.shape_cast %14 : vector<1x1x384xf32> to vector<1x384xf32>
    %16 = vector.broadcast %15 : vector<1x384xf32> to vector<16x384xf32>
    %17 = arith.addf %13, %16 : vector<16x384xf32>
    %18 = vector.extract_strided_slice %17 {offsets = [0, 0], sizes = [16, 128], strides = [1, 1]} : vector<16x384xf32> to vector<16x128xf32>
    %19 = vector.extract_strided_slice %17 {offsets = [0, 128], sizes = [16, 128], strides = [1, 1]} : vector<16x384xf32> to vector<16x128xf32>
    %20 = vector.extract_strided_slice %17 {offsets = [0, 256], sizes = [16, 128], strides = [1, 1]} : vector<16x384xf32> to vector<16x128xf32>
    %21 = vector.extract_strided_slice %18 {offsets = [0, 0], sizes = [16, 16], strides = [1, 1]} : vector<16x128xf32> to vector<16x16xf32>
    %22 = vector.extract_strided_slice %19 {offsets = [0, 0], sizes = [16, 16], strides = [1, 1]} : vector<16x128xf32> to vector<16x16xf32>
    %23 = vector.extract_strided_slice %20 {offsets = [0, 0], sizes = [16, 16], strides = [1, 1]} : vector<16x128xf32> to vector<16x16xf32>
    %cst_16 = arith.constant dense<0.000000e+00> : vector<16x16xf32>
    %24 = tpu.matmul %21, %22, %cst_16 {dimension_numbers = #tpu.dot_dimension_numbers<[1], [1], [0], [0], [0, 0, 1, 0], [], []>} : vector<16x16xf32>, vector<16x16xf32>, vector<16x16xf32> -> vector<16x16xf32>
    %cst_17 = arith.constant dense<0xFF800000> : vector<16xf32>
    %25 = vector.multi_reduction <maximumf>, %24, %cst_17 [1] : vector<16x16xf32> to vector<16xf32>
    %26 = vector.shape_cast %25 : vector<16xf32> to vector<16x1xf32>
    %27 = vector.broadcast %26 : vector<16x1xf32> to vector<16x16xf32>
    %28 = arith.subf %24, %27 : vector<16x16xf32>
    %29 = math.exp %28 : vector<16x16xf32>
    %cst_18 = arith.constant dense<0.000000e+00> : vector<16xf32>
    %30 = vector.multi_reduction <add>, %29, %cst_18 [1] : vector<16x16xf32> to vector<16xf32>
    %31 = vector.shape_cast %30 : vector<16xf32> to vector<16x1xf32>
    %32 = tpu.reciprocal %31 {approx = true} : vector<16x1xf32> -> vector<16x1xf32>
    %33 = vector.broadcast %32 : vector<16x1xf32> to vector<16x16xf32>
    %34 = arith.mulf %29, %33 : vector<16x16xf32>
    %cst_19 = arith.constant dense<0.000000e+00> : vector<16x16xf32>
    %35 = tpu.matmul %34, %23, %cst_19 {dimension_numbers = #tpu.dot_dimension_numbers<[1], [0], [0], [1], [0, 0, 1, 1], [], []>} : vector<16x16xf32>, vector<16x16xf32>, vector<16x16xf32> -> vector<16x16xf32>
    %c0_20 = arith.constant 0 : index
    %c0_21 = arith.constant 0 : index
    %36 = vector.load %arg18[%c0_20, %c0_21] : memref<16x128xf32, #tpu.memory_space<vmem>>, vector<16x16xf32>
    tpu.vector_store %arg18[%c0_20, %c0_21], %35 {strides = array<i32>} : memref<16x128xf32, #tpu.memory_space<vmem>>, vector<16x16xf32>,
    %37 = vector.extract_strided_slice %18 {offsets = [0, 16], sizes = [16, 16], strides = [1, 1]} : vector<16x128xf32> to vector<16x16xf32>
    %38 = vector.extract_strided_slice %19 {offsets = [0, 16], sizes = [16, 16], strides = [1, 1]} : vector<16x128xf32> to vector<16x16xf32>
    %39 = vector.extract_strided_slice %20 {offsets = [0, 16], sizes = [16, 16], strides = [1, 1]} : vector<16x128xf32> to vector<16x16xf32>
    %cst_22 = arith.constant dense<0.000000e+00> : vector<16x16xf32>
    %40 = tpu.matmul %37, %38, %cst_22 {dimension_numbers = #tpu.dot_dimension_numbers<[1], [1], [0], [0], [0, 0, 1, 0], [], []>} : vector<16x16xf32>, vector<16x16xf32>, vector<16x16xf32> -> vector<16x16xf32>
    %cst_23 = arith.constant dense<0xFF800000> : vector<16xf32>
    %41 = vector.multi_reduction <maximumf>, %40, %cst_23 [1] : vector<16x16xf32> to vector<16xf32>
    %42 = vector.shape_cast %41 : vector<16xf32> to vector<16x1xf32>
    %43 = vector.broadcast %42 : vector<16x1xf32> to vector<16x16xf32>
    %44 = arith.subf %40, %43 : vector<16x16xf32>
    %45 = math.exp %44 : vector<16x16xf32>
    %cst_24 = arith.constant dense<0.000000e+00> : vector<16xf32>
    %46 = vector.multi_reduction <add>, %45, %cst_24 [1] : vector<16x16xf32> to vector<16xf32>
    %47 = vector.shape_cast %46 : vector<16xf32> to vector<16x1xf32>
    %48 = tpu.reciprocal %47 {approx = true} : vector<16x1xf32> -> vector<16x1xf32>
    %49 = vector.broadcast %48 : vector<16x1xf32> to vector<16x16xf32>
    %50 = arith.mulf %45, %49 : vector<16x16xf32>
    %cst_25 = arith.constant dense<0.000000e+00> : vector<16x16xf32>
    %51 = tpu.matmul %50, %39, %cst_25 {dimension_numbers = #tpu.dot_dimension_numbers<[1], [0], [0], [1], [0, 0, 1, 1], [], []>} : vector<16x16xf32>, vector<16x16xf32>, vector<16x16xf32> -> vector<16x16xf32>
    %c0_26 = arith.constant 0 : index
    %c16 = arith.constant 16 : index
    %52 = vector.load %arg18[%c0_26, %c16] : memref<16x128xf32, #tpu.memory_space<vmem>>, vector<16x16xf32>
    tpu.vector_store %arg18[%c0_26, %c16], %51 {strides = array<i32>} : memref<16x128xf32, #tpu.memory_space<vmem>>, vector<16x16xf32>,
    %53 = vector.extract_strided_slice %18 {offsets = [0, 32], sizes = [16, 16], strides = [1, 1]} : vector<16x128xf32> to vector<16x16xf32>
    %54 = vector.extract_strided_slice %19 {offsets = [0, 32], sizes = [16, 16], strides = [1, 1]} : vector<16x128xf32> to vector<16x16xf32>
    %55 = vector.extract_strided_slice %20 {offsets = [0, 32], sizes = [16, 16], strides = [1, 1]} : vector<16x128xf32> to vector<16x16xf32>
    %cst_27 = arith.constant dense<0.000000e+00> : vector<16x16xf32>
    %56 = tpu.matmul %53, %54, %cst_27 {dimension_numbers = #tpu.dot_dimension_numbers<[1], [1], [0], [0], [0, 0, 1, 0], [], []>} : vector<16x16xf32>, vector<16x16xf32>, vector<16x16xf32> -> vector<16x16xf32>
    %cst_28 = arith.constant dense<0xFF800000> : vector<16xf32>
    %57 = vector.multi_reduction <maximumf>, %56, %cst_28 [1] : vector<16x16xf32> to vector<16xf32>
    %58 = vector.shape_cast %57 : vector<16xf32> to vector<16x1xf32>
    %59 = vector.broadcast %58 : vector<16x1xf32> to vector<16x16xf32>
    %60 = arith.subf %56, %59 : vector<16x16xf32>
    %61 = math.exp %60 : vector<16x16xf32>
    %cst_29 = arith.constant dense<0.000000e+00> : vector<16xf32>
    %62 = vector.multi_reduction <add>, %61, %cst_29 [1] : vector<16x16xf32> to vector<16xf32>
    %63 = vector.shape_cast %62 : vector<16xf32> to vector<16x1xf32>
    %64 = tpu.reciprocal %63 {approx = true} : vector<16x1xf32> -> vector<16x1xf32>
    %65 = vector.broadcast %64 : vector<16x1xf32> to vector<16x16xf32>
    %66 = arith.mulf %61, %65 : vector<16x16xf32>
    %cst_30 = arith.constant dense<0.000000e+00> : vector<16x16xf32>
    %67 = tpu.matmul %66, %55, %cst_30 {dimension_numbers = #tpu.dot_dimension_numbers<[1], [0], [0], [1], [0, 0, 1, 1], [], []>} : vector<16x16xf32>, vector<16x16xf32>, vector<16x16xf32> -> vector<16x16xf32>
    %c0_31 = arith.constant 0 : index
    %c32 = arith.constant 32 : index
    %68 = vector.load %arg18[%c0_31, %c32] : memref<16x128xf32, #tpu.memory_space<vmem>>, vector<16x16xf32>
    tpu.vector_store %arg18[%c0_31, %c32], %67 {strides = array<i32>} : memref<16x128xf32, #tpu.memory_space<vmem>>, vector<16x16xf32>,
    %69 = vector.extract_strided_slice %18 {offsets = [0, 48], sizes = [16, 16], strides = [1, 1]} : vector<16x128xf32> to vector<16x16xf32>
    %70 = vector.extract_strided_slice %19 {offsets = [0, 48], sizes = [16, 16], strides = [1, 1]} : vector<16x128xf32> to vector<16x16xf32>
    %71 = vector.extract_strided_slice %20 {offsets = [0, 48], sizes = [16, 16], strides = [1, 1]} : vector<16x128xf32> to vector<16x16xf32>
    %cst_32 = arith.constant dense<0.000000e+00> : vector<16x16xf32>
    %72 = tpu.matmul %69, %70, %cst_32 {dimension_numbers = #tpu.dot_dimension_numbers<[1], [1], [0], [0], [0, 0, 1, 0], [], []>} : vector<16x16xf32>, vector<16x16xf32>, vector<16x16xf32> -> vector<16x16xf32>
    %cst_33 = arith.constant dense<0xFF800000> : vector<16xf32>
    %73 = vector.multi_reduction <maximumf>, %72, %cst_33 [1] : vector<16x16xf32> to vector<16xf32>
    %74 = vector.shape_cast %73 : vector<16xf32> to vector<16x1xf32>
    %75 = vector.broadcast %74 : vector<16x1xf32> to vector<16x16xf32>
    %76 = arith.subf %72, %75 : vector<16x16xf32>
    %77 = math.exp %76 : vector<16x16xf32>
    %cst_34 = arith.constant dense<0.000000e+00> : vector<16xf32>
    %78 = vector.multi_reduction <add>, %77, %cst_34 [1] : vector<16x16xf32> to vector<16xf32>
    %79 = vector.shape_cast %78 : vector<16xf32> to vector<16x1xf32>
    %80 = tpu.reciprocal %79 {approx = true} : vector<16x1xf32> -> vector<16x1xf32>
    %81 = vector.broadcast %80 : vector<16x1xf32> to vector<16x16xf32>
    %82 = arith.mulf %77, %81 : vector<16x16xf32>
    %cst_35 = arith.constant dense<0.000000e+00> : vector<16x16xf32>
    %83 = tpu.matmul %82, %71, %cst_35 {dimension_numbers = #tpu.dot_dimension_numbers<[1], [0], [0], [1], [0, 0, 1, 1], [], []>} : vector<16x16xf32>, vector<16x16xf32>, vector<16x16xf32> -> vector<16x16xf32>
    %c0_36 = arith.constant 0 : index
    %c48 = arith.constant 48 : index
    %84 = vector.load %arg18[%c0_36, %c48] : memref<16x128xf32, #tpu.memory_space<vmem>>, vector<16x16xf32>
    tpu.vector_store %arg18[%c0_36, %c48], %83 {strides = array<i32>} : memref<16x128xf32, #tpu.memory_space<vmem>>, vector<16x16xf32>,
    %85 = vector.extract_strided_slice %18 {offsets = [0, 64], sizes = [16, 16], strides = [1, 1]} : vector<16x128xf32> to vector<16x16xf32>
    %86 = vector.extract_strided_slice %19 {offsets = [0, 64], sizes = [16, 16], strides = [1, 1]} : vector<16x128xf32> to vector<16x16xf32>
    %87 = vector.extract_strided_slice %20 {offsets = [0, 64], sizes = [16, 16], strides = [1, 1]} : vector<16x128xf32> to vector<16x16xf32>
    %cst_37 = arith.constant dense<0.000000e+00> : vector<16x16xf32>
    %88 = tpu.matmul %85, %86, %cst_37 {dimension_numbers = #tpu.dot_dimension_numbers<[1], [1], [0], [0], [0, 0, 1, 0], [], []>} : vector<16x16xf32>, vector<16x16xf32>, vector<16x16xf32> -> vector<16x16xf32>
    %cst_38 = arith.constant dense<0xFF800000> : vector<16xf32>
    %89 = vector.multi_reduction <maximumf>, %88, %cst_38 [1] : vector<16x16xf32> to vector<16xf32>
    %90 = vector.shape_cast %89 : vector<16xf32> to vector<16x1xf32>
    %91 = vector.broadcast %90 : vector<16x1xf32> to vector<16x16xf32>
    %92 = arith.subf %88, %91 : vector<16x16xf32>
    %93 = math.exp %92 : vector<16x16xf32>
    %cst_39 = arith.constant dense<0.000000e+00> : vector<16xf32>
    %94 = vector.multi_reduction <add>, %93, %cst_39 [1] : vector<16x16xf32> to vector<16xf32>
    %95 = vector.shape_cast %94 : vector<16xf32> to vector<16x1xf32>
    %96 = tpu.reciprocal %95 {approx = true} : vector<16x1xf32> -> vector<16x1xf32>
    %97 = vector.broadcast %96 : vector<16x1xf32> to vector<16x16xf32>
    %98 = arith.mulf %93, %97 : vector<16x16xf32>
    %cst_40 = arith.constant dense<0.000000e+00> : vector<16x16xf32>
    %99 = tpu.matmul %98, %87, %cst_40 {dimension_numbers = #tpu.dot_dimension_numbers<[1], [0], [0], [1], [0, 0, 1, 1], [], []>} : vector<16x16xf32>, vector<16x16xf32>, vector<16x16xf32> -> vector<16x16xf32>
    %c0_41 = arith.constant 0 : index
    %c64 = arith.constant 64 : index
    %100 = vector.load %arg18[%c0_41, %c64] : memref<16x128xf32, #tpu.memory_space<vmem>>, vector<16x16xf32>
    tpu.vector_store %arg18[%c0_41, %c64], %99 {strides = array<i32>} : memref<16x128xf32, #tpu.memory_space<vmem>>, vector<16x16xf32>,
    %101 = vector.extract_strided_slice %18 {offsets = [0, 80], sizes = [16, 16], strides = [1, 1]} : vector<16x128xf32> to vector<16x16xf32>
    %102 = vector.extract_strided_slice %19 {offsets = [0, 80], sizes = [16, 16], strides = [1, 1]} : vector<16x128xf32> to vector<16x16xf32>
    %103 = vector.extract_strided_slice %20 {offsets = [0, 80], sizes = [16, 16], strides = [1, 1]} : vector<16x128xf32> to vector<16x16xf32>
    %cst_42 = arith.constant dense<0.000000e+00> : vector<16x16xf32>
    %104 = tpu.matmul %101, %102, %cst_42 {dimension_numbers = #tpu.dot_dimension_numbers<[1], [1], [0], [0], [0, 0, 1, 0], [], []>} : vector<16x16xf32>, vector<16x16xf32>, vector<16x16xf32> -> vector<16x16xf32>
    %cst_43 = arith.constant dense<0xFF800000> : vector<16xf32>
    %105 = vector.multi_reduction <maximumf>, %104, %cst_43 [1] : vector<16x16xf32> to vector<16xf32>
    %106 = vector.shape_cast %105 : vector<16xf32> to vector<16x1xf32>
    %107 = vector.broadcast %106 : vector<16x1xf32> to vector<16x16xf32>
    %108 = arith.subf %104, %107 : vector<16x16xf32>
    %109 = math.exp %108 : vector<16x16xf32>
    %cst_44 = arith.constant dense<0.000000e+00> : vector<16xf32>
    %110 = vector.multi_reduction <add>, %109, %cst_44 [1] : vector<16x16xf32> to vector<16xf32>
    %111 = vector.shape_cast %110 : vector<16xf32> to vector<16x1xf32>
    %112 = tpu.reciprocal %111 {approx = true} : vector<16x1xf32> -> vector<16x1xf32>
    %113 = vector.broadcast %112 : vector<16x1xf32> to vector<16x16xf32>
    %114 = arith.mulf %109, %113 : vector<16x16xf32>
    %cst_45 = arith.constant dense<0.000000e+00> : vector<16x16xf32>
    %115 = tpu.matmul %114, %103, %cst_45 {dimension_numbers = #tpu.dot_dimension_numbers<[1], [0], [0], [1], [0, 0, 1, 1], [], []>} : vector<16x16xf32>, vector<16x16xf32>, vector<16x16xf32> -> vector<16x16xf32>
    %c0_46 = arith.constant 0 : index
    %c80 = arith.constant 80 : index
    %116 = vector.load %arg18[%c0_46, %c80] : memref<16x128xf32, #tpu.memory_space<vmem>>, vector<16x16xf32>
    tpu.vector_store %arg18[%c0_46, %c80], %115 {strides = array<i32>} : memref<16x128xf32, #tpu.memory_space<vmem>>, vector<16x16xf32>,
    %117 = vector.extract_strided_slice %18 {offsets = [0, 96], sizes = [16, 16], strides = [1, 1]} : vector<16x128xf32> to vector<16x16xf32>
    %118 = vector.extract_strided_slice %19 {offsets = [0, 96], sizes = [16, 16], strides = [1, 1]} : vector<16x128xf32> to vector<16x16xf32>
    %119 = vector.extract_strided_slice %20 {offsets = [0, 96], sizes = [16, 16], strides = [1, 1]} : vector<16x128xf32> to vector<16x16xf32>
    %cst_47 = arith.constant dense<0.000000e+00> : vector<16x16xf32>
    %120 = tpu.matmul %117, %118, %cst_47 {dimension_numbers = #tpu.dot_dimension_numbers<[1], [1], [0], [0], [0, 0, 1, 0], [], []>} : vector<16x16xf32>, vector<16x16xf32>, vector<16x16xf32> -> vector<16x16xf32>
    %cst_48 = arith.constant dense<0xFF800000> : vector<16xf32>
    %121 = vector.multi_reduction <maximumf>, %120, %cst_48 [1] : vector<16x16xf32> to vector<16xf32>
    %122 = vector.shape_cast %121 : vector<16xf32> to vector<16x1xf32>
    %123 = vector.broadcast %122 : vector<16x1xf32> to vector<16x16xf32>
    %124 = arith.subf %120, %123 : vector<16x16xf32>
    %125 = math.exp %124 : vector<16x16xf32>
    %cst_49 = arith.constant dense<0.000000e+00> : vector<16xf32>
    %126 = vector.multi_reduction <add>, %125, %cst_49 [1] : vector<16x16xf32> to vector<16xf32>
    %127 = vector.shape_cast %126 : vector<16xf32> to vector<16x1xf32>
    %128 = tpu.reciprocal %127 {approx = true} : vector<16x1xf32> -> vector<16x1xf32>
    %129 = vector.broadcast %128 : vector<16x1xf32> to vector<16x16xf32>
    %130 = arith.mulf %125, %129 : vector<16x16xf32>
    %cst_50 = arith.constant dense<0.000000e+00> : vector<16x16xf32>
    %131 = tpu.matmul %130, %119, %cst_50 {dimension_numbers = #tpu.dot_dimension_numbers<[1], [0], [0], [1], [0, 0, 1, 1], [], []>} : vector<16x16xf32>, vector<16x16xf32>, vector<16x16xf32> -> vector<16x16xf32>
    %c0_51 = arith.constant 0 : index
    %c96 = arith.constant 96 : index
    %132 = vector.load %arg18[%c0_51, %c96] : memref<16x128xf32, #tpu.memory_space<vmem>>, vector<16x16xf32>
    tpu.vector_store %arg18[%c0_51, %c96], %131 {strides = array<i32>} : memref<16x128xf32, #tpu.memory_space<vmem>>, vector<16x16xf32>,
    %133 = vector.extract_strided_slice %18 {offsets = [0, 112], sizes = [16, 16], strides = [1, 1]} : vector<16x128xf32> to vector<16x16xf32>
    %134 = vector.extract_strided_slice %19 {offsets = [0, 112], sizes = [16, 16], strides = [1, 1]} : vector<16x128xf32> to vector<16x16xf32>
    %135 = vector.extract_strided_slice %20 {offsets = [0, 112], sizes = [16, 16], strides = [1, 1]} : vector<16x128xf32> to vector<16x16xf32>
    %cst_52 = arith.constant dense<0.000000e+00> : vector<16x16xf32>
    %136 = tpu.matmul %133, %134, %cst_52 {dimension_numbers = #tpu.dot_dimension_numbers<[1], [1], [0], [0], [0, 0, 1, 0], [], []>} : vector<16x16xf32>, vector<16x16xf32>, vector<16x16xf32> -> vector<16x16xf32>
    %cst_53 = arith.constant dense<0xFF800000> : vector<16xf32>
    %137 = vector.multi_reduction <maximumf>, %136, %cst_53 [1] : vector<16x16xf32> to vector<16xf32>
    %138 = vector.shape_cast %137 : vector<16xf32> to vector<16x1xf32>
    %139 = vector.broadcast %138 : vector<16x1xf32> to vector<16x16xf32>
    %140 = arith.subf %136, %139 : vector<16x16xf32>
    %141 = math.exp %140 : vector<16x16xf32>
    %cst_54 = arith.constant dense<0.000000e+00> : vector<16xf32>
    %142 = vector.multi_reduction <add>, %141, %cst_54 [1] : vector<16x16xf32> to vector<16xf32>
    %143 = vector.shape_cast %142 : vector<16xf32> to vector<16x1xf32>
    %144 = tpu.reciprocal %143 {approx = true} : vector<16x1xf32> -> vector<16x1xf32>
    %145 = vector.broadcast %144 : vector<16x1xf32> to vector<16x16xf32>
    %146 = arith.mulf %141, %145 : vector<16x16xf32>
    %cst_55 = arith.constant dense<0.000000e+00> : vector<16x16xf32>
    %147 = tpu.matmul %146, %135, %cst_55 {dimension_numbers = #tpu.dot_dimension_numbers<[1], [0], [0], [1], [0, 0, 1, 1], [], []>} : vector<16x16xf32>, vector<16x16xf32>, vector<16x16xf32> -> vector<16x16xf32>
    %c0_56 = arith.constant 0 : index
    %c112 = arith.constant 112 : index
    %148 = vector.load %arg18[%c0_56, %c112] : memref<16x128xf32, #tpu.memory_space<vmem>>, vector<16x16xf32>
    tpu.vector_store %arg18[%c0_56, %c112], %147 {strides = array<i32>} : memref<16x128xf32, #tpu.memory_space<vmem>>, vector<16x16xf32>,
    %c0_57 = arith.constant 0 : index
    %c0_58 = arith.constant 0 : index
    %149 = vector.load %arg18[%c0_57, %c0_58] : memref<16x128xf32, #tpu.memory_space<vmem>>, vector<16x128xf32>
    %c0_59 = arith.constant 0 : index
    %c0_60 = arith.constant 0 : index
    %c0_61 = arith.constant 0 : index
    %150 = vector.load %arg7[%c0_59, %c0_60, %c0_61] : memref<2x128x128xf32, #tpu.memory_space<vmem>>, vector<1x128x128xf32>
    %151 = vector.shape_cast %150 : vector<1x128x128xf32> to vector<128x128xf32>
    %cst_62 = arith.constant dense<0.000000e+00> : vector<16x128xf32>
    %152 = tpu.matmul %149, %151, %cst_62 {dimension_numbers = #tpu.dot_dimension_numbers<[1], [0], [0], [1], [0, 0, 1, 1], [], []>} : vector<16x128xf32>, vector<128x128xf32>, vector<16x128xf32> -> vector<16x128xf32>
    %c0_63 = arith.constant 0 : index
    %c0_64 = arith.constant 0 : index
    %c0_65 = arith.constant 0 : index
    %153 = vector.load %arg8[%c0_63, %c0_64, %c0_65] : memref<2x1x128xf32, #tpu.memory_space<vmem>>, vector<1x1x128xf32>
    %154 = vector.shape_cast %153 : vector<1x1x128xf32> to vector<1x128xf32>
    %155 = vector.broadcast %154 : vector<1x128xf32> to vector<16x128xf32>
    %156 = arith.addf %152, %155 : vector<16x128xf32>
    %157 = arith.addf %156, %10 : vector<16x128xf32>
    %c0_66 = arith.constant 0 : index
    %c0_67 = arith.constant 0 : index
    %c0_68 = arith.constant 0 : index
    %158 = vector.load %arg9[%c0_66, %c0_67, %c0_68] : memref<2x1x128xf32, #tpu.memory_space<vmem>>, vector<1x1x128xf32>
    %159 = vector.shape_cast %158 : vector<1x1x128xf32> to vector<1x128xf32>
    %c0_69 = arith.constant 0 : index
    %c0_70 = arith.constant 0 : index
    %c0_71 = arith.constant 0 : index
    %160 = vector.load %arg10[%c0_69, %c0_70, %c0_71] : memref<2x1x128xf32, #tpu.memory_space<vmem>>, vector<1x1x128xf32>
    %161 = vector.shape_cast %160 : vector<1x1x128xf32> to vector<1x128xf32>
    %cst_72 = arith.constant dense<0.000000e+00> : vector<16xf32>
    %162 = vector.multi_reduction <add>, %157, %cst_72 [1] : vector<16x128xf32> to vector<16xf32>
    %163 = vector.shape_cast %162 : vector<16xf32> to vector<16x1xf32>
    %cst_73 = arith.constant 1.280000e+02 : f32
    %164 = vector.broadcast %cst_73 : f32 to vector<16x1xf32>
    %165 = arith.divf %163, %164 : vector<16x1xf32>
    %166 = vector.broadcast %165 : vector<16x1xf32> to vector<16x128xf32>
    %167 = arith.subf %157, %166 : vector<16x128xf32>
    %168 = arith.mulf %167, %167 : vector<16x128xf32>
    %cst_74 = arith.constant dense<0.000000e+00> : vector<16xf32>
    %169 = vector.multi_reduction <add>, %168, %cst_74 [1] : vector<16x128xf32> to vector<16xf32>
    %170 = vector.shape_cast %169 : vector<16xf32> to vector<16x1xf32>
    %cst_75 = arith.constant 1.280000e+02 : f32
    %171 = vector.broadcast %cst_75 : f32 to vector<16x1xf32>
    %172 = arith.divf %170, %171 : vector<16x1xf32>
    %cst_76 = arith.constant 9.99999974E-6 : f32
    %173 = vector.broadcast %cst_76 : f32 to vector<16x1xf32>
    %174 = arith.addf %172, %173 : vector<16x1xf32>
    %175 = math.rsqrt %174 : vector<16x1xf32>
    %176 = vector.broadcast %175 : vector<16x1xf32> to vector<16x128xf32>
    %177 = arith.mulf %167, %176 : vector<16x128xf32>
    %178 = vector.broadcast %159 : vector<1x128xf32> to vector<16x128xf32>
    %179 = arith.mulf %177, %178 : vector<16x128xf32>
    %180 = vector.broadcast %161 : vector<1x128xf32> to vector<16x128xf32>
    %181 = arith.addf %179, %180 : vector<16x128xf32>
    %c0_77 = arith.constant 0 : index
    %c0_78 = arith.constant 0 : index
    %c0_79 = arith.constant 0 : index
    %182 = vector.load %arg11[%c0_77, %c0_78, %c0_79] : memref<2x128x256xf32, #tpu.memory_space<vmem>>, vector<1x128x256xf32>
    %183 = vector.shape_cast %182 : vector<1x128x256xf32> to vector<128x256xf32>
    %cst_80 = arith.constant dense<0.000000e+00> : vector<16x256xf32>
    %184 = tpu.matmul %181, %183, %cst_80 {dimension_numbers = #tpu.dot_dimension_numbers<[1], [0], [0], [1], [0, 0, 1, 1], [], []>} : vector<16x128xf32>, vector<128x256xf32>, vector<16x256xf32> -> vector<16x256xf32>
    %c0_81 = arith.constant 0 : index
    %c0_82 = arith.constant 0 : index
    %c0_83 = arith.constant 0 : index
    %185 = vector.load %arg12[%c0_81, %c0_82, %c0_83] : memref<2x1x256xf32, #tpu.memory_space<vmem>>, vector<1x1x256xf32>
    %186 = vector.shape_cast %185 : vector<1x1x256xf32> to vector<1x256xf32>
    %187 = vector.broadcast %186 : vector<1x256xf32> to vector<16x256xf32>
    %188 = arith.addf %184, %187 : vector<16x256xf32>
    %cst_84 = arith.constant 5.000000e-01 : f32
    %189 = vector.broadcast %cst_84 : f32 to vector<16x256xf32>
    %190 = arith.mulf %189, %188 : vector<16x256xf32>
    %cst_85 = arith.constant 4.471500e-02 : f32
    %191 = vector.broadcast %cst_85 : f32 to vector<16x256xf32>
    %192 = arith.mulf %191, %188 : vector<16x256xf32>
    %193 = arith.mulf %192, %188 : vector<16x256xf32>
    %194 = arith.mulf %193, %188 : vector<16x256xf32>
    %195 = arith.addf %188, %194 : vector<16x256xf32>
    %cst_86 = arith.constant 0.797884583 : f32
    %196 = vector.broadcast %cst_86 : f32 to vector<16x256xf32>
    %197 = arith.mulf %196, %195 : vector<16x256xf32>
    %198 = math.tanh %197 : vector<16x256xf32>
    %cst_87 = arith.constant 1.000000e+00 : f32
    %199 = vector.broadcast %cst_87 : f32 to vector<16x256xf32>
    %200 = arith.addf %199, %198 : vector<16x256xf32>
    %201 = arith.mulf %190, %200 : vector<16x256xf32>
    %c0_88 = arith.constant 0 : index
    %c0_89 = arith.constant 0 : index
    %c0_90 = arith.constant 0 : index
    %202 = vector.load %arg13[%c0_88, %c0_89, %c0_90] : memref<2x256x128xf32, #tpu.memory_space<vmem>>, vector<1x256x128xf32>
    %203 = vector.shape_cast %202 : vector<1x256x128xf32> to vector<256x128xf32>
    %cst_91 = arith.constant dense<0.000000e+00> : vector<16x128xf32>
    %204 = tpu.matmul %201, %203, %cst_91 {dimension_numbers = #tpu.dot_dimension_numbers<[1], [0], [0], [1], [0, 0, 1, 1], [], []>} : vector<16x256xf32>, vector<256x128xf32>, vector<16x128xf32> -> vector<16x128xf32>
    %c0_92 = arith.constant 0 : index
    %c0_93 = arith.constant 0 : index
    %c0_94 = arith.constant 0 : index
    %205 = vector.load %arg14[%c0_92, %c0_93, %c0_94] : memref<2x1x128xf32, #tpu.memory_space<vmem>>, vector<1x1x128xf32>
    %206 = vector.shape_cast %205 : vector<1x1x128xf32> to vector<1x128xf32>
    %207 = vector.broadcast %206 : vector<1x128xf32> to vector<16x128xf32>
    %208 = arith.addf %204, %207 : vector<16x128xf32>
    %209 = arith.addf %208, %181 : vector<16x128xf32>
    %c0_95 = arith.constant 0 : index
    %c0_96 = arith.constant 0 : index
    %c0_97 = arith.constant 0 : index
    %210 = vector.load %arg15[%c0_95, %c0_96, %c0_97] : memref<2x1x128xf32, #tpu.memory_space<vmem>>, vector<1x1x128xf32>
    %211 = vector.shape_cast %210 : vector<1x1x128xf32> to vector<1x128xf32>
    %c0_98 = arith.constant 0 : index
    %c0_99 = arith.constant 0 : index
    %c0_100 = arith.constant 0 : index
    %212 = vector.load %arg16[%c0_98, %c0_99, %c0_100] : memref<2x1x128xf32, #tpu.memory_space<vmem>>, vector<1x1x128xf32>
    %213 = vector.shape_cast %212 : vector<1x1x128xf32> to vector<1x128xf32>
    %cst_101 = arith.constant dense<0.000000e+00> : vector<16xf32>
    %214 = vector.multi_reduction <add>, %209, %cst_101 [1] : vector<16x128xf32> to vector<16xf32>
    %215 = vector.shape_cast %214 : vector<16xf32> to vector<16x1xf32>
    %cst_102 = arith.constant 1.280000e+02 : f32
    %216 = vector.broadcast %cst_102 : f32 to vector<16x1xf32>
    %217 = arith.divf %215, %216 : vector<16x1xf32>
    %218 = vector.broadcast %217 : vector<16x1xf32> to vector<16x128xf32>
    %219 = arith.subf %209, %218 : vector<16x128xf32>
    %220 = arith.mulf %219, %219 : vector<16x128xf32>
    %cst_103 = arith.constant dense<0.000000e+00> : vector<16xf32>
    %221 = vector.multi_reduction <add>, %220, %cst_103 [1] : vector<16x128xf32> to vector<16xf32>
    %222 = vector.shape_cast %221 : vector<16xf32> to vector<16x1xf32>
    %cst_104 = arith.constant 1.280000e+02 : f32
    %223 = vector.broadcast %cst_104 : f32 to vector<16x1xf32>
    %224 = arith.divf %222, %223 : vector<16x1xf32>
    %cst_105 = arith.constant 9.99999974E-6 : f32
    %225 = vector.broadcast %cst_105 : f32 to vector<16x1xf32>
    %226 = arith.addf %224, %225 : vector<16x1xf32>
    %227 = math.rsqrt %226 : vector<16x1xf32>
    %228 = vector.broadcast %227 : vector<16x1xf32> to vector<16x128xf32>
    %229 = arith.mulf %219, %228 : vector<16x128xf32>
    %230 = vector.broadcast %211 : vector<1x128xf32> to vector<16x128xf32>
    %231 = arith.mulf %229, %230 : vector<16x128xf32>
    %232 = vector.broadcast %213 : vector<1x128xf32> to vector<16x128xf32>
    %233 = arith.addf %231, %232 : vector<16x128xf32>
    %c1 = arith.constant 1 : index
    %c0_106 = arith.constant 0 : index
    %c0_107 = arith.constant 0 : index
    %234 = vector.load %arg5[%c1, %c0_106, %c0_107] : memref<2x128x384xf32, #tpu.memory_space<vmem>>, vector<1x128x384xf32>
    %235 = vector.shape_cast %234 : vector<1x128x384xf32> to vector<128x384xf32>
    %cst_108 = arith.constant dense<0.000000e+00> : vector<16x384xf32>
    %236 = tpu.matmul %233, %235, %cst_108 {dimension_numbers = #tpu.dot_dimension_numbers<[1], [0], [0], [1], [0, 0, 1, 1], [], []>} : vector<16x128xf32>, vector<128x384xf32>, vector<16x384xf32> -> vector<16x384xf32>
    %c1_109 = arith.constant 1 : index
    %c0_110 = arith.constant 0 : index
    %c0_111 = arith.constant 0 : index
    %237 = vector.load %arg6[%c1_109, %c0_110, %c0_111] : memref<2x1x384xf32, #tpu.memory_space<vmem>>, vector<1x1x384xf32>
    %238 = vector.shape_cast %237 : vector<1x1x384xf32> to vector<1x384xf32>
    %239 = vector.broadcast %238 : vector<1x384xf32> to vector<16x384xf32>
    %240 = arith.addf %236, %239 : vector<16x384xf32>
    %241 = vector.extract_strided_slice %240 {offsets = [0, 0], sizes = [16, 128], strides = [1, 1]} : vector<16x384xf32> to vector<16x128xf32>
    %242 = vector.extract_strided_slice %240 {offsets = [0, 128], sizes = [16, 128], strides = [1, 1]} : vector<16x384xf32> to vector<16x128xf32>
    %243 = vector.extract_strided_slice %240 {offsets = [0, 256], sizes = [16, 128], strides = [1, 1]} : vector<16x384xf32> to vector<16x128xf32>
    %244 = vector.extract_strided_slice %241 {offsets = [0, 0], sizes = [16, 16], strides = [1, 1]} : vector<16x128xf32> to vector<16x16xf32>
    %245 = vector.extract_strided_slice %242 {offsets = [0, 0], sizes = [16, 16], strides = [1, 1]} : vector<16x128xf32> to vector<16x16xf32>
    %246 = vector.extract_strided_slice %243 {offsets = [0, 0], sizes = [16, 16], strides = [1, 1]} : vector<16x128xf32> to vector<16x16xf32>
    %cst_112 = arith.constant dense<0.000000e+00> : vector<16x16xf32>
    %247 = tpu.matmul %244, %245, %cst_112 {dimension_numbers = #tpu.dot_dimension_numbers<[1], [1], [0], [0], [0, 0, 1, 0], [], []>} : vector<16x16xf32>, vector<16x16xf32>, vector<16x16xf32> -> vector<16x16xf32>
    %cst_113 = arith.constant dense<0xFF800000> : vector<16xf32>
    %248 = vector.multi_reduction <maximumf>, %247, %cst_113 [1] : vector<16x16xf32> to vector<16xf32>
    %249 = vector.shape_cast %248 : vector<16xf32> to vector<16x1xf32>
    %250 = vector.broadcast %249 : vector<16x1xf32> to vector<16x16xf32>
    %251 = arith.subf %247, %250 : vector<16x16xf32>
    %252 = math.exp %251 : vector<16x16xf32>
    %cst_114 = arith.constant dense<0.000000e+00> : vector<16xf32>
    %253 = vector.multi_reduction <add>, %252, %cst_114 [1] : vector<16x16xf32> to vector<16xf32>
    %254 = vector.shape_cast %253 : vector<16xf32> to vector<16x1xf32>
    %255 = tpu.reciprocal %254 {approx = true} : vector<16x1xf32> -> vector<16x1xf32>
    %256 = vector.broadcast %255 : vector<16x1xf32> to vector<16x16xf32>
    %257 = arith.mulf %252, %256 : vector<16x16xf32>
    %cst_115 = arith.constant dense<0.000000e+00> : vector<16x16xf32>
    %258 = tpu.matmul %257, %246, %cst_115 {dimension_numbers = #tpu.dot_dimension_numbers<[1], [0], [0], [1], [0, 0, 1, 1], [], []>} : vector<16x16xf32>, vector<16x16xf32>, vector<16x16xf32> -> vector<16x16xf32>
    %c0_116 = arith.constant 0 : index
    %c0_117 = arith.constant 0 : index
    %259 = vector.load %arg18[%c0_116, %c0_117] : memref<16x128xf32, #tpu.memory_space<vmem>>, vector<16x16xf32>
    tpu.vector_store %arg18[%c0_116, %c0_117], %258 {strides = array<i32>} : memref<16x128xf32, #tpu.memory_space<vmem>>, vector<16x16xf32>,
    %260 = vector.extract_strided_slice %241 {offsets = [0, 16], sizes = [16, 16], strides = [1, 1]} : vector<16x128xf32> to vector<16x16xf32>
    %261 = vector.extract_strided_slice %242 {offsets = [0, 16], sizes = [16, 16], strides = [1, 1]} : vector<16x128xf32> to vector<16x16xf32>
    %262 = vector.extract_strided_slice %243 {offsets = [0, 16], sizes = [16, 16], strides = [1, 1]} : vector<16x128xf32> to vector<16x16xf32>
    %cst_118 = arith.constant dense<0.000000e+00> : vector<16x16xf32>
    %263 = tpu.matmul %260, %261, %cst_118 {dimension_numbers = #tpu.dot_dimension_numbers<[1], [1], [0], [0], [0, 0, 1, 0], [], []>} : vector<16x16xf32>, vector<16x16xf32>, vector<16x16xf32> -> vector<16x16xf32>
    %cst_119 = arith.constant dense<0xFF800000> : vector<16xf32>
    %264 = vector.multi_reduction <maximumf>, %263, %cst_119 [1] : vector<16x16xf32> to vector<16xf32>
    %265 = vector.shape_cast %264 : vector<16xf32> to vector<16x1xf32>
    %266 = vector.broadcast %265 : vector<16x1xf32> to vector<16x16xf32>
    %267 = arith.subf %263, %266 : vector<16x16xf32>
    %268 = math.exp %267 : vector<16x16xf32>
    %cst_120 = arith.constant dense<0.000000e+00> : vector<16xf32>
    %269 = vector.multi_reduction <add>, %268, %cst_120 [1] : vector<16x16xf32> to vector<16xf32>
    %270 = vector.shape_cast %269 : vector<16xf32> to vector<16x1xf32>
    %271 = tpu.reciprocal %270 {approx = true} : vector<16x1xf32> -> vector<16x1xf32>
    %272 = vector.broadcast %271 : vector<16x1xf32> to vector<16x16xf32>
    %273 = arith.mulf %268, %272 : vector<16x16xf32>
    %cst_121 = arith.constant dense<0.000000e+00> : vector<16x16xf32>
    %274 = tpu.matmul %273, %262, %cst_121 {dimension_numbers = #tpu.dot_dimension_numbers<[1], [0], [0], [1], [0, 0, 1, 1], [], []>} : vector<16x16xf32>, vector<16x16xf32>, vector<16x16xf32> -> vector<16x16xf32>
    %c0_122 = arith.constant 0 : index
    %c16_123 = arith.constant 16 : index
    %275 = vector.load %arg18[%c0_122, %c16_123] : memref<16x128xf32, #tpu.memory_space<vmem>>, vector<16x16xf32>
    tpu.vector_store %arg18[%c0_122, %c16_123], %274 {strides = array<i32>} : memref<16x128xf32, #tpu.memory_space<vmem>>, vector<16x16xf32>,
    %276 = vector.extract_strided_slice %241 {offsets = [0, 32], sizes = [16, 16], strides = [1, 1]} : vector<16x128xf32> to vector<16x16xf32>
    %277 = vector.extract_strided_slice %242 {offsets = [0, 32], sizes = [16, 16], strides = [1, 1]} : vector<16x128xf32> to vector<16x16xf32>
    %278 = vector.extract_strided_slice %243 {offsets = [0, 32], sizes = [16, 16], strides = [1, 1]} : vector<16x128xf32> to vector<16x16xf32>
    %cst_124 = arith.constant dense<0.000000e+00> : vector<16x16xf32>
    %279 = tpu.matmul %276, %277, %cst_124 {dimension_numbers = #tpu.dot_dimension_numbers<[1], [1], [0], [0], [0, 0, 1, 0], [], []>} : vector<16x16xf32>, vector<16x16xf32>, vector<16x16xf32> -> vector<16x16xf32>
    %cst_125 = arith.constant dense<0xFF800000> : vector<16xf32>
    %280 = vector.multi_reduction <maximumf>, %279, %cst_125 [1] : vector<16x16xf32> to vector<16xf32>
    %281 = vector.shape_cast %280 : vector<16xf32> to vector<16x1xf32>
    %282 = vector.broadcast %281 : vector<16x1xf32> to vector<16x16xf32>
    %283 = arith.subf %279, %282 : vector<16x16xf32>
    %284 = math.exp %283 : vector<16x16xf32>
    %cst_126 = arith.constant dense<0.000000e+00> : vector<16xf32>
    %285 = vector.multi_reduction <add>, %284, %cst_126 [1] : vector<16x16xf32> to vector<16xf32>
    %286 = vector.shape_cast %285 : vector<16xf32> to vector<16x1xf32>
    %287 = tpu.reciprocal %286 {approx = true} : vector<16x1xf32> -> vector<16x1xf32>
    %288 = vector.broadcast %287 : vector<16x1xf32> to vector<16x16xf32>
    %289 = arith.mulf %284, %288 : vector<16x16xf32>
    %cst_127 = arith.constant dense<0.000000e+00> : vector<16x16xf32>
    %290 = tpu.matmul %289, %278, %cst_127 {dimension_numbers = #tpu.dot_dimension_numbers<[1], [0], [0], [1], [0, 0, 1, 1], [], []>} : vector<16x16xf32>, vector<16x16xf32>, vector<16x16xf32> -> vector<16x16xf32>
    %c0_128 = arith.constant 0 : index
    %c32_129 = arith.constant 32 : index
    %291 = vector.load %arg18[%c0_128, %c32_129] : memref<16x128xf32, #tpu.memory_space<vmem>>, vector<16x16xf32>
    tpu.vector_store %arg18[%c0_128, %c32_129], %290 {strides = array<i32>} : memref<16x128xf32, #tpu.memory_space<vmem>>, vector<16x16xf32>,
    %292 = vector.extract_strided_slice %241 {offsets = [0, 48], sizes = [16, 16], strides = [1, 1]} : vector<16x128xf32> to vector<16x16xf32>
    %293 = vector.extract_strided_slice %242 {offsets = [0, 48], sizes = [16, 16], strides = [1, 1]} : vector<16x128xf32> to vector<16x16xf32>
    %294 = vector.extract_strided_slice %243 {offsets = [0, 48], sizes = [16, 16], strides = [1, 1]} : vector<16x128xf32> to vector<16x16xf32>
    %cst_130 = arith.constant dense<0.000000e+00> : vector<16x16xf32>
    %295 = tpu.matmul %292, %293, %cst_130 {dimension_numbers = #tpu.dot_dimension_numbers<[1], [1], [0], [0], [0, 0, 1, 0], [], []>} : vector<16x16xf32>, vector<16x16xf32>, vector<16x16xf32> -> vector<16x16xf32>
    %cst_131 = arith.constant dense<0xFF800000> : vector<16xf32>
    %296 = vector.multi_reduction <maximumf>, %295, %cst_131 [1] : vector<16x16xf32> to vector<16xf32>
    %297 = vector.shape_cast %296 : vector<16xf32> to vector<16x1xf32>
    %298 = vector.broadcast %297 : vector<16x1xf32> to vector<16x16xf32>
    %299 = arith.subf %295, %298 : vector<16x16xf32>
    %300 = math.exp %299 : vector<16x16xf32>
    %cst_132 = arith.constant dense<0.000000e+00> : vector<16xf32>
    %301 = vector.multi_reduction <add>, %300, %cst_132 [1] : vector<16x16xf32> to vector<16xf32>
    %302 = vector.shape_cast %301 : vector<16xf32> to vector<16x1xf32>
    %303 = tpu.reciprocal %302 {approx = true} : vector<16x1xf32> -> vector<16x1xf32>
    %304 = vector.broadcast %303 : vector<16x1xf32> to vector<16x16xf32>
    %305 = arith.mulf %300, %304 : vector<16x16xf32>
    %cst_133 = arith.constant dense<0.000000e+00> : vector<16x16xf32>
    %306 = tpu.matmul %305, %294, %cst_133 {dimension_numbers = #tpu.dot_dimension_numbers<[1], [0], [0], [1], [0, 0, 1, 1], [], []>} : vector<16x16xf32>, vector<16x16xf32>, vector<16x16xf32> -> vector<16x16xf32>
    %c0_134 = arith.constant 0 : index
    %c48_135 = arith.constant 48 : index
    %307 = vector.load %arg18[%c0_134, %c48_135] : memref<16x128xf32, #tpu.memory_space<vmem>>, vector<16x16xf32>
    tpu.vector_store %arg18[%c0_134, %c48_135], %306 {strides = array<i32>} : memref<16x128xf32, #tpu.memory_space<vmem>>, vector<16x16xf32>,
    %308 = vector.extract_strided_slice %241 {offsets = [0, 64], sizes = [16, 16], strides = [1, 1]} : vector<16x128xf32> to vector<16x16xf32>
    %309 = vector.extract_strided_slice %242 {offsets = [0, 64], sizes = [16, 16], strides = [1, 1]} : vector<16x128xf32> to vector<16x16xf32>
    %310 = vector.extract_strided_slice %243 {offsets = [0, 64], sizes = [16, 16], strides = [1, 1]} : vector<16x128xf32> to vector<16x16xf32>
    %cst_136 = arith.constant dense<0.000000e+00> : vector<16x16xf32>
    %311 = tpu.matmul %308, %309, %cst_136 {dimension_numbers = #tpu.dot_dimension_numbers<[1], [1], [0], [0], [0, 0, 1, 0], [], []>} : vector<16x16xf32>, vector<16x16xf32>, vector<16x16xf32> -> vector<16x16xf32>
    %cst_137 = arith.constant dense<0xFF800000> : vector<16xf32>
    %312 = vector.multi_reduction <maximumf>, %311, %cst_137 [1] : vector<16x16xf32> to vector<16xf32>
    %313 = vector.shape_cast %312 : vector<16xf32> to vector<16x1xf32>
    %314 = vector.broadcast %313 : vector<16x1xf32> to vector<16x16xf32>
    %315 = arith.subf %311, %314 : vector<16x16xf32>
    %316 = math.exp %315 : vector<16x16xf32>
    %cst_138 = arith.constant dense<0.000000e+00> : vector<16xf32>
    %317 = vector.multi_reduction <add>, %316, %cst_138 [1] : vector<16x16xf32> to vector<16xf32>
    %318 = vector.shape_cast %317 : vector<16xf32> to vector<16x1xf32>
    %319 = tpu.reciprocal %318 {approx = true} : vector<16x1xf32> -> vector<16x1xf32>
    %320 = vector.broadcast %319 : vector<16x1xf32> to vector<16x16xf32>
    %321 = arith.mulf %316, %320 : vector<16x16xf32>
    %cst_139 = arith.constant dense<0.000000e+00> : vector<16x16xf32>
    %322 = tpu.matmul %321, %310, %cst_139 {dimension_numbers = #tpu.dot_dimension_numbers<[1], [0], [0], [1], [0, 0, 1, 1], [], []>} : vector<16x16xf32>, vector<16x16xf32>, vector<16x16xf32> -> vector<16x16xf32>
    %c0_140 = arith.constant 0 : index
    %c64_141 = arith.constant 64 : index
    %323 = vector.load %arg18[%c0_140, %c64_141] : memref<16x128xf32, #tpu.memory_space<vmem>>, vector<16x16xf32>
    tpu.vector_store %arg18[%c0_140, %c64_141], %322 {strides = array<i32>} : memref<16x128xf32, #tpu.memory_space<vmem>>, vector<16x16xf32>,
    %324 = vector.extract_strided_slice %241 {offsets = [0, 80], sizes = [16, 16], strides = [1, 1]} : vector<16x128xf32> to vector<16x16xf32>
    %325 = vector.extract_strided_slice %242 {offsets = [0, 80], sizes = [16, 16], strides = [1, 1]} : vector<16x128xf32> to vector<16x16xf32>
    %326 = vector.extract_strided_slice %243 {offsets = [0, 80], sizes = [16, 16], strides = [1, 1]} : vector<16x128xf32> to vector<16x16xf32>
    %cst_142 = arith.constant dense<0.000000e+00> : vector<16x16xf32>
    %327 = tpu.matmul %324, %325, %cst_142 {dimension_numbers = #tpu.dot_dimension_numbers<[1], [1], [0], [0], [0, 0, 1, 0], [], []>} : vector<16x16xf32>, vector<16x16xf32>, vector<16x16xf32> -> vector<16x16xf32>
    %cst_143 = arith.constant dense<0xFF800000> : vector<16xf32>
    %328 = vector.multi_reduction <maximumf>, %327, %cst_143 [1] : vector<16x16xf32> to vector<16xf32>
    %329 = vector.shape_cast %328 : vector<16xf32> to vector<16x1xf32>
    %330 = vector.broadcast %329 : vector<16x1xf32> to vector<16x16xf32>
    %331 = arith.subf %327, %330 : vector<16x16xf32>
    %332 = math.exp %331 : vector<16x16xf32>
    %cst_144 = arith.constant dense<0.000000e+00> : vector<16xf32>
    %333 = vector.multi_reduction <add>, %332, %cst_144 [1] : vector<16x16xf32> to vector<16xf32>
    %334 = vector.shape_cast %333 : vector<16xf32> to vector<16x1xf32>
    %335 = tpu.reciprocal %334 {approx = true} : vector<16x1xf32> -> vector<16x1xf32>
    %336 = vector.broadcast %335 : vector<16x1xf32> to vector<16x16xf32>
    %337 = arith.mulf %332, %336 : vector<16x16xf32>
    %cst_145 = arith.constant dense<0.000000e+00> : vector<16x16xf32>
    %338 = tpu.matmul %337, %326, %cst_145 {dimension_numbers = #tpu.dot_dimension_numbers<[1], [0], [0], [1], [0, 0, 1, 1], [], []>} : vector<16x16xf32>, vector<16x16xf32>, vector<16x16xf32> -> vector<16x16xf32>
    %c0_146 = arith.constant 0 : index
    %c80_147 = arith.constant 80 : index
    %339 = vector.load %arg18[%c0_146, %c80_147] : memref<16x128xf32, #tpu.memory_space<vmem>>, vector<16x16xf32>
    tpu.vector_store %arg18[%c0_146, %c80_147], %338 {strides = array<i32>} : memref<16x128xf32, #tpu.memory_space<vmem>>, vector<16x16xf32>,
    %340 = vector.extract_strided_slice %241 {offsets = [0, 96], sizes = [16, 16], strides = [1, 1]} : vector<16x128xf32> to vector<16x16xf32>
    %341 = vector.extract_strided_slice %242 {offsets = [0, 96], sizes = [16, 16], strides = [1, 1]} : vector<16x128xf32> to vector<16x16xf32>
    %342 = vector.extract_strided_slice %243 {offsets = [0, 96], sizes = [16, 16], strides = [1, 1]} : vector<16x128xf32> to vector<16x16xf32>
    %cst_148 = arith.constant dense<0.000000e+00> : vector<16x16xf32>
    %343 = tpu.matmul %340, %341, %cst_148 {dimension_numbers = #tpu.dot_dimension_numbers<[1], [1], [0], [0], [0, 0, 1, 0], [], []>} : vector<16x16xf32>, vector<16x16xf32>, vector<16x16xf32> -> vector<16x16xf32>
    %cst_149 = arith.constant dense<0xFF800000> : vector<16xf32>
    %344 = vector.multi_reduction <maximumf>, %343, %cst_149 [1] : vector<16x16xf32> to vector<16xf32>
    %345 = vector.shape_cast %344 : vector<16xf32> to vector<16x1xf32>
    %346 = vector.broadcast %345 : vector<16x1xf32> to vector<16x16xf32>
    %347 = arith.subf %343, %346 : vector<16x16xf32>
    %348 = math.exp %347 : vector<16x16xf32>
    %cst_150 = arith.constant dense<0.000000e+00> : vector<16xf32>
    %349 = vector.multi_reduction <add>, %348, %cst_150 [1] : vector<16x16xf32> to vector<16xf32>
    %350 = vector.shape_cast %349 : vector<16xf32> to vector<16x1xf32>
    %351 = tpu.reciprocal %350 {approx = true} : vector<16x1xf32> -> vector<16x1xf32>
    %352 = vector.broadcast %351 : vector<16x1xf32> to vector<16x16xf32>
    %353 = arith.mulf %348, %352 : vector<16x16xf32>
    %cst_151 = arith.constant dense<0.000000e+00> : vector<16x16xf32>
    %354 = tpu.matmul %353, %342, %cst_151 {dimension_numbers = #tpu.dot_dimension_numbers<[1], [0], [0], [1], [0, 0, 1, 1], [], []>} : vector<16x16xf32>, vector<16x16xf32>, vector<16x16xf32> -> vector<16x16xf32>
    %c0_152 = arith.constant 0 : index
    %c96_153 = arith.constant 96 : index
    %355 = vector.load %arg18[%c0_152, %c96_153] : memref<16x128xf32, #tpu.memory_space<vmem>>, vector<16x16xf32>
    tpu.vector_store %arg18[%c0_152, %c96_153], %354 {strides = array<i32>} : memref<16x128xf32, #tpu.memory_space<vmem>>, vector<16x16xf32>,
    %356 = vector.extract_strided_slice %241 {offsets = [0, 112], sizes = [16, 16], strides = [1, 1]} : vector<16x128xf32> to vector<16x16xf32>
    %357 = vector.extract_strided_slice %242 {offsets = [0, 112], sizes = [16, 16], strides = [1, 1]} : vector<16x128xf32> to vector<16x16xf32>
    %358 = vector.extract_strided_slice %243 {offsets = [0, 112], sizes = [16, 16], strides = [1, 1]} : vector<16x128xf32> to vector<16x16xf32>
    %cst_154 = arith.constant dense<0.000000e+00> : vector<16x16xf32>
    %359 = tpu.matmul %356, %357, %cst_154 {dimension_numbers = #tpu.dot_dimension_numbers<[1], [1], [0], [0], [0, 0, 1, 0], [], []>} : vector<16x16xf32>, vector<16x16xf32>, vector<16x16xf32> -> vector<16x16xf32>
    %cst_155 = arith.constant dense<0xFF800000> : vector<16xf32>
    %360 = vector.multi_reduction <maximumf>, %359, %cst_155 [1] : vector<16x16xf32> to vector<16xf32>
    %361 = vector.shape_cast %360 : vector<16xf32> to vector<16x1xf32>
    %362 = vector.broadcast %361 : vector<16x1xf32> to vector<16x16xf32>
    %363 = arith.subf %359, %362 : vector<16x16xf32>
    %364 = math.exp %363 : vector<16x16xf32>
    %cst_156 = arith.constant dense<0.000000e+00> : vector<16xf32>
    %365 = vector.multi_reduction <add>, %364, %cst_156 [1] : vector<16x16xf32> to vector<16xf32>
    %366 = vector.shape_cast %365 : vector<16xf32> to vector<16x1xf32>
    %367 = tpu.reciprocal %366 {approx = true} : vector<16x1xf32> -> vector<16x1xf32>
    %368 = vector.broadcast %367 : vector<16x1xf32> to vector<16x16xf32>
    %369 = arith.mulf %364, %368 : vector<16x16xf32>
    %cst_157 = arith.constant dense<0.000000e+00> : vector<16x16xf32>
    %370 = tpu.matmul %369, %358, %cst_157 {dimension_numbers = #tpu.dot_dimension_numbers<[1], [0], [0], [1], [0, 0, 1, 1], [], []>} : vector<16x16xf32>, vector<16x16xf32>, vector<16x16xf32> -> vector<16x16xf32>
    %c0_158 = arith.constant 0 : index
    %c112_159 = arith.constant 112 : index
    %371 = vector.load %arg18[%c0_158, %c112_159] : memref<16x128xf32, #tpu.memory_space<vmem>>, vector<16x16xf32>
    tpu.vector_store %arg18[%c0_158, %c112_159], %370 {strides = array<i32>} : memref<16x128xf32, #tpu.memory_space<vmem>>, vector<16x16xf32>,
    %c0_160 = arith.constant 0 : index
    %c0_161 = arith.constant 0 : index
    %372 = vector.load %arg18[%c0_160, %c0_161] : memref<16x128xf32, #tpu.memory_space<vmem>>, vector<16x128xf32>
    %c1_162 = arith.constant 1 : index
    %c0_163 = arith.constant 0 : index
    %c0_164 = arith.constant 0 : index
    %373 = vector.load %arg7[%c1_162, %c0_163, %c0_164] : memref<2x128x128xf32, #tpu.memory_space<vmem>>, vector<1x128x128xf32>
    %374 = vector.shape_cast %373 : vector<1x128x128xf32> to vector<128x128xf32>
    %cst_165 = arith.constant dense<0.000000e+00> : vector<16x128xf32>
    %375 = tpu.matmul %372, %374, %cst_165 {dimension_numbers = #tpu.dot_dimension_numbers<[1], [0], [0], [1], [0, 0, 1, 1], [], []>} : vector<16x128xf32>, vector<128x128xf32>, vector<16x128xf32> -> vector<16x128xf32>
    %c1_166 = arith.constant 1 : index
    %c0_167 = arith.constant 0 : index
    %c0_168 = arith.constant 0 : index
    %376 = vector.load %arg8[%c1_166, %c0_167, %c0_168] : memref<2x1x128xf32, #tpu.memory_space<vmem>>, vector<1x1x128xf32>
    %377 = vector.shape_cast %376 : vector<1x1x128xf32> to vector<1x128xf32>
    %378 = vector.broadcast %377 : vector<1x128xf32> to vector<16x128xf32>
    %379 = arith.addf %375, %378 : vector<16x128xf32>
    %380 = arith.addf %379, %233 : vector<16x128xf32>
    %c1_169 = arith.constant 1 : index
    %c0_170 = arith.constant 0 : index
    %c0_171 = arith.constant 0 : index
    %381 = vector.load %arg9[%c1_169, %c0_170, %c0_171] : memref<2x1x128xf32, #tpu.memory_space<vmem>>, vector<1x1x128xf32>
    %382 = vector.shape_cast %381 : vector<1x1x128xf32> to vector<1x128xf32>
    %c1_172 = arith.constant 1 : index
    %c0_173 = arith.constant 0 : index
    %c0_174 = arith.constant 0 : index
    %383 = vector.load %arg10[%c1_172, %c0_173, %c0_174] : memref<2x1x128xf32, #tpu.memory_space<vmem>>, vector<1x1x128xf32>
    %384 = vector.shape_cast %383 : vector<1x1x128xf32> to vector<1x128xf32>
    %cst_175 = arith.constant dense<0.000000e+00> : vector<16xf32>
    %385 = vector.multi_reduction <add>, %380, %cst_175 [1] : vector<16x128xf32> to vector<16xf32>
    %386 = vector.shape_cast %385 : vector<16xf32> to vector<16x1xf32>
    %cst_176 = arith.constant 1.280000e+02 : f32
    %387 = vector.broadcast %cst_176 : f32 to vector<16x1xf32>
    %388 = arith.divf %386, %387 : vector<16x1xf32>
    %389 = vector.broadcast %388 : vector<16x1xf32> to vector<16x128xf32>
    %390 = arith.subf %380, %389 : vector<16x128xf32>
    %391 = arith.mulf %390, %390 : vector<16x128xf32>
    %cst_177 = arith.constant dense<0.000000e+00> : vector<16xf32>
    %392 = vector.multi_reduction <add>, %391, %cst_177 [1] : vector<16x128xf32> to vector<16xf32>
    %393 = vector.shape_cast %392 : vector<16xf32> to vector<16x1xf32>
    %cst_178 = arith.constant 1.280000e+02 : f32
    %394 = vector.broadcast %cst_178 : f32 to vector<16x1xf32>
    %395 = arith.divf %393, %394 : vector<16x1xf32>
    %cst_179 = arith.constant 9.99999974E-6 : f32
    %396 = vector.broadcast %cst_179 : f32 to vector<16x1xf32>
    %397 = arith.addf %395, %396 : vector<16x1xf32>
    %398 = math.rsqrt %397 : vector<16x1xf32>
    %399 = vector.broadcast %398 : vector<16x1xf32> to vector<16x128xf32>
    %400 = arith.mulf %390, %399 : vector<16x128xf32>
    %401 = vector.broadcast %382 : vector<1x128xf32> to vector<16x128xf32>
    %402 = arith.mulf %400, %401 : vector<16x128xf32>
    %403 = vector.broadcast %384 : vector<1x128xf32> to vector<16x128xf32>
    %404 = arith.addf %402, %403 : vector<16x128xf32>
    %c1_180 = arith.constant 1 : index
    %c0_181 = arith.constant 0 : index
    %c0_182 = arith.constant 0 : index
    %405 = vector.load %arg11[%c1_180, %c0_181, %c0_182] : memref<2x128x256xf32, #tpu.memory_space<vmem>>, vector<1x128x256xf32>
    %406 = vector.shape_cast %405 : vector<1x128x256xf32> to vector<128x256xf32>
    %cst_183 = arith.constant dense<0.000000e+00> : vector<16x256xf32>
    %407 = tpu.matmul %404, %406, %cst_183 {dimension_numbers = #tpu.dot_dimension_numbers<[1], [0], [0], [1], [0, 0, 1, 1], [], []>} : vector<16x128xf32>, vector<128x256xf32>, vector<16x256xf32> -> vector<16x256xf32>
    %c1_184 = arith.constant 1 : index
    %c0_185 = arith.constant 0 : index
    %c0_186 = arith.constant 0 : index
    %408 = vector.load %arg12[%c1_184, %c0_185, %c0_186] : memref<2x1x256xf32, #tpu.memory_space<vmem>>, vector<1x1x256xf32>
    %409 = vector.shape_cast %408 : vector<1x1x256xf32> to vector<1x256xf32>
    %410 = vector.broadcast %409 : vector<1x256xf32> to vector<16x256xf32>
    %411 = arith.addf %407, %410 : vector<16x256xf32>
    %cst_187 = arith.constant 5.000000e-01 : f32
    %412 = vector.broadcast %cst_187 : f32 to vector<16x256xf32>
    %413 = arith.mulf %412, %411 : vector<16x256xf32>
    %cst_188 = arith.constant 4.471500e-02 : f32
    %414 = vector.broadcast %cst_188 : f32 to vector<16x256xf32>
    %415 = arith.mulf %414, %411 : vector<16x256xf32>
    %416 = arith.mulf %415, %411 : vector<16x256xf32>
    %417 = arith.mulf %416, %411 : vector<16x256xf32>
    %418 = arith.addf %411, %417 : vector<16x256xf32>
    %cst_189 = arith.constant 0.797884583 : f32
    %419 = vector.broadcast %cst_189 : f32 to vector<16x256xf32>
    %420 = arith.mulf %419, %418 : vector<16x256xf32>
    %421 = math.tanh %420 : vector<16x256xf32>
    %cst_190 = arith.constant 1.000000e+00 : f32
    %422 = vector.broadcast %cst_190 : f32 to vector<16x256xf32>
    %423 = arith.addf %422, %421 : vector<16x256xf32>
    %424 = arith.mulf %413, %423 : vector<16x256xf32>
    %c1_191 = arith.constant 1 : index
    %c0_192 = arith.constant 0 : index
    %c0_193 = arith.constant 0 : index
    %425 = vector.load %arg13[%c1_191, %c0_192, %c0_193] : memref<2x256x128xf32, #tpu.memory_space<vmem>>, vector<1x256x128xf32>
    %426 = vector.shape_cast %425 : vector<1x256x128xf32> to vector<256x128xf32>
    %cst_194 = arith.constant dense<0.000000e+00> : vector<16x128xf32>
    %427 = tpu.matmul %424, %426, %cst_194 {dimension_numbers = #tpu.dot_dimension_numbers<[1], [0], [0], [1], [0, 0, 1, 1], [], []>} : vector<16x256xf32>, vector<256x128xf32>, vector<16x128xf32> -> vector<16x128xf32>
    %c1_195 = arith.constant 1 : index
    %c0_196 = arith.constant 0 : index
    %c0_197 = arith.constant 0 : index
    %428 = vector.load %arg14[%c1_195, %c0_196, %c0_197] : memref<2x1x128xf32, #tpu.memory_space<vmem>>, vector<1x1x128xf32>
    %429 = vector.shape_cast %428 : vector<1x1x128xf32> to vector<1x128xf32>
    %430 = vector.broadcast %429 : vector<1x128xf32> to vector<16x128xf32>
    %431 = arith.addf %427, %430 : vector<16x128xf32>
    %432 = arith.addf %431, %404 : vector<16x128xf32>
    %c1_198 = arith.constant 1 : index
    %c0_199 = arith.constant 0 : index
    %c0_200 = arith.constant 0 : index
    %433 = vector.load %arg15[%c1_198, %c0_199, %c0_200] : memref<2x1x128xf32, #tpu.memory_space<vmem>>, vector<1x1x128xf32>
    %434 = vector.shape_cast %433 : vector<1x1x128xf32> to vector<1x128xf32>
    %c1_201 = arith.constant 1 : index
    %c0_202 = arith.constant 0 : index
    %c0_203 = arith.constant 0 : index
    %435 = vector.load %arg16[%c1_201, %c0_202, %c0_203] : memref<2x1x128xf32, #tpu.memory_space<vmem>>, vector<1x1x128xf32>
    %436 = vector.shape_cast %435 : vector<1x1x128xf32> to vector<1x128xf32>
    %cst_204 = arith.constant dense<0.000000e+00> : vector<16xf32>
    %437 = vector.multi_reduction <add>, %432, %cst_204 [1] : vector<16x128xf32> to vector<16xf32>
    %438 = vector.shape_cast %437 : vector<16xf32> to vector<16x1xf32>
    %cst_205 = arith.constant 1.280000e+02 : f32
    %439 = vector.broadcast %cst_205 : f32 to vector<16x1xf32>
    %440 = arith.divf %438, %439 : vector<16x1xf32>
    %441 = vector.broadcast %440 : vector<16x1xf32> to vector<16x128xf32>
    %442 = arith.subf %432, %441 : vector<16x128xf32>
    %443 = arith.mulf %442, %442 : vector<16x128xf32>
    %cst_206 = arith.constant dense<0.000000e+00> : vector<16xf32>
    %444 = vector.multi_reduction <add>, %443, %cst_206 [1] : vector<16x128xf32> to vector<16xf32>
    %445 = vector.shape_cast %444 : vector<16xf32> to vector<16x1xf32>
    %cst_207 = arith.constant 1.280000e+02 : f32
    %446 = vector.broadcast %cst_207 : f32 to vector<16x1xf32>
    %447 = arith.divf %445, %446 : vector<16x1xf32>
    %cst_208 = arith.constant 9.99999974E-6 : f32
    %448 = vector.broadcast %cst_208 : f32 to vector<16x1xf32>
    %449 = arith.addf %447, %448 : vector<16x1xf32>
    %450 = math.rsqrt %449 : vector<16x1xf32>
    %451 = vector.broadcast %450 : vector<16x1xf32> to vector<16x128xf32>
    %452 = arith.mulf %442, %451 : vector<16x128xf32>
    %453 = vector.broadcast %434 : vector<1x128xf32> to vector<16x128xf32>
    %454 = arith.mulf %452, %453 : vector<16x128xf32>
    %455 = vector.broadcast %436 : vector<1x128xf32> to vector<16x128xf32>
    %456 = arith.addf %454, %455 : vector<16x128xf32>
    %c0_209 = arith.constant 0 : index
    %c0_210 = arith.constant 0 : index
    %c0_211 = arith.constant 0 : index
    %457 = vector.load %arg17[%c0_209, %c0_210, %c0_211] : memref<1x16x128xf32, #tpu.memory_space<vmem>>, vector<1x16x128xf32>
    %458 = vector.shape_cast %457 : vector<1x16x128xf32> to vector<16x128xf32>
    %459 = vector.shape_cast %456 : vector<16x128xf32> to vector<1x16x128xf32>
    tpu.vector_store %arg17[%c0_209, %c0_210, %c0_211], %459 {strides = array<i32>} : memref<1x16x128xf32, #tpu.memory_space<vmem>>, vector<1x16x128xf32>,
    return
  }
  func.func @transform_0(%arg0: i32) -> (i32, i32, i32) {
    %c0_i32 = arith.constant 0 : i32
    %c0_i32_0 = arith.constant 0 : i32
    %c0_i32_1 = arith.constant 0 : i32
    return %arg0, %c0_i32, %c0_i32_0 : i32, i32, i32
  }
  func.func @transform_1(%arg0: i32) -> (i32, i32, i32) {
    %c0_i32 = arith.constant 0 : i32
    %c0_i32_0 = arith.constant 0 : i32
    %c0_i32_1 = arith.constant 0 : i32
    return %arg0, %c0_i32, %c0_i32_0 : i32, i32, i32
  }
  func.func @transform_2(%arg0: i32) -> (i32, i32) {
    %c0_i32 = arith.constant 0 : i32
    %c0_i32_0 = arith.constant 0 : i32
    %c0_i32_1 = arith.constant 0 : i32
    return %c0_i32, %c0_i32_0 : i32, i32
  }
  func.func @transform_3(%arg0: i32) -> (i32, i32) {
    %c0_i32 = arith.constant 0 : i32
    %c0_i32_0 = arith.constant 0 : i32
    %c0_i32_1 = arith.constant 0 : i32
    return %c0_i32, %c0_i32_0 : i32, i32
  }
  func.func @transform_4(%arg0: i32) -> (i32, i32, i32) {
    %c0_i32 = arith.constant 0 : i32
    %c0_i32_0 = arith.constant 0 : i32
    %c0_i32_1 = arith.constant 0 : i32
    %c0_i32_2 = arith.constant 0 : i32
    return %c0_i32, %c0_i32_0, %c0_i32_1 : i32, i32, i32
  }
  func.func @transform_5(%arg0: i32) -> (i32, i32, i32) {
    %c0_i32 = arith.constant 0 : i32
    %c0_i32_0 = arith.constant 0 : i32
    %c0_i32_1 = arith.constant 0 : i32
    %c0_i32_2 = arith.constant 0 : i32
    return %c0_i32, %c0_i32_0, %c0_i32_1 : i32, i32, i32
  }
  func.func @transform_6(%arg0: i32) -> (i32, i32, i32) {
    %c0_i32 = arith.constant 0 : i32
    %c0_i32_0 = arith.constant 0 : i32
    %c0_i32_1 = arith.constant 0 : i32
    %c0_i32_2 = arith.constant 0 : i32
    return %c0_i32, %c0_i32_0, %c0_i32_1 : i32, i32, i32
  }
  func.func @transform_7(%arg0: i32) -> (i32, i32, i32) {
    %c0_i32 = arith.constant 0 : i32
    %c0_i32_0 = arith.constant 0 : i32
    %c0_i32_1 = arith.constant 0 : i32
    %c0_i32_2 = arith.constant 0 : i32
    return %c0_i32, %c0_i32_0, %c0_i32_1 : i32, i32, i32
  }
  func.func @transform_8(%arg0: i32) -> (i32, i32, i32) {
    %c0_i32 = arith.constant 0 : i32
    %c0_i32_0 = arith.constant 0 : i32
    %c0_i32_1 = arith.constant 0 : i32
    %c0_i32_2 = arith.constant 0 : i32
    return %c0_i32, %c0_i32_0, %c0_i32_1 : i32, i32, i32
  }
  func.func @transform_9(%arg0: i32) -> (i32, i32, i32) {
    %c0_i32 = arith.constant 0 : i32
    %c0_i32_0 = arith.constant 0 : i32
    %c0_i32_1 = arith.constant 0 : i32
    %c0_i32_2 = arith.constant 0 : i32
    return %c0_i32, %c0_i32_0, %c0_i32_1 : i32, i32, i32
  }
  func.func @transform_10(%arg0: i32) -> (i32, i32, i32) {
    %c0_i32 = arith.constant 0 : i32
    %c0_i32_0 = arith.constant 0 : i32
    %c0_i32_1 = arith.constant 0 : i32
    %c0_i32_2 = arith.constant 0 : i32
    return %c0_i32, %c0_i32_0, %c0_i32_1 : i32, i32, i32
  }
  func.func @transform_11(%arg0: i32) -> (i32, i32, i32) {
    %c0_i32 = arith.constant 0 : i32
    %c0_i32_0 = arith.constant 0 : i32
    %c0_i32_1 = arith.constant 0 : i32
    %c0_i32_2 = arith.constant 0 : i32
    return %c0_i32, %c0_i32_0, %c0_i32_1 : i32, i32, i32
  }
  func.func @transform_12(%arg0: i32) -> (i32, i32, i32) {
    %c0_i32 = arith.constant 0 : i32
    %c0_i32_0 = arith.constant 0 : i32
    %c0_i32_1 = arith.constant 0 : i32
    %c0_i32_2 = arith.constant 0 : i32
    return %c0_i32, %c0_i32_0, %c0_i32_1 : i32, i32, i32
  }
  func.func @transform_13(%arg0: i32) -> (i32, i32, i32) {
    %c0_i32 = arith.constant 0 : i32
    %c0_i32_0 = arith.constant 0 : i32
    %c0_i32_1 = arith.constant 0 : i32
    %c0_i32_2 = arith.constant 0 : i32
    return %c0_i32, %c0_i32_0, %c0_i32_1 : i32, i32, i32
  }
  func.func @transform_14(%arg0: i32) -> (i32, i32, i32) {
    %c0_i32 = arith.constant 0 : i32
    %c0_i32_0 = arith.constant 0 : i32
    %c0_i32_1 = arith.constant 0 : i32
    %c0_i32_2 = arith.constant 0 : i32
    return %c0_i32, %c0_i32_0, %c0_i32_1 : i32, i32, i32
  }
  func.func @transform_15(%arg0: i32) -> (i32, i32, i32) {
    %c0_i32 = arith.constant 0 : i32
    %c0_i32_0 = arith.constant 0 : i32
    %c0_i32_1 = arith.constant 0 : i32
    %c0_i32_2 = arith.constant 0 : i32
    return %c0_i32, %c0_i32_0, %c0_i32_1 : i32, i32, i32
  }
  func.func @transform_16(%arg0: i32) -> (i32, i32, i32) {
    %c0_i32 = arith.constant 0 : i32
    %c0_i32_0 = arith.constant 0 : i32
    %c0_i32_1 = arith.constant 0 : i32
    return %arg0, %c0_i32, %c0_i32_0 : i32, i32, i32
  }
}

</mosaic_0001>

<llo_original>
// kernel: tpu_custom_call.1
$region0: #{tpu_custom_call.1}
  #allocation0 [shape = 'u32[]', space=smem, size = 0x4, offset = 0x4, fixed_abs, tag = 'smem constant byte address 0x4 - core index']
  #allocation1 [shape = 'u32[144,128]{1,0:T(1,128)}', space=vmem, size = 0x12000, scoped, tag = 'internal scratch']
  #allocation2 [shape = 'f32[16,128]{1,0:T(8,128)}', space=vmem, size = 0x2000, scoped, tag = 'scratch operand']
  %s0 = inlined_call_operand.hbm [shape: f32[2,16,64], index: 0, kind: input, shape index: {}]
  %s1 = inlined_call_operand.hbm [shape: f32[2,1,128], index: 1, kind: input, shape index: {}]
  %s2 = inlined_call_operand.hbm [shape: f32[64,128], index: 2, kind: input, shape index: {}]
  %s3 = inlined_call_operand.hbm [shape: f32[1,128], index: 3, kind: input, shape index: {}]
  %s4 = inlined_call_operand.hbm [shape: f32[2,128,384], index: 4, kind: input, shape index: {}]
  %s5 = inlined_call_operand.vmem [shape: f32[2,1,384], index: 5, kind: input, shape index: {}]
  %s6 = inlined_call_operand.hbm [shape: f32[2,128,128], index: 6, kind: input, shape index: {}]
  %s7 = inlined_call_operand.vmem [shape: f32[2,1,128], index: 7, kind: input, shape index: {}]
  %s8 = inlined_call_operand.vmem [shape: f32[2,1,128], index: 8, kind: input, shape index: {}]
  %s9 = inlined_call_operand.vmem [shape: f32[2,1,128], index: 9, kind: input, shape index: {}]
  %s10 = inlined_call_operand.hbm [shape: f32[2,128,256], index: 10, kind: input, shape index: {}]
  %s11 = inlined_call_operand.vmem [shape: f32[2,1,256], index: 11, kind: input, shape index: {}]
  %s12 = inlined_call_operand.hbm [shape: f32[2,256,128], index: 12, kind: input, shape index: {}]
  %s13 = inlined_call_operand.vmem [shape: f32[2,1,128], index: 13, kind: input, shape index: {}]
  %s14 = inlined_call_operand.vmem [shape: f32[2,1,128], index: 14, kind: input, shape index: {}]
  %s15 = inlined_call_operand.vmem [shape: f32[2,1,128], index: 15, kind: input, shape index: {}]
  %s16 = inlined_call_operand.hbm [shape: f32[2,16,128], index: 16, kind: output, shape index: {}]
  %s17 = sld [smem:[#allocation0]]
  $region129: #{tpu_custom_call.1} parent=0
    _
  %s19 = ssub.s32 1, %s17
  %s20 = scalar_select 0, %s19, %s17
  $region1: #{tpu_custom_call.1} parent=0
    #allocation3 [shape = 'u8[16384]{0}', space=vmem, size = 0x4000, scoped, tag = 'input window, operand 0']
    #allocation4 [shape = 's32[2]{0}', space=sflag, size = 0x8, scoped, tag = 'scoped memory for tpu_custom_call.1']
    #allocation5 [shape = 's32[2]{0}', space=sflag, size = 0x8, scoped, tag = 'scoped memory for tpu_custom_call.1']
    #allocation6 [shape = 'u8[1024]{0}', space=vmem, size = 0x400, scoped, tag = 'input window, operand 1']
    #allocation7 [shape = 's32[2]{0}', space=sflag, size = 0x8, scoped, tag = 'scoped memory for tpu_custom_call.1']
    #allocation8 [shape = 'u8[32768]{0}', space=vmem, size = 0x8000, scoped, tag = 'input window, operand 2, single buffered']
    #allocation9 [shape = 'u8[512]{0}', space=vmem, size = 0x400, scoped, tag = 'input window, operand 3, single buffered']
    #allocation10 [shape = 's32[1]{0}', space=sflag, size = 0x4, scoped, tag = 'scoped memory for tpu_custom_call.1']
    #allocation11 [shape = 'u8[393216]{0}', space=vmem, size = 0x60000, scoped, tag = 'input window, operand 4, single buffered']
    #allocation12 [shape = 'u8[131072]{0}', space=vmem, size = 0x20000, scoped, tag = 'input window, operand 6, single buffered']
    #allocation13 [shape = 's32[1]{0}', space=sflag, size = 0x4, scoped, tag = 'scoped memory for tpu_custom_call.1']
    #allocation14 [shape = 'u8[262144]{0}', space=vmem, size = 0x40000, scoped, tag = 'input window, operand 10, single buffered']
    #allocation15 [shape = 'u8[262144]{0}', space=vmem, size = 0x40000, scoped, tag = 'input window, operand 12, single buffered']
    #allocation16 [shape = 's32[1]{0}', space=sflag, size = 0x4, scoped, tag = 'scoped memory for tpu_custom_call.1']
    #allocation17 [shape = 'u8[16384]{0}', space=vmem, size = 0x4000, scoped, tag = 'output window, operand 0']
    %21 = vsyncpa [#allocation4], 0
    %s22 = scalar_lea.sflag [#allocation4], 1
    %23 = vsyncpa %s22, 0
    %24 = vsyncpa [#allocation7], 0
    %s25 = scalar_lea.sflag [#allocation7], 1
    %26 = vsyncpa %s25, 0
    %27 = vsyncpa [#allocation10], 0
    %28 = vsyncpa [#allocation13], 0
    %29 = vsyncpa [#allocation16], 0
    %30 = vsyncpa [#allocation5], 0
    %s31 = scalar_lea.sflag [#allocation5], 1
    %32 = vsyncpa %s31, 0
    loop: start=0, step=1, limit=4
    $region2: #{tpu_custom_call.1} parent=1 // loop_pre_header
      _
    $region3: #{tpu_custom_call.1} parent=1 // loop_header
      %s34 = sphi 0, %s38
      %p35 = scmp.ge.s32.totalorder %s34, 4
      %s44 = sphi 0, %s46
      %s47 = sphi 0, %s44
      %s48 = sphi 0, %s47
      %s64 = sphi 0, %s48
      %s70 = sphi 0, %s72
      %s73 = sphi 0, %s70
      %s74 = sphi 0, %s73
      %s90 = sphi 0, %s74
      %s94 = sphi 0, %s94
      %s96 = sphi 0, %s94
      %s97 = sphi 0, %s96
      %s111 = sphi 0, %s97
      %s115 = sphi 0, %s115
      %s117 = sphi 0, %s115
      %s118 = sphi 0, %s117
      %s132 = sphi 0, %s118
      %s136 = sphi 0, %s136
      %s138 = sphi 0, %s136
      %s139 = sphi 0, %s138
      %s153 = sphi 0, %s139
      %s157 = sphi 0, %s157
      %s159 = sphi 0, %s157
      %s160 = sphi 0, %s159
      %s174 = sphi 0, %s160
      %s178 = sphi 0, %s178
      %s180 = sphi 0, %s178
      %s181 = sphi 0, %s180
      %s195 = sphi 0, %s181
      %s199 = sphi 0, %s199
      %s201 = sphi 0, %s199
      %s202 = sphi 0, %s201
      %s216 = sphi 0, %s202
      %s220 = sphi 0, %s220
      %s222 = sphi 0, %s220
      %s223 = sphi 0, %s222
      %s237 = sphi 0, %s223
      %s241 = sphi 0, %s241
      %s243 = sphi 0, %s241
      %s244 = sphi 0, %s243
      %s258 = sphi 0, %s244
      %s262 = sphi 0, %s262
      %s264 = sphi 0, %s262
      %s265 = sphi 0, %s264
      %s279 = sphi 0, %s265
      %s283 = sphi 0, %s283
      %s285 = sphi 0, %s283
      %s286 = sphi 0, %s285
      %s300 = sphi 0, %s286
      %s304 = sphi 0, %s304
      %s306 = sphi 0, %s304
      %s307 = sphi 0, %s306
      %s321 = sphi 0, %s307
      %s325 = sphi 0, %s325
      %s327 = sphi 0, %s325
      %s328 = sphi 0, %s327
      %s342 = sphi 0, %s328
      %s346 = sphi 0, %s346
      %s348 = sphi 0, %s346
      %s349 = sphi 0, %s348
      %s363 = sphi 0, %s349
      %s367 = sphi 0, %s367
      %s369 = sphi 0, %s367
      %s370 = sphi 0, %s369
      %s384 = sphi 0, %s370
      %s390 = sphi 0, %s392
      %s393 = sphi 0, %s390
      %s394 = sphi 0, %s393
      %s410 = sphi 0, %s394
    $region4: #{tpu_custom_call.1} parent=1 // loop_header_branch
      %37 = sbr.rel (%p35) target = $region8
    $region5: #{tpu_custom_call.1} parent=1 // loop_body
      %s39 = ssub.s32 %s34, 1
      %s40 = ssub.s32 %s34, 2
      %s41 = sadd.s32 %s34, 1
      %s42 = ssub.s32 %s34, %s41
      %p43 = scmp.eq.s32.totalorder %s42, 0
      %s45 = sadd.s32 %s44, 1
      %s46 = scalar_select %p43, %s44, %s45
      %p49 = pneg %p43
      %p50 = scmp.eq.s32.totalorder %s34, 1
      %p51 = por %p49, %p50
      %p52 = scmp.ne.s32.totalorder %s44, %s47
      %p53 = scmp.eq.s32.totalorder %s34, 0
      %p54 = por %p52, %p53
      %p55 = scmp.ne.s32.totalorder %s44, %s47
      %p56 = scmp.eq.s32.totalorder %s39, 1
      %p57 = por %p55, %p56
      %p58 = scmp.ne.s32.totalorder %s47, %s48
      %p59 = scmp.eq.s32.totalorder %s39, 0
      %p60 = por %p58, %p59
      %p61 = scmp.ne.s32.totalorder %s47, %s48
      %p62 = scmp.eq.s32.totalorder %s40, 1
      %p63 = por %p61, %p62
      %p65 = scmp.ne.s32.totalorder %s48, %s64
      %p66 = scmp.eq.s32.totalorder %s40, 0
      %p67 = por %p65, %p66
      %s68 = ssub.s32 %s34, %s41
      %p69 = scmp.eq.s32.totalorder %s68, 0
      %s71 = sadd.s32 %s70, 1
      %s72 = scalar_select %p69, %s70, %s71
      %p75 = pneg %p69
      %p76 = scmp.eq.s32.totalorder %s34, 1
      %p77 = por %p75, %p76
      %p78 = scmp.ne.s32.totalorder %s70, %s73
      %p79 = scmp.eq.s32.totalorder %s34, 0
      %p80 = por %p78, %p79
      %p81 = scmp.ne.s32.totalorder %s70, %s73
      %p82 = scmp.eq.s32.totalorder %s39, 1
      %p83 = por %p81, %p82
      %p84 = scmp.ne.s32.totalorder %s73, %s74
      %p85 = scmp.eq.s32.totalorder %s39, 0
      %p86 = por %p84, %p85
      %p87 = scmp.ne.s32.totalorder %s73, %s74
      %p88 = scmp.eq.s32.totalorder %s40, 1
      %p89 = por %p87, %p88
      %p91 = scmp.ne.s32.totalorder %s74, %s90
      %p92 = scmp.eq.s32.totalorder %s40, 0
      %p93 = por %p91, %p92
      %s95 = sadd.s32 %s94, 1
      %p98 = scmp.eq.s32.totalorder %s34, 1
      %p99 = scmp.ne.s32.totalorder %s94, %s96
      %p100 = scmp.eq.s32.totalorder %s34, 0
      %p101 = por %p99, %p100
      %p102 = scmp.ne.s32.totalorder %s94, %s96
      %p103 = scmp.eq.s32.totalorder %s39, 1
      %p104 = por %p102, %p103
      %p105 = scmp.ne.s32.totalorder %s96, %s97
      %p106 = scmp.eq.s32.totalorder %s39, 0
      %p107 = por %p105, %p106
      %p108 = scmp.ne.s32.totalorder %s96, %s97
      %p109 = scmp.eq.s32.totalorder %s40, 1
      %p110 = por %p108, %p109
      %p112 = scmp.ne.s32.totalorder %s97, %s111
      %p113 = scmp.eq.s32.totalorder %s40, 0
      %p114 = por %p112, %p113
      %s116 = sadd.s32 %s115, 1
      %p119 = scmp.eq.s32.totalorder %s34, 1
      %p120 = scmp.ne.s32.totalorder %s115, %s117
      %p121 = scmp.eq.s32.totalorder %s34, 0
      %p122 = por %p120, %p121
      %p123 = scmp.ne.s32.totalorder %s115, %s117
      %p124 = scmp.eq.s32.totalorder %s39, 1
      %p125 = por %p123, %p124
      %p126 = scmp.ne.s32.totalorder %s117, %s118
      %p127 = scmp.eq.s32.totalorder %s39, 0
      %p128 = por %p126, %p127
      %p129 = scmp.ne.s32.totalorder %s117, %s118
      %p130 = scmp.eq.s32.totalorder %s40, 1
      %p131 = por %p129, %p130
      %p133 = scmp.ne.s32.totalorder %s118, %s132
      %p134 = scmp.eq.s32.totalorder %s40, 0
      %p135 = por %p133, %p134
      %s137 = sadd.s32 %s136, 1
      %p140 = scmp.eq.s32.totalorder %s34, 1
      %p141 = scmp.ne.s32.totalorder %s136, %s138
      %p142 = scmp.eq.s32.totalorder %s34, 0
      %p143 = por %p141, %p142
      %p144 = scmp.ne.s32.totalorder %s136, %s138
      %p145 = scmp.eq.s32.totalorder %s39, 1
      %p146 = por %p144, %p145
      %p147 = scmp.ne.s32.totalorder %s138, %s139
      %p148 = scmp.eq.s32.totalorder %s39, 0
      %p149 = por %p147, %p148
      %p150 = scmp.ne.s32.totalorder %s138, %s139
      %p151 = scmp.eq.s32.totalorder %s40, 1
      %p152 = por %p150, %p151
      %p154 = scmp.ne.s32.totalorder %s139, %s153
      %p155 = scmp.eq.s32.totalorder %s40, 0
      %p156 = por %p154, %p155
      %s158 = sadd.s32 %s157, 1
      %p161 = scmp.eq.s32.totalorder %s34, 1
      %p162 = scmp.ne.s32.totalorder %s157, %s159
      %p163 = scmp.eq.s32.totalorder %s34, 0
      %p164 = por %p162, %p163
      %p165 = scmp.ne.s32.totalorder %s157, %s159
      %p166 = scmp.eq.s32.totalorder %s39, 1
      %p167 = por %p165, %p166
      %p168 = scmp.ne.s32.totalorder %s159, %s160
      %p169 = scmp.eq.s32.totalorder %s39, 0
      %p170 = por %p168, %p169
      %p171 = scmp.ne.s32.totalorder %s159, %s160
      %p172 = scmp.eq.s32.totalorder %s40, 1
      %p173 = por %p171, %p172
      %p175 = scmp.ne.s32.totalorder %s160, %s174
      %p176 = scmp.eq.s32.totalorder %s40, 0
      %p177 = por %p175, %p176
      %s179 = sadd.s32 %s178, 1
      %p182 = scmp.eq.s32.totalorder %s34, 1
      %p183 = scmp.ne.s32.totalorder %s178, %s180
      %p184 = scmp.eq.s32.totalorder %s34, 0
      %p185 = por %p183, %p184
      %p186 = scmp.ne.s32.totalorder %s178, %s180
      %p187 = scmp.eq.s32.totalorder %s39, 1
      %p188 = por %p186, %p187
      %p189 = scmp.ne.s32.totalorder %s180, %s181
      %p190 = scmp.eq.s32.totalorder %s39, 0
      %p191 = por %p189, %p190
      %p192 = scmp.ne.s32.totalorder %s180, %s181
      %p193 = scmp.eq.s32.totalorder %s40, 1
      %p194 = por %p192, %p193
      %p196 = scmp.ne.s32.totalorder %s181, %s195
      %p197 = scmp.eq.s32.totalorder %s40, 0
      %p198 = por %p196, %p197
      %s200 = sadd.s32 %s199, 1
      %p203 = scmp.eq.s32.totalorder %s34, 1
      %p204 = scmp.ne.s32.totalorder %s199, %s201
      %p205 = scmp.eq.s32.totalorder %s34, 0
      %p206 = por %p204, %p205
      %p207 = scmp.ne.s32.totalorder %s199, %s201
      %p208 = scmp.eq.s32.totalorder %s39, 1
      %p209 = por %p207, %p208
      %p210 = scmp.ne.s32.totalorder %s201, %s202
      %p211 = scmp.eq.s32.totalorder %s39, 0
      %p212 = por %p210, %p211
      %p213 = scmp.ne.s32.totalorder %s201, %s202
      %p214 = scmp.eq.s32.totalorder %s40, 1
      %p215 = por %p213, %p214
      %p217 = scmp.ne.s32.totalorder %s202, %s216
      %p218 = scmp.eq.s32.totalorder %s40, 0
      %p219 = por %p217, %p218
      %s221 = sadd.s32 %s220, 1
      %p224 = scmp.eq.s32.totalorder %s34, 1
      %p225 = scmp.ne.s32.totalorder %s220, %s222
      %p226 = scmp.eq.s32.totalorder %s34, 0
      %p227 = por %p225, %p226
      %p228 = scmp.ne.s32.totalorder %s220, %s222
      %p229 = scmp.eq.s32.totalorder %s39, 1
      %p230 = por %p228, %p229
      %p231 = scmp.ne.s32.totalorder %s222, %s223
      %p232 = scmp.eq.s32.totalorder %s39, 0
      %p233 = por %p231, %p232
      %p234 = scmp.ne.s32.totalorder %s222, %s223
      %p235 = scmp.eq.s32.totalorder %s40, 1
      %p236 = por %p234, %p235
      %p238 = scmp.ne.s32.totalorder %s223, %s237
      %p239 = scmp.eq.s32.totalorder %s40, 0
      %p240 = por %p238, %p239
      %s242 = sadd.s32 %s241, 1
      %p245 = scmp.eq.s32.totalorder %s34, 1
      %p246 = scmp.ne.s32.totalorder %s241, %s243
      %p247 = scmp.eq.s32.totalorder %s34, 0
      %p248 = por %p246, %p247
      %p249 = scmp.ne.s32.totalorder %s241, %s243
      %p250 = scmp.eq.s32.totalorder %s39, 1
      %p251 = por %p249, %p250
      %p252 = scmp.ne.s32.totalorder %s243, %s244
      %p253 = scmp.eq.s32.totalorder %s39, 0
      %p254 = por %p252, %p253
      %p255 = scmp.ne.s32.totalorder %s243, %s244
      %p256 = scmp.eq.s32.totalorder %s40, 1
      %p257 = por %p255, %p256
      %p259 = scmp.ne.s32.totalorder %s244, %s258
      %p260 = scmp.eq.s32.totalorder %s40, 0
      %p261 = por %p259, %p260
      %s263 = sadd.s32 %s262, 1
      %p266 = scmp.eq.s32.totalorder %s34, 1
      %p267 = scmp.ne.s32.totalorder %s262, %s264
      %p268 = scmp.eq.s32.totalorder %s34, 0
      %p269 = por %p267, %p268
      %p270 = scmp.ne.s32.totalorder %s262, %s264
      %p271 = scmp.eq.s32.totalorder %s39, 1
      %p272 = por %p270, %p271
      %p273 = scmp.ne.s32.totalorder %s264, %s265
      %p274 = scmp.eq.s32.totalorder %s39, 0
      %p275 = por %p273, %p274
      %p276 = scmp.ne.s32.totalorder %s264, %s265
      %p277 = scmp.eq.s32.totalorder %s40, 1
      %p278 = por %p276, %p277
      %p280 = scmp.ne.s32.totalorder %s265, %s279
      %p281 = scmp.eq.s32.totalorder %s40, 0
      %p282 = por %p280, %p281
      %s284 = sadd.s32 %s283, 1
      %p287 = scmp.eq.s32.totalorder %s34, 1
      %p288 = scmp.ne.s32.totalorder %s283, %s285
      %p289 = scmp.eq.s32.totalorder %s34, 0
      %p290 = por %p288, %p289
      %p291 = scmp.ne.s32.totalorder %s283, %s285
      %p292 = scmp.eq.s32.totalorder %s39, 1
      %p293 = por %p291, %p292
      %p294 = scmp.ne.s32.totalorder %s285, %s286
      %p295 = scmp.eq.s32.totalorder %s39, 0
      %p296 = por %p294, %p295
      %p297 = scmp.ne.s32.totalorder %s285, %s286
      %p298 = scmp.eq.s32.totalorder %s40, 1
      %p299 = por %p297, %p298
      %p301 = scmp.ne.s32.totalorder %s286, %s300
      %p302 = scmp.eq.s32.totalorder %s40, 0
      %p303 = por %p301, %p302
      %s305 = sadd.s32 %s304, 1
      %p308 = scmp.eq.s32.totalorder %s34, 1
      %p309 = scmp.ne.s32.totalorder %s304, %s306
      %p310 = scmp.eq.s32.totalorder %s34, 0
      %p311 = por %p309, %p310
      %p312 = scmp.ne.s32.totalorder %s304, %s306
      %p313 = scmp.eq.s32.totalorder %s39, 1
      %p314 = por %p312, %p313
      %p315 = scmp.ne.s32.totalorder %s306, %s307
      %p316 = scmp.eq.s32.totalorder %s39, 0
      %p317 = por %p315, %p316
      %p318 = scmp.ne.s32.totalorder %s306, %s307
      %p319 = scmp.eq.s32.totalorder %s40, 1
      %p320 = por %p318, %p319
      %p322 = scmp.ne.s32.totalorder %s307, %s321
      %p323 = scmp.eq.s32.totalorder %s40, 0
      %p324 = por %p322, %p323
      %s326 = sadd.s32 %s325, 1
      %p329 = scmp.eq.s32.totalorder %s34, 1
      %p330 = scmp.ne.s32.totalorder %s325, %s327
      %p331 = scmp.eq.s32.totalorder %s34, 0
      %p332 = por %p330, %p331
      %p333 = scmp.ne.s32.totalorder %s325, %s327
      %p334 = scmp.eq.s32.totalorder %s39, 1
      %p335 = por %p333, %p334
      %p336 = scmp.ne.s32.totalorder %s327, %s328
      %p337 = scmp.eq.s32.totalorder %s39, 0
      %p338 = por %p336, %p337
      %p339 = scmp.ne.s32.totalorder %s327, %s328
      %p340 = scmp.eq.s32.totalorder %s40, 1
      %p341 = por %p339, %p340
      %p343 = scmp.ne.s32.totalorder %s328, %s342
      %p344 = scmp.eq.s32.totalorder %s40, 0
      %p345 = por %p343, %p344
      %s347 = sadd.s32 %s346, 1
      %p350 = scmp.eq.s32.totalorder %s34, 1
      %p351 = scmp.ne.s32.totalorder %s346, %s348
      %p352 = scmp.eq.s32.totalorder %s34, 0
      %p353 = por %p351, %p352
      %p354 = scmp.ne.s32.totalorder %s346, %s348
      %p355 = scmp.eq.s32.totalorder %s39, 1
      %p356 = por %p354, %p355
      %p357 = scmp.ne.s32.totalorder %s348, %s349
      %p358 = scmp.eq.s32.totalorder %s39, 0
      %p359 = por %p357, %p358
      %p360 = scmp.ne.s32.totalorder %s348, %s349
      %p361 = scmp.eq.s32.totalorder %s40, 1
      %p362 = por %p360, %p361
      %p364 = scmp.ne.s32.totalorder %s349, %s363
      %p365 = scmp.eq.s32.totalorder %s40, 0
      %p366 = por %p364, %p365
      %s368 = sadd.s32 %s367, 1
      %p371 = scmp.eq.s32.totalorder %s34, 1
      %p372 = scmp.ne.s32.totalorder %s367, %s369
      %p373 = scmp.eq.s32.totalorder %s34, 0
      %p374 = por %p372, %p373
      %p375 = scmp.ne.s32.totalorder %s367, %s369
      %p376 = scmp.eq.s32.totalorder %s39, 1
      %p377 = por %p375, %p376
      %p378 = scmp.ne.s32.totalorder %s369, %s370
      %p379 = scmp.eq.s32.totalorder %s39, 0
      %p380 = por %p378, %p379
      %p381 = scmp.ne.s32.totalorder %s369, %s370
      %p382 = scmp.eq.s32.totalorder %s40, 1
      %p383 = por %p381, %p382
      %p385 = scmp.ne.s32.totalorder %s370, %s384
      %p386 = scmp.eq.s32.totalorder %s40, 0
      %p387 = por %p385, %p386
      %s388 = ssub.s32 %s34, %s41
      %p389 = scmp.eq.s32.totalorder %s388, 0
      %s391 = sadd.s32 %s390, 1
      %s392 = scalar_select %p389, %s390, %s391
      %p395 = pneg %p389
      %p396 = scmp.eq.s32.totalorder %s34, 1
      %p397 = por %p395, %p396
      %p398 = scmp.ne.s32.totalorder %s390, %s393
      %p399 = scmp.eq.s32.totalorder %s34, 0
      %p400 = por %p398, %p399
      %p401 = scmp.ne.s32.totalorder %s390, %s393
      %p402 = scmp.eq.s32.totalorder %s39, 1
      %p403 = por %p401, %p402
      %p404 = scmp.ne.s32.totalorder %s393, %s394
      %p405 = scmp.eq.s32.totalorder %s39, 0
      %p406 = por %p404, %p405
      %p407 = scmp.ne.s32.totalorder %s393, %s394
      %p408 = scmp.eq.s32.totalorder %s40, 1
      %p409 = por %p407, %p408
      %p411 = scmp.ne.s32.totalorder %s394, %s410
      %p412 = scmp.eq.s32.totalorder %s40, 0
      %p413 = por %p411, %p412
      %p414 = scmp.le.s32.totalorder 1, %s34
      %p415 = scmp.lt.s32.totalorder %s34, 3
      %p416 = pnand %p414, %p415
      %p417 = pneg %p416
      // Predicated region
      $region9: #{tpu_custom_call.1} parent=5 // pred_check
        _
      $region10: #{tpu_custom_call.1} parent=5 // pred_check_branch
        %419 = sbr.rel (%p416) target = $region12
      $region11: #{tpu_custom_call.1} parent=5 // pred_region
        %s420 = ssub.s32 %s34, 1
        // Predicated region
        $region13: #{tpu_custom_call.1} parent=11 // pred_check
          %p421 = pneg %p107
        $region14: #{tpu_custom_call.1} parent=11 // pred_check_branch
          %423 = sbr.rel (%p421) target = $region16
        $region15: #{tpu_custom_call.1} parent=11 // pred_region
          %s425 = ssub.s32 1024, 1024
          %426 = vsyncadd [#allocation7], %s425
          %s427 = sshll.u32 [#allocation8], 4
          %s428 = int_to_ptr.vmem [resolvable:$true] %s427
          %433 = dma.hbm_to_vmem [thread:$0]  %s2, 1024, %s428, [#allocation7], 128, 128, 8
        $region16: #{tpu_custom_call.1} parent=11 // pred_fallthru
          _
        // Predicated region
        $region17: #{tpu_custom_call.1} parent=11 // pred_check
          %p434 = pneg %p128
        $region18: #{tpu_custom_call.1} parent=11 // pred_check_branch
          %436 = sbr.rel (%p434) target = $region20
        $region19: #{tpu_custom_call.1} parent=11 // pred_region
          %s438 = ssub.s32 16, 16
          %439 = vsyncadd [#allocation10], %s438
          %s441 = sshll.u32 [#allocation9], 4
          %s442 = int_to_ptr.vmem [resolvable:$true] %s441
          %444 = dma.hbm_to_vmem [thread:$0]  %s3, 16, %s442, [#allocation10]
        $region20: #{tpu_custom_call.1} parent=11 // pred_fallthru
          _
        // Predicated region
        $region21: #{tpu_custom_call.1} parent=11 // pred_check
          %p445 = pneg %p149
        $region22: #{tpu_custom_call.1} parent=11 // pred_check_branch
          %447 = sbr.rel (%p445) target = $region24
        $region23: #{tpu_custom_call.1} parent=11 // pred_region
          %s449 = ssub.s32 12288, 12288
          %450 = vsyncadd [#allocation10], %s449
          %s451 = sshll.u32 [#allocation11], 4
          %s452 = int_to_ptr.vmem [resolvable:$true] %s451
          %457 = dma.hbm_to_vmem [thread:$0]  %s4, 12288, %s452, [#allocation10], 384, 384, 24
        $region24: #{tpu_custom_call.1} parent=11 // pred_fallthru
          _
        // Predicated region
        $region25: #{tpu_custom_call.1} parent=11 // pred_check
          %p458 = pneg %p170
        $region26: #{tpu_custom_call.1} parent=11 // pred_check_branch
          %460 = sbr.rel (%p458) target = $region28
        $region27: #{tpu_custom_call.1} parent=11 // pred_region
          _
        $region28: #{tpu_custom_call.1} parent=11 // pred_fallthru
          _
        // Predicated region
        $region29: #{tpu_custom_call.1} parent=11 // pred_check
          %p461 = pneg %p191
        $region30: #{tpu_custom_call.1} parent=11 // pred_check_branch
          %463 = sbr.rel (%p461) target = $region32
        $region31: #{tpu_custom_call.1} parent=11 // pred_region
          %s465 = ssub.s32 4096, 4096
          %466 = vsyncadd [#allocation13], %s465
          %s467 = sshll.u32 [#allocation12], 4
          %s468 = int_to_ptr.vmem [resolvable:$true] %s467
          %473 = dma.hbm_to_vmem [thread:$0]  %s6, 4096, %s468, [#allocation13], 128, 128, 8
        $region32: #{tpu_custom_call.1} parent=11 // pred_fallthru
          _
        // Predicated region
        $region33: #{tpu_custom_call.1} parent=11 // pred_check
          %p474 = pneg %p212
        $region34: #{tpu_custom_call.1} parent=11 // pred_check_branch
          %476 = sbr.rel (%p474) target = $region36
        $region35: #{tpu_custom_call.1} parent=11 // pred_region
          _
        $region36: #{tpu_custom_call.1} parent=11 // pred_fallthru
          _
        // Predicated region
        $region37: #{tpu_custom_call.1} parent=11 // pred_check
          %p477 = pneg %p233
        $region38: #{tpu_custom_call.1} parent=11 // pred_check_branch
          %479 = sbr.rel (%p477) target = $region40
        $region39: #{tpu_custom_call.1} parent=11 // pred_region
          _
        $region40: #{tpu_custom_call.1} parent=11 // pred_fallthru
          _
        // Predicated region
        $region41: #{tpu_custom_call.1} parent=11 // pred_check
          %p480 = pneg %p254
        $region42: #{tpu_custom_call.1} parent=11 // pred_check_branch
          %482 = sbr.rel (%p480) target = $region44
        $region43: #{tpu_custom_call.1} parent=11 // pred_region
          _
        $region44: #{tpu_custom_call.1} parent=11 // pred_fallthru
          _
        // Predicated region
        $region45: #{tpu_custom_call.1} parent=11 // pred_check
          %p483 = pneg %p275
        $region46: #{tpu_custom_call.1} parent=11 // pred_check_branch
          %485 = sbr.rel (%p483) target = $region48
        $region47: #{tpu_custom_call.1} parent=11 // pred_region
          %s487 = ssub.s32 8192, 8192
          %488 = vsyncadd [#allocation13], %s487
          %s489 = sshll.u32 [#allocation14], 4
          %s490 = int_to_ptr.vmem [resolvable:$true] %s489
          %495 = dma.hbm_to_vmem [thread:$0]  %s10, 8192, %s490, [#allocation13], 256, 256, 16
        $region48: #{tpu_custom_call.1} parent=11 // pred_fallthru
          _
        // Predicated region
        $region49: #{tpu_custom_call.1} parent=11 // pred_check
          %p496 = pneg %p296
        $region50: #{tpu_custom_call.1} parent=11 // pred_check_branch
          %498 = sbr.rel (%p496) target = $region52
        $region51: #{tpu_custom_call.1} parent=11 // pred_region
          _
        $region52: #{tpu_custom_call.1} parent=11 // pred_fallthru
          _
        // Predicated region
        $region53: #{tpu_custom_call.1} parent=11 // pred_check
          %p499 = pneg %p317
        $region54: #{tpu_custom_call.1} parent=11 // pred_check_branch
          %501 = sbr.rel (%p499) target = $region56
        $region55: #{tpu_custom_call.1} parent=11 // pred_region
          %s503 = ssub.s32 8192, 8192
          %504 = vsyncadd [#allocation16], %s503
          %s505 = sshll.u32 [#allocation15], 4
          %s506 = int_to_ptr.vmem [resolvable:$true] %s505
          %511 = dma.hbm_to_vmem [thread:$0]  %s12, 8192, %s506, [#allocation16], 128, 128, 8
        $region56: #{tpu_custom_call.1} parent=11 // pred_fallthru
          _
        // Predicated region
        $region57: #{tpu_custom_call.1} parent=11 // pred_check
          %p512 = pneg %p338
        $region58: #{tpu_custom_call.1} parent=11 // pred_check_branch
          %514 = sbr.rel (%p512) target = $region60
        $region59: #{tpu_custom_call.1} parent=11 // pred_region
          _
        $region60: #{tpu_custom_call.1} parent=11 // pred_fallthru
          _
        // Predicated region
        $region61: #{tpu_custom_call.1} parent=11 // pred_check
          %p515 = pneg %p359
        $region62: #{tpu_custom_call.1} parent=11 // pred_check_branch
          %517 = sbr.rel (%p515) target = $region64
        $region63: #{tpu_custom_call.1} parent=11 // pred_region
          _
        $region64: #{tpu_custom_call.1} parent=11 // pred_fallthru
          _
        // Predicated region
        $region65: #{tpu_custom_call.1} parent=11 // pred_check
          %p518 = pneg %p380
        $region66: #{tpu_custom_call.1} parent=11 // pred_check_branch
          %520 = sbr.rel (%p518) target = $region68
        $region67: #{tpu_custom_call.1} parent=11 // pred_region
          _
        $region68: #{tpu_custom_call.1} parent=11 // pred_fallthru
          _
      $region12: #{tpu_custom_call.1} parent=5 // pred_fallthru
        _
      %p521 = scmp.lt.s32.totalorder %s34, 2
      // Predicated region
      $region69: #{tpu_custom_call.1} parent=5 // pred_check
        %p522 = pneg %p521
      $region70: #{tpu_custom_call.1} parent=5 // pred_check_branch
        %524 = sbr.rel (%p522) target = $region72
      $region71: #{tpu_custom_call.1} parent=5 // pred_region
        // Predicated region
        $region73: #{tpu_custom_call.1} parent=71 // pred_check
          %p525 = pneg %p54
        $region74: #{tpu_custom_call.1} parent=71 // pred_check_branch
          %527 = sbr.rel (%p525) target = $region76
        $region75: #{tpu_custom_call.1} parent=71 // pred_region
          %s528 = sand.u32 %s44, 1
          %s529 = scalar_lea.sflag [#allocation4], %s528
          %s530 = sand.u32 %s44, 1
          %s531 = smul.addr %s530, 16
          %s532 = scalar_lea.vmem [#allocation3], %s531
          %s534 = ssub.s32 256, 256
          %535 = vsyncadd %s529, %s534
          %s536 = smul.addr %s34, 2
          %s537 = smul.addr %s536, 128
          %s538 = scalar_lea.hbm %s0, %s537
          %s539 = sshll.u32 %s532, 4
          %s540 = int_to_ptr.vmem [resolvable:$true] %s539
          %545 = dma.hbm_to_vmem [thread:$0]  %s538, 256, %s540, %s529, 128, 128, 8
        $region76: #{tpu_custom_call.1} parent=71 // pred_fallthru
          _
        // Predicated region
        $region77: #{tpu_custom_call.1} parent=71 // pred_check
          %p546 = pneg %p80
        $region78: #{tpu_custom_call.1} parent=71 // pred_check_branch
          %548 = sbr.rel (%p546) target = $region80
        $region79: #{tpu_custom_call.1} parent=71 // pred_region
          %s549 = sand.u32 %s34, 1
          %s550 = scalar_lea.sflag [#allocation7], %s549
          %s551 = sand.u32 %s70, 1
          %s552 = scalar_lea.vmem [#allocation6], %s551
          %s554 = ssub.s32 16, 16
          %555 = vsyncadd %s550, %s554
          %s556 = smul.addr %s34, 16
          %s557 = scalar_lea.hbm %s1, %s556
          %s559 = sshll.u32 %s552, 4
          %s560 = int_to_ptr.vmem [resolvable:$true] %s559
          %562 = dma.hbm_to_vmem [thread:$0]  %s557, 16, %s560, %s550
        $region80: #{tpu_custom_call.1} parent=71 // pred_fallthru
          _
      $region72: #{tpu_custom_call.1} parent=5 // pred_fallthru
        _
      %p563 = scmp.le.s32.totalorder 1, %s34
      %p564 = scmp.lt.s32.totalorder %s34, 3
      %p565 = pnand %p563, %p564
      %p566 = pneg %p565
      // Predicated region
      $region81: #{tpu_custom_call.1} parent=5 // pred_check
        _
      $region82: #{tpu_custom_call.1} parent=5 // pred_check_branch
        %568 = sbr.rel (%p565) target = $region84
      $region83: #{tpu_custom_call.1} parent=5 // pred_region
        %s569 = ssub.s32 %s34, 1
        %s570 = sand.u32 %s47, 1
        %s571 = scalar_lea.sflag [#allocation4], %s570
        %s572 = sand.u32 %s47, 1
        %s573 = smul.addr %s572, 16
        %s574 = scalar_lea.vmem [#allocation3], %s573
        // Predicated region
        $region85: #{tpu_custom_call.1} parent=83 // pred_check
          %p575 = pneg %p60
        $region86: #{tpu_custom_call.1} parent=83 // pred_check_branch
          %577 = sbr.rel (%p575) target = $region88
        $region87: #{tpu_custom_call.1} parent=83 // pred_region
          %578 = dma.done %s571, 256
        $region88: #{tpu_custom_call.1} parent=83 // pred_fallthru
          _
        %s579 = sand.u32 %s39, 1
        %s580 = scalar_lea.sflag [#allocation7], %s579
        %s581 = sand.u32 %s73, 1
        %s582 = scalar_lea.vmem [#allocation6], %s581
        // Predicated region
        $region89: #{tpu_custom_call.1} parent=83 // pred_check
          %p583 = pneg %p86
        $region90: #{tpu_custom_call.1} parent=83 // pred_check_branch
          %585 = sbr.rel (%p583) target = $region92
        $region91: #{tpu_custom_call.1} parent=83 // pred_region
          %586 = dma.done %s580, 16
        $region92: #{tpu_custom_call.1} parent=83 // pred_fallthru
          _
        // Predicated region
        $region93: #{tpu_custom_call.1} parent=83 // pred_check
          %p587 = pneg %p107
        $region94: #{tpu_custom_call.1} parent=83 // pred_check_branch
          %589 = sbr.rel (%p587) target = $region96
        $region95: #{tpu_custom_call.1} parent=83 // pred_region
          %590 = dma.done [#allocation7], 1024
        $region96: #{tpu_custom_call.1} parent=83 // pred_fallthru
          _
        // Predicated region
        $region97: #{tpu_custom_call.1} parent=83 // pred_check
          %p591 = pneg %p128
        $region98: #{tpu_custom_call.1} parent=83 // pred_check_branch
          %593 = sbr.rel (%p591) target = $region100
        $region99: #{tpu_custom_call.1} parent=83 // pred_region
          %594 = dma.done [#allocation10], 16
        $region100: #{tpu_custom_call.1} parent=83 // pred_fallthru
          _
        // Predicated region
        $region101: #{tpu_custom_call.1} parent=83 // pred_check
          %p595 = pneg %p149
        $region102: #{tpu_custom_call.1} parent=83 // pred_check_branch
          %597 = sbr.rel (%p595) target = $region104
        $region103: #{tpu_custom_call.1} parent=83 // pred_region
          %598 = dma.done [#allocation10], 12288
        $region104: #{tpu_custom_call.1} parent=83 // pred_fallthru
          _
        // Predicated region
        $region105: #{tpu_custom_call.1} parent=83 // pred_check
          %p599 = pneg %p191
        $region106: #{tpu_custom_call.1} parent=83 // pred_check_branch
          %601 = sbr.rel (%p599) target = $region108
        $region107: #{tpu_custom_call.1} parent=83 // pred_region
          %602 = dma.done [#allocation13], 4096
        $region108: #{tpu_custom_call.1} parent=83 // pred_fallthru
          _
        // Predicated region
        $region109: #{tpu_custom_call.1} parent=83 // pred_check
          %p603 = pneg %p275
        $region110: #{tpu_custom_call.1} parent=83 // pred_check_branch
          %605 = sbr.rel (%p603) target = $region112
        $region111: #{tpu_custom_call.1} parent=83 // pred_region
          %606 = dma.done [#allocation13], 8192
        $region112: #{tpu_custom_call.1} parent=83 // pred_fallthru
          _
        // Predicated region
        $region113: #{tpu_custom_call.1} parent=83 // pred_check
          %p607 = pneg %p317
        $region114: #{tpu_custom_call.1} parent=83 // pred_check_branch
          %609 = sbr.rel (%p607) target = $region116
        $region115: #{tpu_custom_call.1} parent=83 // pred_region
          %610 = dma.done [#allocation16], 8192
        $region116: #{tpu_custom_call.1} parent=83 // pred_fallthru
          _
        %s611 = sand.u32 %s47, 1
        %s612 = scalar_lea.sflag [#allocation4], %s611
        %s613 = sand.u32 %s47, 1
        %s614 = smul.addr %s613, 16
        %s615 = scalar_lea.vmem [#allocation3], %s614
        %p616 = pneg %p60
        %p617 = pneg %p57
        %s618 = sand.u32 %s39, 1
        %s619 = scalar_lea.sflag [#allocation7], %s618
        %s620 = sand.u32 %s73, 1
        %s621 = scalar_lea.vmem [#allocation6], %s620
        %p622 = pneg %p86
        %p623 = pneg %p83
        %p624 = pneg %p107
        %p625 = pneg %p104
        %p626 = pneg %p128
        %p627 = pneg %p125
        %p628 = pneg %p149
        %p629 = pneg %p146
        %p630 = pneg %p170
        %p631 = pneg %p167
        %p632 = pneg %p191
        %p633 = pneg %p188
        %p634 = pneg %p212
        %p635 = pneg %p209
        %p636 = pneg %p233
        %p637 = pneg %p230
        %p638 = pneg %p254
        %p639 = pneg %p251
        %p640 = pneg %p275
        %p641 = pneg %p272
        %p642 = pneg %p296
        %p643 = pneg %p293
        %p644 = pneg %p317
        %p645 = pneg %p314
        %p646 = pneg %p338
        %p647 = pneg %p335
        %p648 = pneg %p359
        %p649 = pneg %p356
        %p650 = pneg %p380
        %p651 = pneg %p377
        %p652 = pneg %p406
        %p653 = pneg %p403
        %s654 = sand.u32 %s393, 1
        %s655 = scalar_lea.sflag [#allocation5], %s654
        %s656 = sand.u32 %s393, 1
        %s657 = smul.addr %s656, 16
        %s658 = scalar_lea.vmem [#allocation17], %s657
        %v659 = vld [vmem:[%s574] sm:$0xff]
        %v660 = vld [vmem:[%s574 + $0x8] sm:$0xff]
        %v661 = vld [vmem:[#allocation8] sm:$0xff]
        %v662 = vld [vmem:[#allocation8 + $0x8] sm:$0xff]
        %v663 = vld [vmem:[#allocation8 + $0x10] sm:$0xff]
        %v664 = vld [vmem:[#allocation8 + $0x18] sm:$0xff]
        %v665 = vld [vmem:[#allocation8 + $0x20] sm:$0xff]
        %v666 = vld [vmem:[#allocation8 + $0x28] sm:$0xff]
        %v667 = vld [vmem:[#allocation8 + $0x30] sm:$0xff]
        %v668 = vld [vmem:[#allocation8 + $0x38] sm:$0xff]
        %v669 = vld [vmem:[#allocation9] sm:$0x1]
        %v671 = vlaneseq
        %v672 = vshrl.u32 %v671, 7
        %v673 = vsub.s32 0, %v672
        %v674 = vrot.slane %v669, %v673
        %vm676 = vcmask 523264
        %v678 = vsel %vm676, %v659, 0
        %v681 = vsel %vm676, %v660, 0
        %683 = vmatprep.subr.mxu0 0.0
        %684 = vmatpush1.msra.mxu0 %v661
        %685 = vmatprep.subr.mxu0 0.0
        %686 = vmatpush1.msra.mxu0 %v662
        %687 = vmatprep.subr.mxu0 0.0
        %688 = vmatpush1.msra.mxu0 %v663
        %689 = vmatprep.subr.mxu0 0.0
        %690 = vmatpush1.msra.mxu0 %v664
        %691 = vmatprep.subr.mxu0 0.0
        %692 = vmatpush1.msra.mxu0 %v665
        %693 = vmatprep.subr.mxu0 0.0
        %694 = vmatpush1.msra.mxu0 %v666
        %695 = vmatprep.subr.mxu0 0.0
        %696 = vmatpush1.msra.mxu0 %v667
        %697 = vmatprep.subr.mxu0 0.0
        %698 = vmatpush1.msra.mxu0 %v668
        %699 = vmatprep.subr.mxu0 0.0
        %700 = vmatpush1.msra.mxu0 0.0
        %701 = vmatprep.subr.mxu0 0.0
        %702 = vmatpush1.msra.mxu0 0.0
        %703 = vmatprep.subr.mxu0 0.0
        %704 = vmatpush1.msra.mxu0 0.0
        %705 = vmatprep.subr.mxu0 0.0
        %706 = vmatpush1.msra.mxu0 0.0
        %707 = vmatprep.subr.mxu0 0.0
        %708 = vmatpush1.msra.mxu0 0.0
        %709 = vmatprep.subr.mxu0 0.0
        %710 = vmatpush1.msra.mxu0 0.0
        %711 = vmatprep.subr.mxu0 0.0
        %712 = vmatpush1.msra.mxu0 0.0
        %713 = vmatprep.subr.mxu0 0.0
        %714 = vmatpush1.msra.mxu0 0.0
        %715 = vmatprep.subr.mxu0 0.0
        %716 = vmatpush1.msra.mxu0 0.0
        %717 = vmatprep.subr.mxu0 0.0
        %718 = vmatpush1.msra.mxu0 0.0
        %719 = vmatprep.subr.mxu0 0.0
        %720 = vmatpush1.msra.mxu0 0.0
        %721 = vmatprep.subr.mxu0 0.0
        %722 = vmatpush1.msra.mxu0 0.0
        %723 = vmatprep.subr.mxu0 0.0
        %724 = vmatpush1.msra.mxu0 0.0
        %725 = vmatprep.subr.mxu0 0.0
        %726 = vmatpush1.msra.mxu0 0.0
        %727 = vmatprep.subr.mxu0 0.0
        %728 = vmatpush1.msra.mxu0 0.0
        %729 = vmatprep.subr.mxu0 0.0
        %730 = vmatpush1.msra.mxu0 0.0
        %731 = vmatprep.subr.mxu0 0.0
        %732 = vmatpush1.msra.mxu0 0.0
        %733 = vmatprep.subr.mxu0 0.0
        %734 = vmatpush1.msra.mxu0 0.0
        %735 = vmatprep.subr.mxu0 0.0
        %736 = vmatpush1.msra.mxu0 0.0
        %737 = vmatprep.subr.mxu0 0.0
        %738 = vmatpush1.msra.mxu0 0.0
        %739 = vmatprep.subr.mxu0 0.0
        %740 = vmatpush1.msra.mxu0 0.0
        %741 = vmatprep.subr.mxu0 0.0
        %742 = vmatpush1.msra.mxu0 0.0
        %743 = vmatprep.subr.mxu0 0.0
        %744 = vmatpush1.msra.mxu0 0.0
        %745 = vmatprep.subr.mxu0 0.0
        %746 = vmatpush1.msra.mxu0 0.0
        %747 = vmatprep.mubr.f32.mxu0 0.0
        %748 = vmatmul.mubr.f32.gmra.mrb[0].mxu0 %v678
        %v749 = vpop.f32.mrb[0].mxu0
        %v750 = vadd.f32 %v674, %v749
        %v751 = vpop.f32.mrb[0].mxu0
        %752 = vmatprep.mubr.f32.mxu0 0.0
        %753 = vmatmul.mubr.f32.gmra.mrb[0].mxu0 %v681
        %v754 = vpop.f32.mrb[0].mxu0
        %v755 = vadd.f32 %v674, %v754
        %v756 = vpop.f32.mrb[0].mxu0
        %757 = vdwg.mxu0
        %v758 = vld [vmem:[%s582] sm:$0x1]
        %v760 = vlaneseq
        %v761 = vshrl.u32 %v760, 7
        %v762 = vsub.s32 0, %v761
        %v763 = vrot.slane %v758, %v762
        %v765 = vadd.f32 %v750, %v763
        %v766 = vadd.f32 %v755, %v763
        %v767 = vld [vmem:[#allocation11] sm:$0xff]
        %v768 = vld [vmem:[#allocation11 + $0x8] sm:$0xff]
        %v769 = vld [vmem:[#allocation11 + $0x10] sm:$0xff]
        %v770 = vld [vmem:[#allocation11 + $0x18] sm:$0xff]
        %v771 = vld [vmem:[#allocation11 + $0x20] sm:$0xff]
        %v772 = vld [vmem:[#allocation11 + $0x28] sm:$0xff]
        %v773 = vld [vmem:[#allocation11 + $0x30] sm:$0xff]
        %v774 = vld [vmem:[#allocation11 + $0x38] sm:$0xff]
        %v775 = vld [vmem:[#allocation11 + $0x40] sm:$0xff]
        %v776 = vld [vmem:[#allocation11 + $0x48] sm:$0xff]
        %v777 = vld [vmem:[#allocation11 + $0x50] sm:$0xff]
        %v778 = vld [vmem:[#allocation11 + $0x58] sm:$0xff]
        %v779 = vld [vmem:[#allocation11 + $0x60] sm:$0xff]
        %v780 = vld [vmem:[#allocation11 + $0x68] sm:$0xff]
        %v781 = vld [vmem:[#allocation11 + $0x70] sm:$0xff]
        %v782 = vld [vmem:[#allocation11 + $0x78] sm:$0xff]
        %v783 = vld [vmem:[#allocation11 + $0x80] sm:$0xff]
        %v784 = vld [vmem:[#allocation11 + $0x88] sm:$0xff]
        %v785 = vld [vmem:[#allocation11 + $0x90] sm:$0xff]
        %v786 = vld [vmem:[#allocation11 + $0x98] sm:$0xff]
        %v787 = vld [vmem:[#allocation11 + $0xa0] sm:$0xff]
        %v788 = vld [vmem:[#allocation11 + $0xa8] sm:$0xff]
        %v789 = vld [vmem:[#allocation11 + $0xb0] sm:$0xff]
        %v790 = vld [vmem:[#allocation11 + $0xb8] sm:$0xff]
        %v791 = vld [vmem:[#allocation11 + $0xc0] sm:$0xff]
        %v792 = vld [vmem:[#allocation11 + $0xc8] sm:$0xff]
        %v793 = vld [vmem:[#allocation11 + $0xd0] sm:$0xff]
        %v794 = vld [vmem:[#allocation11 + $0xd8] sm:$0xff]
        %v795 = vld [vmem:[#allocation11 + $0xe0] sm:$0xff]
        %v796 = vld [vmem:[#allocation11 + $0xe8] sm:$0xff]
        %v797 = vld [vmem:[#allocation11 + $0xf0] sm:$0xff]
        %v798 = vld [vmem:[#allocation11 + $0xf8] sm:$0xff]
        %v799 = vld [vmem:[#allocation11 + $0x100] sm:$0xff]
        %v800 = vld [vmem:[#allocation11 + $0x108] sm:$0xff]
        %v801 = vld [vmem:[#allocation11 + $0x110] sm:$0xff]
        %v802 = vld [vmem:[#allocation11 + $0x118] sm:$0xff]
        %v803 = vld [vmem:[#allocation11 + $0x120] sm:$0xff]
        %v804 = vld [vmem:[#allocation11 + $0x128] sm:$0xff]
        %v805 = vld [vmem:[#allocation11 + $0x130] sm:$0xff]
        %v806 = vld [vmem:[#allocation11 + $0x138] sm:$0xff]
        %v807 = vld [vmem:[#allocation11 + $0x140] sm:$0xff]
        %v808 = vld [vmem:[#allocation11 + $0x148] sm:$0xff]
        %v809 = vld [vmem:[#allocation11 + $0x150] sm:$0xff]
        %v810 = vld [vmem:[#allocation11 + $0x158] sm:$0xff]
        %v811 = vld [vmem:[#allocation11 + $0x160] sm:$0xff]
        %v812 = vld [vmem:[#allocation11 + $0x168] sm:$0xff]
        %v813 = vld [vmem:[#allocation11 + $0x170] sm:$0xff]
        %v814 = vld [vmem:[#allocation11 + $0x178] sm:$0xff]
        %v815 = vld [vmem:[%s5] sm:$0x7]
        %v817 = vlaneseq
        %v818 = vshrl.u32 %v817, 7
        %v819 = vsub.s32 0, %v818
        %v820 = vrot.slane %v815, %v819
        %v821 = vlaneseq
        %v822 = vshrl.u32 %v821, 7
        %v823 = vsub.s32 1, %v822
        %v824 = vrot.slane %v815, %v823
        %v825 = vlaneseq
        %v826 = vshrl.u32 %v825, 7
        %v827 = vsub.s32 2, %v826
        %v828 = vrot.slane %v815, %v827
        %832 = vmatprep.subr.mxu0 %v768
        %833 = vmatpush1.msra.mxu0 %v767
        %834 = vmatprep.subr.mxu0 %v771
        %835 = vmatpush1.msra.mxu0 %v770
        %836 = vmatprep.subr.mxu0 %v774
        %837 = vmatpush1.msra.mxu0 %v773
        %838 = vmatprep.subr.mxu0 %v777
        %839 = vmatpush1.msra.mxu0 %v776
        %840 = vmatprep.subr.mxu0 %v780
        %841 = vmatpush1.msra.mxu0 %v779
        %842 = vmatprep.subr.mxu0 %v783
        %843 = vmatpush1.msra.mxu0 %v782
        %844 = vmatprep.subr.mxu0 %v786
        %845 = vmatpush1.msra.mxu0 %v785
        %846 = vmatprep.subr.mxu0 %v789
        %847 = vmatpush1.msra.mxu0 %v788
        %848 = vmatprep.subr.mxu0 %v792
        %849 = vmatpush1.msra.mxu0 %v791
        %850 = vmatprep.subr.mxu0 %v795
        %851 = vmatpush1.msra.mxu0 %v794
        %852 = vmatprep.subr.mxu0 %v798
        %853 = vmatpush1.msra.mxu0 %v797
        %854 = vmatprep.subr.mxu0 %v801
        %855 = vmatpush1.msra.mxu0 %v800
        %856 = vmatprep.subr.mxu0 %v804
        %857 = vmatpush1.msra.mxu0 %v803
        %858 = vmatprep.subr.mxu0 %v807
        %859 = vmatpush1.msra.mxu0 %v806
        %860 = vmatprep.subr.mxu0 %v810
        %861 = vmatpush1.msra.mxu0 %v809
        %862 = vmatprep.subr.mxu0 %v813
        %863 = vmatpush1.msra.mxu0 %v812
        %864 = vmatprep.subr.mxu0 0.0
        %865 = vmatpush1.msra.mxu0 0.0
        %866 = vmatprep.subr.mxu0 0.0
        %867 = vmatpush1.msra.mxu0 0.0
        %868 = vmatprep.subr.mxu0 0.0
        %869 = vmatpush1.msra.mxu0 0.0
        %870 = vmatprep.subr.mxu0 0.0
        %871 = vmatpush1.msra.mxu0 0.0
        %872 = vmatprep.subr.mxu0 0.0
        %873 = vmatpush1.msra.mxu0 0.0
        %874 = vmatprep.subr.mxu0 0.0
        %875 = vmatpush1.msra.mxu0 0.0
        %876 = vmatprep.subr.mxu0 0.0
        %877 = vmatpush1.msra.mxu0 0.0
        %878 = vmatprep.subr.mxu0 0.0
        %879 = vmatpush1.msra.mxu0 0.0
        %880 = vmatprep.subr.mxu0 0.0
        %881 = vmatpush1.msra.mxu0 0.0
        %882 = vmatprep.subr.mxu0 0.0
        %883 = vmatpush1.msra.mxu0 0.0
        %884 = vmatprep.subr.mxu0 0.0
        %885 = vmatpush1.msra.mxu0 0.0
        %886 = vmatprep.subr.mxu0 0.0
        %887 = vmatpush1.msra.mxu0 0.0
        %888 = vmatprep.subr.mxu0 0.0
        %889 = vmatpush1.msra.mxu0 0.0
        %890 = vmatprep.subr.mxu0 0.0
        %891 = vmatpush1.msra.mxu0 0.0
        %892 = vmatprep.subr.mxu0 0.0
        %893 = vmatpush1.msra.mxu0 0.0
        %894 = vmatprep.subr.mxu0 0.0
        %895 = vmatpush1.msra.mxu0 0.0
        %896 = vmatprep.mubr.f32.mxu0 0.0
        %897 = vmatmul.mubr.f32.gmra.mrb[0].mxu0 %v765
        %v898 = vpop.f32.mrb[0].mxu0
        %v899 = vadd.f32 %v820, %v898
        %v900 = vpop.f32.mrb[0].mxu0
        %v901 = vadd.f32 %v824, %v900
        %902 = vmatprep.mubr.f32.mxu0 0.0
        %903 = vmatmul.mubr.f32.gmra.mrb[0].mxu0 %v766
        %v904 = vpop.f32.mrb[0].mxu0
        %v905 = vadd.f32 %v820, %v904
        %v906 = vpop.f32.mrb[0].mxu0
        %v907 = vadd.f32 %v824, %v906
        %908 = vdwg.mxu0
        %909 = vmatprep.subr.mxu0 0.0
        %910 = vmatpush1.msra.mxu0 %v769
        %911 = vmatprep.subr.mxu0 0.0
        %912 = vmatpush1.msra.mxu0 %v772
        %913 = vmatprep.subr.mxu0 0.0
        %914 = vmatpush1.msra.mxu0 %v775
        %915 = vmatprep.subr.mxu0 0.0
        %916 = vmatpush1.msra.mxu0 %v778
        %917 = vmatprep.subr.mxu0 0.0
        %918 = vmatpush1.msra.mxu0 %v781
        %919 = vmatprep.subr.mxu0 0.0
        %920 = vmatpush1.msra.mxu0 %v784
        %921 = vmatprep.subr.mxu0 0.0
        %922 = vmatpush1.msra.mxu0 %v787
        %923 = vmatprep.subr.mxu0 0.0
        %924 = vmatpush1.msra.mxu0 %v790
        %925 = vmatprep.subr.mxu0 0.0
        %926 = vmatpush1.msra.mxu0 %v793
        %927 = vmatprep.subr.mxu0 0.0
        %928 = vmatpush1.msra.mxu0 %v796
        %929 = vmatprep.subr.mxu0 0.0
        %930 = vmatpush1.msra.mxu0 %v799
        %931 = vmatprep.subr.mxu0 0.0
        %932 = vmatpush1.msra.mxu0 %v802
        %933 = vmatprep.subr.mxu0 0.0
        %934 = vmatpush1.msra.mxu0 %v805
        %935 = vmatprep.subr.mxu0 0.0
        %936 = vmatpush1.msra.mxu0 %v808
        %937 = vmatprep.subr.mxu0 0.0
        %938 = vmatpush1.msra.mxu0 %v811
        %939 = vmatprep.subr.mxu0 0.0
        %940 = vmatpush1.msra.mxu0 %v814
        %941 = vmatprep.subr.mxu0 0.0
        %942 = vmatpush1.msra.mxu0 0.0
        %943 = vmatprep.subr.mxu0 0.0
        %944 = vmatpush1.msra.mxu0 0.0
        %945 = vmatprep.subr.mxu0 0.0
        %946 = vmatpush1.msra.mxu0 0.0
        %947 = vmatprep.subr.mxu0 0.0
        %948 = vmatpush1.msra.mxu0 0.0
        %949 = vmatprep.subr.mxu0 0.0
        %950 = vmatpush1.msra.mxu0 0.0
        %951 = vmatprep.subr.mxu0 0.0
        %952 = vmatpush1.msra.mxu0 0.0
        %953 = vmatprep.subr.mxu0 0.0
        %954 = vmatpush1.msra.mxu0 0.0
        %955 = vmatprep.subr.mxu0 0.0
        %956 = vmatpush1.msra.mxu0 0.0
        %957 = vmatprep.subr.mxu0 0.0
        %958 = vmatpush1.msra.mxu0 0.0
        %959 = vmatprep.subr.mxu0 0.0
        %960 = vmatpush1.msra.mxu0 0.0
        %961 = vmatprep.subr.mxu0 0.0
        %962 = vmatpush1.msra.mxu0 0.0
        %963 = vmatprep.subr.mxu0 0.0
        %964 = vmatpush1.msra.mxu0 0.0
        %965 = vmatprep.subr.mxu0 0.0
        %966 = vmatpush1.msra.mxu0 0.0
        %967 = vmatprep.subr.mxu0 0.0
        %968 = vmatpush1.msra.mxu0 0.0
        %969 = vmatprep.subr.mxu0 0.0
        %970 = vmatpush1.msra.mxu0 0.0
        %971 = vmatprep.subr.mxu0 0.0
        %972 = vmatpush1.msra.mxu0 0.0
        %973 = vmatprep.mubr.f32.mxu0 0.0
        %974 = vmatmul.mubr.f32.gmra.mrb[0].mxu0 %v765
        %v975 = vpop.f32.mrb[0].mxu0
        %v976 = vadd.f32 %v828, %v975
        %v977 = vpop.f32.mrb[0].mxu0
        %978 = vmatprep.mubr.f32.mxu0 0.0
        %979 = vmatmul.mubr.f32.gmra.mrb[0].mxu0 %v766
        %v980 = vpop.f32.mrb[0].mxu0
        %v981 = vadd.f32 %v828, %v980
        %v982 = vpop.f32.mrb[0].mxu0
        %983 = vdwg.mxu0
        %vm984 = vcmask 130048
        %v986 = vsel %vm984, %v899, 0
        %v989 = vsel %vm984, %v905, 0
        %v992 = vsel %vm984, %v901, 0
        %v995 = vsel %vm984, %v907, 0
        %997 = vmatprep.subr.mxu0 0.0
        %998 = vmatpush1.xpose.msra.mxu0 %v992
        %999 = vmatprep.subr.mxu0 0.0
        %1000 = vmatpush1.xpose.msra.mxu0 %v995
        %1001 = vmatprep.subr.mxu0 0.0
        %1002 = vmatpush1.xpose.msra.mxu0 0.0
        %1003 = vmatprep.subr.mxu0 0.0
        %1004 = vmatpush1.xpose.msra.mxu0 0.0
        %1005 = vmatprep.subr.mxu0 0.0
        %1006 = vmatpush1.xpose.msra.mxu0 0.0
        %1007 = vmatprep.subr.mxu0 0.0
        %1008 = vmatpush1.xpose.msra.mxu0 0.0
        %1009 = vmatprep.subr.mxu0 0.0
        %1010 = vmatpush1.xpose.msra.mxu0 0.0
        %1011 = vmatprep.subr.mxu0 0.0
        %1012 = vmatpush1.xpose.msra.mxu0 0.0
        %1013 = vmatprep.subr.mxu0 0.0
        %1014 = vmatpush1.xpose.msra.mxu0 0.0
        %1015 = vmatprep.subr.mxu0 0.0
        %1016 = vmatpush1.xpose.msra.mxu0 0.0
        %1017 = vmatprep.subr.mxu0 0.0
        %1018 = vmatpush1.xpose.msra.mxu0 0.0
        %1019 = vmatprep.subr.mxu0 0.0
        %1020 = vmatpush1.xpose.msra.mxu0 0.0
        %1021 = vmatprep.subr.mxu0 0.0
        %1022 = vmatpush1.xpose.msra.mxu0 0.0
        %1023 = vmatprep.subr.mxu0 0.0
        %1024 = vmatpush1.xpose.msra.mxu0 0.0
        %1025 = vmatprep.subr.mxu0 0.0
        %1026 = vmatpush1.xpose.msra.mxu0 0.0
        %1027 = vmatprep.subr.mxu0 0.0
        %1028 = vmatpush1.xpose.msra.mxu0 0.0
        %1029 = vmatprep.subr.mxu0 0.0
        %1030 = vmatpush1.xpose.msra.mxu0 0.0
        %1031 = vmatprep.subr.mxu0 0.0
        %1032 = vmatpush1.xpose.msra.mxu0 0.0
        %1033 = vmatprep.subr.mxu0 0.0
        %1034 = vmatpush1.xpose.msra.mxu0 0.0
        %1035 = vmatprep.subr.mxu0 0.0
        %1036 = vmatpush1.xpose.msra.mxu0 0.0
        %1037 = vmatprep.subr.mxu0 0.0
        %1038 = vmatpush1.xpose.msra.mxu0 0.0
        %1039 = vmatprep.subr.mxu0 0.0
        %1040 = vmatpush1.xpose.msra.mxu0 0.0
        %1041 = vmatprep.subr.mxu0 0.0
        %1042 = vmatpush1.xpose.msra.mxu0 0.0
        %1043 = vmatprep.subr.mxu0 0.0
        %1044 = vmatpush1.xpose.msra.mxu0 0.0
        %1045 = vmatprep.subr.mxu0 0.0
        %1046 = vmatpush1.xpose.msra.mxu0 0.0
        %1047 = vmatprep.subr.mxu0 0.0
        %1048 = vmatpush1.xpose.msra.mxu0 0.0
        %1049 = vmatprep.subr.mxu0 0.0
        %1050 = vmatpush1.xpose.msra.mxu0 0.0
        %1051 = vmatprep.subr.mxu0 0.0
        %1052 = vmatpush1.xpose.msra.mxu0 0.0
        %1053 = vmatprep.subr.mxu0 0.0
        %1054 = vmatpush1.xpose.msra.mxu0 0.0
        %1055 = vmatprep.subr.mxu0 0.0
        %1056 = vmatpush1.xpose.msra.mxu0 0.0
        %1057 = vmatprep.subr.mxu0 0.0
        %1058 = vmatpush1.xpose.msra.mxu0 0.0
        %1059 = vmatprep.subr.mxu0 0.0
        %1060 = vmatpush1.xpose.msra.mxu0 0.0
        %1061 = vmatprep.mubr.f32.mxu0 0.0
        %1062 = vmatmul.mubr.f32.gmra.mrb[0].mxu0 %v986
        %v1063 = vpop.f32.mrb[0].mxu0
        %v1064 = vadd.f32 0.0, %v1063
        %v1065 = vpop.f32.mrb[0].mxu0
        %1066 = vmatprep.mubr.f32.mxu0 0.0
        %1067 = vmatmul.mubr.f32.gmra.mrb[0].mxu0 %v989
        %v1068 = vpop.f32.mrb[0].mxu0
        %v1069 = vadd.f32 0.0, %v1068
        %v1070 = vpop.f32.mrb[0].mxu0
        %1071 = vdwg.mxu0
        %v1072 = vsel %vm984, %v1064, -inf
        %1073 = vmax.xlane.f32.xlu0 %v1072
        %v1074 = vpop.xlane.xlu0 %1073
        %v1075 = vsel %vm984, %v1069, -inf
        %1076 = vmax.xlane.f32.xlu0 %v1075
        %v1077 = vpop.xlane.xlu0 %1076
        %v1078 = vsub.f32 %v1064, %v1074
        %v1079 = vsub.f32 %v1069, %v1077
        %v1080 = vmul.f32 %v1078, 1.442695
        %v1081 = vpow.pop %v1080
        %v1082 = vmul.f32 %v1079, 1.442695
        %v1083 = vpow.pop %v1082
        %v1084 = vsel %vm984, %v1081, 0.0
        %1085 = vadd.xlane.f32.xlu0 %v1084
        %v1086 = vpop.xlane.xlu0 %1085
        %v1087 = vsel %vm984, %v1083, 0.0
        %1088 = vadd.xlane.f32.xlu0 %v1087
        %v1089 = vpop.xlane.xlu0 %1088
        %v1090 = vrcp.pop %v1086
        %v1091 = vrcp.pop %v1089
        %v1092 = vmul.f32 %v1081, %v1090
        %v1093 = vmul.f32 %v1083, %v1091
        %v1095 = vsel %vm984, %v1092, 0
        %v1098 = vsel %vm984, %v1093, 0
        %1100 = vmatprep.subr.mxu0 0.0
        %1101 = vmatpush1.msra.mxu0 %v976
        %1102 = vmatprep.subr.mxu0 0.0
        %1103 = vmatpush1.msra.mxu0 %v981
        %1104 = vmatprep.subr.mxu0 0.0
        %1105 = vmatpush1.msra.mxu0 0.0
        %1106 = vmatprep.subr.mxu0 0.0
        %1107 = vmatpush1.msra.mxu0 0.0
        %1108 = vmatprep.subr.mxu0 0.0
        %1109 = vmatpush1.msra.mxu0 0.0
        %1110 = vmatprep.subr.mxu0 0.0
        %1111 = vmatpush1.msra.mxu0 0.0
        %1112 = vmatprep.subr.mxu0 0.0
        %1113 = vmatpush1.msra.mxu0 0.0
        %1114 = vmatprep.subr.mxu0 0.0
        %1115 = vmatpush1.msra.mxu0 0.0
        %1116 = vmatprep.subr.mxu0 0.0
        %1117 = vmatpush1.msra.mxu0 0.0
        %1118 = vmatprep.subr.mxu0 0.0
        %1119 = vmatpush1.msra.mxu0 0.0
        %1120 = vmatprep.subr.mxu0 0.0
        %1121 = vmatpush1.msra.mxu0 0.0
        %1122 = vmatprep.subr.mxu0 0.0
        %1123 = vmatpush1.msra.mxu0 0.0
        %1124 = vmatprep.subr.mxu0 0.0
        %1125 = vmatpush1.msra.mxu0 0.0
        %1126 = vmatprep.subr.mxu0 0.0
        %1127 = vmatpush1.msra.mxu0 0.0
        %1128 = vmatprep.subr.mxu0 0.0
        %1129 = vmatpush1.msra.mxu0 0.0
        %1130 = vmatprep.subr.mxu0 0.0
        %1131 = vmatpush1.msra.mxu0 0.0
        %1132 = vmatprep.subr.mxu0 0.0
        %1133 = vmatpush1.msra.mxu0 0.0
        %1134 = vmatprep.subr.mxu0 0.0
        %1135 = vmatpush1.msra.mxu0 0.0
        %1136 = vmatprep.subr.mxu0 0.0
        %1137 = vmatpush1.msra.mxu0 0.0
        %1138 = vmatprep.subr.mxu0 0.0
        %1139 = vmatpush1.msra.mxu0 0.0
        %1140 = vmatprep.subr.mxu0 0.0
        %1141 = vmatpush1.msra.mxu0 0.0
        %1142 = vmatprep.subr.mxu0 0.0
        %1143 = vmatpush1.msra.mxu0 0.0
        %1144 = vmatprep.subr.mxu0 0.0
        %1145 = vmatpush1.msra.mxu0 0.0
        %1146 = vmatprep.subr.mxu0 0.0
        %1147 = vmatpush1.msra.mxu0 0.0
        %1148 = vmatprep.subr.mxu0 0.0
        %1149 = vmatpush1.msra.mxu0 0.0
        %1150 = vmatprep.subr.mxu0 0.0
        %1151 = vmatpush1.msra.mxu0 0.0
        %1152 = vmatprep.subr.mxu0 0.0
        %1153 = vmatpush1.msra.mxu0 0.0
        %1154 = vmatprep.subr.mxu0 0.0
        %1155 = vmatpush1.msra.mxu0 0.0
        %1156 = vmatprep.subr.mxu0 0.0
        %1157 = vmatpush1.msra.mxu0 0.0
        %1158 = vmatprep.subr.mxu0 0.0
        %1159 = vmatpush1.msra.mxu0 0.0
        %1160 = vmatprep.subr.mxu0 0.0
        %1161 = vmatpush1.msra.mxu0 0.0
        %1162 = vmatprep.subr.mxu0 0.0
        %1163 = vmatpush1.msra.mxu0 0.0
        %1164 = vmatprep.mubr.f32.mxu0 0.0
        %1165 = vmatmul.mubr.f32.gmra.mrb[0].mxu0 %v1095
        %v1166 = vpop.f32.mrb[0].mxu0
        %v1167 = vadd.f32 0.0, %v1166
        %v1168 = vpop.f32.mrb[0].mxu0
        %1169 = vmatprep.mubr.f32.mxu0 0.0
        %1170 = vmatmul.mubr.f32.gmra.mrb[0].mxu0 %v1098
        %v1171 = vpop.f32.mrb[0].mxu0
        %v1172 = vadd.f32 0.0, %v1171
        %v1173 = vpop.f32.mrb[0].mxu0
        %1174 = vdwg.mxu0
        %1175 = vst.msk [vmem:[#allocation2] sm:$0xff] %vm984, %v1167
        %1176 = vst.msk [vmem:[#allocation2 + $0x8] sm:$0xff] %vm984, %v1172
        %1177 = vrot.lane.b32.xlu0 %v899, 112
        %v1178 = vpop.permute.xlu0 %1177
        %1179 = vrot.lane.b32.xlu0 %v905, 112
        %v1180 = vpop.permute.xlu0 %1179
        %1181 = vrot.lane.b32.xlu0 %v901, 112
        %v1182 = vpop.permute.xlu0 %1181
        %1183 = vrot.lane.b32.xlu0 %v907, 112
        %v1184 = vpop.permute.xlu0 %1183
        %v1185 = vsel %vm984, %v1178, 0
        %v1187 = vsel %vm984, %v1180, 0
        %v1189 = vsel %vm984, %v1182, 0
        %v1191 = vsel %vm984, %v1184, 0
        %1193 = vmatprep.subr.mxu0 0.0
        %1194 = vmatpush1.xpose.msra.mxu0 %v1189
        %1195 = vmatprep.subr.mxu0 0.0
        %1196 = vmatpush1.xpose.msra.mxu0 %v1191
        %1197 = vmatprep.subr.mxu0 0.0
        %1198 = vmatpush1.xpose.msra.mxu0 0.0
        %1199 = vmatprep.subr.mxu0 0.0
        %1200 = vmatpush1.xpose.msra.mxu0 0.0
        %1201 = vmatprep.subr.mxu0 0.0
        %1202 = vmatpush1.xpose.msra.mxu0 0.0
        %1203 = vmatprep.subr.mxu0 0.0
        %1204 = vmatpush1.xpose.msra.mxu0 0.0
        %1205 = vmatprep.subr.mxu0 0.0
        %1206 = vmatpush1.xpose.msra.mxu0 0.0
        %1207 = vmatprep.subr.mxu0 0.0
        %1208 = vmatpush1.xpose.msra.mxu0 0.0
        %1209 = vmatprep.subr.mxu0 0.0
        %1210 = vmatpush1.xpose.msra.mxu0 0.0
        %1211 = vmatprep.subr.mxu0 0.0
        %1212 = vmatpush1.xpose.msra.mxu0 0.0
        %1213 = vmatprep.subr.mxu0 0.0
        %1214 = vmatpush1.xpose.msra.mxu0 0.0
        %1215 = vmatprep.subr.mxu0 0.0
        %1216 = vmatpush1.xpose.msra.mxu0 0.0
        %1217 = vmatprep.subr.mxu0 0.0
        %1218 = vmatpush1.xpose.msra.mxu0 0.0
        %1219 = vmatprep.subr.mxu0 0.0
        %1220 = vmatpush1.xpose.msra.mxu0 0.0
        %1221 = vmatprep.subr.mxu0 0.0
        %1222 = vmatpush1.xpose.msra.mxu0 0.0
        %1223 = vmatprep.subr.mxu0 0.0
        %1224 = vmatpush1.xpose.msra.mxu0 0.0
        %1225 = vmatprep.subr.mxu0 0.0
        %1226 = vmatpush1.xpose.msra.mxu0 0.0
        %1227 = vmatprep.subr.mxu0 0.0
        %1228 = vmatpush1.xpose.msra.mxu0 0.0
        %1229 = vmatprep.subr.mxu0 0.0
        %1230 = vmatpush1.xpose.msra.mxu0 0.0
        %1231 = vmatprep.subr.mxu0 0.0
        %1232 = vmatpush1.xpose.msra.mxu0 0.0
        %1233 = vmatprep.subr.mxu0 0.0
        %1234 = vmatpush1.xpose.msra.mxu0 0.0
        %1235 = vmatprep.subr.mxu0 0.0
        %1236 = vmatpush1.xpose.msra.mxu0 0.0
        %1237 = vmatprep.subr.mxu0 0.0
        %1238 = vmatpush1.xpose.msra.mxu0 0.0
        %1239 = vmatprep.subr.mxu0 0.0
        %1240 = vmatpush1.xpose.msra.mxu0 0.0
        %1241 = vmatprep.subr.mxu0 0.0
        %1242 = vmatpush1.xpose.msra.mxu0 0.0
        %1243 = vmatprep.subr.mxu0 0.0
        %1244 = vmatpush1.xpose.msra.mxu0 0.0
        %1245 = vmatprep.subr.mxu0 0.0
        %1246 = vmatpush1.xpose.msra.mxu0 0.0
        %1247 = vmatprep.subr.mxu0 0.0
        %1248 = vmatpush1.xpose.msra.mxu0 0.0
        %1249 = vmatprep.subr.mxu0 0.0
        %1250 = vmatpush1.xpose.msra.mxu0 0.0
        %1251 = vmatprep.subr.mxu0 0.0
        %1252 = vmatpush1.xpose.msra.mxu0 0.0
        %1253 = vmatprep.subr.mxu0 0.0
        %1254 = vmatpush1.xpose.msra.mxu0 0.0
        %1255 = vmatprep.subr.mxu0 0.0
        %1256 = vmatpush1.xpose.msra.mxu0 0.0
        %1257 = vmatprep.mubr.f32.mxu0 0.0
        %1258 = vmatmul.mubr.f32.gmra.mrb[0].mxu0 %v1185
        %v1259 = vpop.f32.mrb[0].mxu0
        %v1260 = vadd.f32 0.0, %v1259
        %v1261 = vpop.f32.mrb[0].mxu0
        %1262 = vmatprep.mubr.f32.mxu0 0.0
        %1263 = vmatmul.mubr.f32.gmra.mrb[0].mxu0 %v1187
        %v1264 = vpop.f32.mrb[0].mxu0
        %v1265 = vadd.f32 0.0, %v1264
        %v1266 = vpop.f32.mrb[0].mxu0
        %1267 = vdwg.mxu0
        %v1268 = vsel %vm984, %v1260, -inf
        %1269 = vmax.xlane.f32.xlu0 %v1268
        %v1270 = vpop.xlane.xlu0 %1269
        %v1271 = vsel %vm984, %v1265, -inf
        %1272 = vmax.xlane.f32.xlu0 %v1271
        %v1273 = vpop.xlane.xlu0 %1272
        %v1274 = vsub.f32 %v1260, %v1270
        %v1275 = vsub.f32 %v1265, %v1273
        %v1276 = vmul.f32 %v1274, 1.442695
        %v1277 = vpow.pop %v1276
        %v1278 = vmul.f32 %v1275, 1.442695
        %v1279 = vpow.pop %v1278
        %v1280 = vsel %vm984, %v1277, 0.0
        %1281 = vadd.xlane.f32.xlu0 %v1280
        %v1282 = vpop.xlane.xlu0 %1281
        %v1283 = vsel %vm984, %v1279, 0.0
        %1284 = vadd.xlane.f32.xlu0 %v1283
        %v1285 = vpop.xlane.xlu0 %1284
        %v1286 = vrcp.pop %v1282
        %v1287 = vrcp.pop %v1285
        %v1288 = vmul.f32 %v1277, %v1286
        %v1289 = vmul.f32 %v1279, %v1287
        %1292 = vrot.lane.b32.xlu0 %v976, 112
        %v1293 = vpop.permute.xlu0 %1292
        %1294 = vrot.lane.b32.xlu0 %v981, 112
        %v1295 = vpop.permute.xlu0 %1294
        %v1299 = vsel %vm984, %v1288, 0
        %v1302 = vsel %vm984, %v1289, 0
        %1304 = vmatprep.subr.mxu0 0.0
        %1305 = vmatpush1.msra.mxu0 %v1293
        %1306 = vmatprep.subr.mxu0 0.0
        %1307 = vmatpush1.msra.mxu0 %v1295
        %1308 = vmatprep.subr.mxu0 0.0
        %1309 = vmatpush1.msra.mxu0 0.0
        %1310 = vmatprep.subr.mxu0 0.0
        %1311 = vmatpush1.msra.mxu0 0.0
        %1312 = vmatprep.subr.mxu0 0.0
        %1313 = vmatpush1.msra.mxu0 0.0
        %1314 = vmatprep.subr.mxu0 0.0
        %1315 = vmatpush1.msra.mxu0 0.0
        %1316 = vmatprep.subr.mxu0 0.0
        %1317 = vmatpush1.msra.mxu0 0.0
        %1318 = vmatprep.subr.mxu0 0.0
        %1319 = vmatpush1.msra.mxu0 0.0
        %1320 = vmatprep.subr.mxu0 0.0
        %1321 = vmatpush1.msra.mxu0 0.0
        %1322 = vmatprep.subr.mxu0 0.0
        %1323 = vmatpush1.msra.mxu0 0.0
        %1324 = vmatprep.subr.mxu0 0.0
        %1325 = vmatpush1.msra.mxu0 0.0
        %1326 = vmatprep.subr.mxu0 0.0
        %1327 = vmatpush1.msra.mxu0 0.0
        %1328 = vmatprep.subr.mxu0 0.0
        %1329 = vmatpush1.msra.mxu0 0.0
        %1330 = vmatprep.subr.mxu0 0.0
        %1331 = vmatpush1.msra.mxu0 0.0
        %1332 = vmatprep.subr.mxu0 0.0
        %1333 = vmatpush1.msra.mxu0 0.0
        %1334 = vmatprep.subr.mxu0 0.0
        %1335 = vmatpush1.msra.mxu0 0.0
        %1336 = vmatprep.subr.mxu0 0.0
        %1337 = vmatpush1.msra.mxu0 0.0
        %1338 = vmatprep.subr.mxu0 0.0
        %1339 = vmatpush1.msra.mxu0 0.0
        %1340 = vmatprep.subr.mxu0 0.0
        %1341 = vmatpush1.msra.mxu0 0.0
        %1342 = vmatprep.subr.mxu0 0.0
        %1343 = vmatpush1.msra.mxu0 0.0
        %1344 = vmatprep.subr.mxu0 0.0
        %1345 = vmatpush1.msra.mxu0 0.0
        %1346 = vmatprep.subr.mxu0 0.0
        %1347 = vmatpush1.msra.mxu0 0.0
        %1348 = vmatprep.subr.mxu0 0.0
        %1349 = vmatpush1.msra.mxu0 0.0
        %1350 = vmatprep.subr.mxu0 0.0
        %1351 = vmatpush1.msra.mxu0 0.0
        %1352 = vmatprep.subr.mxu0 0.0
        %1353 = vmatpush1.msra.mxu0 0.0
        %1354 = vmatprep.subr.mxu0 0.0
        %1355 = vmatpush1.msra.mxu0 0.0
        %1356 = vmatprep.subr.mxu0 0.0
        %1357 = vmatpush1.msra.mxu0 0.0
        %1358 = vmatprep.subr.mxu0 0.0
        %1359 = vmatpush1.msra.mxu0 0.0
        %1360 = vmatprep.subr.mxu0 0.0
        %1361 = vmatpush1.msra.mxu0 0.0
        %1362 = vmatprep.subr.mxu0 0.0
        %1363 = vmatpush1.msra.mxu0 0.0
        %1364 = vmatprep.subr.mxu0 0.0
        %1365 = vmatpush1.msra.mxu0 0.0
        %1366 = vmatprep.subr.mxu0 0.0
        %1367 = vmatpush1.msra.mxu0 0.0
        %1368 = vmatprep.mubr.f32.mxu0 0.0
        %1369 = vmatmul.mubr.f32.gmra.mrb[0].mxu0 %v1299
        %v1370 = vpop.f32.mrb[0].mxu0
        %v1371 = vadd.f32 0.0, %v1370
        %v1372 = vpop.f32.mrb[0].mxu0
        %1373 = vmatprep.mubr.f32.mxu0 0.0
        %1374 = vmatmul.mubr.f32.gmra.mrb[0].mxu0 %v1302
        %v1375 = vpop.f32.mrb[0].mxu0
        %v1376 = vadd.f32 0.0, %v1375
        %v1377 = vpop.f32.mrb[0].mxu0
        %1378 = vdwg.mxu0
        %1381 = vrot.lane.b32.xlu0 %v1371, 16
        %v1382 = vpop.permute.xlu0 %1381
        %1383 = vrot.lane.b32.xlu0 %v1376, 16
        %v1384 = vpop.permute.xlu0 %1383
        %vm1387 = vcmask 261248
        %1388 = vst.msk [vmem:[#allocation2] sm:$0xff] %vm1387, %v1382
        %1389 = vst.msk [vmem:[#allocation2 + $0x8] sm:$0xff] %vm1387, %v1384
        %1390 = vrot.lane.b32.xlu0 %v899, 96
        %v1391 = vpop.permute.xlu0 %1390
        %1392 = vrot.lane.b32.xlu0 %v905, 96
        %v1393 = vpop.permute.xlu0 %1392
        %1394 = vrot.lane.b32.xlu0 %v901, 96
        %v1395 = vpop.permute.xlu0 %1394
        %1396 = vrot.lane.b32.xlu0 %v907, 96
        %v1397 = vpop.permute.xlu0 %1396
        %v1398 = vsel %vm984, %v1391, 0
        %v1400 = vsel %vm984, %v1393, 0
        %v1402 = vsel %vm984, %v1395, 0
        %v1404 = vsel %vm984, %v1397, 0
        %1406 = vmatprep.subr.mxu0 0.0
        %1407 = vmatpush1.xpose.msra.mxu0 %v1402
        %1408 = vmatprep.subr.mxu0 0.0
        %1409 = vmatpush1.xpose.msra.mxu0 %v1404
        %1410 = vmatprep.subr.mxu0 0.0
        %1411 = vmatpush1.xpose.msra.mxu0 0.0
        %1412 = vmatprep.subr.mxu0 0.0
        %1413 = vmatpush1.xpose.msra.mxu0 0.0
        %1414 = vmatprep.subr.mxu0 0.0
        %1415 = vmatpush1.xpose.msra.mxu0 0.0
        %1416 = vmatprep.subr.mxu0 0.0
        %1417 = vmatpush1.xpose.msra.mxu0 0.0
        %1418 = vmatprep.subr.mxu0 0.0
        %1419 = vmatpush1.xpose.msra.mxu0 0.0
        %1420 = vmatprep.subr.mxu0 0.0
        %1421 = vmatpush1.xpose.msra.mxu0 0.0
        %1422 = vmatprep.subr.mxu0 0.0
        %1423 = vmatpush1.xpose.msra.mxu0 0.0
        %1424 = vmatprep.subr.mxu0 0.0
        %1425 = vmatpush1.xpose.msra.mxu0 0.0
        %1426 = vmatprep.subr.mxu0 0.0
        %1427 = vmatpush1.xpose.msra.mxu0 0.0
        %1428 = vmatprep.subr.mxu0 0.0
        %1429 = vmatpush1.xpose.msra.mxu0 0.0
        %1430 = vmatprep.subr.mxu0 0.0
        %1431 = vmatpush1.xpose.msra.mxu0 0.0
        %1432 = vmatprep.subr.mxu0 0.0
        %1433 = vmatpush1.xpose.msra.mxu0 0.0
        %1434 = vmatprep.subr.mxu0 0.0
        %1435 = vmatpush1.xpose.msra.mxu0 0.0
        %1436 = vmatprep.subr.mxu0 0.0
        %1437 = vmatpush1.xpose.msra.mxu0 0.0
        %1438 = vmatprep.subr.mxu0 0.0
        %1439 = vmatpush1.xpose.msra.mxu0 0.0
        %1440 = vmatprep.subr.mxu0 0.0
        %1441 = vmatpush1.xpose.msra.mxu0 0.0
        %1442 = vmatprep.subr.mxu0 0.0
        %1443 = vmatpush1.xpose.msra.mxu0 0.0
        %1444 = vmatprep.subr.mxu0 0.0
        %1445 = vmatpush1.xpose.msra.mxu0 0.0
        %1446 = vmatprep.subr.mxu0 0.0
        %1447 = vmatpush1.xpose.msra.mxu0 0.0
        %1448 = vmatprep.subr.mxu0 0.0
        %1449 = vmatpush1.xpose.msra.mxu0 0.0
        %1450 = vmatprep.subr.mxu0 0.0
        %1451 = vmatpush1.xpose.msra.mxu0 0.0
        %1452 = vmatprep.subr.mxu0 0.0
        %1453 = vmatpush1.xpose.msra.mxu0 0.0
        %1454 = vmatprep.subr.mxu0 0.0
        %1455 = vmatpush1.xpose.msra.mxu0 0.0
        %1456 = vmatprep.subr.mxu0 0.0
        %1457 = vmatpush1.xpose.msra.mxu0 0.0
        %1458 = vmatprep.subr.mxu0 0.0
        %1459 = vmatpush1.xpose.msra.mxu0 0.0
        %1460 = vmatprep.subr.mxu0 0.0
        %1461 = vmatpush1.xpose.msra.mxu0 0.0
        %1462 = vmatprep.subr.mxu0 0.0
        %1463 = vmatpush1.xpose.msra.mxu0 0.0
        %1464 = vmatprep.subr.mxu0 0.0
        %1465 = vmatpush1.xpose.msra.mxu0 0.0
        %1466 = vmatprep.subr.mxu0 0.0
        %1467 = vmatpush1.xpose.msra.mxu0 0.0
        %1468 = vmatprep.subr.mxu0 0.0
        %1469 = vmatpush1.xpose.msra.mxu0 0.0
        %1470 = vmatprep.mubr.f32.mxu0 0.0
        %1471 = vmatmul.mubr.f32.gmra.mrb[0].mxu0 %v1398
        %v1472 = vpop.f32.mrb[0].mxu0
        %v1473 = vadd.f32 0.0, %v1472
        %v1474 = vpop.f32.mrb[0].mxu0
        %1475 = vmatprep.mubr.f32.mxu0 0.0
        %1476 = vmatmul.mubr.f32.gmra.mrb[0].mxu0 %v1400
        %v1477 = vpop.f32.mrb[0].mxu0
        %v1478 = vadd.f32 0.0, %v1477
        %v1479 = vpop.f32.mrb[0].mxu0
        %1480 = vdwg.mxu0
        %v1481 = vsel %vm984, %v1473, -inf
        %1482 = vmax.xlane.f32.xlu0 %v1481
        %v1483 = vpop.xlane.xlu0 %1482
        %v1484 = vsel %vm984, %v1478, -inf
        %1485 = vmax.xlane.f32.xlu0 %v1484
        %v1486 = vpop.xlane.xlu0 %1485
        %v1487 = vsub.f32 %v1473, %v1483
        %v1488 = vsub.f32 %v1478, %v1486
        %v1489 = vmul.f32 %v1487, 1.442695
        %v1490 = vpow.pop %v1489
        %v1491 = vmul.f32 %v1488, 1.442695
        %v1492 = vpow.pop %v1491
        %v1493 = vsel %vm984, %v1490, 0.0
        %1494 = vadd.xlane.f32.xlu0 %v1493
        %v1495 = vpop.xlane.xlu0 %1494
        %v1496 = vsel %vm984, %v1492, 0.0
        %1497 = vadd.xlane.f32.xlu0 %v1496
        %v1498 = vpop.xlane.xlu0 %1497
        %v1499 = vrcp.pop %v1495
        %v1500 = vrcp.pop %v1498
        %v1501 = vmul.f32 %v1490, %v1499
        %v1502 = vmul.f32 %v1492, %v1500
        %1503 = vrot.lane.b32.xlu0 %v976, 96
        %v1504 = vpop.permute.xlu0 %1503
        %1505 = vrot.lane.b32.xlu0 %v981, 96
        %v1506 = vpop.permute.xlu0 %1505
        %v1510 = vsel %vm984, %v1501, 0
        %v1513 = vsel %vm984, %v1502, 0
        %1515 = vmatprep.subr.mxu0 0.0
        %1516 = vmatpush1.msra.mxu0 %v1504
        %1517 = vmatprep.subr.mxu0 0.0
        %1518 = vmatpush1.msra.mxu0 %v1506
        %1519 = vmatprep.subr.mxu0 0.0
        %1520 = vmatpush1.msra.mxu0 0.0
        %1521 = vmatprep.subr.mxu0 0.0
        %1522 = vmatpush1.msra.mxu0 0.0
        %1523 = vmatprep.subr.mxu0 0.0
        %1524 = vmatpush1.msra.mxu0 0.0
        %1525 = vmatprep.subr.mxu0 0.0
        %1526 = vmatpush1.msra.mxu0 0.0
        %1527 = vmatprep.subr.mxu0 0.0
        %1528 = vmatpush1.msra.mxu0 0.0
        %1529 = vmatprep.subr.mxu0 0.0
        %1530 = vmatpush1.msra.mxu0 0.0
        %1531 = vmatprep.subr.mxu0 0.0
        %1532 = vmatpush1.msra.mxu0 0.0
        %1533 = vmatprep.subr.mxu0 0.0
        %1534 = vmatpush1.msra.mxu0 0.0
        %1535 = vmatprep.subr.mxu0 0.0
        %1536 = vmatpush1.msra.mxu0 0.0
        %1537 = vmatprep.subr.mxu0 0.0
        %1538 = vmatpush1.msra.mxu0 0.0
        %1539 = vmatprep.subr.mxu0 0.0
        %1540 = vmatpush1.msra.mxu0 0.0
        %1541 = vmatprep.subr.mxu0 0.0
        %1542 = vmatpush1.msra.mxu0 0.0
        %1543 = vmatprep.subr.mxu0 0.0
        %1544 = vmatpush1.msra.mxu0 0.0
        %1545 = vmatprep.subr.mxu0 0.0
        %1546 = vmatpush1.msra.mxu0 0.0
        %1547 = vmatprep.subr.mxu0 0.0
        %1548 = vmatpush1.msra.mxu0 0.0
        %1549 = vmatprep.subr.mxu0 0.0
        %1550 = vmatpush1.msra.mxu0 0.0
        %1551 = vmatprep.subr.mxu0 0.0
        %1552 = vmatpush1.msra.mxu0 0.0
        %1553 = vmatprep.subr.mxu0 0.0
        %1554 = vmatpush1.msra.mxu0 0.0
        %1555 = vmatprep.subr.mxu0 0.0
        %1556 = vmatpush1.msra.mxu0 0.0
        %1557 = vmatprep.subr.mxu0 0.0
        %1558 = vmatpush1.msra.mxu0 0.0
        %1559 = vmatprep.subr.mxu0 0.0
        %1560 = vmatpush1.msra.mxu0 0.0
        %1561 = vmatprep.subr.mxu0 0.0
        %1562 = vmatpush1.msra.mxu0 0.0
        %1563 = vmatprep.subr.mxu0 0.0
        %1564 = vmatpush1.msra.mxu0 0.0
        %1565 = vmatprep.subr.mxu0 0.0
        %1566 = vmatpush1.msra.mxu0 0.0
        %1567 = vmatprep.subr.mxu0 0.0
        %1568 = vmatpush1.msra.mxu0 0.0
        %1569 = vmatprep.subr.mxu0 0.0
        %1570 = vmatpush1.msra.mxu0 0.0
        %1571 = vmatprep.subr.mxu0 0.0
        %1572 = vmatpush1.msra.mxu0 0.0
        %1573 = vmatprep.subr.mxu0 0.0
        %1574 = vmatpush1.msra.mxu0 0.0
        %1575 = vmatprep.subr.mxu0 0.0
        %1576 = vmatpush1.msra.mxu0 0.0
        %1577 = vmatprep.subr.mxu0 0.0
        %1578 = vmatpush1.msra.mxu0 0.0
        %1579 = vmatprep.mubr.f32.mxu0 0.0
        %1580 = vmatmul.mubr.f32.gmra.mrb[0].mxu0 %v1510
        %v1581 = vpop.f32.mrb[0].mxu0
        %v1582 = vadd.f32 0.0, %v1581
        %v1583 = vpop.f32.mrb[0].mxu0
        %1584 = vmatprep.mubr.f32.mxu0 0.0
        %1585 = vmatmul.mubr.f32.gmra.mrb[0].mxu0 %v1513
        %v1586 = vpop.f32.mrb[0].mxu0
        %v1587 = vadd.f32 0.0, %v1586
        %v1588 = vpop.f32.mrb[0].mxu0
        %1589 = vdwg.mxu0
        %1592 = vrot.lane.b32.xlu0 %v1582, 32
        %v1593 = vpop.permute.xlu0 %1592
        %1594 = vrot.lane.b32.xlu0 %v1587, 32
        %v1595 = vpop.permute.xlu0 %1594
        %vm1598 = vcmask 392448
        %1599 = vst.msk [vmem:[#allocation2] sm:$0xff] %vm1598, %v1593
        %1600 = vst.msk [vmem:[#allocation2 + $0x8] sm:$0xff] %vm1598, %v1595
        %1601 = vrot.lane.b32.xlu0 %v899, 80
        %v1602 = vpop.permute.xlu0 %1601
        %1603 = vrot.lane.b32.xlu0 %v905, 80
        %v1604 = vpop.permute.xlu0 %1603
        %1605 = vrot.lane.b32.xlu0 %v901, 80
        %v1606 = vpop.permute.xlu0 %1605
        %1607 = vrot.lane.b32.xlu0 %v907, 80
        %v1608 = vpop.permute.xlu0 %1607
        %v1609 = vsel %vm984, %v1602, 0
        %v1611 = vsel %vm984, %v1604, 0
        %v1613 = vsel %vm984, %v1606, 0
        %v1615 = vsel %vm984, %v1608, 0
        %1617 = vmatprep.subr.mxu0 0.0
        %1618 = vmatpush1.xpose.msra.mxu0 %v1613
        %1619 = vmatprep.subr.mxu0 0.0
        %1620 = vmatpush1.xpose.msra.mxu0 %v1615
        %1621 = vmatprep.subr.mxu0 0.0
        %1622 = vmatpush1.xpose.msra.mxu0 0.0
        %1623 = vmatprep.subr.mxu0 0.0
        %1624 = vmatpush1.xpose.msra.mxu0 0.0
        %1625 = vmatprep.subr.mxu0 0.0
        %1626 = vmatpush1.xpose.msra.mxu0 0.0
        %1627 = vmatprep.subr.mxu0 0.0
        %1628 = vmatpush1.xpose.msra.mxu0 0.0
        %1629 = vmatprep.subr.mxu0 0.0
        %1630 = vmatpush1.xpose.msra.mxu0 0.0
        %1631 = vmatprep.subr.mxu0 0.0
        %1632 = vmatpush1.xpose.msra.mxu0 0.0
        %1633 = vmatprep.subr.mxu0 0.0
        %1634 = vmatpush1.xpose.msra.mxu0 0.0
        %1635 = vmatprep.subr.mxu0 0.0
        %1636 = vmatpush1.xpose.msra.mxu0 0.0
        %1637 = vmatprep.subr.mxu0 0.0
        %1638 = vmatpush1.xpose.msra.mxu0 0.0
        %1639 = vmatprep.subr.mxu0 0.0
        %1640 = vmatpush1.xpose.msra.mxu0 0.0
        %1641 = vmatprep.subr.mxu0 0.0
        %1642 = vmatpush1.xpose.msra.mxu0 0.0
        %1643 = vmatprep.subr.mxu0 0.0
        %1644 = vmatpush1.xpose.msra.mxu0 0.0
        %1645 = vmatprep.subr.mxu0 0.0
        %1646 = vmatpush1.xpose.msra.mxu0 0.0
        %1647 = vmatprep.subr.mxu0 0.0
        %1648 = vmatpush1.xpose.msra.mxu0 0.0
        %1649 = vmatprep.subr.mxu0 0.0
        %1650 = vmatpush1.xpose.msra.mxu0 0.0
        %1651 = vmatprep.subr.mxu0 0.0
        %1652 = vmatpush1.xpose.msra.mxu0 0.0
        %1653 = vmatprep.subr.mxu0 0.0
        %1654 = vmatpush1.xpose.msra.mxu0 0.0
        %1655 = vmatprep.subr.mxu0 0.0
        %1656 = vmatpush1.xpose.msra.mxu0 0.0
        %1657 = vmatprep.subr.mxu0 0.0
        %1658 = vmatpush1.xpose.msra.mxu0 0.0
        %1659 = vmatprep.subr.mxu0 0.0
        %1660 = vmatpush1.xpose.msra.mxu0 0.0
        %1661 = vmatprep.subr.mxu0 0.0
        %1662 = vmatpush1.xpose.msra.mxu0 0.0
        %1663 = vmatprep.subr.mxu0 0.0
        %1664 = vmatpush1.xpose.msra.mxu0 0.0
        %1665 = vmatprep.subr.mxu0 0.0
        %1666 = vmatpush1.xpose.msra.mxu0 0.0
        %1667 = vmatprep.subr.mxu0 0.0
        %1668 = vmatpush1.xpose.msra.mxu0 0.0
        %1669 = vmatprep.subr.mxu0 0.0
        %1670 = vmatpush1.xpose.msra.mxu0 0.0
        %1671 = vmatprep.subr.mxu0 0.0
        %1672 = vmatpush1.xpose.msra.mxu0 0.0
        %1673 = vmatprep.subr.mxu0 0.0
        %1674 = vmatpush1.xpose.msra.mxu0 0.0
        %1675 = vmatprep.subr.mxu0 0.0
        %1676 = vmatpush1.xpose.msra.mxu0 0.0
        %1677 = vmatprep.subr.mxu0 0.0
        %1678 = vmatpush1.xpose.msra.mxu0 0.0
        %1679 = vmatprep.subr.mxu0 0.0
        %1680 = vmatpush1.xpose.msra.mxu0 0.0
        %1681 = vmatprep.mubr.f32.mxu0 0.0
        %1682 = vmatmul.mubr.f32.gmra.mrb[0].mxu0 %v1609
        %v1683 = vpop.f32.mrb[0].mxu0
        %v1684 = vadd.f32 0.0, %v1683
        %v1685 = vpop.f32.mrb[0].mxu0
        %1686 = vmatprep.mubr.f32.mxu0 0.0
        %1687 = vmatmul.mubr.f32.gmra.mrb[0].mxu0 %v1611
        %v1688 = vpop.f32.mrb[0].mxu0
        %v1689 = vadd.f32 0.0, %v1688
        %v1690 = vpop.f32.mrb[0].mxu0
        %1691 = vdwg.mxu0
        %v1692 = vsel %vm984, %v1684, -inf
        %1693 = vmax.xlane.f32.xlu0 %v1692
        %v1694 = vpop.xlane.xlu0 %1693
        %v1695 = vsel %vm984, %v1689, -inf
        %1696 = vmax.xlane.f32.xlu0 %v1695
        %v1697 = vpop.xlane.xlu0 %1696
        %v1698 = vsub.f32 %v1684, %v1694
        %v1699 = vsub.f32 %v1689, %v1697
        %v1700 = vmul.f32 %v1698, 1.442695
        %v1701 = vpow.pop %v1700
        %v1702 = vmul.f32 %v1699, 1.442695
        %v1703 = vpow.pop %v1702
        %v1704 = vsel %vm984, %v1701, 0.0
        %1705 = vadd.xlane.f32.xlu0 %v1704
        %v1706 = vpop.xlane.xlu0 %1705
        %v1707 = vsel %vm984, %v1703, 0.0
        %1708 = vadd.xlane.f32.xlu0 %v1707
        %v1709 = vpop.xlane.xlu0 %1708
        %v1710 = vrcp.pop %v1706
        %v1711 = vrcp.pop %v1709
        %v1712 = vmul.f32 %v1701, %v1710
        %v1713 = vmul.f32 %v1703, %v1711
        %1714 = vrot.lane.b32.xlu0 %v976, 80
        %v1715 = vpop.permute.xlu0 %1714
        %1716 = vrot.lane.b32.xlu0 %v981, 80
        %v1717 = vpop.permute.xlu0 %1716
        %v1721 = vsel %vm984, %v1712, 0
        %v1724 = vsel %vm984, %v1713, 0
        %1726 = vmatprep.subr.mxu0 0.0
        %1727 = vmatpush1.msra.mxu0 %v1715
        %1728 = vmatprep.subr.mxu0 0.0
        %1729 = vmatpush1.msra.mxu0 %v1717
        %1730 = vmatprep.subr.mxu0 0.0
        %1731 = vmatpush1.msra.mxu0 0.0
        %1732 = vmatprep.subr.mxu0 0.0
        %1733 = vmatpush1.msra.mxu0 0.0
        %1734 = vmatprep.subr.mxu0 0.0
        %1735 = vmatpush1.msra.mxu0 0.0
        %1736 = vmatprep.subr.mxu0 0.0
        %1737 = vmatpush1.msra.mxu0 0.0
        %1738 = vmatprep.subr.mxu0 0.0
        %1739 = vmatpush1.msra.mxu0 0.0
        %1740 = vmatprep.subr.mxu0 0.0
        %1741 = vmatpush1.msra.mxu0 0.0
        %1742 = vmatprep.subr.mxu0 0.0
        %1743 = vmatpush1.msra.mxu0 0.0
        %1744 = vmatprep.subr.mxu0 0.0
        %1745 = vmatpush1.msra.mxu0 0.0
        %1746 = vmatprep.subr.mxu0 0.0
        %1747 = vmatpush1.msra.mxu0 0.0
        %1748 = vmatprep.subr.mxu0 0.0
        %1749 = vmatpush1.msra.mxu0 0.0
        %1750 = vmatprep.subr.mxu0 0.0
        %1751 = vmatpush1.msra.mxu0 0.0
        %1752 = vmatprep.subr.mxu0 0.0
        %1753 = vmatpush1.msra.mxu0 0.0
        %1754 = vmatprep.subr.mxu0 0.0
        %1755 = vmatpush1.msra.mxu0 0.0
        %1756 = vmatprep.subr.mxu0 0.0
        %1757 = vmatpush1.msra.mxu0 0.0
        %1758 = vmatprep.subr.mxu0 0.0
        %1759 = vmatpush1.msra.mxu0 0.0
        %1760 = vmatprep.subr.mxu0 0.0
        %1761 = vmatpush1.msra.mxu0 0.0
        %1762 = vmatprep.subr.mxu0 0.0
        %1763 = vmatpush1.msra.mxu0 0.0
        %1764 = vmatprep.subr.mxu0 0.0
        %1765 = vmatpush1.msra.mxu0 0.0
        %1766 = vmatprep.subr.mxu0 0.0
        %1767 = vmatpush1.msra.mxu0 0.0
        %1768 = vmatprep.subr.mxu0 0.0
        %1769 = vmatpush1.msra.mxu0 0.0
        %1770 = vmatprep.subr.mxu0 0.0
        %1771 = vmatpush1.msra.mxu0 0.0
        %1772 = vmatprep.subr.mxu0 0.0
        %1773 = vmatpush1.msra.mxu0 0.0
        %1774 = vmatprep.subr.mxu0 0.0
        %1775 = vmatpush1.msra.mxu0 0.0
        %1776 = vmatprep.subr.mxu0 0.0
        %1777 = vmatpush1.msra.mxu0 0.0
        %1778 = vmatprep.subr.mxu0 0.0
        %1779 = vmatpush1.msra.mxu0 0.0
        %1780 = vmatprep.subr.mxu0 0.0
        %1781 = vmatpush1.msra.mxu0 0.0
        %1782 = vmatprep.subr.mxu0 0.0
        %1783 = vmatpush1.msra.mxu0 0.0
        %1784 = vmatprep.subr.mxu0 0.0
        %1785 = vmatpush1.msra.mxu0 0.0
        %1786 = vmatprep.subr.mxu0 0.0
        %1787 = vmatpush1.msra.mxu0 0.0
        %1788 = vmatprep.subr.mxu0 0.0
        %1789 = vmatpush1.msra.mxu0 0.0
        %1790 = vmatprep.mubr.f32.mxu0 0.0
        %1791 = vmatmul.mubr.f32.gmra.mrb[0].mxu0 %v1721
        %v1792 = vpop.f32.mrb[0].mxu0
        %v1793 = vadd.f32 0.0, %v1792
        %v1794 = vpop.f32.mrb[0].mxu0
        %1795 = vmatprep.mubr.f32.mxu0 0.0
        %1796 = vmatmul.mubr.f32.gmra.mrb[0].mxu0 %v1724
        %v1797 = vpop.f32.mrb[0].mxu0
        %v1798 = vadd.f32 0.0, %v1797
        %v1799 = vpop.f32.mrb[0].mxu0
        %1800 = vdwg.mxu0
        %1803 = vrot.lane.b32.xlu0 %v1793, 48
        %v1804 = vpop.permute.xlu0 %1803
        %1805 = vrot.lane.b32.xlu0 %v1798, 48
        %v1806 = vpop.permute.xlu0 %1805
        %vm1809 = vcmask 523648
        %1810 = vst.msk [vmem:[#allocation2] sm:$0xff] %vm1809, %v1804
        %1811 = vst.msk [vmem:[#allocation2 + $0x8] sm:$0xff] %vm1809, %v1806
        %1812 = vrot.lane.b32.xlu0 %v899, 64
        %v1813 = vpop.permute.xlu0 %1812
        %1814 = vrot.lane.b32.xlu0 %v905, 64
        %v1815 = vpop.permute.xlu0 %1814
        %1816 = vrot.lane.b32.xlu0 %v901, 64
        %v1817 = vpop.permute.xlu0 %1816
        %1818 = vrot.lane.b32.xlu0 %v907, 64
        %v1819 = vpop.permute.xlu0 %1818
        %v1820 = vsel %vm984, %v1813, 0
        %v1822 = vsel %vm984, %v1815, 0
        %v1824 = vsel %vm984, %v1817, 0
        %v1826 = vsel %vm984, %v1819, 0
        %1828 = vmatprep.subr.mxu0 0.0
        %1829 = vmatpush1.xpose.msra.mxu0 %v1824
        %1830 = vmatprep.subr.mxu0 0.0
        %1831 = vmatpush1.xpose.msra.mxu0 %v1826
        %1832 = vmatprep.subr.mxu0 0.0
        %1833 = vmatpush1.xpose.msra.mxu0 0.0
        %1834 = vmatprep.subr.mxu0 0.0
        %1835 = vmatpush1.xpose.msra.mxu0 0.0
        %1836 = vmatprep.subr.mxu0 0.0
        %1837 = vmatpush1.xpose.msra.mxu0 0.0
        %1838 = vmatprep.subr.mxu0 0.0
        %1839 = vmatpush1.xpose.msra.mxu0 0.0
        %1840 = vmatprep.subr.mxu0 0.0
        %1841 = vmatpush1.xpose.msra.mxu0 0.0
        %1842 = vmatprep.subr.mxu0 0.0
        %1843 = vmatpush1.xpose.msra.mxu0 0.0
        %1844 = vmatprep.subr.mxu0 0.0
        %1845 = vmatpush1.xpose.msra.mxu0 0.0
        %1846 = vmatprep.subr.mxu0 0.0
        %1847 = vmatpush1.xpose.msra.mxu0 0.0
        %1848 = vmatprep.subr.mxu0 0.0
        %1849 = vmatpush1.xpose.msra.mxu0 0.0
        %1850 = vmatprep.subr.mxu0 0.0
        %1851 = vmatpush1.xpose.msra.mxu0 0.0
        %1852 = vmatprep.subr.mxu0 0.0
        %1853 = vmatpush1.xpose.msra.mxu0 0.0
        %1854 = vmatprep.subr.mxu0 0.0
        %1855 = vmatpush1.xpose.msra.mxu0 0.0
        %1856 = vmatprep.subr.mxu0 0.0
        %1857 = vmatpush1.xpose.msra.mxu0 0.0
        %1858 = vmatprep.subr.mxu0 0.0
        %1859 = vmatpush1.xpose.msra.mxu0 0.0
        %1860 = vmatprep.subr.mxu0 0.0
        %1861 = vmatpush1.xpose.msra.mxu0 0.0
        %1862 = vmatprep.subr.mxu0 0.0
        %1863 = vmatpush1.xpose.msra.mxu0 0.0
        %1864 = vmatprep.subr.mxu0 0.0
        %1865 = vmatpush1.xpose.msra.mxu0 0.0
        %1866 = vmatprep.subr.mxu0 0.0
        %1867 = vmatpush1.xpose.msra.mxu0 0.0
        %1868 = vmatprep.subr.mxu0 0.0
        %1869 = vmatpush1.xpose.msra.mxu0 0.0
        %1870 = vmatprep.subr.mxu0 0.0
        %1871 = vmatpush1.xpose.msra.mxu0 0.0
        %1872 = vmatprep.subr.mxu0 0.0
        %1873 = vmatpush1.xpose.msra.mxu0 0.0
        %1874 = vmatprep.subr.mxu0 0.0
        %1875 = vmatpush1.xpose.msra.mxu0 0.0
        %1876 = vmatprep.subr.mxu0 0.0
        %1877 = vmatpush1.xpose.msra.mxu0 0.0
        %1878 = vmatprep.subr.mxu0 0.0
        %1879 = vmatpush1.xpose.msra.mxu0 0.0
        %1880 = vmatprep.subr.mxu0 0.0
        %1881 = vmatpush1.xpose.msra.mxu0 0.0
        %1882 = vmatprep.subr.mxu0 0.0
        %1883 = vmatpush1.xpose.msra.mxu0 0.0
        %1884 = vmatprep.subr.mxu0 0.0
        %1885 = vmatpush1.xpose.msra.mxu0 0.0
        %1886 = vmatprep.subr.mxu0 0.0
        %1887 = vmatpush1.xpose.msra.mxu0 0.0
        %1888 = vmatprep.subr.mxu0 0.0
        %1889 = vmatpush1.xpose.msra.mxu0 0.0
        %1890 = vmatprep.subr.mxu0 0.0
        %1891 = vmatpush1.xpose.msra.mxu0 0.0
        %1892 = vmatprep.mubr.f32.mxu0 0.0
        %1893 = vmatmul.mubr.f32.gmra.mrb[0].mxu0 %v1820
        %v1894 = vpop.f32.mrb[0].mxu0
        %v1895 = vadd.f32 0.0, %v1894
        %v1896 = vpop.f32.mrb[0].mxu0
        %1897 = vmatprep.mubr.f32.mxu0 0.0
        %1898 = vmatmul.mubr.f32.gmra.mrb[0].mxu0 %v1822
        %v1899 = vpop.f32.mrb[0].mxu0
        %v1900 = vadd.f32 0.0, %v1899
        %v1901 = vpop.f32.mrb[0].mxu0
        %1902 = vdwg.mxu0
        %v1903 = vsel %vm984, %v1895, -inf
        %1904 = vmax.xlane.f32.xlu0 %v1903
        %v1905 = vpop.xlane.xlu0 %1904
        %v1906 = vsel %vm984, %v1900, -inf
        %1907 = vmax.xlane.f32.xlu0 %v1906
        %v1908 = vpop.xlane.xlu0 %1907
        %v1909 = vsub.f32 %v1895, %v1905
        %v1910 = vsub.f32 %v1900, %v1908
        %v1911 = vmul.f32 %v1909, 1.442695
        %v1912 = vpow.pop %v1911
        %v1913 = vmul.f32 %v1910, 1.442695
        %v1914 = vpow.pop %v1913
        %v1915 = vsel %vm984, %v1912, 0.0
        %1916 = vadd.xlane.f32.xlu0 %v1915
        %v1917 = vpop.xlane.xlu0 %1916
        %v1918 = vsel %vm984, %v1914, 0.0
        %1919 = vadd.xlane.f32.xlu0 %v1918
        %v1920 = vpop.xlane.xlu0 %1919
        %v1921 = vrcp.pop %v1917
        %v1922 = vrcp.pop %v1920
        %v1923 = vmul.f32 %v1912, %v1921
        %v1924 = vmul.f32 %v1914, %v1922
        %1925 = vrot.lane.b32.xlu0 %v976, 64
        %v1926 = vpop.permute.xlu0 %1925
        %1927 = vrot.lane.b32.xlu0 %v981, 64
        %v1928 = vpop.permute.xlu0 %1927
        %v1932 = vsel %vm984, %v1923, 0
        %v1935 = vsel %vm984, %v1924, 0
        %1937 = vmatprep.subr.mxu0 0.0
        %1938 = vmatpush1.msra.mxu0 %v1926
        %1939 = vmatprep.subr.mxu0 0.0
        %1940 = vmatpush1.msra.mxu0 %v1928
        %1941 = vmatprep.subr.mxu0 0.0
        %1942 = vmatpush1.msra.mxu0 0.0
        %1943 = vmatprep.subr.mxu0 0.0
        %1944 = vmatpush1.msra.mxu0 0.0
        %1945 = vmatprep.subr.mxu0 0.0
        %1946 = vmatpush1.msra.mxu0 0.0
        %1947 = vmatprep.subr.mxu0 0.0
        %1948 = vmatpush1.msra.mxu0 0.0
        %1949 = vmatprep.subr.mxu0 0.0
        %1950 = vmatpush1.msra.mxu0 0.0
        %1951 = vmatprep.subr.mxu0 0.0
        %1952 = vmatpush1.msra.mxu0 0.0
        %1953 = vmatprep.subr.mxu0 0.0
        %1954 = vmatpush1.msra.mxu0 0.0
        %1955 = vmatprep.subr.mxu0 0.0
        %1956 = vmatpush1.msra.mxu0 0.0
        %1957 = vmatprep.subr.mxu0 0.0
        %1958 = vmatpush1.msra.mxu0 0.0
        %1959 = vmatprep.subr.mxu0 0.0
        %1960 = vmatpush1.msra.mxu0 0.0
        %1961 = vmatprep.subr.mxu0 0.0
        %1962 = vmatpush1.msra.mxu0 0.0
        %1963 = vmatprep.subr.mxu0 0.0
        %1964 = vmatpush1.msra.mxu0 0.0
        %1965 = vmatprep.subr.mxu0 0.0
        %1966 = vmatpush1.msra.mxu0 0.0
        %1967 = vmatprep.subr.mxu0 0.0
        %1968 = vmatpush1.msra.mxu0 0.0
        %1969 = vmatprep.subr.mxu0 0.0
        %1970 = vmatpush1.msra.mxu0 0.0
        %1971 = vmatprep.subr.mxu0 0.0
        %1972 = vmatpush1.msra.mxu0 0.0
        %1973 = vmatprep.subr.mxu0 0.0
        %1974 = vmatpush1.msra.mxu0 0.0
        %1975 = vmatprep.subr.mxu0 0.0
        %1976 = vmatpush1.msra.mxu0 0.0
        %1977 = vmatprep.subr.mxu0 0.0
        %1978 = vmatpush1.msra.mxu0 0.0
        %1979 = vmatprep.subr.mxu0 0.0
        %1980 = vmatpush1.msra.mxu0 0.0
        %1981 = vmatprep.subr.mxu0 0.0
        %1982 = vmatpush1.msra.mxu0 0.0
        %1983 = vmatprep.subr.mxu0 0.0
        %1984 = vmatpush1.msra.mxu0 0.0
        %1985 = vmatprep.subr.mxu0 0.0
        %1986 = vmatpush1.msra.mxu0 0.0
        %1987 = vmatprep.subr.mxu0 0.0
        %1988 = vmatpush1.msra.mxu0 0.0
        %1989 = vmatprep.subr.mxu0 0.0
        %1990 = vmatpush1.msra.mxu0 0.0
        %1991 = vmatprep.subr.mxu0 0.0
        %1992 = vmatpush1.msra.mxu0 0.0
        %1993 = vmatprep.subr.mxu0 0.0
        %1994 = vmatpush1.msra.mxu0 0.0
        %1995 = vmatprep.subr.mxu0 0.0
        %1996 = vmatpush1.msra.mxu0 0.0
        %1997 = vmatprep.subr.mxu0 0.0
        %1998 = vmatpush1.msra.mxu0 0.0
        %1999 = vmatprep.subr.mxu0 0.0
        %2000 = vmatpush1.msra.mxu0 0.0
        %2001 = vmatprep.mubr.f32.mxu0 0.0
        %2002 = vmatmul.mubr.f32.gmra.mrb[0].mxu0 %v1932
        %v2003 = vpop.f32.mrb[0].mxu0
        %v2004 = vadd.f32 0.0, %v2003
        %v2005 = vpop.f32.mrb[0].mxu0
        %2006 = vmatprep.mubr.f32.mxu0 0.0
        %2007 = vmatmul.mubr.f32.gmra.mrb[0].mxu0 %v1935
        %v2008 = vpop.f32.mrb[0].mxu0
        %v2009 = vadd.f32 0.0, %v2008
        %v2010 = vpop.f32.mrb[0].mxu0
        %2011 = vdwg.mxu0
        %2014 = vrot.lane.b32.xlu0 %v2004, 64
        %v2015 = vpop.permute.xlu0 %2014
        %2016 = vrot.lane.b32.xlu0 %v2009, 64
        %v2017 = vpop.permute.xlu0 %2016
        %vm2020 = vcmask 654848
        %2021 = vst.msk [vmem:[#allocation2] sm:$0xff] %vm2020, %v2015
        %2022 = vst.msk [vmem:[#allocation2 + $0x8] sm:$0xff] %vm2020, %v2017
        %2023 = vrot.lane.b32.xlu0 %v899, 48
        %v2024 = vpop.permute.xlu0 %2023
        %2025 = vrot.lane.b32.xlu0 %v905, 48
        %v2026 = vpop.permute.xlu0 %2025
        %2027 = vrot.lane.b32.xlu0 %v901, 48
        %v2028 = vpop.permute.xlu0 %2027
        %2029 = vrot.lane.b32.xlu0 %v907, 48
        %v2030 = vpop.permute.xlu0 %2029
        %v2031 = vsel %vm984, %v2024, 0
        %v2033 = vsel %vm984, %v2026, 0
        %v2035 = vsel %vm984, %v2028, 0
        %v2037 = vsel %vm984, %v2030, 0
        %2039 = vmatprep.subr.mxu0 0.0
        %2040 = vmatpush1.xpose.msra.mxu0 %v2035
        %2041 = vmatprep.subr.mxu0 0.0
        %2042 = vmatpush1.xpose.msra.mxu0 %v2037
        %2043 = vmatprep.subr.mxu0 0.0
        %2044 = vmatpush1.xpose.msra.mxu0 0.0
        %2045 = vmatprep.subr.mxu0 0.0
        %2046 = vmatpush1.xpose.msra.mxu0 0.0
        %2047 = vmatprep.subr.mxu0 0.0
        %2048 = vmatpush1.xpose.msra.mxu0 0.0
        %2049 = vmatprep.subr.mxu0 0.0
        %2050 = vmatpush1.xpose.msra.mxu0 0.0
        %2051 = vmatprep.subr.mxu0 0.0
        %2052 = vmatpush1.xpose.msra.mxu0 0.0
        %2053 = vmatprep.subr.mxu0 0.0
        %2054 = vmatpush1.xpose.msra.mxu0 0.0
        %2055 = vmatprep.subr.mxu0 0.0
        %2056 = vmatpush1.xpose.msra.mxu0 0.0
        %2057 = vmatprep.subr.mxu0 0.0
        %2058 = vmatpush1.xpose.msra.mxu0 0.0
        %2059 = vmatprep.subr.mxu0 0.0
        %2060 = vmatpush1.xpose.msra.mxu0 0.0
        %2061 = vmatprep.subr.mxu0 0.0
        %2062 = vmatpush1.xpose.msra.mxu0 0.0
        %2063 = vmatprep.subr.mxu0 0.0
        %2064 = vmatpush1.xpose.msra.mxu0 0.0
        %2065 = vmatprep.subr.mxu0 0.0
        %2066 = vmatpush1.xpose.msra.mxu0 0.0
        %2067 = vmatprep.subr.mxu0 0.0
        %2068 = vmatpush1.xpose.msra.mxu0 0.0
        %2069 = vmatprep.subr.mxu0 0.0
        %2070 = vmatpush1.xpose.msra.mxu0 0.0
        %2071 = vmatprep.subr.mxu0 0.0
        %2072 = vmatpush1.xpose.msra.mxu0 0.0
        %2073 = vmatprep.subr.mxu0 0.0
        %2074 = vmatpush1.xpose.msra.mxu0 0.0
        %2075 = vmatprep.subr.mxu0 0.0
        %2076 = vmatpush1.xpose.msra.mxu0 0.0
        %2077 = vmatprep.subr.mxu0 0.0
        %2078 = vmatpush1.xpose.msra.mxu0 0.0
        %2079 = vmatprep.subr.mxu0 0.0
        %2080 = vmatpush1.xpose.msra.mxu0 0.0
        %2081 = vmatprep.subr.mxu0 0.0
        %2082 = vmatpush1.xpose.msra.mxu0 0.0
        %2083 = vmatprep.subr.mxu0 0.0
        %2084 = vmatpush1.xpose.msra.mxu0 0.0
        %2085 = vmatprep.subr.mxu0 0.0
        %2086 = vmatpush1.xpose.msra.mxu0 0.0
        %2087 = vmatprep.subr.mxu0 0.0
        %2088 = vmatpush1.xpose.msra.mxu0 0.0
        %2089 = vmatprep.subr.mxu0 0.0
        %2090 = vmatpush1.xpose.msra.mxu0 0.0
        %2091 = vmatprep.subr.mxu0 0.0
        %2092 = vmatpush1.xpose.msra.mxu0 0.0
        %2093 = vmatprep.subr.mxu0 0.0
        %2094 = vmatpush1.xpose.msra.mxu0 0.0
        %2095 = vmatprep.subr.mxu0 0.0
        %2096 = vmatpush1.xpose.msra.mxu0 0.0
        %2097 = vmatprep.subr.mxu0 0.0
        %2098 = vmatpush1.xpose.msra.mxu0 0.0
        %2099 = vmatprep.subr.mxu0 0.0
        %2100 = vmatpush1.xpose.msra.mxu0 0.0
        %2101 = vmatprep.subr.mxu0 0.0
        %2102 = vmatpush1.xpose.msra.mxu0 0.0
        %2103 = vmatprep.mubr.f32.mxu0 0.0
        %2104 = vmatmul.mubr.f32.gmra.mrb[0].mxu0 %v2031
        %v2105 = vpop.f32.mrb[0].mxu0
        %v2106 = vadd.f32 0.0, %v2105
        %v2107 = vpop.f32.mrb[0].mxu0
        %2108 = vmatprep.mubr.f32.mxu0 0.0
        %2109 = vmatmul.mubr.f32.gmra.mrb[0].mxu0 %v2033
        %v2110 = vpop.f32.mrb[0].mxu0
        %v2111 = vadd.f32 0.0, %v2110
        %v2112 = vpop.f32.mrb[0].mxu0
        %2113 = vdwg.mxu0
        %v2114 = vsel %vm984, %v2106, -inf
        %2115 = vmax.xlane.f32.xlu0 %v2114
        %v2116 = vpop.xlane.xlu0 %2115
        %v2117 = vsel %vm984, %v2111, -inf
        %2118 = vmax.xlane.f32.xlu0 %v2117
        %v2119 = vpop.xlane.xlu0 %2118
        %v2120 = vsub.f32 %v2106, %v2116
        %v2121 = vsub.f32 %v2111, %v2119
        %v2122 = vmul.f32 %v2120, 1.442695
        %v2123 = vpow.pop %v2122
        %v2124 = vmul.f32 %v2121, 1.442695
        %v2125 = vpow.pop %v2124
        %v2126 = vsel %vm984, %v2123, 0.0
        %2127 = vadd.xlane.f32.xlu0 %v2126
        %v2128 = vpop.xlane.xlu0 %2127
        %v2129 = vsel %vm984, %v2125, 0.0
        %2130 = vadd.xlane.f32.xlu0 %v2129
        %v2131 = vpop.xlane.xlu0 %2130
        %v2132 = vrcp.pop %v2128
        %v2133 = vrcp.pop %v2131
        %v2134 = vmul.f32 %v2123, %v2132
        %v2135 = vmul.f32 %v2125, %v2133
        %2136 = vrot.lane.b32.xlu0 %v976, 48
        %v2137 = vpop.permute.xlu0 %2136
        %2138 = vrot.lane.b32.xlu0 %v981, 48
        %v2139 = vpop.permute.xlu0 %2138
        %v2143 = vsel %vm984, %v2134, 0
        %v2146 = vsel %vm984, %v2135, 0
        %2148 = vmatprep.subr.mxu0 0.0
        %2149 = vmatpush1.msra.mxu0 %v2137
        %2150 = vmatprep.subr.mxu0 0.0
        %2151 = vmatpush1.msra.mxu0 %v2139
        %2152 = vmatprep.subr.mxu0 0.0
        %2153 = vmatpush1.msra.mxu0 0.0
        %2154 = vmatprep.subr.mxu0 0.0
        %2155 = vmatpush1.msra.mxu0 0.0
        %2156 = vmatprep.subr.mxu0 0.0
        %2157 = vmatpush1.msra.mxu0 0.0
        %2158 = vmatprep.subr.mxu0 0.0
        %2159 = vmatpush1.msra.mxu0 0.0
        %2160 = vmatprep.subr.mxu0 0.0
        %2161 = vmatpush1.msra.mxu0 0.0
        %2162 = vmatprep.subr.mxu0 0.0
        %2163 = vmatpush1.msra.mxu0 0.0
        %2164 = vmatprep.subr.mxu0 0.0
        %2165 = vmatpush1.msra.mxu0 0.0
        %2166 = vmatprep.subr.mxu0 0.0
        %2167 = vmatpush1.msra.mxu0 0.0
        %2168 = vmatprep.subr.mxu0 0.0
        %2169 = vmatpush1.msra.mxu0 0.0
        %2170 = vmatprep.subr.mxu0 0.0
        %2171 = vmatpush1.msra.mxu0 0.0
        %2172 = vmatprep.subr.mxu0 0.0
        %2173 = vmatpush1.msra.mxu0 0.0
        %2174 = vmatprep.subr.mxu0 0.0
        %2175 = vmatpush1.msra.mxu0 0.0
        %2176 = vmatprep.subr.mxu0 0.0
        %2177 = vmatpush1.msra.mxu0 0.0
        %2178 = vmatprep.subr.mxu0 0.0
        %2179 = vmatpush1.msra.mxu0 0.0
        %2180 = vmatprep.subr.mxu0 0.0
        %2181 = vmatpush1.msra.mxu0 0.0
        %2182 = vmatprep.subr.mxu0 0.0
        %2183 = vmatpush1.msra.mxu0 0.0
        %2184 = vmatprep.subr.mxu0 0.0
        %2185 = vmatpush1.msra.mxu0 0.0
        %2186 = vmatprep.subr.mxu0 0.0
        %2187 = vmatpush1.msra.mxu0 0.0
        %2188 = vmatprep.subr.mxu0 0.0
        %2189 = vmatpush1.msra.mxu0 0.0
        %2190 = vmatprep.subr.mxu0 0.0
        %2191 = vmatpush1.msra.mxu0 0.0
        %2192 = vmatprep.subr.mxu0 0.0
        %2193 = vmatpush1.msra.mxu0 0.0
        %2194 = vmatprep.subr.mxu0 0.0
        %2195 = vmatpush1.msra.mxu0 0.0
        %2196 = vmatprep.subr.mxu0 0.0
        %2197 = vmatpush1.msra.mxu0 0.0
        %2198 = vmatprep.subr.mxu0 0.0
        %2199 = vmatpush1.msra.mxu0 0.0
        %2200 = vmatprep.subr.mxu0 0.0
        %2201 = vmatpush1.msra.mxu0 0.0
        %2202 = vmatprep.subr.mxu0 0.0
        %2203 = vmatpush1.msra.mxu0 0.0
        %2204 = vmatprep.subr.mxu0 0.0
        %2205 = vmatpush1.msra.mxu0 0.0
        %2206 = vmatprep.subr.mxu0 0.0
        %2207 = vmatpush1.msra.mxu0 0.0
        %2208 = vmatprep.subr.mxu0 0.0
        %2209 = vmatpush1.msra.mxu0 0.0
        %2210 = vmatprep.subr.mxu0 0.0
        %2211 = vmatpush1.msra.mxu0 0.0
        %2212 = vmatprep.mubr.f32.mxu0 0.0
        %2213 = vmatmul.mubr.f32.gmra.mrb[0].mxu0 %v2143
        %v2214 = vpop.f32.mrb[0].mxu0
        %v2215 = vadd.f32 0.0, %v2214
        %v2216 = vpop.f32.mrb[0].mxu0
        %2217 = vmatprep.mubr.f32.mxu0 0.0
        %2218 = vmatmul.mubr.f32.gmra.mrb[0].mxu0 %v2146
        %v2219 = vpop.f32.mrb[0].mxu0
        %v2220 = vadd.f32 0.0, %v2219
        %v2221 = vpop.f32.mrb[0].mxu0
        %2222 = vdwg.mxu0
        %2225 = vrot.lane.b32.xlu0 %v2215, 80
        %v2226 = vpop.permute.xlu0 %2225
        %2227 = vrot.lane.b32.xlu0 %v2220, 80
        %v2228 = vpop.permute.xlu0 %2227
        %vm2231 = vcmask 786048
        %2232 = vst.msk [vmem:[#allocation2] sm:$0xff] %vm2231, %v2226
        %2233 = vst.msk [vmem:[#allocation2 + $0x8] sm:$0xff] %vm2231, %v2228
        %2234 = vrot.lane.b32.xlu0 %v899, 32
        %v2235 = vpop.permute.xlu0 %2234
        %2236 = vrot.lane.b32.xlu0 %v905, 32
        %v2237 = vpop.permute.xlu0 %2236
        %2238 = vrot.lane.b32.xlu0 %v901, 32
        %v2239 = vpop.permute.xlu0 %2238
        %2240 = vrot.lane.b32.xlu0 %v907, 32
        %v2241 = vpop.permute.xlu0 %2240
        %v2242 = vsel %vm984, %v2235, 0
        %v2244 = vsel %vm984, %v2237, 0
        %v2246 = vsel %vm984, %v2239, 0
        %v2248 = vsel %vm984, %v2241, 0
        %2250 = vmatprep.subr.mxu0 0.0
        %2251 = vmatpush1.xpose.msra.mxu0 %v2246
        %2252 = vmatprep.subr.mxu0 0.0
        %2253 = vmatpush1.xpose.msra.mxu0 %v2248
        %2254 = vmatprep.subr.mxu0 0.0
        %2255 = vmatpush1.xpose.msra.mxu0 0.0
        %2256 = vmatprep.subr.mxu0 0.0
        %2257 = vmatpush1.xpose.msra.mxu0 0.0
        %2258 = vmatprep.subr.mxu0 0.0
        %2259 = vmatpush1.xpose.msra.mxu0 0.0
        %2260 = vmatprep.subr.mxu0 0.0
        %2261 = vmatpush1.xpose.msra.mxu0 0.0
        %2262 = vmatprep.subr.mxu0 0.0
        %2263 = vmatpush1.xpose.msra.mxu0 0.0
        %2264 = vmatprep.subr.mxu0 0.0
        %2265 = vmatpush1.xpose.msra.mxu0 0.0
        %2266 = vmatprep.subr.mxu0 0.0
        %2267 = vmatpush1.xpose.msra.mxu0 0.0
        %2268 = vmatprep.subr.mxu0 0.0
        %2269 = vmatpush1.xpose.msra.mxu0 0.0
        %2270 = vmatprep.subr.mxu0 0.0
        %2271 = vmatpush1.xpose.msra.mxu0 0.0
        %2272 = vmatprep.subr.mxu0 0.0
        %2273 = vmatpush1.xpose.msra.mxu0 0.0
        %2274 = vmatprep.subr.mxu0 0.0
        %2275 = vmatpush1.xpose.msra.mxu0 0.0
        %2276 = vmatprep.subr.mxu0 0.0
        %2277 = vmatpush1.xpose.msra.mxu0 0.0
        %2278 = vmatprep.subr.mxu0 0.0
        %2279 = vmatpush1.xpose.msra.mxu0 0.0
        %2280 = vmatprep.subr.mxu0 0.0
        %2281 = vmatpush1.xpose.msra.mxu0 0.0
        %2282 = vmatprep.subr.mxu0 0.0
        %2283 = vmatpush1.xpose.msra.mxu0 0.0
        %2284 = vmatprep.subr.mxu0 0.0
        %2285 = vmatpush1.xpose.msra.mxu0 0.0
        %2286 = vmatprep.subr.mxu0 0.0
        %2287 = vmatpush1.xpose.msra.mxu0 0.0
        %2288 = vmatprep.subr.mxu0 0.0
        %2289 = vmatpush1.xpose.msra.mxu0 0.0
        %2290 = vmatprep.subr.mxu0 0.0
        %2291 = vmatpush1.xpose.msra.mxu0 0.0
        %2292 = vmatprep.subr.mxu0 0.0
        %2293 = vmatpush1.xpose.msra.mxu0 0.0
        %2294 = vmatprep.subr.mxu0 0.0
        %2295 = vmatpush1.xpose.msra.mxu0 0.0
        %2296 = vmatprep.subr.mxu0 0.0
        %2297 = vmatpush1.xpose.msra.mxu0 0.0
        %2298 = vmatprep.subr.mxu0 0.0
        %2299 = vmatpush1.xpose.msra.mxu0 0.0
        %2300 = vmatprep.subr.mxu0 0.0
        %2301 = vmatpush1.xpose.msra.mxu0 0.0
        %2302 = vmatprep.subr.mxu0 0.0
        %2303 = vmatpush1.xpose.msra.mxu0 0.0
        %2304 = vmatprep.subr.mxu0 0.0
        %2305 = vmatpush1.xpose.msra.mxu0 0.0
        %2306 = vmatprep.subr.mxu0 0.0
        %2307 = vmatpush1.xpose.msra.mxu0 0.0
        %2308 = vmatprep.subr.mxu0 0.0
        %2309 = vmatpush1.xpose.msra.mxu0 0.0
        %2310 = vmatprep.subr.mxu0 0.0
        %2311 = vmatpush1.xpose.msra.mxu0 0.0
        %2312 = vmatprep.subr.mxu0 0.0
        %2313 = vmatpush1.xpose.msra.mxu0 0.0
        %2314 = vmatprep.mubr.f32.mxu0 0.0
        %2315 = vmatmul.mubr.f32.gmra.mrb[0].mxu0 %v2242
        %v2316 = vpop.f32.mrb[0].mxu0
        %v2317 = vadd.f32 0.0, %v2316
        %v2318 = vpop.f32.mrb[0].mxu0
        %2319 = vmatprep.mubr.f32.mxu0 0.0
        %2320 = vmatmul.mubr.f32.gmra.mrb[0].mxu0 %v2244
        %v2321 = vpop.f32.mrb[0].mxu0
        %v2322 = vadd.f32 0.0, %v2321
        %v2323 = vpop.f32.mrb[0].mxu0
        %2324 = vdwg.mxu0
        %v2325 = vsel %vm984, %v2317, -inf
        %2326 = vmax.xlane.f32.xlu0 %v2325
        %v2327 = vpop.xlane.xlu0 %2326
        %v2328 = vsel %vm984, %v2322, -inf
        %2329 = vmax.xlane.f32.xlu0 %v2328
        %v2330 = vpop.xlane.xlu0 %2329
        %v2331 = vsub.f32 %v2317, %v2327
        %v2332 = vsub.f32 %v2322, %v2330
        %v2333 = vmul.f32 %v2331, 1.442695
        %v2334 = vpow.pop %v2333
        %v2335 = vmul.f32 %v2332, 1.442695
        %v2336 = vpow.pop %v2335
        %v2337 = vsel %vm984, %v2334, 0.0
        %2338 = vadd.xlane.f32.xlu0 %v2337
        %v2339 = vpop.xlane.xlu0 %2338
        %v2340 = vsel %vm984, %v2336, 0.0
        %2341 = vadd.xlane.f32.xlu0 %v2340
        %v2342 = vpop.xlane.xlu0 %2341
        %v2343 = vrcp.pop %v2339
        %v2344 = vrcp.pop %v2342
        %v2345 = vmul.f32 %v2334, %v2343
        %v2346 = vmul.f32 %v2336, %v2344
        %2347 = vrot.lane.b32.xlu0 %v976, 32
        %v2348 = vpop.permute.xlu0 %2347
        %2349 = vrot.lane.b32.xlu0 %v981, 32
        %v2350 = vpop.permute.xlu0 %2349
        %v2354 = vsel %vm984, %v2345, 0
        %v2357 = vsel %vm984, %v2346, 0
        %2359 = vmatprep.subr.mxu0 0.0
        %2360 = vmatpush1.msra.mxu0 %v2348
        %2361 = vmatprep.subr.mxu0 0.0
        %2362 = vmatpush1.msra.mxu0 %v2350
        %2363 = vmatprep.subr.mxu0 0.0
        %2364 = vmatpush1.msra.mxu0 0.0
        %2365 = vmatprep.subr.mxu0 0.0
        %2366 = vmatpush1.msra.mxu0 0.0
        %2367 = vmatprep.subr.mxu0 0.0
        %2368 = vmatpush1.msra.mxu0 0.0
        %2369 = vmatprep.subr.mxu0 0.0
        %2370 = vmatpush1.msra.mxu0 0.0
        %2371 = vmatprep.subr.mxu0 0.0
        %2372 = vmatpush1.msra.mxu0 0.0
        %2373 = vmatprep.subr.mxu0 0.0
        %2374 = vmatpush1.msra.mxu0 0.0
        %2375 = vmatprep.subr.mxu0 0.0
        %2376 = vmatpush1.msra.mxu0 0.0
        %2377 = vmatprep.subr.mxu0 0.0
        %2378 = vmatpush1.msra.mxu0 0.0
        %2379 = vmatprep.subr.mxu0 0.0
        %2380 = vmatpush1.msra.mxu0 0.0
        %2381 = vmatprep.subr.mxu0 0.0
        %2382 = vmatpush1.msra.mxu0 0.0
        %2383 = vmatprep.subr.mxu0 0.0
        %2384 = vmatpush1.msra.mxu0 0.0
        %2385 = vmatprep.subr.mxu0 0.0
        %2386 = vmatpush1.msra.mxu0 0.0
        %2387 = vmatprep.subr.mxu0 0.0
        %2388 = vmatpush1.msra.mxu0 0.0
        %2389 = vmatprep.subr.mxu0 0.0
        %2390 = vmatpush1.msra.mxu0 0.0
        %2391 = vmatprep.subr.mxu0 0.0
        %2392 = vmatpush1.msra.mxu0 0.0
        %2393 = vmatprep.subr.mxu0 0.0
        %2394 = vmatpush1.msra.mxu0 0.0
        %2395 = vmatprep.subr.mxu0 0.0
        %2396 = vmatpush1.msra.mxu0 0.0
        %2397 = vmatprep.subr.mxu0 0.0
        %2398 = vmatpush1.msra.mxu0 0.0
        %2399 = vmatprep.subr.mxu0 0.0
        %2400 = vmatpush1.msra.mxu0 0.0
        %2401 = vmatprep.subr.mxu0 0.0
        %2402 = vmatpush1.msra.mxu0 0.0
        %2403 = vmatprep.subr.mxu0 0.0
        %2404 = vmatpush1.msra.mxu0 0.0
        %2405 = vmatprep.subr.mxu0 0.0
        %2406 = vmatpush1.msra.mxu0 0.0
        %2407 = vmatprep.subr.mxu0 0.0
        %2408 = vmatpush1.msra.mxu0 0.0
        %2409 = vmatprep.subr.mxu0 0.0
        %2410 = vmatpush1.msra.mxu0 0.0
        %2411 = vmatprep.subr.mxu0 0.0
        %2412 = vmatpush1.msra.mxu0 0.0
        %2413 = vmatprep.subr.mxu0 0.0
        %2414 = vmatpush1.msra.mxu0 0.0
        %2415 = vmatprep.subr.mxu0 0.0
        %2416 = vmatpush1.msra.mxu0 0.0
        %2417 = vmatprep.subr.mxu0 0.0
        %2418 = vmatpush1.msra.mxu0 0.0
        %2419 = vmatprep.subr.mxu0 0.0
        %2420 = vmatpush1.msra.mxu0 0.0
        %2421 = vmatprep.subr.mxu0 0.0
        %2422 = vmatpush1.msra.mxu0 0.0
        %2423 = vmatprep.mubr.f32.mxu0 0.0
        %2424 = vmatmul.mubr.f32.gmra.mrb[0].mxu0 %v2354
        %v2425 = vpop.f32.mrb[0].mxu0
        %v2426 = vadd.f32 0.0, %v2425
        %v2427 = vpop.f32.mrb[0].mxu0
        %2428 = vmatprep.mubr.f32.mxu0 0.0
        %2429 = vmatmul.mubr.f32.gmra.mrb[0].mxu0 %v2357
        %v2430 = vpop.f32.mrb[0].mxu0
        %v2431 = vadd.f32 0.0, %v2430
        %v2432 = vpop.f32.mrb[0].mxu0
        %2433 = vdwg.mxu0
        %2436 = vrot.lane.b32.xlu0 %v2426, 96
        %v2437 = vpop.permute.xlu0 %2436
        %2438 = vrot.lane.b32.xlu0 %v2431, 96
        %v2439 = vpop.permute.xlu0 %2438
        %vm2442 = vcmask 917248
        %2443 = vst.msk [vmem:[#allocation2] sm:$0xff] %vm2442, %v2437
        %2444 = vst.msk [vmem:[#allocation2 + $0x8] sm:$0xff] %vm2442, %v2439
        %2445 = vrot.lane.b32.xlu0 %v899, 16
        %v2446 = vpop.permute.xlu0 %2445
        %2447 = vrot.lane.b32.xlu0 %v905, 16
        %v2448 = vpop.permute.xlu0 %2447
        %2449 = vrot.lane.b32.xlu0 %v901, 16
        %v2450 = vpop.permute.xlu0 %2449
        %2451 = vrot.lane.b32.xlu0 %v907, 16
        %v2452 = vpop.permute.xlu0 %2451
        %v2453 = vsel %vm984, %v2446, 0
        %v2455 = vsel %vm984, %v2448, 0
        %v2457 = vsel %vm984, %v2450, 0
        %v2459 = vsel %vm984, %v2452, 0
        %2461 = vmatprep.subr.mxu0 0.0
        %2462 = vmatpush1.xpose.msra.mxu0 %v2457
        %2463 = vmatprep.subr.mxu0 0.0
        %2464 = vmatpush1.xpose.msra.mxu0 %v2459
        %2465 = vmatprep.subr.mxu0 0.0
        %2466 = vmatpush1.xpose.msra.mxu0 0.0
        %2467 = vmatprep.subr.mxu0 0.0
        %2468 = vmatpush1.xpose.msra.mxu0 0.0
        %2469 = vmatprep.subr.mxu0 0.0
        %2470 = vmatpush1.xpose.msra.mxu0 0.0
        %2471 = vmatprep.subr.mxu0 0.0
        %2472 = vmatpush1.xpose.msra.mxu0 0.0
        %2473 = vmatprep.subr.mxu0 0.0
        %2474 = vmatpush1.xpose.msra.mxu0 0.0
        %2475 = vmatprep.subr.mxu0 0.0
        %2476 = vmatpush1.xpose.msra.mxu0 0.0
        %2477 = vmatprep.subr.mxu0 0.0
        %2478 = vmatpush1.xpose.msra.mxu0 0.0
        %2479 = vmatprep.subr.mxu0 0.0
        %2480 = vmatpush1.xpose.msra.mxu0 0.0
        %2481 = vmatprep.subr.mxu0 0.0
        %2482 = vmatpush1.xpose.msra.mxu0 0.0
        %2483 = vmatprep.subr.mxu0 0.0
        %2484 = vmatpush1.xpose.msra.mxu0 0.0
        %2485 = vmatprep.subr.mxu0 0.0
        %2486 = vmatpush1.xpose.msra.mxu0 0.0
        %2487 = vmatprep.subr.mxu0 0.0
        %2488 = vmatpush1.xpose.msra.mxu0 0.0
        %2489 = vmatprep.subr.mxu0 0.0
        %2490 = vmatpush1.xpose.msra.mxu0 0.0
        %2491 = vmatprep.subr.mxu0 0.0
        %2492 = vmatpush1.xpose.msra.mxu0 0.0
        %2493 = vmatprep.subr.mxu0 0.0
        %2494 = vmatpush1.xpose.msra.mxu0 0.0
        %2495 = vmatprep.subr.mxu0 0.0
        %2496 = vmatpush1.xpose.msra.mxu0 0.0
        %2497 = vmatprep.subr.mxu0 0.0
        %2498 = vmatpush1.xpose.msra.mxu0 0.0
        %2499 = vmatprep.subr.mxu0 0.0
        %2500 = vmatpush1.xpose.msra.mxu0 0.0
        %2501 = vmatprep.subr.mxu0 0.0
        %2502 = vmatpush1.xpose.msra.mxu0 0.0
        %2503 = vmatprep.subr.mxu0 0.0
        %2504 = vmatpush1.xpose.msra.mxu0 0.0
        %2505 = vmatprep.subr.mxu0 0.0
        %2506 = vmatpush1.xpose.msra.mxu0 0.0
        %2507 = vmatprep.subr.mxu0 0.0
        %2508 = vmatpush1.xpose.msra.mxu0 0.0
        %2509 = vmatprep.subr.mxu0 0.0
        %2510 = vmatpush1.xpose.msra.mxu0 0.0
        %2511 = vmatprep.subr.mxu0 0.0
        %2512 = vmatpush1.xpose.msra.mxu0 0.0
        %2513 = vmatprep.subr.mxu0 0.0
        %2514 = vmatpush1.xpose.msra.mxu0 0.0
        %2515 = vmatprep.subr.mxu0 0.0
        %2516 = vmatpush1.xpose.msra.mxu0 0.0
        %2517 = vmatprep.subr.mxu0 0.0
        %2518 = vmatpush1.xpose.msra.mxu0 0.0
        %2519 = vmatprep.subr.mxu0 0.0
        %2520 = vmatpush1.xpose.msra.mxu0 0.0
        %2521 = vmatprep.subr.mxu0 0.0
        %2522 = vmatpush1.xpose.msra.mxu0 0.0
        %2523 = vmatprep.subr.mxu0 0.0
        %2524 = vmatpush1.xpose.msra.mxu0 0.0
        %2525 = vmatprep.mubr.f32.mxu0 0.0
        %2526 = vmatmul.mubr.f32.gmra.mrb[0].mxu0 %v2453
        %v2527 = vpop.f32.mrb[0].mxu0
        %v2528 = vadd.f32 0.0, %v2527
        %v2529 = vpop.f32.mrb[0].mxu0
        %2530 = vmatprep.mubr.f32.mxu0 0.0
        %2531 = vmatmul.mubr.f32.gmra.mrb[0].mxu0 %v2455
        %v2532 = vpop.f32.mrb[0].mxu0
        %v2533 = vadd.f32 0.0, %v2532
        %v2534 = vpop.f32.mrb[0].mxu0
        %2535 = vdwg.mxu0
        %v2536 = vsel %vm984, %v2528, -inf
        %2537 = vmax.xlane.f32.xlu0 %v2536
        %v2538 = vpop.xlane.xlu0 %2537
        %v2539 = vsel %vm984, %v2533, -inf
        %2540 = vmax.xlane.f32.xlu0 %v2539
        %v2541 = vpop.xlane.xlu0 %2540
        %v2542 = vsub.f32 %v2528, %v2538
        %v2543 = vsub.f32 %v2533, %v2541
        %v2544 = vmul.f32 %v2542, 1.442695
        %v2545 = vpow.pop %v2544
        %v2546 = vmul.f32 %v2543, 1.442695
        %v2547 = vpow.pop %v2546
        %v2548 = vsel %vm984, %v2545, 0.0
        %2549 = vadd.xlane.f32.xlu0 %v2548
        %v2550 = vpop.xlane.xlu0 %2549
        %v2551 = vsel %vm984, %v2547, 0.0
        %2552 = vadd.xlane.f32.xlu0 %v2551
        %v2553 = vpop.xlane.xlu0 %2552
        %v2554 = vrcp.pop %v2550
        %v2555 = vrcp.pop %v2553
        %v2556 = vmul.f32 %v2545, %v2554
        %v2557 = vmul.f32 %v2547, %v2555
        %2558 = vrot.lane.b32.xlu0 %v976, 16
        %v2559 = vpop.permute.xlu0 %2558
        %2560 = vrot.lane.b32.xlu0 %v981, 16
        %v2561 = vpop.permute.xlu0 %2560
        %v2565 = vsel %vm984, %v2556, 0
        %v2568 = vsel %vm984, %v2557, 0
        %2570 = vmatprep.subr.mxu0 0.0
        %2571 = vmatpush1.msra.mxu0 %v2559
        %2572 = vmatprep.subr.mxu0 0.0
        %2573 = vmatpush1.msra.mxu0 %v2561
        %2574 = vmatprep.subr.mxu0 0.0
        %2575 = vmatpush1.msra.mxu0 0.0
        %2576 = vmatprep.subr.mxu0 0.0
        %2577 = vmatpush1.msra.mxu0 0.0
        %2578 = vmatprep.subr.mxu0 0.0
        %2579 = vmatpush1.msra.mxu0 0.0
        %2580 = vmatprep.subr.mxu0 0.0
        %2581 = vmatpush1.msra.mxu0 0.0
        %2582 = vmatprep.subr.mxu0 0.0
        %2583 = vmatpush1.msra.mxu0 0.0
        %2584 = vmatprep.subr.mxu0 0.0
        %2585 = vmatpush1.msra.mxu0 0.0
        %2586 = vmatprep.subr.mxu0 0.0
        %2587 = vmatpush1.msra.mxu0 0.0
        %2588 = vmatprep.subr.mxu0 0.0
        %2589 = vmatpush1.msra.mxu0 0.0
        %2590 = vmatprep.subr.mxu0 0.0
        %2591 = vmatpush1.msra.mxu0 0.0
        %2592 = vmatprep.subr.mxu0 0.0
        %2593 = vmatpush1.msra.mxu0 0.0
        %2594 = vmatprep.subr.mxu0 0.0
        %2595 = vmatpush1.msra.mxu0 0.0
        %2596 = vmatprep.subr.mxu0 0.0
        %2597 = vmatpush1.msra.mxu0 0.0
        %2598 = vmatprep.subr.mxu0 0.0
        %2599 = vmatpush1.msra.mxu0 0.0
        %2600 = vmatprep.subr.mxu0 0.0
        %2601 = vmatpush1.msra.mxu0 0.0
        %2602 = vmatprep.subr.mxu0 0.0
        %2603 = vmatpush1.msra.mxu0 0.0
        %2604 = vmatprep.subr.mxu0 0.0
        %2605 = vmatpush1.msra.mxu0 0.0
        %2606 = vmatprep.subr.mxu0 0.0
        %2607 = vmatpush1.msra.mxu0 0.0
        %2608 = vmatprep.subr.mxu0 0.0
        %2609 = vmatpush1.msra.mxu0 0.0
        %2610 = vmatprep.subr.mxu0 0.0
        %2611 = vmatpush1.msra.mxu0 0.0
        %2612 = vmatprep.subr.mxu0 0.0
        %2613 = vmatpush1.msra.mxu0 0.0
        %2614 = vmatprep.subr.mxu0 0.0
        %2615 = vmatpush1.msra.mxu0 0.0
        %2616 = vmatprep.subr.mxu0 0.0
        %2617 = vmatpush1.msra.mxu0 0.0
        %2618 = vmatprep.subr.mxu0 0.0
        %2619 = vmatpush1.msra.mxu0 0.0
        %2620 = vmatprep.subr.mxu0 0.0
        %2621 = vmatpush1.msra.mxu0 0.0
        %2622 = vmatprep.subr.mxu0 0.0
        %2623 = vmatpush1.msra.mxu0 0.0
        %2624 = vmatprep.subr.mxu0 0.0
        %2625 = vmatpush1.msra.mxu0 0.0
        %2626 = vmatprep.subr.mxu0 0.0
        %2627 = vmatpush1.msra.mxu0 0.0
        %2628 = vmatprep.subr.mxu0 0.0
        %2629 = vmatpush1.msra.mxu0 0.0
        %2630 = vmatprep.subr.mxu0 0.0
        %2631 = vmatpush1.msra.mxu0 0.0
        %2632 = vmatprep.subr.mxu0 0.0
        %2633 = vmatpush1.msra.mxu0 0.0
        %2634 = vmatprep.mubr.f32.mxu0 0.0
        %2635 = vmatmul.mubr.f32.gmra.mrb[0].mxu0 %v2565
        %v2636 = vpop.f32.mrb[0].mxu0
        %v2637 = vadd.f32 0.0, %v2636
        %v2638 = vpop.f32.mrb[0].mxu0
        %2639 = vmatprep.mubr.f32.mxu0 0.0
        %2640 = vmatmul.mubr.f32.gmra.mrb[0].mxu0 %v2568
        %v2641 = vpop.f32.mrb[0].mxu0
        %v2642 = vadd.f32 0.0, %v2641
        %v2643 = vpop.f32.mrb[0].mxu0
        %2644 = vdwg.mxu0
        %2647 = vrot.lane.b32.xlu0 %v2637, 112
        %v2648 = vpop.permute.xlu0 %2647
        %2649 = vrot.lane.b32.xlu0 %v2642, 112
        %v2650 = vpop.permute.xlu0 %2649
        %vm2653 = vcmask 1048448
        %2654 = vst.msk [vmem:[#allocation2] sm:$0xff] %vm2653, %v2648
        %2655 = vst.msk [vmem:[#allocation2 + $0x8] sm:$0xff] %vm2653, %v2650
        %v2656 = vld [vmem:[#allocation2] sm:$0xff]
        %v2657 = vld [vmem:[#allocation2 + $0x8] sm:$0xff]
        %v2658 = vld [vmem:[#allocation12] sm:$0xff]
        %v2659 = vld [vmem:[#allocation12 + $0x8] sm:$0xff]
        %v2660 = vld [vmem:[#allocation12 + $0x10] sm:$0xff]
        %v2661 = vld [vmem:[#allocation12 + $0x18] sm:$0xff]
        %v2662 = vld [vmem:[#allocation12 + $0x20] sm:$0xff]
        %v2663 = vld [vmem:[#allocation12 + $0x28] sm:$0xff]
        %v2664 = vld [vmem:[#allocation12 + $0x30] sm:$0xff]
        %v2665 = vld [vmem:[#allocation12 + $0x38] sm:$0xff]
        %v2666 = vld [vmem:[#allocation12 + $0x40] sm:$0xff]
        %v2667 = vld [vmem:[#allocation12 + $0x48] sm:$0xff]
        %v2668 = vld [vmem:[#allocation12 + $0x50] sm:$0xff]
        %v2669 = vld [vmem:[#allocation12 + $0x58] sm:$0xff]
        %v2670 = vld [vmem:[#allocation12 + $0x60] sm:$0xff]
        %v2671 = vld [vmem:[#allocation12 + $0x68] sm:$0xff]
        %v2672 = vld [vmem:[#allocation12 + $0x70] sm:$0xff]
        %v2673 = vld [vmem:[#allocation12 + $0x78] sm:$0xff]
        %v2674 = vld [vmem:[%s7] sm:$0x1]
        %v2676 = vlaneseq
        %v2677 = vshrl.u32 %v2676, 7
        %v2678 = vsub.s32 0, %v2677
        %v2679 = vrot.slane %v2674, %v2678
        %2681 = vmatprep.subr.mxu0 0.0
        %2682 = vmatpush1.msra.mxu0 %v2658
        %2683 = vmatprep.subr.mxu0 0.0
        %2684 = vmatpush1.msra.mxu0 %v2659
        %2685 = vmatprep.subr.mxu0 0.0
        %2686 = vmatpush1.msra.mxu0 %v2660
        %2687 = vmatprep.subr.mxu0 0.0
        %2688 = vmatpush1.msra.mxu0 %v2661
        %2689 = vmatprep.subr.mxu0 0.0
        %2690 = vmatpush1.msra.mxu0 %v2662
        %2691 = vmatprep.subr.mxu0 0.0
        %2692 = vmatpush1.msra.mxu0 %v2663
        %2693 = vmatprep.subr.mxu0 0.0
        %2694 = vmatpush1.msra.mxu0 %v2664
        %2695 = vmatprep.subr.mxu0 0.0
        %2696 = vmatpush1.msra.mxu0 %v2665
        %2697 = vmatprep.subr.mxu0 0.0
        %2698 = vmatpush1.msra.mxu0 %v2666
        %2699 = vmatprep.subr.mxu0 0.0
        %2700 = vmatpush1.msra.mxu0 %v2667
        %2701 = vmatprep.subr.mxu0 0.0
        %2702 = vmatpush1.msra.mxu0 %v2668
        %2703 = vmatprep.subr.mxu0 0.0
        %2704 = vmatpush1.msra.mxu0 %v2669
        %2705 = vmatprep.subr.mxu0 0.0
        %2706 = vmatpush1.msra.mxu0 %v2670
        %2707 = vmatprep.subr.mxu0 0.0
        %2708 = vmatpush1.msra.mxu0 %v2671
        %2709 = vmatprep.subr.mxu0 0.0
        %2710 = vmatpush1.msra.mxu0 %v2672
        %2711 = vmatprep.subr.mxu0 0.0
        %2712 = vmatpush1.msra.mxu0 %v2673
        %2713 = vmatprep.subr.mxu0 0.0
        %2714 = vmatpush1.msra.mxu0 0.0
        %2715 = vmatprep.subr.mxu0 0.0
        %2716 = vmatpush1.msra.mxu0 0.0
        %2717 = vmatprep.subr.mxu0 0.0
        %2718 = vmatpush1.msra.mxu0 0.0
        %2719 = vmatprep.subr.mxu0 0.0
        %2720 = vmatpush1.msra.mxu0 0.0
        %2721 = vmatprep.subr.mxu0 0.0
        %2722 = vmatpush1.msra.mxu0 0.0
        %2723 = vmatprep.subr.mxu0 0.0
        %2724 = vmatpush1.msra.mxu0 0.0
        %2725 = vmatprep.subr.mxu0 0.0
        %2726 = vmatpush1.msra.mxu0 0.0
        %2727 = vmatprep.subr.mxu0 0.0
        %2728 = vmatpush1.msra.mxu0 0.0
        %2729 = vmatprep.subr.mxu0 0.0
        %2730 = vmatpush1.msra.mxu0 0.0
        %2731 = vmatprep.subr.mxu0 0.0
        %2732 = vmatpush1.msra.mxu0 0.0
        %2733 = vmatprep.subr.mxu0 0.0
        %2734 = vmatpush1.msra.mxu0 0.0
        %2735 = vmatprep.subr.mxu0 0.0
        %2736 = vmatpush1.msra.mxu0 0.0
        %2737 = vmatprep.subr.mxu0 0.0
        %2738 = vmatpush1.msra.mxu0 0.0
        %2739 = vmatprep.subr.mxu0 0.0
        %2740 = vmatpush1.msra.mxu0 0.0
        %2741 = vmatprep.subr.mxu0 0.0
        %2742 = vmatpush1.msra.mxu0 0.0
        %2743 = vmatprep.subr.mxu0 0.0
        %2744 = vmatpush1.msra.mxu0 0.0
        %2745 = vmatprep.mubr.f32.mxu0 0.0
        %2746 = vmatmul.mubr.f32.gmra.mrb[0].mxu0 %v2656
        %v2747 = vpop.f32.mrb[0].mxu0
        %v2748 = vadd.f32 %v2679, %v2747
        %v2749 = vpop.f32.mrb[0].mxu0
        %2750 = vmatprep.mubr.f32.mxu0 0.0
        %2751 = vmatmul.mubr.f32.gmra.mrb[0].mxu0 %v2657
        %v2752 = vpop.f32.mrb[0].mxu0
        %v2753 = vadd.f32 %v2679, %v2752
        %v2754 = vpop.f32.mrb[0].mxu0
        %2755 = vdwg.mxu0
        %v2756 = vadd.f32 %v2748, %v765
        %v2757 = vadd.f32 %v2753, %v766
        %v2758 = vld [vmem:[%s8] sm:$0x1]
        %v2759 = vld [vmem:[%s9] sm:$0x1]
        %2760 = vadd.xlane.f32.xlu0 %v2756
        %v2761 = vpop.xlane.xlu0 %2760
        %2762 = vadd.xlane.f32.xlu0 %v2757
        %v2763 = vpop.xlane.xlu0 %2762
        %v2764 = vrcp.pop 128.0
        %v2765 = vmul.f32 %v2761, %v2764
        %v2766 = vmul.f32 %v2763, %v2764
        %v2767 = vsub.f32 %v2756, %v2765
        %v2768 = vsub.f32 %v2757, %v2766
        %v2769 = vmul.f32 %v2767, %v2767
        %v2770 = vmul.f32 %v2768, %v2768
        %2771 = vadd.xlane.f32.xlu0 %v2769
        %v2772 = vpop.xlane.xlu0 %2771
        %2773 = vadd.xlane.f32.xlu0 %v2770
        %v2774 = vpop.xlane.xlu0 %2773
        %v2775 = vmul.f32 %v2772, %v2764
        %v2776 = vmul.f32 %v2774, %v2764
        %v2777 = vadd.f32 %v2775, 1e-05
        %v2778 = vadd.f32 %v2776, 1e-05
        %v2779 = vrsqrt.pop %v2777
        %v2780 = vrsqrt.pop %v2778
        %v2781 = vmul.f32 %v2767, %v2779
        %v2782 = vmul.f32 %v2768, %v2780
        %v2784 = vlaneseq
        %v2785 = vshrl.u32 %v2784, 7
        %v2786 = vsub.s32 0, %v2785
        %v2787 = vrot.slane %v2758, %v2786
        %v2789 = vmul.f32 %v2781, %v2787
        %v2790 = vmul.f32 %v2782, %v2787
        %v2792 = vlaneseq
        %v2793 = vshrl.u32 %v2792, 7
        %v2794 = vsub.s32 0, %v2793
        %v2795 = vrot.slane %v2759, %v2794
        %v2797 = vadd.f32 %v2789, %v2795
        %v2798 = vadd.f32 %v2790, %v2795
        %v2799 = vld [vmem:[#allocation14] sm:$0xff]
        %v2800 = vld [vmem:[#allocation14 + $0x8] sm:$0xff]
        %v2801 = vld [vmem:[#allocation14 + $0x10] sm:$0xff]
        %v2802 = vld [vmem:[#allocation14 + $0x18] sm:$0xff]
        %v2803 = vld [vmem:[#allocation14 + $0x20] sm:$0xff]
        %v2804 = vld [vmem:[#allocation14 + $0x28] sm:$0xff]
        %v2805 = vld [vmem:[#allocation14 + $0x30] sm:$0xff]
        %v2806 = vld [vmem:[#allocation14 + $0x38] sm:$0xff]
        %v2807 = vld [vmem:[#allocation14 + $0x40] sm:$0xff]
        %v2808 = vld [vmem:[#allocation14 + $0x48] sm:$0xff]
        %v2809 = vld [vmem:[#allocation14 + $0x50] sm:$0xff]
        %v2810 = vld [vmem:[#allocation14 + $0x58] sm:$0xff]
        %v2811 = vld [vmem:[#allocation14 + $0x60] sm:$0xff]
        %v2812 = vld [vmem:[#allocation14 + $0x68] sm:$0xff]
        %v2813 = vld [vmem:[#allocation14 + $0x70] sm:$0xff]
        %v2814 = vld [vmem:[#allocation14 + $0x78] sm:$0xff]
        %v2815 = vld [vmem:[#allocation14 + $0x80] sm:$0xff]
        %v2816 = vld [vmem:[#allocation14 + $0x88] sm:$0xff]
        %v2817 = vld [vmem:[#allocation14 + $0x90] sm:$0xff]
        %v2818 = vld [vmem:[#allocation14 + $0x98] sm:$0xff]
        %v2819 = vld [vmem:[#allocation14 + $0xa0] sm:$0xff]
        %v2820 = vld [vmem:[#allocation14 + $0xa8] sm:$0xff]
        %v2821 = vld [vmem:[#allocation14 + $0xb0] sm:$0xff]
        %v2822 = vld [vmem:[#allocation14 + $0xb8] sm:$0xff]
        %v2823 = vld [vmem:[#allocation14 + $0xc0] sm:$0xff]
        %v2824 = vld [vmem:[#allocation14 + $0xc8] sm:$0xff]
        %v2825 = vld [vmem:[#allocation14 + $0xd0] sm:$0xff]
        %v2826 = vld [vmem:[#allocation14 + $0xd8] sm:$0xff]
        %v2827 = vld [vmem:[#allocation14 + $0xe0] sm:$0xff]
        %v2828 = vld [vmem:[#allocation14 + $0xe8] sm:$0xff]
        %v2829 = vld [vmem:[#allocation14 + $0xf0] sm:$0xff]
        %v2830 = vld [vmem:[#allocation14 + $0xf8] sm:$0xff]
        %v2831 = vld [vmem:[%s11] sm:$0x3]
        %v2833 = vlaneseq
        %v2834 = vshrl.u32 %v2833, 7
        %v2835 = vsub.s32 0, %v2834
        %v2836 = vrot.slane %v2831, %v2835
        %v2837 = vlaneseq
        %v2838 = vshrl.u32 %v2837, 7
        %v2839 = vsub.s32 1, %v2838
        %v2840 = vrot.slane %v2831, %v2839
        %2843 = vmatprep.subr.mxu0 %v2800
        %2844 = vmatpush1.msra.mxu0 %v2799
        %2845 = vmatprep.subr.mxu0 %v2802
        %2846 = vmatpush1.msra.mxu0 %v2801
        %2847 = vmatprep.subr.mxu0 %v2804
        %2848 = vmatpush1.msra.mxu0 %v2803
        %2849 = vmatprep.subr.mxu0 %v2806
        %2850 = vmatpush1.msra.mxu0 %v2805
        %2851 = vmatprep.subr.mxu0 %v2808
        %2852 = vmatpush1.msra.mxu0 %v2807
        %2853 = vmatprep.subr.mxu0 %v2810
        %2854 = vmatpush1.msra.mxu0 %v2809
        %2855 = vmatprep.subr.mxu0 %v2812
        %2856 = vmatpush1.msra.mxu0 %v2811
        %2857 = vmatprep.subr.mxu0 %v2814
        %2858 = vmatpush1.msra.mxu0 %v2813
        %2859 = vmatprep.subr.mxu0 %v2816
        %2860 = vmatpush1.msra.mxu0 %v2815
        %2861 = vmatprep.subr.mxu0 %v2818
        %2862 = vmatpush1.msra.mxu0 %v2817
        %2863 = vmatprep.subr.mxu0 %v2820
        %2864 = vmatpush1.msra.mxu0 %v2819
        %2865 = vmatprep.subr.mxu0 %v2822
        %2866 = vmatpush1.msra.mxu0 %v2821
        %2867 = vmatprep.subr.mxu0 %v2824
        %2868 = vmatpush1.msra.mxu0 %v2823
        %2869 = vmatprep.subr.mxu0 %v2826
        %2870 = vmatpush1.msra.mxu0 %v2825
        %2871 = vmatprep.subr.mxu0 %v2828
        %2872 = vmatpush1.msra.mxu0 %v2827
        %2873 = vmatprep.subr.mxu0 %v2830
        %2874 = vmatpush1.msra.mxu0 %v2829
        %2875 = vmatprep.subr.mxu0 0.0
        %2876 = vmatpush1.msra.mxu0 0.0
        %2877 = vmatprep.subr.mxu0 0.0
        %2878 = vmatpush1.msra.mxu0 0.0
        %2879 = vmatprep.subr.mxu0 0.0
        %2880 = vmatpush1.msra.mxu0 0.0
        %2881 = vmatprep.subr.mxu0 0.0
        %2882 = vmatpush1.msra.mxu0 0.0
        %2883 = vmatprep.subr.mxu0 0.0
        %2884 = vmatpush1.msra.mxu0 0.0
        %2885 = vmatprep.subr.mxu0 0.0
        %2886 = vmatpush1.msra.mxu0 0.0
        %2887 = vmatprep.subr.mxu0 0.0
        %2888 = vmatpush1.msra.mxu0 0.0
        %2889 = vmatprep.subr.mxu0 0.0
        %2890 = vmatpush1.msra.mxu0 0.0
        %2891 = vmatprep.subr.mxu0 0.0
        %2892 = vmatpush1.msra.mxu0 0.0
        %2893 = vmatprep.subr.mxu0 0.0
        %2894 = vmatpush1.msra.mxu0 0.0
        %2895 = vmatprep.subr.mxu0 0.0
        %2896 = vmatpush1.msra.mxu0 0.0
        %2897 = vmatprep.subr.mxu0 0.0
        %2898 = vmatpush1.msra.mxu0 0.0
        %2899 = vmatprep.subr.mxu0 0.0
        %2900 = vmatpush1.msra.mxu0 0.0
        %2901 = vmatprep.subr.mxu0 0.0
        %2902 = vmatpush1.msra.mxu0 0.0
        %2903 = vmatprep.subr.mxu0 0.0
        %2904 = vmatpush1.msra.mxu0 0.0
        %2905 = vmatprep.subr.mxu0 0.0
        %2906 = vmatpush1.msra.mxu0 0.0
        %2907 = vmatprep.mubr.f32.mxu0 0.0
        %2908 = vmatmul.mubr.f32.gmra.mrb[0].mxu0 %v2797
        %v2909 = vpop.f32.mrb[0].mxu0
        %v2910 = vadd.f32 %v2836, %v2909
        %v2911 = vpop.f32.mrb[0].mxu0
        %v2912 = vadd.f32 %v2840, %v2911
        %2913 = vmatprep.mubr.f32.mxu0 0.0
        %2914 = vmatmul.mubr.f32.gmra.mrb[0].mxu0 %v2798
        %v2915 = vpop.f32.mrb[0].mxu0
        %v2916 = vadd.f32 %v2836, %v2915
        %v2917 = vpop.f32.mrb[0].mxu0
        %v2918 = vadd.f32 %v2840, %v2917
        %2919 = vdwg.mxu0
        %v2920 = vmul.f32 %v2910, 0.5
        %v2921 = vmul.f32 %v2912, 0.5
        %v2922 = vmul.f32 %v2916, 0.5
        %v2923 = vmul.f32 %v2918, 0.5
        %v2924 = vmul.f32 %v2910, 0.044715
        %v2925 = vmul.f32 %v2912, 0.044715
        %v2926 = vmul.f32 %v2916, 0.044715
        %v2927 = vmul.f32 %v2918, 0.044715
        %v2928 = vmul.f32 %v2924, %v2910
        %v2929 = vmul.f32 %v2925, %v2912
        %v2930 = vmul.f32 %v2926, %v2916
        %v2931 = vmul.f32 %v2927, %v2918
        %v2932 = vmul.f32 %v2928, %v2910
        %v2933 = vmul.f32 %v2929, %v2912
        %v2934 = vmul.f32 %v2930, %v2916
        %v2935 = vmul.f32 %v2931, %v2918
        %v2936 = vadd.f32 %v2910, %v2932
        %v2937 = vadd.f32 %v2912, %v2933
        %v2938 = vadd.f32 %v2916, %v2934
        %v2939 = vadd.f32 %v2918, %v2935
        %v2940 = vmul.f32 %v2936, 0.7978846
        %v2941 = vmul.f32 %v2937, 0.7978846
        %v2942 = vmul.f32 %v2938, 0.7978846
        %v2943 = vmul.f32 %v2939, 0.7978846
        %v2944 = vtanh.pop %v2940
        %v2945 = vtanh.pop %v2941
        %v2946 = vtanh.pop %v2942
        %v2947 = vtanh.pop %v2943
        %v2948 = vadd.f32 %v2944, 1.0
        %v2949 = vadd.f32 %v2945, 1.0
        %v2950 = vadd.f32 %v2946, 1.0
        %v2951 = vadd.f32 %v2947, 1.0
        %v2952 = vmul.f32 %v2920, %v2948
        %v2953 = vmul.f32 %v2921, %v2949
        %v2954 = vmul.f32 %v2922, %v2950
        %v2955 = vmul.f32 %v2923, %v2951
        %v2956 = vld [vmem:[#allocation15] sm:$0xff]
        %v2957 = vld [vmem:[#allocation15 + $0x8] sm:$0xff]
        %v2958 = vld [vmem:[#allocation15 + $0x10] sm:$0xff]
        %v2959 = vld [vmem:[#allocation15 + $0x18] sm:$0xff]
        %v2960 = vld [vmem:[#allocation15 + $0x20] sm:$0xff]
        %v2961 = vld [vmem:[#allocation15 + $0x28] sm:$0xff]
        %v2962 = vld [vmem:[#allocation15 + $0x30] sm:$0xff]
        %v2963 = vld [vmem:[#allocation15 + $0x38] sm:$0xff]
        %v2964 = vld [vmem:[#allocation15 + $0x40] sm:$0xff]
        %v2965 = vld [vmem:[#allocation15 + $0x48] sm:$0xff]
        %v2966 = vld [vmem:[#allocation15 + $0x50] sm:$0xff]
        %v2967 = vld [vmem:[#allocation15 + $0x58] sm:$0xff]
        %v2968 = vld [vmem:[#allocation15 + $0x60] sm:$0xff]
        %v2969 = vld [vmem:[#allocation15 + $0x68] sm:$0xff]
        %v2970 = vld [vmem:[#allocation15 + $0x70] sm:$0xff]
        %v2971 = vld [vmem:[#allocation15 + $0x78] sm:$0xff]
        %v2972 = vld [vmem:[#allocation15 + $0x80] sm:$0xff]
        %v2973 = vld [vmem:[#allocation15 + $0x88] sm:$0xff]
        %v2974 = vld [vmem:[#allocation15 + $0x90] sm:$0xff]
        %v2975 = vld [vmem:[#allocation15 + $0x98] sm:$0xff]
        %v2976 = vld [vmem:[#allocation15 + $0xa0] sm:$0xff]
        %v2977 = vld [vmem:[#allocation15 + $0xa8] sm:$0xff]
        %v2978 = vld [vmem:[#allocation15 + $0xb0] sm:$0xff]
        %v2979 = vld [vmem:[#allocation15 + $0xb8] sm:$0xff]
        %v2980 = vld [vmem:[#allocation15 + $0xc0] sm:$0xff]
        %v2981 = vld [vmem:[#allocation15 + $0xc8] sm:$0xff]
        %v2982 = vld [vmem:[#allocation15 + $0xd0] sm:$0xff]
        %v2983 = vld [vmem:[#allocation15 + $0xd8] sm:$0xff]
        %v2984 = vld [vmem:[#allocation15 + $0xe0] sm:$0xff]
        %v2985 = vld [vmem:[#allocation15 + $0xe8] sm:$0xff]
        %v2986 = vld [vmem:[#allocation15 + $0xf0] sm:$0xff]
        %v2987 = vld [vmem:[#allocation15 + $0xf8] sm:$0xff]
        %v2988 = vld [vmem:[%s13] sm:$0x1]
        %v2990 = vlaneseq
        %v2991 = vshrl.u32 %v2990, 7
        %v2992 = vsub.s32 0, %v2991
        %v2993 = vrot.slane %v2988, %v2992
        %2995 = vmatprep.subr.mxu0 0.0
        %2996 = vmatpush1.msra.mxu0 %v2956
        %2997 = vmatprep.subr.mxu0 0.0
        %2998 = vmatpush1.msra.mxu0 %v2957
        %2999 = vmatprep.subr.mxu0 0.0
        %3000 = vmatpush1.msra.mxu0 %v2958
        %3001 = vmatprep.subr.mxu0 0.0
        %3002 = vmatpush1.msra.mxu0 %v2959
        %3003 = vmatprep.subr.mxu0 0.0
        %3004 = vmatpush1.msra.mxu0 %v2960
        %3005 = vmatprep.subr.mxu0 0.0
        %3006 = vmatpush1.msra.mxu0 %v2961
        %3007 = vmatprep.subr.mxu0 0.0
        %3008 = vmatpush1.msra.mxu0 %v2962
        %3009 = vmatprep.subr.mxu0 0.0
        %3010 = vmatpush1.msra.mxu0 %v2963
        %3011 = vmatprep.subr.mxu0 0.0
        %3012 = vmatpush1.msra.mxu0 %v2964
        %3013 = vmatprep.subr.mxu0 0.0
        %3014 = vmatpush1.msra.mxu0 %v2965
        %3015 = vmatprep.subr.mxu0 0.0
        %3016 = vmatpush1.msra.mxu0 %v2966
        %3017 = vmatprep.subr.mxu0 0.0
        %3018 = vmatpush1.msra.mxu0 %v2967
        %3019 = vmatprep.subr.mxu0 0.0
        %3020 = vmatpush1.msra.mxu0 %v2968
        %3021 = vmatprep.subr.mxu0 0.0
        %3022 = vmatpush1.msra.mxu0 %v2969
        %3023 = vmatprep.subr.mxu0 0.0
        %3024 = vmatpush1.msra.mxu0 %v2970
        %3025 = vmatprep.subr.mxu0 0.0
        %3026 = vmatpush1.msra.mxu0 %v2971
        %3027 = vmatprep.subr.mxu0 0.0
        %3028 = vmatpush1.msra.mxu0 %v2972
        %3029 = vmatprep.subr.mxu0 0.0
        %3030 = vmatpush1.msra.mxu0 %v2973
        %3031 = vmatprep.subr.mxu0 0.0
        %3032 = vmatpush1.msra.mxu0 %v2974
        %3033 = vmatprep.subr.mxu0 0.0
        %3034 = vmatpush1.msra.mxu0 %v2975
        %3035 = vmatprep.subr.mxu0 0.0
        %3036 = vmatpush1.msra.mxu0 %v2976
        %3037 = vmatprep.subr.mxu0 0.0
        %3038 = vmatpush1.msra.mxu0 %v2977
        %3039 = vmatprep.subr.mxu0 0.0
        %3040 = vmatpush1.msra.mxu0 %v2978
        %3041 = vmatprep.subr.mxu0 0.0
        %3042 = vmatpush1.msra.mxu0 %v2979
        %3043 = vmatprep.subr.mxu0 0.0
        %3044 = vmatpush1.msra.mxu0 %v2980
        %3045 = vmatprep.subr.mxu0 0.0
        %3046 = vmatpush1.msra.mxu0 %v2981
        %3047 = vmatprep.subr.mxu0 0.0
        %3048 = vmatpush1.msra.mxu0 %v2982
        %3049 = vmatprep.subr.mxu0 0.0
        %3050 = vmatpush1.msra.mxu0 %v2983
        %3051 = vmatprep.subr.mxu0 0.0
        %3052 = vmatpush1.msra.mxu0 %v2984
        %3053 = vmatprep.subr.mxu0 0.0
        %3054 = vmatpush1.msra.mxu0 %v2985
        %3055 = vmatprep.subr.mxu0 0.0
        %3056 = vmatpush1.msra.mxu0 %v2986
        %3057 = vmatprep.subr.mxu0 0.0
        %3058 = vmatpush1.msra.mxu0 %v2987
        %3059 = vmatprep.mubr.f32.mxu0 %v2953
        %3060 = vmatmul.mubr.f32.gmra.mrb[0].mxu0 %v2952
        %v3061 = vpop.f32.mrb[0].mxu0
        %v3062 = vadd.f32 %v2993, %v3061
        %v3063 = vpop.f32.mrb[0].mxu0
        %3064 = vmatprep.mubr.f32.mxu0 %v2955
        %3065 = vmatmul.mubr.f32.gmra.mrb[0].mxu0 %v2954
        %v3066 = vpop.f32.mrb[0].mxu0
        %v3067 = vadd.f32 %v2993, %v3066
        %v3068 = vpop.f32.mrb[0].mxu0
        %3069 = vdwg.mxu0
        %v3070 = vadd.f32 %v3062, %v2797
        %v3071 = vadd.f32 %v3067, %v2798
        %v3072 = vld [vmem:[%s14] sm:$0x1]
        %v3073 = vld [vmem:[%s15] sm:$0x1]
        %3074 = vadd.xlane.f32.xlu0 %v3070
        %v3075 = vpop.xlane.xlu0 %3074
        %3076 = vadd.xlane.f32.xlu0 %v3071
        %v3077 = vpop.xlane.xlu0 %3076
        %v3078 = vmul.f32 %v3075, %v2764
        %v3079 = vmul.f32 %v3077, %v2764
        %v3080 = vsub.f32 %v3070, %v3078
        %v3081 = vsub.f32 %v3071, %v3079
        %v3082 = vmul.f32 %v3080, %v3080
        %v3083 = vmul.f32 %v3081, %v3081
        %3084 = vadd.xlane.f32.xlu0 %v3082
        %v3085 = vpop.xlane.xlu0 %3084
        %3086 = vadd.xlane.f32.xlu0 %v3083
        %v3087 = vpop.xlane.xlu0 %3086
        %v3088 = vmul.f32 %v3085, %v2764
        %v3089 = vmul.f32 %v3087, %v2764
        %v3090 = vadd.f32 %v3088, 1e-05
        %v3091 = vadd.f32 %v3089, 1e-05
        %v3092 = vrsqrt.pop %v3090
        %v3093 = vrsqrt.pop %v3091
        %v3094 = vmul.f32 %v3080, %v3092
        %v3095 = vmul.f32 %v3081, %v3093
        %v3097 = vlaneseq
        %v3098 = vshrl.u32 %v3097, 7
        %v3099 = vsub.s32 0, %v3098
        %v3100 = vrot.slane %v3072, %v3099
        %v3102 = vmul.f32 %v3094, %v3100
        %v3103 = vmul.f32 %v3095, %v3100
        %v3105 = vlaneseq
        %v3106 = vshrl.u32 %v3105, 7
        %v3107 = vsub.s32 0, %v3106
        %v3108 = vrot.slane %v3073, %v3107
        %v3110 = vadd.f32 %v3102, %v3108
        %v3111 = vadd.f32 %v3103, %v3108
        %s3112 = scalar_lea.vmem [#allocation11], 384
        %v3113 = vld [vmem:[%s3112] sm:$0xff]
        %v3114 = vld [vmem:[%s3112 + $0x8] sm:$0xff]
        %v3115 = vld [vmem:[%s3112 + $0x10] sm:$0xff]
        %v3116 = vld [vmem:[%s3112 + $0x18] sm:$0xff]
        %v3117 = vld [vmem:[%s3112 + $0x20] sm:$0xff]
        %v3118 = vld [vmem:[%s3112 + $0x28] sm:$0xff]
        %v3119 = vld [vmem:[%s3112 + $0x30] sm:$0xff]
        %v3120 = vld [vmem:[%s3112 + $0x38] sm:$0xff]
        %v3121 = vld [vmem:[%s3112 + $0x40] sm:$0xff]
        %v3122 = vld [vmem:[%s3112 + $0x48] sm:$0xff]
        %v3123 = vld [vmem:[%s3112 + $0x50] sm:$0xff]
        %v3124 = vld [vmem:[%s3112 + $0x58] sm:$0xff]
        %v3125 = vld [vmem:[%s3112 + $0x60] sm:$0xff]
        %v3126 = vld [vmem:[%s3112 + $0x68] sm:$0xff]
        %v3127 = vld [vmem:[%s3112 + $0x70] sm:$0xff]
        %v3128 = vld [vmem:[%s3112 + $0x78] sm:$0xff]
        %v3129 = vld [vmem:[%s3112 + $0x80] sm:$0xff]
        %v3130 = vld [vmem:[%s3112 + $0x88] sm:$0xff]
        %v3131 = vld [vmem:[%s3112 + $0x90] sm:$0xff]
        %v3132 = vld [vmem:[%s3112 + $0x98] sm:$0xff]
        %v3133 = vld [vmem:[%s3112 + $0xa0] sm:$0xff]
        %v3134 = vld [vmem:[%s3112 + $0xa8] sm:$0xff]
        %v3135 = vld [vmem:[%s3112 + $0xb0] sm:$0xff]
        %v3136 = vld [vmem:[%s3112 + $0xb8] sm:$0xff]
        %v3137 = vld [vmem:[%s3112 + $0xc0] sm:$0xff]
        %v3138 = vld [vmem:[%s3112 + $0xc8] sm:$0xff]
        %v3139 = vld [vmem:[%s3112 + $0xd0] sm:$0xff]
        %v3140 = vld [vmem:[%s3112 + $0xd8] sm:$0xff]
        %v3141 = vld [vmem:[%s3112 + $0xe0] sm:$0xff]
        %v3142 = vld [vmem:[%s3112 + $0xe8] sm:$0xff]
        %v3143 = vld [vmem:[%s3112 + $0xf0] sm:$0xff]
        %v3144 = vld [vmem:[%s3112 + $0xf8] sm:$0xff]
        %v3145 = vld [vmem:[%s3112 + $0x100] sm:$0xff]
        %v3146 = vld [vmem:[%s3112 + $0x108] sm:$0xff]
        %v3147 = vld [vmem:[%s3112 + $0x110] sm:$0xff]
        %v3148 = vld [vmem:[%s3112 + $0x118] sm:$0xff]
        %v3149 = vld [vmem:[%s3112 + $0x120] sm:$0xff]
        %v3150 = vld [vmem:[%s3112 + $0x128] sm:$0xff]
        %v3151 = vld [vmem:[%s3112 + $0x130] sm:$0xff]
        %v3152 = vld [vmem:[%s3112 + $0x138] sm:$0xff]
        %v3153 = vld [vmem:[%s3112 + $0x140] sm:$0xff]
        %v3154 = vld [vmem:[%s3112 + $0x148] sm:$0xff]
        %v3155 = vld [vmem:[%s3112 + $0x150] sm:$0xff]
        %v3156 = vld [vmem:[%s3112 + $0x158] sm:$0xff]
        %v3157 = vld [vmem:[%s3112 + $0x160] sm:$0xff]
        %v3158 = vld [vmem:[%s3112 + $0x168] sm:$0xff]
        %v3159 = vld [vmem:[%s3112 + $0x170] sm:$0xff]
        %v3160 = vld [vmem:[%s3112 + $0x178] sm:$0xff]
        %s3161 = scalar_lea.vmem %s5, 3
        %v3162 = vld [vmem:[%s3161] sm:$0x7]
        %v3164 = vlaneseq
        %v3165 = vshrl.u32 %v3164, 7
        %v3166 = vsub.s32 0, %v3165
        %v3167 = vrot.slane %v3162, %v3166
        %v3168 = vlaneseq
        %v3169 = vshrl.u32 %v3168, 7
        %v3170 = vsub.s32 1, %v3169
        %v3171 = vrot.slane %v3162, %v3170
        %v3172 = vlaneseq
        %v3173 = vshrl.u32 %v3172, 7
        %v3174 = vsub.s32 2, %v3173
        %v3175 = vrot.slane %v3162, %v3174
        %3179 = vmatprep.subr.mxu0 %v3114
        %3180 = vmatpush1.msra.mxu0 %v3113
        %3181 = vmatprep.subr.mxu0 %v3117
        %3182 = vmatpush1.msra.mxu0 %v3116
        %3183 = vmatprep.subr.mxu0 %v3120
        %3184 = vmatpush1.msra.mxu0 %v3119
        %3185 = vmatprep.subr.mxu0 %v3123
        %3186 = vmatpush1.msra.mxu0 %v3122
        %3187 = vmatprep.subr.mxu0 %v3126
        %3188 = vmatpush1.msra.mxu0 %v3125
        %3189 = vmatprep.subr.mxu0 %v3129
        %3190 = vmatpush1.msra.mxu0 %v3128
        %3191 = vmatprep.subr.mxu0 %v3132
        %3192 = vmatpush1.msra.mxu0 %v3131
        %3193 = vmatprep.subr.mxu0 %v3135
        %3194 = vmatpush1.msra.mxu0 %v3134
        %3195 = vmatprep.subr.mxu0 %v3138
        %3196 = vmatpush1.msra.mxu0 %v3137
        %3197 = vmatprep.subr.mxu0 %v3141
        %3198 = vmatpush1.msra.mxu0 %v3140
        %3199 = vmatprep.subr.mxu0 %v3144
        %3200 = vmatpush1.msra.mxu0 %v3143
        %3201 = vmatprep.subr.mxu0 %v3147
        %3202 = vmatpush1.msra.mxu0 %v3146
        %3203 = vmatprep.subr.mxu0 %v3150
        %3204 = vmatpush1.msra.mxu0 %v3149
        %3205 = vmatprep.subr.mxu0 %v3153
        %3206 = vmatpush1.msra.mxu0 %v3152
        %3207 = vmatprep.subr.mxu0 %v3156
        %3208 = vmatpush1.msra.mxu0 %v3155
        %3209 = vmatprep.subr.mxu0 %v3159
        %3210 = vmatpush1.msra.mxu0 %v3158
        %3211 = vmatprep.subr.mxu0 0.0
        %3212 = vmatpush1.msra.mxu0 0.0
        %3213 = vmatprep.subr.mxu0 0.0
        %3214 = vmatpush1.msra.mxu0 0.0
        %3215 = vmatprep.subr.mxu0 0.0
        %3216 = vmatpush1.msra.mxu0 0.0
        %3217 = vmatprep.subr.mxu0 0.0
        %3218 = vmatpush1.msra.mxu0 0.0
        %3219 = vmatprep.subr.mxu0 0.0
        %3220 = vmatpush1.msra.mxu0 0.0
        %3221 = vmatprep.subr.mxu0 0.0
        %3222 = vmatpush1.msra.mxu0 0.0
        %3223 = vmatprep.subr.mxu0 0.0
        %3224 = vmatpush1.msra.mxu0 0.0
        %3225 = vmatprep.subr.mxu0 0.0
        %3226 = vmatpush1.msra.mxu0 0.0
        %3227 = vmatprep.subr.mxu0 0.0
        %3228 = vmatpush1.msra.mxu0 0.0
        %3229 = vmatprep.subr.mxu0 0.0
        %3230 = vmatpush1.msra.mxu0 0.0
        %3231 = vmatprep.subr.mxu0 0.0
        %3232 = vmatpush1.msra.mxu0 0.0
        %3233 = vmatprep.subr.mxu0 0.0
        %3234 = vmatpush1.msra.mxu0 0.0
        %3235 = vmatprep.subr.mxu0 0.0
        %3236 = vmatpush1.msra.mxu0 0.0
        %3237 = vmatprep.subr.mxu0 0.0
        %3238 = vmatpush1.msra.mxu0 0.0
        %3239 = vmatprep.subr.mxu0 0.0
        %3240 = vmatpush1.msra.mxu0 0.0
        %3241 = vmatprep.subr.mxu0 0.0
        %3242 = vmatpush1.msra.mxu0 0.0
        %3243 = vmatprep.mubr.f32.mxu0 0.0
        %3244 = vmatmul.mubr.f32.gmra.mrb[0].mxu0 %v3110
        %v3245 = vpop.f32.mrb[0].mxu0
        %v3246 = vadd.f32 %v3167, %v3245
        %v3247 = vpop.f32.mrb[0].mxu0
        %v3248 = vadd.f32 %v3171, %v3247
        %3249 = vmatprep.mubr.f32.mxu0 0.0
        %3250 = vmatmul.mubr.f32.gmra.mrb[0].mxu0 %v3111
        %v3251 = vpop.f32.mrb[0].mxu0
        %v3252 = vadd.f32 %v3167, %v3251
        %v3253 = vpop.f32.mrb[0].mxu0
        %v3254 = vadd.f32 %v3171, %v3253
        %3255 = vdwg.mxu0
        %3256 = vmatprep.subr.mxu0 0.0
        %3257 = vmatpush1.msra.mxu0 %v3115
        %3258 = vmatprep.subr.mxu0 0.0
        %3259 = vmatpush1.msra.mxu0 %v3118
        %3260 = vmatprep.subr.mxu0 0.0
        %3261 = vmatpush1.msra.mxu0 %v3121
        %3262 = vmatprep.subr.mxu0 0.0
        %3263 = vmatpush1.msra.mxu0 %v3124
        %3264 = vmatprep.subr.mxu0 0.0
        %3265 = vmatpush1.msra.mxu0 %v3127
        %3266 = vmatprep.subr.mxu0 0.0
        %3267 = vmatpush1.msra.mxu0 %v3130
        %3268 = vmatprep.subr.mxu0 0.0
        %3269 = vmatpush1.msra.mxu0 %v3133
        %3270 = vmatprep.subr.mxu0 0.0
        %3271 = vmatpush1.msra.mxu0 %v3136
        %3272 = vmatprep.subr.mxu0 0.0
        %3273 = vmatpush1.msra.mxu0 %v3139
        %3274 = vmatprep.subr.mxu0 0.0
        %3275 = vmatpush1.msra.mxu0 %v3142
        %3276 = vmatprep.subr.mxu0 0.0
        %3277 = vmatpush1.msra.mxu0 %v3145
        %3278 = vmatprep.subr.mxu0 0.0
        %3279 = vmatpush1.msra.mxu0 %v3148
        %3280 = vmatprep.subr.mxu0 0.0
        %3281 = vmatpush1.msra.mxu0 %v3151
        %3282 = vmatprep.subr.mxu0 0.0
        %3283 = vmatpush1.msra.mxu0 %v3154
        %3284 = vmatprep.subr.mxu0 0.0
        %3285 = vmatpush1.msra.mxu0 %v3157
        %3286 = vmatprep.subr.mxu0 0.0
        %3287 = vmatpush1.msra.mxu0 %v3160
        %3288 = vmatprep.subr.mxu0 0.0
        %3289 = vmatpush1.msra.mxu0 0.0
        %3290 = vmatprep.subr.mxu0 0.0
        %3291 = vmatpush1.msra.mxu0 0.0
        %3292 = vmatprep.subr.mxu0 0.0
        %3293 = vmatpush1.msra.mxu0 0.0
        %3294 = vmatprep.subr.mxu0 0.0
        %3295 = vmatpush1.msra.mxu0 0.0
        %3296 = vmatprep.subr.mxu0 0.0
        %3297 = vmatpush1.msra.mxu0 0.0
        %3298 = vmatprep.subr.mxu0 0.0
        %3299 = vmatpush1.msra.mxu0 0.0
        %3300 = vmatprep.subr.mxu0 0.0
        %3301 = vmatpush1.msra.mxu0 0.0
        %3302 = vmatprep.subr.mxu0 0.0
        %3303 = vmatpush1.msra.mxu0 0.0
        %3304 = vmatprep.subr.mxu0 0.0
        %3305 = vmatpush1.msra.mxu0 0.0
        %3306 = vmatprep.subr.mxu0 0.0
        %3307 = vmatpush1.msra.mxu0 0.0
        %3308 = vmatprep.subr.mxu0 0.0
        %3309 = vmatpush1.msra.mxu0 0.0
        %3310 = vmatprep.subr.mxu0 0.0
        %3311 = vmatpush1.msra.mxu0 0.0
        %3312 = vmatprep.subr.mxu0 0.0
        %3313 = vmatpush1.msra.mxu0 0.0
        %3314 = vmatprep.subr.mxu0 0.0
        %3315 = vmatpush1.msra.mxu0 0.0
        %3316 = vmatprep.subr.mxu0 0.0
        %3317 = vmatpush1.msra.mxu0 0.0
        %3318 = vmatprep.subr.mxu0 0.0
        %3319 = vmatpush1.msra.mxu0 0.0
        %3320 = vmatprep.mubr.f32.mxu0 0.0
        %3321 = vmatmul.mubr.f32.gmra.mrb[0].mxu0 %v3110
        %v3322 = vpop.f32.mrb[0].mxu0
        %v3323 = vadd.f32 %v3175, %v3322
        %v3324 = vpop.f32.mrb[0].mxu0
        %3325 = vmatprep.mubr.f32.mxu0 0.0
        %3326 = vmatmul.mubr.f32.gmra.mrb[0].mxu0 %v3111
        %v3327 = vpop.f32.mrb[0].mxu0
        %v3328 = vadd.f32 %v3175, %v3327
        %v3329 = vpop.f32.mrb[0].mxu0
        %3330 = vdwg.mxu0
        %v3332 = vsel %vm984, %v3246, 0
        %v3335 = vsel %vm984, %v3252, 0
        %v3338 = vsel %vm984, %v3248, 0
        %v3341 = vsel %vm984, %v3254, 0
        %3343 = vmatprep.subr.mxu0 0.0
        %3344 = vmatpush1.xpose.msra.mxu0 %v3338
        %3345 = vmatprep.subr.mxu0 0.0
        %3346 = vmatpush1.xpose.msra.mxu0 %v3341
        %3347 = vmatprep.subr.mxu0 0.0
        %3348 = vmatpush1.xpose.msra.mxu0 0.0
        %3349 = vmatprep.subr.mxu0 0.0
        %3350 = vmatpush1.xpose.msra.mxu0 0.0
        %3351 = vmatprep.subr.mxu0 0.0
        %3352 = vmatpush1.xpose.msra.mxu0 0.0
        %3353 = vmatprep.subr.mxu0 0.0
        %3354 = vmatpush1.xpose.msra.mxu0 0.0
        %3355 = vmatprep.subr.mxu0 0.0
        %3356 = vmatpush1.xpose.msra.mxu0 0.0
        %3357 = vmatprep.subr.mxu0 0.0
        %3358 = vmatpush1.xpose.msra.mxu0 0.0
        %3359 = vmatprep.subr.mxu0 0.0
        %3360 = vmatpush1.xpose.msra.mxu0 0.0
        %3361 = vmatprep.subr.mxu0 0.0
        %3362 = vmatpush1.xpose.msra.mxu0 0.0
        %3363 = vmatprep.subr.mxu0 0.0
        %3364 = vmatpush1.xpose.msra.mxu0 0.0
        %3365 = vmatprep.subr.mxu0 0.0
        %3366 = vmatpush1.xpose.msra.mxu0 0.0
        %3367 = vmatprep.subr.mxu0 0.0
        %3368 = vmatpush1.xpose.msra.mxu0 0.0
        %3369 = vmatprep.subr.mxu0 0.0
        %3370 = vmatpush1.xpose.msra.mxu0 0.0
        %3371 = vmatprep.subr.mxu0 0.0
        %3372 = vmatpush1.xpose.msra.mxu0 0.0
        %3373 = vmatprep.subr.mxu0 0.0
        %3374 = vmatpush1.xpose.msra.mxu0 0.0
        %3375 = vmatprep.subr.mxu0 0.0
        %3376 = vmatpush1.xpose.msra.mxu0 0.0
        %3377 = vmatprep.subr.mxu0 0.0
        %3378 = vmatpush1.xpose.msra.mxu0 0.0
        %3379 = vmatprep.subr.mxu0 0.0
        %3380 = vmatpush1.xpose.msra.mxu0 0.0
        %3381 = vmatprep.subr.mxu0 0.0
        %3382 = vmatpush1.xpose.msra.mxu0 0.0
        %3383 = vmatprep.subr.mxu0 0.0
        %3384 = vmatpush1.xpose.msra.mxu0 0.0
        %3385 = vmatprep.subr.mxu0 0.0
        %3386 = vmatpush1.xpose.msra.mxu0 0.0
        %3387 = vmatprep.subr.mxu0 0.0
        %3388 = vmatpush1.xpose.msra.mxu0 0.0
        %3389 = vmatprep.subr.mxu0 0.0
        %3390 = vmatpush1.xpose.msra.mxu0 0.0
        %3391 = vmatprep.subr.mxu0 0.0
        %3392 = vmatpush1.xpose.msra.mxu0 0.0
        %3393 = vmatprep.subr.mxu0 0.0
        %3394 = vmatpush1.xpose.msra.mxu0 0.0
        %3395 = vmatprep.subr.mxu0 0.0
        %3396 = vmatpush1.xpose.msra.mxu0 0.0
        %3397 = vmatprep.subr.mxu0 0.0
        %3398 = vmatpush1.xpose.msra.mxu0 0.0
        %3399 = vmatprep.subr.mxu0 0.0
        %3400 = vmatpush1.xpose.msra.mxu0 0.0
        %3401 = vmatprep.subr.mxu0 0.0
        %3402 = vmatpush1.xpose.msra.mxu0 0.0
        %3403 = vmatprep.subr.mxu0 0.0
        %3404 = vmatpush1.xpose.msra.mxu0 0.0
        %3405 = vmatprep.subr.mxu0 0.0
        %3406 = vmatpush1.xpose.msra.mxu0 0.0
        %3407 = vmatprep.mubr.f32.mxu0 0.0
        %3408 = vmatmul.mubr.f32.gmra.mrb[0].mxu0 %v3332
        %v3409 = vpop.f32.mrb[0].mxu0
        %v3410 = vadd.f32 0.0, %v3409
        %v3411 = vpop.f32.mrb[0].mxu0
        %3412 = vmatprep.mubr.f32.mxu0 0.0
        %3413 = vmatmul.mubr.f32.gmra.mrb[0].mxu0 %v3335
        %v3414 = vpop.f32.mrb[0].mxu0
        %v3415 = vadd.f32 0.0, %v3414
        %v3416 = vpop.f32.mrb[0].mxu0
        %3417 = vdwg.mxu0
        %v3418 = vsel %vm984, %v3410, -inf
        %3419 = vmax.xlane.f32.xlu0 %v3418
        %v3420 = vpop.xlane.xlu0 %3419
        %v3421 = vsel %vm984, %v3415, -inf
        %3422 = vmax.xlane.f32.xlu0 %v3421
        %v3423 = vpop.xlane.xlu0 %3422
        %v3424 = vsub.f32 %v3410, %v3420
        %v3425 = vsub.f32 %v3415, %v3423
        %v3426 = vmul.f32 %v3424, 1.442695
        %v3427 = vpow.pop %v3426
        %v3428 = vmul.f32 %v3425, 1.442695
        %v3429 = vpow.pop %v3428
        %v3430 = vsel %vm984, %v3427, 0.0
        %3431 = vadd.xlane.f32.xlu0 %v3430
        %v3432 = vpop.xlane.xlu0 %3431
        %v3433 = vsel %vm984, %v3429, 0.0
        %3434 = vadd.xlane.f32.xlu0 %v3433
        %v3435 = vpop.xlane.xlu0 %3434
        %v3436 = vrcp.pop %v3432
        %v3437 = vrcp.pop %v3435
        %v3438 = vmul.f32 %v3427, %v3436
        %v3439 = vmul.f32 %v3429, %v3437
        %v3441 = vsel %vm984, %v3438, 0
        %v3444 = vsel %vm984, %v3439, 0
        %3446 = vmatprep.subr.mxu0 0.0
        %3447 = vmatpush1.msra.mxu0 %v3323
        %3448 = vmatprep.subr.mxu0 0.0
        %3449 = vmatpush1.msra.mxu0 %v3328
        %3450 = vmatprep.subr.mxu0 0.0
        %3451 = vmatpush1.msra.mxu0 0.0
        %3452 = vmatprep.subr.mxu0 0.0
        %3453 = vmatpush1.msra.mxu0 0.0
        %3454 = vmatprep.subr.mxu0 0.0
        %3455 = vmatpush1.msra.mxu0 0.0
        %3456 = vmatprep.subr.mxu0 0.0
        %3457 = vmatpush1.msra.mxu0 0.0
        %3458 = vmatprep.subr.mxu0 0.0
        %3459 = vmatpush1.msra.mxu0 0.0
        %3460 = vmatprep.subr.mxu0 0.0
        %3461 = vmatpush1.msra.mxu0 0.0
        %3462 = vmatprep.subr.mxu0 0.0
        %3463 = vmatpush1.msra.mxu0 0.0
        %3464 = vmatprep.subr.mxu0 0.0
        %3465 = vmatpush1.msra.mxu0 0.0
        %3466 = vmatprep.subr.mxu0 0.0
        %3467 = vmatpush1.msra.mxu0 0.0
        %3468 = vmatprep.subr.mxu0 0.0
        %3469 = vmatpush1.msra.mxu0 0.0
        %3470 = vmatprep.subr.mxu0 0.0
        %3471 = vmatpush1.msra.mxu0 0.0
        %3472 = vmatprep.subr.mxu0 0.0
        %3473 = vmatpush1.msra.mxu0 0.0
        %3474 = vmatprep.subr.mxu0 0.0
        %3475 = vmatpush1.msra.mxu0 0.0
        %3476 = vmatprep.subr.mxu0 0.0
        %3477 = vmatpush1.msra.mxu0 0.0
        %3478 = vmatprep.subr.mxu0 0.0
        %3479 = vmatpush1.msra.mxu0 0.0
        %3480 = vmatprep.subr.mxu0 0.0
        %3481 = vmatpush1.msra.mxu0 0.0
        %3482 = vmatprep.subr.mxu0 0.0
        %3483 = vmatpush1.msra.mxu0 0.0
        %3484 = vmatprep.subr.mxu0 0.0
        %3485 = vmatpush1.msra.mxu0 0.0
        %3486 = vmatprep.subr.mxu0 0.0
        %3487 = vmatpush1.msra.mxu0 0.0
        %3488 = vmatprep.subr.mxu0 0.0
        %3489 = vmatpush1.msra.mxu0 0.0
        %3490 = vmatprep.subr.mxu0 0.0
        %3491 = vmatpush1.msra.mxu0 0.0
        %3492 = vmatprep.subr.mxu0 0.0
        %3493 = vmatpush1.msra.mxu0 0.0
        %3494 = vmatprep.subr.mxu0 0.0
        %3495 = vmatpush1.msra.mxu0 0.0
        %3496 = vmatprep.subr.mxu0 0.0
        %3497 = vmatpush1.msra.mxu0 0.0
        %3498 = vmatprep.subr.mxu0 0.0
        %3499 = vmatpush1.msra.mxu0 0.0
        %3500 = vmatprep.subr.mxu0 0.0
        %3501 = vmatpush1.msra.mxu0 0.0
        %3502 = vmatprep.subr.mxu0 0.0
        %3503 = vmatpush1.msra.mxu0 0.0
        %3504 = vmatprep.subr.mxu0 0.0
        %3505 = vmatpush1.msra.mxu0 0.0
        %3506 = vmatprep.subr.mxu0 0.0
        %3507 = vmatpush1.msra.mxu0 0.0
        %3508 = vmatprep.subr.mxu0 0.0
        %3509 = vmatpush1.msra.mxu0 0.0
        %3510 = vmatprep.mubr.f32.mxu0 0.0
        %3511 = vmatmul.mubr.f32.gmra.mrb[0].mxu0 %v3441
        %v3512 = vpop.f32.mrb[0].mxu0
        %v3513 = vadd.f32 0.0, %v3512
        %v3514 = vpop.f32.mrb[0].mxu0
        %3515 = vmatprep.mubr.f32.mxu0 0.0
        %3516 = vmatmul.mubr.f32.gmra.mrb[0].mxu0 %v3444
        %v3517 = vpop.f32.mrb[0].mxu0
        %v3518 = vadd.f32 0.0, %v3517
        %v3519 = vpop.f32.mrb[0].mxu0
        %3520 = vdwg.mxu0
        %3521 = vst.msk [vmem:[#allocation2] sm:$0xff] %vm984, %v3513
        %3522 = vst.msk [vmem:[#allocation2 + $0x8] sm:$0xff] %vm984, %v3518
        %3523 = vrot.lane.b32.xlu0 %v3246, 112
        %v3524 = vpop.permute.xlu0 %3523
        %3525 = vrot.lane.b32.xlu0 %v3252, 112
        %v3526 = vpop.permute.xlu0 %3525
        %3527 = vrot.lane.b32.xlu0 %v3248, 112
        %v3528 = vpop.permute.xlu0 %3527
        %3529 = vrot.lane.b32.xlu0 %v3254, 112
        %v3530 = vpop.permute.xlu0 %3529
        %v3531 = vsel %vm984, %v3524, 0
        %v3533 = vsel %vm984, %v3526, 0
        %v3535 = vsel %vm984, %v3528, 0
        %v3537 = vsel %vm984, %v3530, 0
        %3539 = vmatprep.subr.mxu0 0.0
        %3540 = vmatpush1.xpose.msra.mxu0 %v3535
        %3541 = vmatprep.subr.mxu0 0.0
        %3542 = vmatpush1.xpose.msra.mxu0 %v3537
        %3543 = vmatprep.subr.mxu0 0.0
        %3544 = vmatpush1.xpose.msra.mxu0 0.0
        %3545 = vmatprep.subr.mxu0 0.0
        %3546 = vmatpush1.xpose.msra.mxu0 0.0
        %3547 = vmatprep.subr.mxu0 0.0
        %3548 = vmatpush1.xpose.msra.mxu0 0.0
        %3549 = vmatprep.subr.mxu0 0.0
        %3550 = vmatpush1.xpose.msra.mxu0 0.0
        %3551 = vmatprep.subr.mxu0 0.0
        %3552 = vmatpush1.xpose.msra.mxu0 0.0
        %3553 = vmatprep.subr.mxu0 0.0
        %3554 = vmatpush1.xpose.msra.mxu0 0.0
        %3555 = vmatprep.subr.mxu0 0.0
        %3556 = vmatpush1.xpose.msra.mxu0 0.0
        %3557 = vmatprep.subr.mxu0 0.0
        %3558 = vmatpush1.xpose.msra.mxu0 0.0
        %3559 = vmatprep.subr.mxu0 0.0
        %3560 = vmatpush1.xpose.msra.mxu0 0.0
        %3561 = vmatprep.subr.mxu0 0.0
        %3562 = vmatpush1.xpose.msra.mxu0 0.0
        %3563 = vmatprep.subr.mxu0 0.0
        %3564 = vmatpush1.xpose.msra.mxu0 0.0
        %3565 = vmatprep.subr.mxu0 0.0
        %3566 = vmatpush1.xpose.msra.mxu0 0.0
        %3567 = vmatprep.subr.mxu0 0.0
        %3568 = vmatpush1.xpose.msra.mxu0 0.0
        %3569 = vmatprep.subr.mxu0 0.0
        %3570 = vmatpush1.xpose.msra.mxu0 0.0
        %3571 = vmatprep.subr.mxu0 0.0
        %3572 = vmatpush1.xpose.msra.mxu0 0.0
        %3573 = vmatprep.subr.mxu0 0.0
        %3574 = vmatpush1.xpose.msra.mxu0 0.0
        %3575 = vmatprep.subr.mxu0 0.0
        %3576 = vmatpush1.xpose.msra.mxu0 0.0
        %3577 = vmatprep.subr.mxu0 0.0
        %3578 = vmatpush1.xpose.msra.mxu0 0.0
        %3579 = vmatprep.subr.mxu0 0.0
        %3580 = vmatpush1.xpose.msra.mxu0 0.0
        %3581 = vmatprep.subr.mxu0 0.0
        %3582 = vmatpush1.xpose.msra.mxu0 0.0
        %3583 = vmatprep.subr.mxu0 0.0
        %3584 = vmatpush1.xpose.msra.mxu0 0.0
        %3585 = vmatprep.subr.mxu0 0.0
        %3586 = vmatpush1.xpose.msra.mxu0 0.0
        %3587 = vmatprep.subr.mxu0 0.0
        %3588 = vmatpush1.xpose.msra.mxu0 0.0
        %3589 = vmatprep.subr.mxu0 0.0
        %3590 = vmatpush1.xpose.msra.mxu0 0.0
        %3591 = vmatprep.subr.mxu0 0.0
        %3592 = vmatpush1.xpose.msra.mxu0 0.0
        %3593 = vmatprep.subr.mxu0 0.0
        %3594 = vmatpush1.xpose.msra.mxu0 0.0
        %3595 = vmatprep.subr.mxu0 0.0
        %3596 = vmatpush1.xpose.msra.mxu0 0.0
        %3597 = vmatprep.subr.mxu0 0.0
        %3598 = vmatpush1.xpose.msra.mxu0 0.0
        %3599 = vmatprep.subr.mxu0 0.0
        %3600 = vmatpush1.xpose.msra.mxu0 0.0
        %3601 = vmatprep.subr.mxu0 0.0
        %3602 = vmatpush1.xpose.msra.mxu0 0.0
        %3603 = vmatprep.mubr.f32.mxu0 0.0
        %3604 = vmatmul.mubr.f32.gmra.mrb[0].mxu0 %v3531
        %v3605 = vpop.f32.mrb[0].mxu0
        %v3606 = vadd.f32 0.0, %v3605
        %v3607 = vpop.f32.mrb[0].mxu0
        %3608 = vmatprep.mubr.f32.mxu0 0.0
        %3609 = vmatmul.mubr.f32.gmra.mrb[0].mxu0 %v3533
        %v3610 = vpop.f32.mrb[0].mxu0
        %v3611 = vadd.f32 0.0, %v3610
        %v3612 = vpop.f32.mrb[0].mxu0
        %3613 = vdwg.mxu0
        %v3614 = vsel %vm984, %v3606, -inf
        %3615 = vmax.xlane.f32.xlu0 %v3614
        %v3616 = vpop.xlane.xlu0 %3615
        %v3617 = vsel %vm984, %v3611, -inf
        %3618 = vmax.xlane.f32.xlu0 %v3617
        %v3619 = vpop.xlane.xlu0 %3618
        %v3620 = vsub.f32 %v3606, %v3616
        %v3621 = vsub.f32 %v3611, %v3619
        %v3622 = vmul.f32 %v3620, 1.442695
        %v3623 = vpow.pop %v3622
        %v3624 = vmul.f32 %v3621, 1.442695
        %v3625 = vpow.pop %v3624
        %v3626 = vsel %vm984, %v3623, 0.0
        %3627 = vadd.xlane.f32.xlu0 %v3626
        %v3628 = vpop.xlane.xlu0 %3627
        %v3629 = vsel %vm984, %v3625, 0.0
        %3630 = vadd.xlane.f32.xlu0 %v3629
        %v3631 = vpop.xlane.xlu0 %3630
        %v3632 = vrcp.pop %v3628
        %v3633 = vrcp.pop %v3631
        %v3634 = vmul.f32 %v3623, %v3632
        %v3635 = vmul.f32 %v3625, %v3633
        %3638 = vrot.lane.b32.xlu0 %v3323, 112
        %v3639 = vpop.permute.xlu0 %3638
        %3640 = vrot.lane.b32.xlu0 %v3328, 112
        %v3641 = vpop.permute.xlu0 %3640
        %v3645 = vsel %vm984, %v3634, 0
        %v3648 = vsel %vm984, %v3635, 0
        %3650 = vmatprep.subr.mxu0 0.0
        %3651 = vmatpush1.msra.mxu0 %v3639
        %3652 = vmatprep.subr.mxu0 0.0
        %3653 = vmatpush1.msra.mxu0 %v3641
        %3654 = vmatprep.subr.mxu0 0.0
        %3655 = vmatpush1.msra.mxu0 0.0
        %3656 = vmatprep.subr.mxu0 0.0
        %3657 = vmatpush1.msra.mxu0 0.0
        %3658 = vmatprep.subr.mxu0 0.0
        %3659 = vmatpush1.msra.mxu0 0.0
        %3660 = vmatprep.subr.mxu0 0.0
        %3661 = vmatpush1.msra.mxu0 0.0
        %3662 = vmatprep.subr.mxu0 0.0
        %3663 = vmatpush1.msra.mxu0 0.0
        %3664 = vmatprep.subr.mxu0 0.0
        %3665 = vmatpush1.msra.mxu0 0.0
        %3666 = vmatprep.subr.mxu0 0.0
        %3667 = vmatpush1.msra.mxu0 0.0
        %3668 = vmatprep.subr.mxu0 0.0
        %3669 = vmatpush1.msra.mxu0 0.0
        %3670 = vmatprep.subr.mxu0 0.0
        %3671 = vmatpush1.msra.mxu0 0.0
        %3672 = vmatprep.subr.mxu0 0.0
        %3673 = vmatpush1.msra.mxu0 0.0
        %3674 = vmatprep.subr.mxu0 0.0
        %3675 = vmatpush1.msra.mxu0 0.0
        %3676 = vmatprep.subr.mxu0 0.0
        %3677 = vmatpush1.msra.mxu0 0.0
        %3678 = vmatprep.subr.mxu0 0.0
        %3679 = vmatpush1.msra.mxu0 0.0
        %3680 = vmatprep.subr.mxu0 0.0
        %3681 = vmatpush1.msra.mxu0 0.0
        %3682 = vmatprep.subr.mxu0 0.0
        %3683 = vmatpush1.msra.mxu0 0.0
        %3684 = vmatprep.subr.mxu0 0.0
        %3685 = vmatpush1.msra.mxu0 0.0
        %3686 = vmatprep.subr.mxu0 0.0
        %3687 = vmatpush1.msra.mxu0 0.0
        %3688 = vmatprep.subr.mxu0 0.0
        %3689 = vmatpush1.msra.mxu0 0.0
        %3690 = vmatprep.subr.mxu0 0.0
        %3691 = vmatpush1.msra.mxu0 0.0
        %3692 = vmatprep.subr.mxu0 0.0
        %3693 = vmatpush1.msra.mxu0 0.0
        %3694 = vmatprep.subr.mxu0 0.0
        %3695 = vmatpush1.msra.mxu0 0.0
        %3696 = vmatprep.subr.mxu0 0.0
        %3697 = vmatpush1.msra.mxu0 0.0
        %3698 = vmatprep.subr.mxu0 0.0
        %3699 = vmatpush1.msra.mxu0 0.0
        %3700 = vmatprep.subr.mxu0 0.0
        %3701 = vmatpush1.msra.mxu0 0.0
        %3702 = vmatprep.subr.mxu0 0.0
        %3703 = vmatpush1.msra.mxu0 0.0
        %3704 = vmatprep.subr.mxu0 0.0
        %3705 = vmatpush1.msra.mxu0 0.0
        %3706 = vmatprep.subr.mxu0 0.0
        %3707 = vmatpush1.msra.mxu0 0.0
        %3708 = vmatprep.subr.mxu0 0.0
        %3709 = vmatpush1.msra.mxu0 0.0
        %3710 = vmatprep.subr.mxu0 0.0
        %3711 = vmatpush1.msra.mxu0 0.0
        %3712 = vmatprep.subr.mxu0 0.0
        %3713 = vmatpush1.msra.mxu0 0.0
        %3714 = vmatprep.mubr.f32.mxu0 0.0
        %3715 = vmatmul.mubr.f32.gmra.mrb[0].mxu0 %v3645
        %v3716 = vpop.f32.mrb[0].mxu0
        %v3717 = vadd.f32 0.0, %v3716
        %v3718 = vpop.f32.mrb[0].mxu0
        %3719 = vmatprep.mubr.f32.mxu0 0.0
        %3720 = vmatmul.mubr.f32.gmra.mrb[0].mxu0 %v3648
        %v3721 = vpop.f32.mrb[0].mxu0
        %v3722 = vadd.f32 0.0, %v3721
        %v3723 = vpop.f32.mrb[0].mxu0
        %3724 = vdwg.mxu0
        %3727 = vrot.lane.b32.xlu0 %v3717, 16
        %v3728 = vpop.permute.xlu0 %3727
        %3729 = vrot.lane.b32.xlu0 %v3722, 16
        %v3730 = vpop.permute.xlu0 %3729
        %3733 = vst.msk [vmem:[#allocation2] sm:$0xff] %vm1387, %v3728
        %3734 = vst.msk [vmem:[#allocation2 + $0x8] sm:$0xff] %vm1387, %v3730
        %3735 = vrot.lane.b32.xlu0 %v3246, 96
        %v3736 = vpop.permute.xlu0 %3735
        %3737 = vrot.lane.b32.xlu0 %v3252, 96
        %v3738 = vpop.permute.xlu0 %3737
        %3739 = vrot.lane.b32.xlu0 %v3248, 96
        %v3740 = vpop.permute.xlu0 %3739
        %3741 = vrot.lane.b32.xlu0 %v3254, 96
        %v3742 = vpop.permute.xlu0 %3741
        %v3743 = vsel %vm984, %v3736, 0
        %v3745 = vsel %vm984, %v3738, 0
        %v3747 = vsel %vm984, %v3740, 0
        %v3749 = vsel %vm984, %v3742, 0
        %3751 = vmatprep.subr.mxu0 0.0
        %3752 = vmatpush1.xpose.msra.mxu0 %v3747
        %3753 = vmatprep.subr.mxu0 0.0
        %3754 = vmatpush1.xpose.msra.mxu0 %v3749
        %3755 = vmatprep.subr.mxu0 0.0
        %3756 = vmatpush1.xpose.msra.mxu0 0.0
        %3757 = vmatprep.subr.mxu0 0.0
        %3758 = vmatpush1.xpose.msra.mxu0 0.0
        %3759 = vmatprep.subr.mxu0 0.0
        %3760 = vmatpush1.xpose.msra.mxu0 0.0
        %3761 = vmatprep.subr.mxu0 0.0
        %3762 = vmatpush1.xpose.msra.mxu0 0.0
        %3763 = vmatprep.subr.mxu0 0.0
        %3764 = vmatpush1.xpose.msra.mxu0 0.0
        %3765 = vmatprep.subr.mxu0 0.0
        %3766 = vmatpush1.xpose.msra.mxu0 0.0
        %3767 = vmatprep.subr.mxu0 0.0
        %3768 = vmatpush1.xpose.msra.mxu0 0.0
        %3769 = vmatprep.subr.mxu0 0.0
        %3770 = vmatpush1.xpose.msra.mxu0 0.0
        %3771 = vmatprep.subr.mxu0 0.0
        %3772 = vmatpush1.xpose.msra.mxu0 0.0
        %3773 = vmatprep.subr.mxu0 0.0
        %3774 = vmatpush1.xpose.msra.mxu0 0.0
        %3775 = vmatprep.subr.mxu0 0.0
        %3776 = vmatpush1.xpose.msra.mxu0 0.0
        %3777 = vmatprep.subr.mxu0 0.0
        %3778 = vmatpush1.xpose.msra.mxu0 0.0
        %3779 = vmatprep.subr.mxu0 0.0
        %3780 = vmatpush1.xpose.msra.mxu0 0.0
        %3781 = vmatprep.subr.mxu0 0.0
        %3782 = vmatpush1.xpose.msra.mxu0 0.0
        %3783 = vmatprep.subr.mxu0 0.0
        %3784 = vmatpush1.xpose.msra.mxu0 0.0
        %3785 = vmatprep.subr.mxu0 0.0
        %3786 = vmatpush1.xpose.msra.mxu0 0.0
        %3787 = vmatprep.subr.mxu0 0.0
        %3788 = vmatpush1.xpose.msra.mxu0 0.0
        %3789 = vmatprep.subr.mxu0 0.0
        %3790 = vmatpush1.xpose.msra.mxu0 0.0
        %3791 = vmatprep.subr.mxu0 0.0
        %3792 = vmatpush1.xpose.msra.mxu0 0.0
        %3793 = vmatprep.subr.mxu0 0.0
        %3794 = vmatpush1.xpose.msra.mxu0 0.0
        %3795 = vmatprep.subr.mxu0 0.0
        %3796 = vmatpush1.xpose.msra.mxu0 0.0
        %3797 = vmatprep.subr.mxu0 0.0
        %3798 = vmatpush1.xpose.msra.mxu0 0.0
        %3799 = vmatprep.subr.mxu0 0.0
        %3800 = vmatpush1.xpose.msra.mxu0 0.0
        %3801 = vmatprep.subr.mxu0 0.0
        %3802 = vmatpush1.xpose.msra.mxu0 0.0
        %3803 = vmatprep.subr.mxu0 0.0
        %3804 = vmatpush1.xpose.msra.mxu0 0.0
        %3805 = vmatprep.subr.mxu0 0.0
        %3806 = vmatpush1.xpose.msra.mxu0 0.0
        %3807 = vmatprep.subr.mxu0 0.0
        %3808 = vmatpush1.xpose.msra.mxu0 0.0
        %3809 = vmatprep.subr.mxu0 0.0
        %3810 = vmatpush1.xpose.msra.mxu0 0.0
        %3811 = vmatprep.subr.mxu0 0.0
        %3812 = vmatpush1.xpose.msra.mxu0 0.0
        %3813 = vmatprep.subr.mxu0 0.0
        %3814 = vmatpush1.xpose.msra.mxu0 0.0
        %3815 = vmatprep.mubr.f32.mxu0 0.0
        %3816 = vmatmul.mubr.f32.gmra.mrb[0].mxu0 %v3743
        %v3817 = vpop.f32.mrb[0].mxu0
        %v3818 = vadd.f32 0.0, %v3817
        %v3819 = vpop.f32.mrb[0].mxu0
        %3820 = vmatprep.mubr.f32.mxu0 0.0
        %3821 = vmatmul.mubr.f32.gmra.mrb[0].mxu0 %v3745
        %v3822 = vpop.f32.mrb[0].mxu0
        %v3823 = vadd.f32 0.0, %v3822
        %v3824 = vpop.f32.mrb[0].mxu0
        %3825 = vdwg.mxu0
        %v3826 = vsel %vm984, %v3818, -inf
        %3827 = vmax.xlane.f32.xlu0 %v3826
        %v3828 = vpop.xlane.xlu0 %3827
        %v3829 = vsel %vm984, %v3823, -inf
        %3830 = vmax.xlane.f32.xlu0 %v3829
        %v3831 = vpop.xlane.xlu0 %3830
        %v3832 = vsub.f32 %v3818, %v3828
        %v3833 = vsub.f32 %v3823, %v3831
        %v3834 = vmul.f32 %v3832, 1.442695
        %v3835 = vpow.pop %v3834
        %v3836 = vmul.f32 %v3833, 1.442695
        %v3837 = vpow.pop %v3836
        %v3838 = vsel %vm984, %v3835, 0.0
        %3839 = vadd.xlane.f32.xlu0 %v3838
        %v3840 = vpop.xlane.xlu0 %3839
        %v3841 = vsel %vm984, %v3837, 0.0
        %3842 = vadd.xlane.f32.xlu0 %v3841
        %v3843 = vpop.xlane.xlu0 %3842
        %v3844 = vrcp.pop %v3840
        %v3845 = vrcp.pop %v3843
        %v3846 = vmul.f32 %v3835, %v3844
        %v3847 = vmul.f32 %v3837, %v3845
        %3848 = vrot.lane.b32.xlu0 %v3323, 96
        %v3849 = vpop.permute.xlu0 %3848
        %3850 = vrot.lane.b32.xlu0 %v3328, 96
        %v3851 = vpop.permute.xlu0 %3850
        %v3855 = vsel %vm984, %v3846, 0
        %v3858 = vsel %vm984, %v3847, 0
        %3860 = vmatprep.subr.mxu0 0.0
        %3861 = vmatpush1.msra.mxu0 %v3849
        %3862 = vmatprep.subr.mxu0 0.0
        %3863 = vmatpush1.msra.mxu0 %v3851
        %3864 = vmatprep.subr.mxu0 0.0
        %3865 = vmatpush1.msra.mxu0 0.0
        %3866 = vmatprep.subr.mxu0 0.0
        %3867 = vmatpush1.msra.mxu0 0.0
        %3868 = vmatprep.subr.mxu0 0.0
        %3869 = vmatpush1.msra.mxu0 0.0
        %3870 = vmatprep.subr.mxu0 0.0
        %3871 = vmatpush1.msra.mxu0 0.0
        %3872 = vmatprep.subr.mxu0 0.0
        %3873 = vmatpush1.msra.mxu0 0.0
        %3874 = vmatprep.subr.mxu0 0.0
        %3875 = vmatpush1.msra.mxu0 0.0
        %3876 = vmatprep.subr.mxu0 0.0
        %3877 = vmatpush1.msra.mxu0 0.0
        %3878 = vmatprep.subr.mxu0 0.0
        %3879 = vmatpush1.msra.mxu0 0.0
        %3880 = vmatprep.subr.mxu0 0.0
        %3881 = vmatpush1.msra.mxu0 0.0
        %3882 = vmatprep.subr.mxu0 0.0
        %3883 = vmatpush1.msra.mxu0 0.0
        %3884 = vmatprep.subr.mxu0 0.0
        %3885 = vmatpush1.msra.mxu0 0.0
        %3886 = vmatprep.subr.mxu0 0.0
        %3887 = vmatpush1.msra.mxu0 0.0
        %3888 = vmatprep.subr.mxu0 0.0
        %3889 = vmatpush1.msra.mxu0 0.0
        %3890 = vmatprep.subr.mxu0 0.0
        %3891 = vmatpush1.msra.mxu0 0.0
        %3892 = vmatprep.subr.mxu0 0.0
        %3893 = vmatpush1.msra.mxu0 0.0
        %3894 = vmatprep.subr.mxu0 0.0
        %3895 = vmatpush1.msra.mxu0 0.0
        %3896 = vmatprep.subr.mxu0 0.0
        %3897 = vmatpush1.msra.mxu0 0.0
        %3898 = vmatprep.subr.mxu0 0.0
        %3899 = vmatpush1.msra.mxu0 0.0
        %3900 = vmatprep.subr.mxu0 0.0
        %3901 = vmatpush1.msra.mxu0 0.0
        %3902 = vmatprep.subr.mxu0 0.0
        %3903 = vmatpush1.msra.mxu0 0.0
        %3904 = vmatprep.subr.mxu0 0.0
        %3905 = vmatpush1.msra.mxu0 0.0
        %3906 = vmatprep.subr.mxu0 0.0
        %3907 = vmatpush1.msra.mxu0 0.0
        %3908 = vmatprep.subr.mxu0 0.0
        %3909 = vmatpush1.msra.mxu0 0.0
        %3910 = vmatprep.subr.mxu0 0.0
        %3911 = vmatpush1.msra.mxu0 0.0
        %3912 = vmatprep.subr.mxu0 0.0
        %3913 = vmatpush1.msra.mxu0 0.0
        %3914 = vmatprep.subr.mxu0 0.0
        %3915 = vmatpush1.msra.mxu0 0.0
        %3916 = vmatprep.subr.mxu0 0.0
        %3917 = vmatpush1.msra.mxu0 0.0
        %3918 = vmatprep.subr.mxu0 0.0
        %3919 = vmatpush1.msra.mxu0 0.0
        %3920 = vmatprep.subr.mxu0 0.0
        %3921 = vmatpush1.msra.mxu0 0.0
        %3922 = vmatprep.subr.mxu0 0.0
        %3923 = vmatpush1.msra.mxu0 0.0
        %3924 = vmatprep.mubr.f32.mxu0 0.0
        %3925 = vmatmul.mubr.f32.gmra.mrb[0].mxu0 %v3855
        %v3926 = vpop.f32.mrb[0].mxu0
        %v3927 = vadd.f32 0.0, %v3926
        %v3928 = vpop.f32.mrb[0].mxu0
        %3929 = vmatprep.mubr.f32.mxu0 0.0
        %3930 = vmatmul.mubr.f32.gmra.mrb[0].mxu0 %v3858
        %v3931 = vpop.f32.mrb[0].mxu0
        %v3932 = vadd.f32 0.0, %v3931
        %v3933 = vpop.f32.mrb[0].mxu0
        %3934 = vdwg.mxu0
        %3937 = vrot.lane.b32.xlu0 %v3927, 32
        %v3938 = vpop.permute.xlu0 %3937
        %3939 = vrot.lane.b32.xlu0 %v3932, 32
        %v3940 = vpop.permute.xlu0 %3939
        %3943 = vst.msk [vmem:[#allocation2] sm:$0xff] %vm1598, %v3938
        %3944 = vst.msk [vmem:[#allocation2 + $0x8] sm:$0xff] %vm1598, %v3940
        %3945 = vrot.lane.b32.xlu0 %v3246, 80
        %v3946 = vpop.permute.xlu0 %3945
        %3947 = vrot.lane.b32.xlu0 %v3252, 80
        %v3948 = vpop.permute.xlu0 %3947
        %3949 = vrot.lane.b32.xlu0 %v3248, 80
        %v3950 = vpop.permute.xlu0 %3949
        %3951 = vrot.lane.b32.xlu0 %v3254, 80
        %v3952 = vpop.permute.xlu0 %3951
        %v3953 = vsel %vm984, %v3946, 0
        %v3955 = vsel %vm984, %v3948, 0
        %v3957 = vsel %vm984, %v3950, 0
        %v3959 = vsel %vm984, %v3952, 0
        %3961 = vmatprep.subr.mxu0 0.0
        %3962 = vmatpush1.xpose.msra.mxu0 %v3957
        %3963 = vmatprep.subr.mxu0 0.0
        %3964 = vmatpush1.xpose.msra.mxu0 %v3959
        %3965 = vmatprep.subr.mxu0 0.0
        %3966 = vmatpush1.xpose.msra.mxu0 0.0
        %3967 = vmatprep.subr.mxu0 0.0
        %3968 = vmatpush1.xpose.msra.mxu0 0.0
        %3969 = vmatprep.subr.mxu0 0.0
        %3970 = vmatpush1.xpose.msra.mxu0 0.0
        %3971 = vmatprep.subr.mxu0 0.0
        %3972 = vmatpush1.xpose.msra.mxu0 0.0
        %3973 = vmatprep.subr.mxu0 0.0
        %3974 = vmatpush1.xpose.msra.mxu0 0.0
        %3975 = vmatprep.subr.mxu0 0.0
        %3976 = vmatpush1.xpose.msra.mxu0 0.0
        %3977 = vmatprep.subr.mxu0 0.0
        %3978 = vmatpush1.xpose.msra.mxu0 0.0
        %3979 = vmatprep.subr.mxu0 0.0
        %3980 = vmatpush1.xpose.msra.mxu0 0.0
        %3981 = vmatprep.subr.mxu0 0.0
        %3982 = vmatpush1.xpose.msra.mxu0 0.0
        %3983 = vmatprep.subr.mxu0 0.0
        %3984 = vmatpush1.xpose.msra.mxu0 0.0
        %3985 = vmatprep.subr.mxu0 0.0
        %3986 = vmatpush1.xpose.msra.mxu0 0.0
        %3987 = vmatprep.subr.mxu0 0.0
        %3988 = vmatpush1.xpose.msra.mxu0 0.0
        %3989 = vmatprep.subr.mxu0 0.0
        %3990 = vmatpush1.xpose.msra.mxu0 0.0
        %3991 = vmatprep.subr.mxu0 0.0
        %3992 = vmatpush1.xpose.msra.mxu0 0.0
        %3993 = vmatprep.subr.mxu0 0.0
        %3994 = vmatpush1.xpose.msra.mxu0 0.0
        %3995 = vmatprep.subr.mxu0 0.0
        %3996 = vmatpush1.xpose.msra.mxu0 0.0
        %3997 = vmatprep.subr.mxu0 0.0
        %3998 = vmatpush1.xpose.msra.mxu0 0.0
        %3999 = vmatprep.subr.mxu0 0.0
        %4000 = vmatpush1.xpose.msra.mxu0 0.0
        %4001 = vmatprep.subr.mxu0 0.0
        %4002 = vmatpush1.xpose.msra.mxu0 0.0
        %4003 = vmatprep.subr.mxu0 0.0
        %4004 = vmatpush1.xpose.msra.mxu0 0.0
        %4005 = vmatprep.subr.mxu0 0.0
        %4006 = vmatpush1.xpose.msra.mxu0 0.0
        %4007 = vmatprep.subr.mxu0 0.0
        %4008 = vmatpush1.xpose.msra.mxu0 0.0
        %4009 = vmatprep.subr.mxu0 0.0
        %4010 = vmatpush1.xpose.msra.mxu0 0.0
        %4011 = vmatprep.subr.mxu0 0.0
        %4012 = vmatpush1.xpose.msra.mxu0 0.0
        %4013 = vmatprep.subr.mxu0 0.0
        %4014 = vmatpush1.xpose.msra.mxu0 0.0
        %4015 = vmatprep.subr.mxu0 0.0
        %4016 = vmatpush1.xpose.msra.mxu0 0.0
        %4017 = vmatprep.subr.mxu0 0.0
        %4018 = vmatpush1.xpose.msra.mxu0 0.0
        %4019 = vmatprep.subr.mxu0 0.0
        %4020 = vmatpush1.xpose.msra.mxu0 0.0
        %4021 = vmatprep.subr.mxu0 0.0
        %4022 = vmatpush1.xpose.msra.mxu0 0.0
        %4023 = vmatprep.subr.mxu0 0.0
        %4024 = vmatpush1.xpose.msra.mxu0 0.0
        %4025 = vmatprep.mubr.f32.mxu0 0.0
        %4026 = vmatmul.mubr.f32.gmra.mrb[0].mxu0 %v3953
        %v4027 = vpop.f32.mrb[0].mxu0
        %v4028 = vadd.f32 0.0, %v4027
        %v4029 = vpop.f32.mrb[0].mxu0
        %4030 = vmatprep.mubr.f32.mxu0 0.0
        %4031 = vmatmul.mubr.f32.gmra.mrb[0].mxu0 %v3955
        %v4032 = vpop.f32.mrb[0].mxu0
        %v4033 = vadd.f32 0.0, %v4032
        %v4034 = vpop.f32.mrb[0].mxu0
        %4035 = vdwg.mxu0
        %v4036 = vsel %vm984, %v4028, -inf
        %4037 = vmax.xlane.f32.xlu0 %v4036
        %v4038 = vpop.xlane.xlu0 %4037
        %v4039 = vsel %vm984, %v4033, -inf
        %4040 = vmax.xlane.f32.xlu0 %v4039
        %v4041 = vpop.xlane.xlu0 %4040
        %v4042 = vsub.f32 %v4028, %v4038
        %v4043 = vsub.f32 %v4033, %v4041
        %v4044 = vmul.f32 %v4042, 1.442695
        %v4045 = vpow.pop %v4044
        %v4046 = vmul.f32 %v4043, 1.442695
        %v4047 = vpow.pop %v4046
        %v4048 = vsel %vm984, %v4045, 0.0
        %4049 = vadd.xlane.f32.xlu0 %v4048
        %v4050 = vpop.xlane.xlu0 %4049
        %v4051 = vsel %vm984, %v4047, 0.0
        %4052 = vadd.xlane.f32.xlu0 %v4051
        %v4053 = vpop.xlane.xlu0 %4052
        %v4054 = vrcp.pop %v4050
        %v4055 = vrcp.pop %v4053
        %v4056 = vmul.f32 %v4045, %v4054
        %v4057 = vmul.f32 %v4047, %v4055
        %4058 = vrot.lane.b32.xlu0 %v3323, 80
        %v4059 = vpop.permute.xlu0 %4058
        %4060 = vrot.lane.b32.xlu0 %v3328, 80
        %v4061 = vpop.permute.xlu0 %4060
        %v4065 = vsel %vm984, %v4056, 0
        %v4068 = vsel %vm984, %v4057, 0
        %4070 = vmatprep.subr.mxu0 0.0
        %4071 = vmatpush1.msra.mxu0 %v4059
        %4072 = vmatprep.subr.mxu0 0.0
        %4073 = vmatpush1.msra.mxu0 %v4061
        %4074 = vmatprep.subr.mxu0 0.0
        %4075 = vmatpush1.msra.mxu0 0.0
        %4076 = vmatprep.subr.mxu0 0.0
        %4077 = vmatpush1.msra.mxu0 0.0
        %4078 = vmatprep.subr.mxu0 0.0
        %4079 = vmatpush1.msra.mxu0 0.0
        %4080 = vmatprep.subr.mxu0 0.0
        %4081 = vmatpush1.msra.mxu0 0.0
        %4082 = vmatprep.subr.mxu0 0.0
        %4083 = vmatpush1.msra.mxu0 0.0
        %4084 = vmatprep.subr.mxu0 0.0
        %4085 = vmatpush1.msra.mxu0 0.0
        %4086 = vmatprep.subr.mxu0 0.0
        %4087 = vmatpush1.msra.mxu0 0.0
        %4088 = vmatprep.subr.mxu0 0.0
        %4089 = vmatpush1.msra.mxu0 0.0
        %4090 = vmatprep.subr.mxu0 0.0
        %4091 = vmatpush1.msra.mxu0 0.0
        %4092 = vmatprep.subr.mxu0 0.0
        %4093 = vmatpush1.msra.mxu0 0.0
        %4094 = vmatprep.subr.mxu0 0.0
        %4095 = vmatpush1.msra.mxu0 0.0
        %4096 = vmatprep.subr.mxu0 0.0
        %4097 = vmatpush1.msra.mxu0 0.0
        %4098 = vmatprep.subr.mxu0 0.0
        %4099 = vmatpush1.msra.mxu0 0.0
        %4100 = vmatprep.subr.mxu0 0.0
        %4101 = vmatpush1.msra.mxu0 0.0
        %4102 = vmatprep.subr.mxu0 0.0
        %4103 = vmatpush1.msra.mxu0 0.0
        %4104 = vmatprep.subr.mxu0 0.0
        %4105 = vmatpush1.msra.mxu0 0.0
        %4106 = vmatprep.subr.mxu0 0.0
        %4107 = vmatpush1.msra.mxu0 0.0
        %4108 = vmatprep.subr.mxu0 0.0
        %4109 = vmatpush1.msra.mxu0 0.0
        %4110 = vmatprep.subr.mxu0 0.0
        %4111 = vmatpush1.msra.mxu0 0.0
        %4112 = vmatprep.subr.mxu0 0.0
        %4113 = vmatpush1.msra.mxu0 0.0
        %4114 = vmatprep.subr.mxu0 0.0
        %4115 = vmatpush1.msra.mxu0 0.0
        %4116 = vmatprep.subr.mxu0 0.0
        %4117 = vmatpush1.msra.mxu0 0.0
        %4118 = vmatprep.subr.mxu0 0.0
        %4119 = vmatpush1.msra.mxu0 0.0
        %4120 = vmatprep.subr.mxu0 0.0
        %4121 = vmatpush1.msra.mxu0 0.0
        %4122 = vmatprep.subr.mxu0 0.0
        %4123 = vmatpush1.msra.mxu0 0.0
        %4124 = vmatprep.subr.mxu0 0.0
        %4125 = vmatpush1.msra.mxu0 0.0
        %4126 = vmatprep.subr.mxu0 0.0
        %4127 = vmatpush1.msra.mxu0 0.0
        %4128 = vmatprep.subr.mxu0 0.0
        %4129 = vmatpush1.msra.mxu0 0.0
        %4130 = vmatprep.subr.mxu0 0.0
        %4131 = vmatpush1.msra.mxu0 0.0
        %4132 = vmatprep.subr.mxu0 0.0
        %4133 = vmatpush1.msra.mxu0 0.0
        %4134 = vmatprep.mubr.f32.mxu0 0.0
        %4135 = vmatmul.mubr.f32.gmra.mrb[0].mxu0 %v4065
        %v4136 = vpop.f32.mrb[0].mxu0
        %v4137 = vadd.f32 0.0, %v4136
        %v4138 = vpop.f32.mrb[0].mxu0
        %4139 = vmatprep.mubr.f32.mxu0 0.0
        %4140 = vmatmul.mubr.f32.gmra.mrb[0].mxu0 %v4068
        %v4141 = vpop.f32.mrb[0].mxu0
        %v4142 = vadd.f32 0.0, %v4141
        %v4143 = vpop.f32.mrb[0].mxu0
        %4144 = vdwg.mxu0
        %4147 = vrot.lane.b32.xlu0 %v4137, 48
        %v4148 = vpop.permute.xlu0 %4147
        %4149 = vrot.lane.b32.xlu0 %v4142, 48
        %v4150 = vpop.permute.xlu0 %4149
        %4153 = vst.msk [vmem:[#allocation2] sm:$0xff] %vm1809, %v4148
        %4154 = vst.msk [vmem:[#allocation2 + $0x8] sm:$0xff] %vm1809, %v4150
        %4155 = vrot.lane.b32.xlu0 %v3246, 64
        %v4156 = vpop.permute.xlu0 %4155
        %4157 = vrot.lane.b32.xlu0 %v3252, 64
        %v4158 = vpop.permute.xlu0 %4157
        %4159 = vrot.lane.b32.xlu0 %v3248, 64
        %v4160 = vpop.permute.xlu0 %4159
        %4161 = vrot.lane.b32.xlu0 %v3254, 64
        %v4162 = vpop.permute.xlu0 %4161
        %v4163 = vsel %vm984, %v4156, 0
        %v4165 = vsel %vm984, %v4158, 0
        %v4167 = vsel %vm984, %v4160, 0
        %v4169 = vsel %vm984, %v4162, 0
        %4171 = vmatprep.subr.mxu0 0.0
        %4172 = vmatpush1.xpose.msra.mxu0 %v4167
        %4173 = vmatprep.subr.mxu0 0.0
        %4174 = vmatpush1.xpose.msra.mxu0 %v4169
        %4175 = vmatprep.subr.mxu0 0.0
        %4176 = vmatpush1.xpose.msra.mxu0 0.0
        %4177 = vmatprep.subr.mxu0 0.0
        %4178 = vmatpush1.xpose.msra.mxu0 0.0
        %4179 = vmatprep.subr.mxu0 0.0
        %4180 = vmatpush1.xpose.msra.mxu0 0.0
        %4181 = vmatprep.subr.mxu0 0.0
        %4182 = vmatpush1.xpose.msra.mxu0 0.0
        %4183 = vmatprep.subr.mxu0 0.0
        %4184 = vmatpush1.xpose.msra.mxu0 0.0
        %4185 = vmatprep.subr.mxu0 0.0
        %4186 = vmatpush1.xpose.msra.mxu0 0.0
        %4187 = vmatprep.subr.mxu0 0.0
        %4188 = vmatpush1.xpose.msra.mxu0 0.0
        %4189 = vmatprep.subr.mxu0 0.0
        %4190 = vmatpush1.xpose.msra.mxu0 0.0
        %4191 = vmatprep.subr.mxu0 0.0
        %4192 = vmatpush1.xpose.msra.mxu0 0.0
        %4193 = vmatprep.subr.mxu0 0.0
        %4194 = vmatpush1.xpose.msra.mxu0 0.0
        %4195 = vmatprep.subr.mxu0 0.0
        %4196 = vmatpush1.xpose.msra.mxu0 0.0
        %4197 = vmatprep.subr.mxu0 0.0
        %4198 = vmatpush1.xpose.msra.mxu0 0.0
        %4199 = vmatprep.subr.mxu0 0.0
        %4200 = vmatpush1.xpose.msra.mxu0 0.0
        %4201 = vmatprep.subr.mxu0 0.0
        %4202 = vmatpush1.xpose.msra.mxu0 0.0
        %4203 = vmatprep.subr.mxu0 0.0
        %4204 = vmatpush1.xpose.msra.mxu0 0.0
        %4205 = vmatprep.subr.mxu0 0.0
        %4206 = vmatpush1.xpose.msra.mxu0 0.0
        %4207 = vmatprep.subr.mxu0 0.0
        %4208 = vmatpush1.xpose.msra.mxu0 0.0
        %4209 = vmatprep.subr.mxu0 0.0
        %4210 = vmatpush1.xpose.msra.mxu0 0.0
        %4211 = vmatprep.subr.mxu0 0.0
        %4212 = vmatpush1.xpose.msra.mxu0 0.0
        %4213 = vmatprep.subr.mxu0 0.0
        %4214 = vmatpush1.xpose.msra.mxu0 0.0
        %4215 = vmatprep.subr.mxu0 0.0
        %4216 = vmatpush1.xpose.msra.mxu0 0.0
        %4217 = vmatprep.subr.mxu0 0.0
        %4218 = vmatpush1.xpose.msra.mxu0 0.0
        %4219 = vmatprep.subr.mxu0 0.0
        %4220 = vmatpush1.xpose.msra.mxu0 0.0
        %4221 = vmatprep.subr.mxu0 0.0
        %4222 = vmatpush1.xpose.msra.mxu0 0.0
        %4223 = vmatprep.subr.mxu0 0.0
        %4224 = vmatpush1.xpose.msra.mxu0 0.0
        %4225 = vmatprep.subr.mxu0 0.0
        %4226 = vmatpush1.xpose.msra.mxu0 0.0
        %4227 = vmatprep.subr.mxu0 0.0
        %4228 = vmatpush1.xpose.msra.mxu0 0.0
        %4229 = vmatprep.subr.mxu0 0.0
        %4230 = vmatpush1.xpose.msra.mxu0 0.0
        %4231 = vmatprep.subr.mxu0 0.0
        %4232 = vmatpush1.xpose.msra.mxu0 0.0
        %4233 = vmatprep.subr.mxu0 0.0
        %4234 = vmatpush1.xpose.msra.mxu0 0.0
        %4235 = vmatprep.mubr.f32.mxu0 0.0
        %4236 = vmatmul.mubr.f32.gmra.mrb[0].mxu0 %v4163
        %v4237 = vpop.f32.mrb[0].mxu0
        %v4238 = vadd.f32 0.0, %v4237
        %v4239 = vpop.f32.mrb[0].mxu0
        %4240 = vmatprep.mubr.f32.mxu0 0.0
        %4241 = vmatmul.mubr.f32.gmra.mrb[0].mxu0 %v4165
        %v4242 = vpop.f32.mrb[0].mxu0
        %v4243 = vadd.f32 0.0, %v4242
        %v4244 = vpop.f32.mrb[0].mxu0
        %4245 = vdwg.mxu0
        %v4246 = vsel %vm984, %v4238, -inf
        %4247 = vmax.xlane.f32.xlu0 %v4246
        %v4248 = vpop.xlane.xlu0 %4247
        %v4249 = vsel %vm984, %v4243, -inf
        %4250 = vmax.xlane.f32.xlu0 %v4249
        %v4251 = vpop.xlane.xlu0 %4250
        %v4252 = vsub.f32 %v4238, %v4248
        %v4253 = vsub.f32 %v4243, %v4251
        %v4254 = vmul.f32 %v4252, 1.442695
        %v4255 = vpow.pop %v4254
        %v4256 = vmul.f32 %v4253, 1.442695
        %v4257 = vpow.pop %v4256
        %v4258 = vsel %vm984, %v4255, 0.0
        %4259 = vadd.xlane.f32.xlu0 %v4258
        %v4260 = vpop.xlane.xlu0 %4259
        %v4261 = vsel %vm984, %v4257, 0.0
        %4262 = vadd.xlane.f32.xlu0 %v4261
        %v4263 = vpop.xlane.xlu0 %4262
        %v4264 = vrcp.pop %v4260
        %v4265 = vrcp.pop %v4263
        %v4266 = vmul.f32 %v4255, %v4264
        %v4267 = vmul.f32 %v4257, %v4265
        %4268 = vrot.lane.b32.xlu0 %v3323, 64
        %v4269 = vpop.permute.xlu0 %4268
        %4270 = vrot.lane.b32.xlu0 %v3328, 64
        %v4271 = vpop.permute.xlu0 %4270
        %v4275 = vsel %vm984, %v4266, 0
        %v4278 = vsel %vm984, %v4267, 0
        %4280 = vmatprep.subr.mxu0 0.0
        %4281 = vmatpush1.msra.mxu0 %v4269
        %4282 = vmatprep.subr.mxu0 0.0
        %4283 = vmatpush1.msra.mxu0 %v4271
        %4284 = vmatprep.subr.mxu0 0.0
        %4285 = vmatpush1.msra.mxu0 0.0
        %4286 = vmatprep.subr.mxu0 0.0
        %4287 = vmatpush1.msra.mxu0 0.0
        %4288 = vmatprep.subr.mxu0 0.0
        %4289 = vmatpush1.msra.mxu0 0.0
        %4290 = vmatprep.subr.mxu0 0.0
        %4291 = vmatpush1.msra.mxu0 0.0
        %4292 = vmatprep.subr.mxu0 0.0
        %4293 = vmatpush1.msra.mxu0 0.0
        %4294 = vmatprep.subr.mxu0 0.0
        %4295 = vmatpush1.msra.mxu0 0.0
        %4296 = vmatprep.subr.mxu0 0.0
        %4297 = vmatpush1.msra.mxu0 0.0
        %4298 = vmatprep.subr.mxu0 0.0
        %4299 = vmatpush1.msra.mxu0 0.0
        %4300 = vmatprep.subr.mxu0 0.0
        %4301 = vmatpush1.msra.mxu0 0.0
        %4302 = vmatprep.subr.mxu0 0.0
        %4303 = vmatpush1.msra.mxu0 0.0
        %4304 = vmatprep.subr.mxu0 0.0
        %4305 = vmatpush1.msra.mxu0 0.0
        %4306 = vmatprep.subr.mxu0 0.0
        %4307 = vmatpush1.msra.mxu0 0.0
        %4308 = vmatprep.subr.mxu0 0.0
        %4309 = vmatpush1.msra.mxu0 0.0
        %4310 = vmatprep.subr.mxu0 0.0
        %4311 = vmatpush1.msra.mxu0 0.0
        %4312 = vmatprep.subr.mxu0 0.0
        %4313 = vmatpush1.msra.mxu0 0.0
        %4314 = vmatprep.subr.mxu0 0.0
        %4315 = vmatpush1.msra.mxu0 0.0
        %4316 = vmatprep.subr.mxu0 0.0
        %4317 = vmatpush1.msra.mxu0 0.0
        %4318 = vmatprep.subr.mxu0 0.0
        %4319 = vmatpush1.msra.mxu0 0.0
        %4320 = vmatprep.subr.mxu0 0.0
        %4321 = vmatpush1.msra.mxu0 0.0
        %4322 = vmatprep.subr.mxu0 0.0
        %4323 = vmatpush1.msra.mxu0 0.0
        %4324 = vmatprep.subr.mxu0 0.0
        %4325 = vmatpush1.msra.mxu0 0.0
        %4326 = vmatprep.subr.mxu0 0.0
        %4327 = vmatpush1.msra.mxu0 0.0
        %4328 = vmatprep.subr.mxu0 0.0
        %4329 = vmatpush1.msra.mxu0 0.0
        %4330 = vmatprep.subr.mxu0 0.0
        %4331 = vmatpush1.msra.mxu0 0.0
        %4332 = vmatprep.subr.mxu0 0.0
        %4333 = vmatpush1.msra.mxu0 0.0
        %4334 = vmatprep.subr.mxu0 0.0
        %4335 = vmatpush1.msra.mxu0 0.0
        %4336 = vmatprep.subr.mxu0 0.0
        %4337 = vmatpush1.msra.mxu0 0.0
        %4338 = vmatprep.subr.mxu0 0.0
        %4339 = vmatpush1.msra.mxu0 0.0
        %4340 = vmatprep.subr.mxu0 0.0
        %4341 = vmatpush1.msra.mxu0 0.0
        %4342 = vmatprep.subr.mxu0 0.0
        %4343 = vmatpush1.msra.mxu0 0.0
        %4344 = vmatprep.mubr.f32.mxu0 0.0
        %4345 = vmatmul.mubr.f32.gmra.mrb[0].mxu0 %v4275
        %v4346 = vpop.f32.mrb[0].mxu0
        %v4347 = vadd.f32 0.0, %v4346
        %v4348 = vpop.f32.mrb[0].mxu0
        %4349 = vmatprep.mubr.f32.mxu0 0.0
        %4350 = vmatmul.mubr.f32.gmra.mrb[0].mxu0 %v4278
        %v4351 = vpop.f32.mrb[0].mxu0
        %v4352 = vadd.f32 0.0, %v4351
        %v4353 = vpop.f32.mrb[0].mxu0
        %4354 = vdwg.mxu0
        %4357 = vrot.lane.b32.xlu0 %v4347, 64
        %v4358 = vpop.permute.xlu0 %4357
        %4359 = vrot.lane.b32.xlu0 %v4352, 64
        %v4360 = vpop.permute.xlu0 %4359
        %4363 = vst.msk [vmem:[#allocation2] sm:$0xff] %vm2020, %v4358
        %4364 = vst.msk [vmem:[#allocation2 + $0x8] sm:$0xff] %vm2020, %v4360
        %4365 = vrot.lane.b32.xlu0 %v3246, 48
        %v4366 = vpop.permute.xlu0 %4365
        %4367 = vrot.lane.b32.xlu0 %v3252, 48
        %v4368 = vpop.permute.xlu0 %4367
        %4369 = vrot.lane.b32.xlu0 %v3248, 48
        %v4370 = vpop.permute.xlu0 %4369
        %4371 = vrot.lane.b32.xlu0 %v3254, 48
        %v4372 = vpop.permute.xlu0 %4371
        %v4373 = vsel %vm984, %v4366, 0
        %v4375 = vsel %vm984, %v4368, 0
        %v4377 = vsel %vm984, %v4370, 0
        %v4379 = vsel %vm984, %v4372, 0
        %4381 = vmatprep.subr.mxu0 0.0
        %4382 = vmatpush1.xpose.msra.mxu0 %v4377
        %4383 = vmatprep.subr.mxu0 0.0
        %4384 = vmatpush1.xpose.msra.mxu0 %v4379
        %4385 = vmatprep.subr.mxu0 0.0
        %4386 = vmatpush1.xpose.msra.mxu0 0.0
        %4387 = vmatprep.subr.mxu0 0.0
        %4388 = vmatpush1.xpose.msra.mxu0 0.0
        %4389 = vmatprep.subr.mxu0 0.0
        %4390 = vmatpush1.xpose.msra.mxu0 0.0
        %4391 = vmatprep.subr.mxu0 0.0
        %4392 = vmatpush1.xpose.msra.mxu0 0.0
        %4393 = vmatprep.subr.mxu0 0.0
        %4394 = vmatpush1.xpose.msra.mxu0 0.0
        %4395 = vmatprep.subr.mxu0 0.0
        %4396 = vmatpush1.xpose.msra.mxu0 0.0
        %4397 = vmatprep.subr.mxu0 0.0
        %4398 = vmatpush1.xpose.msra.mxu0 0.0
        %4399 = vmatprep.subr.mxu0 0.0
        %4400 = vmatpush1.xpose.msra.mxu0 0.0
        %4401 = vmatprep.subr.mxu0 0.0
        %4402 = vmatpush1.xpose.msra.mxu0 0.0
        %4403 = vmatprep.subr.mxu0 0.0
        %4404 = vmatpush1.xpose.msra.mxu0 0.0
        %4405 = vmatprep.subr.mxu0 0.0
        %4406 = vmatpush1.xpose.msra.mxu0 0.0
        %4407 = vmatprep.subr.mxu0 0.0
        %4408 = vmatpush1.xpose.msra.mxu0 0.0
        %4409 = vmatprep.subr.mxu0 0.0
        %4410 = vmatpush1.xpose.msra.mxu0 0.0
        %4411 = vmatprep.subr.mxu0 0.0
        %4412 = vmatpush1.xpose.msra.mxu0 0.0
        %4413 = vmatprep.subr.mxu0 0.0
        %4414 = vmatpush1.xpose.msra.mxu0 0.0
        %4415 = vmatprep.subr.mxu0 0.0
        %4416 = vmatpush1.xpose.msra.mxu0 0.0
        %4417 = vmatprep.subr.mxu0 0.0
        %4418 = vmatpush1.xpose.msra.mxu0 0.0
        %4419 = vmatprep.subr.mxu0 0.0
        %4420 = vmatpush1.xpose.msra.mxu0 0.0
        %4421 = vmatprep.subr.mxu0 0.0
        %4422 = vmatpush1.xpose.msra.mxu0 0.0
        %4423 = vmatprep.subr.mxu0 0.0
        %4424 = vmatpush1.xpose.msra.mxu0 0.0
        %4425 = vmatprep.subr.mxu0 0.0
        %4426 = vmatpush1.xpose.msra.mxu0 0.0
        %4427 = vmatprep.subr.mxu0 0.0
        %4428 = vmatpush1.xpose.msra.mxu0 0.0
        %4429 = vmatprep.subr.mxu0 0.0
        %4430 = vmatpush1.xpose.msra.mxu0 0.0
        %4431 = vmatprep.subr.mxu0 0.0
        %4432 = vmatpush1.xpose.msra.mxu0 0.0
        %4433 = vmatprep.subr.mxu0 0.0
        %4434 = vmatpush1.xpose.msra.mxu0 0.0
        %4435 = vmatprep.subr.mxu0 0.0
        %4436 = vmatpush1.xpose.msra.mxu0 0.0
        %4437 = vmatprep.subr.mxu0 0.0
        %4438 = vmatpush1.xpose.msra.mxu0 0.0
        %4439 = vmatprep.subr.mxu0 0.0
        %4440 = vmatpush1.xpose.msra.mxu0 0.0
        %4441 = vmatprep.subr.mxu0 0.0
        %4442 = vmatpush1.xpose.msra.mxu0 0.0
        %4443 = vmatprep.subr.mxu0 0.0
        %4444 = vmatpush1.xpose.msra.mxu0 0.0
        %4445 = vmatprep.mubr.f32.mxu0 0.0
        %4446 = vmatmul.mubr.f32.gmra.mrb[0].mxu0 %v4373
        %v4447 = vpop.f32.mrb[0].mxu0
        %v4448 = vadd.f32 0.0, %v4447
        %v4449 = vpop.f32.mrb[0].mxu0
        %4450 = vmatprep.mubr.f32.mxu0 0.0
        %4451 = vmatmul.mubr.f32.gmra.mrb[0].mxu0 %v4375
        %v4452 = vpop.f32.mrb[0].mxu0
        %v4453 = vadd.f32 0.0, %v4452
        %v4454 = vpop.f32.mrb[0].mxu0
        %4455 = vdwg.mxu0
        %v4456 = vsel %vm984, %v4448, -inf
        %4457 = vmax.xlane.f32.xlu0 %v4456
        %v4458 = vpop.xlane.xlu0 %4457
        %v4459 = vsel %vm984, %v4453, -inf
        %4460 = vmax.xlane.f32.xlu0 %v4459
        %v4461 = vpop.xlane.xlu0 %4460
        %v4462 = vsub.f32 %v4448, %v4458
        %v4463 = vsub.f32 %v4453, %v4461
        %v4464 = vmul.f32 %v4462, 1.442695
        %v4465 = vpow.pop %v4464
        %v4466 = vmul.f32 %v4463, 1.442695
        %v4467 = vpow.pop %v4466
        %v4468 = vsel %vm984, %v4465, 0.0
        %4469 = vadd.xlane.f32.xlu0 %v4468
        %v4470 = vpop.xlane.xlu0 %4469
        %v4471 = vsel %vm984, %v4467, 0.0
        %4472 = vadd.xlane.f32.xlu0 %v4471
        %v4473 = vpop.xlane.xlu0 %4472
        %v4474 = vrcp.pop %v4470
        %v4475 = vrcp.pop %v4473
        %v4476 = vmul.f32 %v4465, %v4474
        %v4477 = vmul.f32 %v4467, %v4475
        %4478 = vrot.lane.b32.xlu0 %v3323, 48
        %v4479 = vpop.permute.xlu0 %4478
        %4480 = vrot.lane.b32.xlu0 %v3328, 48
        %v4481 = vpop.permute.xlu0 %4480
        %v4485 = vsel %vm984, %v4476, 0
        %v4488 = vsel %vm984, %v4477, 0
        %4490 = vmatprep.subr.mxu0 0.0
        %4491 = vmatpush1.msra.mxu0 %v4479
        %4492 = vmatprep.subr.mxu0 0.0
        %4493 = vmatpush1.msra.mxu0 %v4481
        %4494 = vmatprep.subr.mxu0 0.0
        %4495 = vmatpush1.msra.mxu0 0.0
        %4496 = vmatprep.subr.mxu0 0.0
        %4497 = vmatpush1.msra.mxu0 0.0
        %4498 = vmatprep.subr.mxu0 0.0
        %4499 = vmatpush1.msra.mxu0 0.0
        %4500 = vmatprep.subr.mxu0 0.0
        %4501 = vmatpush1.msra.mxu0 0.0
        %4502 = vmatprep.subr.mxu0 0.0
        %4503 = vmatpush1.msra.mxu0 0.0
        %4504 = vmatprep.subr.mxu0 0.0
        %4505 = vmatpush1.msra.mxu0 0.0
        %4506 = vmatprep.subr.mxu0 0.0
        %4507 = vmatpush1.msra.mxu0 0.0
        %4508 = vmatprep.subr.mxu0 0.0
        %4509 = vmatpush1.msra.mxu0 0.0
        %4510 = vmatprep.subr.mxu0 0.0
        %4511 = vmatpush1.msra.mxu0 0.0
        %4512 = vmatprep.subr.mxu0 0.0
        %4513 = vmatpush1.msra.mxu0 0.0
        %4514 = vmatprep.subr.mxu0 0.0
        %4515 = vmatpush1.msra.mxu0 0.0
        %4516 = vmatprep.subr.mxu0 0.0
        %4517 = vmatpush1.msra.mxu0 0.0
        %4518 = vmatprep.subr.mxu0 0.0
        %4519 = vmatpush1.msra.mxu0 0.0
        %4520 = vmatprep.subr.mxu0 0.0
        %4521 = vmatpush1.msra.mxu0 0.0
        %4522 = vmatprep.subr.mxu0 0.0
        %4523 = vmatpush1.msra.mxu0 0.0
        %4524 = vmatprep.subr.mxu0 0.0
        %4525 = vmatpush1.msra.mxu0 0.0
        %4526 = vmatprep.subr.mxu0 0.0
        %4527 = vmatpush1.msra.mxu0 0.0
        %4528 = vmatprep.subr.mxu0 0.0
        %4529 = vmatpush1.msra.mxu0 0.0
        %4530 = vmatprep.subr.mxu0 0.0
        %4531 = vmatpush1.msra.mxu0 0.0
        %4532 = vmatprep.subr.mxu0 0.0
        %4533 = vmatpush1.msra.mxu0 0.0
        %4534 = vmatprep.subr.mxu0 0.0
        %4535 = vmatpush1.msra.mxu0 0.0
        %4536 = vmatprep.subr.mxu0 0.0
        %4537 = vmatpush1.msra.mxu0 0.0
        %4538 = vmatprep.subr.mxu0 0.0
        %4539 = vmatpush1.msra.mxu0 0.0
        %4540 = vmatprep.subr.mxu0 0.0
        %4541 = vmatpush1.msra.mxu0 0.0
        %4542 = vmatprep.subr.mxu0 0.0
        %4543 = vmatpush1.msra.mxu0 0.0
        %4544 = vmatprep.subr.mxu0 0.0
        %4545 = vmatpush1.msra.mxu0 0.0
        %4546 = vmatprep.subr.mxu0 0.0
        %4547 = vmatpush1.msra.mxu0 0.0
        %4548 = vmatprep.subr.mxu0 0.0
        %4549 = vmatpush1.msra.mxu0 0.0
        %4550 = vmatprep.subr.mxu0 0.0
        %4551 = vmatpush1.msra.mxu0 0.0
        %4552 = vmatprep.subr.mxu0 0.0
        %4553 = vmatpush1.msra.mxu0 0.0
        %4554 = vmatprep.mubr.f32.mxu0 0.0
        %4555 = vmatmul.mubr.f32.gmra.mrb[0].mxu0 %v4485
        %v4556 = vpop.f32.mrb[0].mxu0
        %v4557 = vadd.f32 0.0, %v4556
        %v4558 = vpop.f32.mrb[0].mxu0
        %4559 = vmatprep.mubr.f32.mxu0 0.0
        %4560 = vmatmul.mubr.f32.gmra.mrb[0].mxu0 %v4488
        %v4561 = vpop.f32.mrb[0].mxu0
        %v4562 = vadd.f32 0.0, %v4561
        %v4563 = vpop.f32.mrb[0].mxu0
        %4564 = vdwg.mxu0
        %4567 = vrot.lane.b32.xlu0 %v4557, 80
        %v4568 = vpop.permute.xlu0 %4567
        %4569 = vrot.lane.b32.xlu0 %v4562, 80
        %v4570 = vpop.permute.xlu0 %4569
        %4573 = vst.msk [vmem:[#allocation2] sm:$0xff] %vm2231, %v4568
        %4574 = vst.msk [vmem:[#allocation2 + $0x8] sm:$0xff] %vm2231, %v4570
        %4575 = vrot.lane.b32.xlu0 %v3246, 32
        %v4576 = vpop.permute.xlu0 %4575
        %4577 = vrot.lane.b32.xlu0 %v3252, 32
        %v4578 = vpop.permute.xlu0 %4577
        %4579 = vrot.lane.b32.xlu0 %v3248, 32
        %v4580 = vpop.permute.xlu0 %4579
        %4581 = vrot.lane.b32.xlu0 %v3254, 32
        %v4582 = vpop.permute.xlu0 %4581
        %v4583 = vsel %vm984, %v4576, 0
        %v4585 = vsel %vm984, %v4578, 0
        %v4587 = vsel %vm984, %v4580, 0
        %v4589 = vsel %vm984, %v4582, 0
        %4591 = vmatprep.subr.mxu0 0.0
        %4592 = vmatpush1.xpose.msra.mxu0 %v4587
        %4593 = vmatprep.subr.mxu0 0.0
        %4594 = vmatpush1.xpose.msra.mxu0 %v4589
        %4595 = vmatprep.subr.mxu0 0.0
        %4596 = vmatpush1.xpose.msra.mxu0 0.0
        %4597 = vmatprep.subr.mxu0 0.0
        %4598 = vmatpush1.xpose.msra.mxu0 0.0
        %4599 = vmatprep.subr.mxu0 0.0
        %4600 = vmatpush1.xpose.msra.mxu0 0.0
        %4601 = vmatprep.subr.mxu0 0.0
        %4602 = vmatpush1.xpose.msra.mxu0 0.0
        %4603 = vmatprep.subr.mxu0 0.0
        %4604 = vmatpush1.xpose.msra.mxu0 0.0
        %4605 = vmatprep.subr.mxu0 0.0
        %4606 = vmatpush1.xpose.msra.mxu0 0.0
        %4607 = vmatprep.subr.mxu0 0.0
        %4608 = vmatpush1.xpose.msra.mxu0 0.0
        %4609 = vmatprep.subr.mxu0 0.0
        %4610 = vmatpush1.xpose.msra.mxu0 0.0
        %4611 = vmatprep.subr.mxu0 0.0
        %4612 = vmatpush1.xpose.msra.mxu0 0.0
        %4613 = vmatprep.subr.mxu0 0.0
        %4614 = vmatpush1.xpose.msra.mxu0 0.0
        %4615 = vmatprep.subr.mxu0 0.0
        %4616 = vmatpush1.xpose.msra.mxu0 0.0
        %4617 = vmatprep.subr.mxu0 0.0
        %4618 = vmatpush1.xpose.msra.mxu0 0.0
        %4619 = vmatprep.subr.mxu0 0.0
        %4620 = vmatpush1.xpose.msra.mxu0 0.0
        %4621 = vmatprep.subr.mxu0 0.0
        %4622 = vmatpush1.xpose.msra.mxu0 0.0
        %4623 = vmatprep.subr.mxu0 0.0
        %4624 = vmatpush1.xpose.msra.mxu0 0.0
        %4625 = vmatprep.subr.mxu0 0.0
        %4626 = vmatpush1.xpose.msra.mxu0 0.0
        %4627 = vmatprep.subr.mxu0 0.0
        %4628 = vmatpush1.xpose.msra.mxu0 0.0
        %4629 = vmatprep.subr.mxu0 0.0
        %4630 = vmatpush1.xpose.msra.mxu0 0.0
        %4631 = vmatprep.subr.mxu0 0.0
        %4632 = vmatpush1.xpose.msra.mxu0 0.0
        %4633 = vmatprep.subr.mxu0 0.0
        %4634 = vmatpush1.xpose.msra.mxu0 0.0
        %4635 = vmatprep.subr.mxu0 0.0
        %4636 = vmatpush1.xpose.msra.mxu0 0.0
        %4637 = vmatprep.subr.mxu0 0.0
        %4638 = vmatpush1.xpose.msra.mxu0 0.0
        %4639 = vmatprep.subr.mxu0 0.0
        %4640 = vmatpush1.xpose.msra.mxu0 0.0
        %4641 = vmatprep.subr.mxu0 0.0
        %4642 = vmatpush1.xpose.msra.mxu0 0.0
        %4643 = vmatprep.subr.mxu0 0.0
        %4644 = vmatpush1.xpose.msra.mxu0 0.0
        %4645 = vmatprep.subr.mxu0 0.0
        %4646 = vmatpush1.xpose.msra.mxu0 0.0
        %4647 = vmatprep.subr.mxu0 0.0
        %4648 = vmatpush1.xpose.msra.mxu0 0.0
        %4649 = vmatprep.subr.mxu0 0.0
        %4650 = vmatpush1.xpose.msra.mxu0 0.0
        %4651 = vmatprep.subr.mxu0 0.0
        %4652 = vmatpush1.xpose.msra.mxu0 0.0
        %4653 = vmatprep.subr.mxu0 0.0
        %4654 = vmatpush1.xpose.msra.mxu0 0.0
        %4655 = vmatprep.mubr.f32.mxu0 0.0
        %4656 = vmatmul.mubr.f32.gmra.mrb[0].mxu0 %v4583
        %v4657 = vpop.f32.mrb[0].mxu0
        %v4658 = vadd.f32 0.0, %v4657
        %v4659 = vpop.f32.mrb[0].mxu0
        %4660 = vmatprep.mubr.f32.mxu0 0.0
        %4661 = vmatmul.mubr.f32.gmra.mrb[0].mxu0 %v4585
        %v4662 = vpop.f32.mrb[0].mxu0
        %v4663 = vadd.f32 0.0, %v4662
        %v4664 = vpop.f32.mrb[0].mxu0
        %4665 = vdwg.mxu0
        %v4666 = vsel %vm984, %v4658, -inf
        %4667 = vmax.xlane.f32.xlu0 %v4666
        %v4668 = vpop.xlane.xlu0 %4667
        %v4669 = vsel %vm984, %v4663, -inf
        %4670 = vmax.xlane.f32.xlu0 %v4669
        %v4671 = vpop.xlane.xlu0 %4670
        %v4672 = vsub.f32 %v4658, %v4668
        %v4673 = vsub.f32 %v4663, %v4671
        %v4674 = vmul.f32 %v4672, 1.442695
        %v4675 = vpow.pop %v4674
        %v4676 = vmul.f32 %v4673, 1.442695
        %v4677 = vpow.pop %v4676
        %v4678 = vsel %vm984, %v4675, 0.0
        %4679 = vadd.xlane.f32.xlu0 %v4678
        %v4680 = vpop.xlane.xlu0 %4679
        %v4681 = vsel %vm984, %v4677, 0.0
        %4682 = vadd.xlane.f32.xlu0 %v4681
        %v4683 = vpop.xlane.xlu0 %4682
        %v4684 = vrcp.pop %v4680
        %v4685 = vrcp.pop %v4683
        %v4686 = vmul.f32 %v4675, %v4684
        %v4687 = vmul.f32 %v4677, %v4685
        %4688 = vrot.lane.b32.xlu0 %v3323, 32
        %v4689 = vpop.permute.xlu0 %4688
        %4690 = vrot.lane.b32.xlu0 %v3328, 32
        %v4691 = vpop.permute.xlu0 %4690
        %v4695 = vsel %vm984, %v4686, 0
        %v4698 = vsel %vm984, %v4687, 0
        %4700 = vmatprep.subr.mxu0 0.0
        %4701 = vmatpush1.msra.mxu0 %v4689
        %4702 = vmatprep.subr.mxu0 0.0
        %4703 = vmatpush1.msra.mxu0 %v4691
        %4704 = vmatprep.subr.mxu0 0.0
        %4705 = vmatpush1.msra.mxu0 0.0
        %4706 = vmatprep.subr.mxu0 0.0
        %4707 = vmatpush1.msra.mxu0 0.0
        %4708 = vmatprep.subr.mxu0 0.0
        %4709 = vmatpush1.msra.mxu0 0.0
        %4710 = vmatprep.subr.mxu0 0.0
        %4711 = vmatpush1.msra.mxu0 0.0
        %4712 = vmatprep.subr.mxu0 0.0
        %4713 = vmatpush1.msra.mxu0 0.0
        %4714 = vmatprep.subr.mxu0 0.0
        %4715 = vmatpush1.msra.mxu0 0.0
        %4716 = vmatprep.subr.mxu0 0.0
        %4717 = vmatpush1.msra.mxu0 0.0
        %4718 = vmatprep.subr.mxu0 0.0
        %4719 = vmatpush1.msra.mxu0 0.0
        %4720 = vmatprep.subr.mxu0 0.0
        %4721 = vmatpush1.msra.mxu0 0.0
        %4722 = vmatprep.subr.mxu0 0.0
        %4723 = vmatpush1.msra.mxu0 0.0
        %4724 = vmatprep.subr.mxu0 0.0
        %4725 = vmatpush1.msra.mxu0 0.0
        %4726 = vmatprep.subr.mxu0 0.0
        %4727 = vmatpush1.msra.mxu0 0.0
        %4728 = vmatprep.subr.mxu0 0.0
        %4729 = vmatpush1.msra.mxu0 0.0
        %4730 = vmatprep.subr.mxu0 0.0
        %4731 = vmatpush1.msra.mxu0 0.0
        %4732 = vmatprep.subr.mxu0 0.0
        %4733 = vmatpush1.msra.mxu0 0.0
        %4734 = vmatprep.subr.mxu0 0.0
        %4735 = vmatpush1.msra.mxu0 0.0
        %4736 = vmatprep.subr.mxu0 0.0
        %4737 = vmatpush1.msra.mxu0 0.0
        %4738 = vmatprep.subr.mxu0 0.0
        %4739 = vmatpush1.msra.mxu0 0.0
        %4740 = vmatprep.subr.mxu0 0.0
        %4741 = vmatpush1.msra.mxu0 0.0
        %4742 = vmatprep.subr.mxu0 0.0
        %4743 = vmatpush1.msra.mxu0 0.0
        %4744 = vmatprep.subr.mxu0 0.0
        %4745 = vmatpush1.msra.mxu0 0.0
        %4746 = vmatprep.subr.mxu0 0.0
        %4747 = vmatpush1.msra.mxu0 0.0
        %4748 = vmatprep.subr.mxu0 0.0
        %4749 = vmatpush1.msra.mxu0 0.0
        %4750 = vmatprep.subr.mxu0 0.0
        %4751 = vmatpush1.msra.mxu0 0.0
        %4752 = vmatprep.subr.mxu0 0.0
        %4753 = vmatpush1.msra.mxu0 0.0
        %4754 = vmatprep.subr.mxu0 0.0
        %4755 = vmatpush1.msra.mxu0 0.0
        %4756 = vmatprep.subr.mxu0 0.0
        %4757 = vmatpush1.msra.mxu0 0.0
        %4758 = vmatprep.subr.mxu0 0.0
        %4759 = vmatpush1.msra.mxu0 0.0
        %4760 = vmatprep.subr.mxu0 0.0
        %4761 = vmatpush1.msra.mxu0 0.0
        %4762 = vmatprep.subr.mxu0 0.0
        %4763 = vmatpush1.msra.mxu0 0.0
        %4764 = vmatprep.mubr.f32.mxu0 0.0
        %4765 = vmatmul.mubr.f32.gmra.mrb[0].mxu0 %v4695
        %v4766 = vpop.f32.mrb[0].mxu0
        %v4767 = vadd.f32 0.0, %v4766
        %v4768 = vpop.f32.mrb[0].mxu0
        %4769 = vmatprep.mubr.f32.mxu0 0.0
        %4770 = vmatmul.mubr.f32.gmra.mrb[0].mxu0 %v4698
        %v4771 = vpop.f32.mrb[0].mxu0
        %v4772 = vadd.f32 0.0, %v4771
        %v4773 = vpop.f32.mrb[0].mxu0
        %4774 = vdwg.mxu0
        %4777 = vrot.lane.b32.xlu0 %v4767, 96
        %v4778 = vpop.permute.xlu0 %4777
        %4779 = vrot.lane.b32.xlu0 %v4772, 96
        %v4780 = vpop.permute.xlu0 %4779
        %4783 = vst.msk [vmem:[#allocation2] sm:$0xff] %vm2442, %v4778
        %4784 = vst.msk [vmem:[#allocation2 + $0x8] sm:$0xff] %vm2442, %v4780
        %4785 = vrot.lane.b32.xlu0 %v3246, 16
        %v4786 = vpop.permute.xlu0 %4785
        %4787 = vrot.lane.b32.xlu0 %v3252, 16
        %v4788 = vpop.permute.xlu0 %4787
        %4789 = vrot.lane.b32.xlu0 %v3248, 16
        %v4790 = vpop.permute.xlu0 %4789
        %4791 = vrot.lane.b32.xlu0 %v3254, 16
        %v4792 = vpop.permute.xlu0 %4791
        %v4793 = vsel %vm984, %v4786, 0
        %v4795 = vsel %vm984, %v4788, 0
        %v4797 = vsel %vm984, %v4790, 0
        %v4799 = vsel %vm984, %v4792, 0
        %4801 = vmatprep.subr.mxu0 0.0
        %4802 = vmatpush1.xpose.msra.mxu0 %v4797
        %4803 = vmatprep.subr.mxu0 0.0
        %4804 = vmatpush1.xpose.msra.mxu0 %v4799
        %4805 = vmatprep.subr.mxu0 0.0
        %4806 = vmatpush1.xpose.msra.mxu0 0.0
        %4807 = vmatprep.subr.mxu0 0.0
        %4808 = vmatpush1.xpose.msra.mxu0 0.0
        %4809 = vmatprep.subr.mxu0 0.0
        %4810 = vmatpush1.xpose.msra.mxu0 0.0
        %4811 = vmatprep.subr.mxu0 0.0
        %4812 = vmatpush1.xpose.msra.mxu0 0.0
        %4813 = vmatprep.subr.mxu0 0.0
        %4814 = vmatpush1.xpose.msra.mxu0 0.0
        %4815 = vmatprep.subr.mxu0 0.0
        %4816 = vmatpush1.xpose.msra.mxu0 0.0
        %4817 = vmatprep.subr.mxu0 0.0
        %4818 = vmatpush1.xpose.msra.mxu0 0.0
        %4819 = vmatprep.subr.mxu0 0.0
        %4820 = vmatpush1.xpose.msra.mxu0 0.0
        %4821 = vmatprep.subr.mxu0 0.0
        %4822 = vmatpush1.xpose.msra.mxu0 0.0
        %4823 = vmatprep.subr.mxu0 0.0
        %4824 = vmatpush1.xpose.msra.mxu0 0.0
        %4825 = vmatprep.subr.mxu0 0.0
        %4826 = vmatpush1.xpose.msra.mxu0 0.0
        %4827 = vmatprep.subr.mxu0 0.0
        %4828 = vmatpush1.xpose.msra.mxu0 0.0
        %4829 = vmatprep.subr.mxu0 0.0
        %4830 = vmatpush1.xpose.msra.mxu0 0.0
        %4831 = vmatprep.subr.mxu0 0.0
        %4832 = vmatpush1.xpose.msra.mxu0 0.0
        %4833 = vmatprep.subr.mxu0 0.0
        %4834 = vmatpush1.xpose.msra.mxu0 0.0
        %4835 = vmatprep.subr.mxu0 0.0
        %4836 = vmatpush1.xpose.msra.mxu0 0.0
        %4837 = vmatprep.subr.mxu0 0.0
        %4838 = vmatpush1.xpose.msra.mxu0 0.0
        %4839 = vmatprep.subr.mxu0 0.0
        %4840 = vmatpush1.xpose.msra.mxu0 0.0
        %4841 = vmatprep.subr.mxu0 0.0
        %4842 = vmatpush1.xpose.msra.mxu0 0.0
        %4843 = vmatprep.subr.mxu0 0.0
        %4844 = vmatpush1.xpose.msra.mxu0 0.0
        %4845 = vmatprep.subr.mxu0 0.0
        %4846 = vmatpush1.xpose.msra.mxu0 0.0
        %4847 = vmatprep.subr.mxu0 0.0
        %4848 = vmatpush1.xpose.msra.mxu0 0.0
        %4849 = vmatprep.subr.mxu0 0.0
        %4850 = vmatpush1.xpose.msra.mxu0 0.0
        %4851 = vmatprep.subr.mxu0 0.0
        %4852 = vmatpush1.xpose.msra.mxu0 0.0
        %4853 = vmatprep.subr.mxu0 0.0
        %4854 = vmatpush1.xpose.msra.mxu0 0.0
        %4855 = vmatprep.subr.mxu0 0.0
        %4856 = vmatpush1.xpose.msra.mxu0 0.0
        %4857 = vmatprep.subr.mxu0 0.0
        %4858 = vmatpush1.xpose.msra.mxu0 0.0
        %4859 = vmatprep.subr.mxu0 0.0
        %4860 = vmatpush1.xpose.msra.mxu0 0.0
        %4861 = vmatprep.subr.mxu0 0.0
        %4862 = vmatpush1.xpose.msra.mxu0 0.0
        %4863 = vmatprep.subr.mxu0 0.0
        %4864 = vmatpush1.xpose.msra.mxu0 0.0
        %4865 = vmatprep.mubr.f32.mxu0 0.0
        %4866 = vmatmul.mubr.f32.gmra.mrb[0].mxu0 %v4793
        %v4867 = vpop.f32.mrb[0].mxu0
        %v4868 = vadd.f32 0.0, %v4867
        %v4869 = vpop.f32.mrb[0].mxu0
        %4870 = vmatprep.mubr.f32.mxu0 0.0
        %4871 = vmatmul.mubr.f32.gmra.mrb[0].mxu0 %v4795
        %v4872 = vpop.f32.mrb[0].mxu0
        %v4873 = vadd.f32 0.0, %v4872
        %v4874 = vpop.f32.mrb[0].mxu0
        %4875 = vdwg.mxu0
        %v4876 = vsel %vm984, %v4868, -inf
        %4877 = vmax.xlane.f32.xlu0 %v4876
        %v4878 = vpop.xlane.xlu0 %4877
        %v4879 = vsel %vm984, %v4873, -inf
        %4880 = vmax.xlane.f32.xlu0 %v4879
        %v4881 = vpop.xlane.xlu0 %4880
        %v4882 = vsub.f32 %v4868, %v4878
        %v4883 = vsub.f32 %v4873, %v4881
        %v4884 = vmul.f32 %v4882, 1.442695
        %v4885 = vpow.pop %v4884
        %v4886 = vmul.f32 %v4883, 1.442695
        %v4887 = vpow.pop %v4886
        %v4888 = vsel %vm984, %v4885, 0.0
        %4889 = vadd.xlane.f32.xlu0 %v4888
        %v4890 = vpop.xlane.xlu0 %4889
        %v4891 = vsel %vm984, %v4887, 0.0
        %4892 = vadd.xlane.f32.xlu0 %v4891
        %v4893 = vpop.xlane.xlu0 %4892
        %v4894 = vrcp.pop %v4890
        %v4895 = vrcp.pop %v4893
        %v4896 = vmul.f32 %v4885, %v4894
        %v4897 = vmul.f32 %v4887, %v4895
        %4898 = vrot.lane.b32.xlu0 %v3323, 16
        %v4899 = vpop.permute.xlu0 %4898
        %4900 = vrot.lane.b32.xlu0 %v3328, 16
        %v4901 = vpop.permute.xlu0 %4900
        %v4905 = vsel %vm984, %v4896, 0
        %v4908 = vsel %vm984, %v4897, 0
        %4910 = vmatprep.subr.mxu0 0.0
        %4911 = vmatpush1.msra.mxu0 %v4899
        %4912 = vmatprep.subr.mxu0 0.0
        %4913 = vmatpush1.msra.mxu0 %v4901
        %4914 = vmatprep.subr.mxu0 0.0
        %4915 = vmatpush1.msra.mxu0 0.0
        %4916 = vmatprep.subr.mxu0 0.0
        %4917 = vmatpush1.msra.mxu0 0.0
        %4918 = vmatprep.subr.mxu0 0.0
        %4919 = vmatpush1.msra.mxu0 0.0
        %4920 = vmatprep.subr.mxu0 0.0
        %4921 = vmatpush1.msra.mxu0 0.0
        %4922 = vmatprep.subr.mxu0 0.0
        %4923 = vmatpush1.msra.mxu0 0.0
        %4924 = vmatprep.subr.mxu0 0.0
        %4925 = vmatpush1.msra.mxu0 0.0
        %4926 = vmatprep.subr.mxu0 0.0
        %4927 = vmatpush1.msra.mxu0 0.0
        %4928 = vmatprep.subr.mxu0 0.0
        %4929 = vmatpush1.msra.mxu0 0.0
        %4930 = vmatprep.subr.mxu0 0.0
        %4931 = vmatpush1.msra.mxu0 0.0
        %4932 = vmatprep.subr.mxu0 0.0
        %4933 = vmatpush1.msra.mxu0 0.0
        %4934 = vmatprep.subr.mxu0 0.0
        %4935 = vmatpush1.msra.mxu0 0.0
        %4936 = vmatprep.subr.mxu0 0.0
        %4937 = vmatpush1.msra.mxu0 0.0
        %4938 = vmatprep.subr.mxu0 0.0
        %4939 = vmatpush1.msra.mxu0 0.0
        %4940 = vmatprep.subr.mxu0 0.0
        %4941 = vmatpush1.msra.mxu0 0.0
        %4942 = vmatprep.subr.mxu0 0.0
        %4943 = vmatpush1.msra.mxu0 0.0
        %4944 = vmatprep.subr.mxu0 0.0
        %4945 = vmatpush1.msra.mxu0 0.0
        %4946 = vmatprep.subr.mxu0 0.0
        %4947 = vmatpush1.msra.mxu0 0.0
        %4948 = vmatprep.subr.mxu0 0.0
        %4949 = vmatpush1.msra.mxu0 0.0
        %4950 = vmatprep.subr.mxu0 0.0
        %4951 = vmatpush1.msra.mxu0 0.0
        %4952 = vmatprep.subr.mxu0 0.0
        %4953 = vmatpush1.msra.mxu0 0.0
        %4954 = vmatprep.subr.mxu0 0.0
        %4955 = vmatpush1.msra.mxu0 0.0
        %4956 = vmatprep.subr.mxu0 0.0
        %4957 = vmatpush1.msra.mxu0 0.0
        %4958 = vmatprep.subr.mxu0 0.0
        %4959 = vmatpush1.msra.mxu0 0.0
        %4960 = vmatprep.subr.mxu0 0.0
        %4961 = vmatpush1.msra.mxu0 0.0
        %4962 = vmatprep.subr.mxu0 0.0
        %4963 = vmatpush1.msra.mxu0 0.0
        %4964 = vmatprep.subr.mxu0 0.0
        %4965 = vmatpush1.msra.mxu0 0.0
        %4966 = vmatprep.subr.mxu0 0.0
        %4967 = vmatpush1.msra.mxu0 0.0
        %4968 = vmatprep.subr.mxu0 0.0
        %4969 = vmatpush1.msra.mxu0 0.0
        %4970 = vmatprep.subr.mxu0 0.0
        %4971 = vmatpush1.msra.mxu0 0.0
        %4972 = vmatprep.subr.mxu0 0.0
        %4973 = vmatpush1.msra.mxu0 0.0
        %4974 = vmatprep.mubr.f32.mxu0 0.0
        %4975 = vmatmul.mubr.f32.gmra.mrb[0].mxu0 %v4905
        %v4976 = vpop.f32.mrb[0].mxu0
        %v4977 = vadd.f32 0.0, %v4976
        %v4978 = vpop.f32.mrb[0].mxu0
        %4979 = vmatprep.mubr.f32.mxu0 0.0
        %4980 = vmatmul.mubr.f32.gmra.mrb[0].mxu0 %v4908
        %v4981 = vpop.f32.mrb[0].mxu0
        %v4982 = vadd.f32 0.0, %v4981
        %v4983 = vpop.f32.mrb[0].mxu0
        %4984 = vdwg.mxu0
        %4987 = vrot.lane.b32.xlu0 %v4977, 112
        %v4988 = vpop.permute.xlu0 %4987
        %4989 = vrot.lane.b32.xlu0 %v4982, 112
        %v4990 = vpop.permute.xlu0 %4989
        %4993 = vst.msk [vmem:[#allocation2] sm:$0xff] %vm2653, %v4988
        %4994 = vst.msk [vmem:[#allocation2 + $0x8] sm:$0xff] %vm2653, %v4990
        %v4995 = vld [vmem:[#allocation2] sm:$0xff]
        %v4996 = vld [vmem:[#allocation2 + $0x8] sm:$0xff]
        %s4997 = scalar_lea.vmem [#allocation12], 128
        %v4998 = vld [vmem:[%s4997] sm:$0xff]
        %v4999 = vld [vmem:[%s4997 + $0x8] sm:$0xff]
        %v5000 = vld [vmem:[%s4997 + $0x10] sm:$0xff]
        %v5001 = vld [vmem:[%s4997 + $0x18] sm:$0xff]
        %v5002 = vld [vmem:[%s4997 + $0x20] sm:$0xff]
        %v5003 = vld [vmem:[%s4997 + $0x28] sm:$0xff]
        %v5004 = vld [vmem:[%s4997 + $0x30] sm:$0xff]
        %v5005 = vld [vmem:[%s4997 + $0x38] sm:$0xff]
        %v5006 = vld [vmem:[%s4997 + $0x40] sm:$0xff]
        %v5007 = vld [vmem:[%s4997 + $0x48] sm:$0xff]
        %v5008 = vld [vmem:[%s4997 + $0x50] sm:$0xff]
        %v5009 = vld [vmem:[%s4997 + $0x58] sm:$0xff]
        %v5010 = vld [vmem:[%s4997 + $0x60] sm:$0xff]
        %v5011 = vld [vmem:[%s4997 + $0x68] sm:$0xff]
        %v5012 = vld [vmem:[%s4997 + $0x70] sm:$0xff]
        %v5013 = vld [vmem:[%s4997 + $0x78] sm:$0xff]
        %s5014 = scalar_lea.vmem %s7, 1
        %v5015 = vld [vmem:[%s5014] sm:$0x1]
        %v5017 = vlaneseq
        %v5018 = vshrl.u32 %v5017, 7
        %v5019 = vsub.s32 0, %v5018
        %v5020 = vrot.slane %v5015, %v5019
        %5022 = vmatprep.subr.mxu0 0.0
        %5023 = vmatpush1.msra.mxu0 %v4998
        %5024 = vmatprep.subr.mxu0 0.0
        %5025 = vmatpush1.msra.mxu0 %v4999
        %5026 = vmatprep.subr.mxu0 0.0
        %5027 = vmatpush1.msra.mxu0 %v5000
        %5028 = vmatprep.subr.mxu0 0.0
        %5029 = vmatpush1.msra.mxu0 %v5001
        %5030 = vmatprep.subr.mxu0 0.0
        %5031 = vmatpush1.msra.mxu0 %v5002
        %5032 = vmatprep.subr.mxu0 0.0
        %5033 = vmatpush1.msra.mxu0 %v5003
        %5034 = vmatprep.subr.mxu0 0.0
        %5035 = vmatpush1.msra.mxu0 %v5004
        %5036 = vmatprep.subr.mxu0 0.0
        %5037 = vmatpush1.msra.mxu0 %v5005
        %5038 = vmatprep.subr.mxu0 0.0
        %5039 = vmatpush1.msra.mxu0 %v5006
        %5040 = vmatprep.subr.mxu0 0.0
        %5041 = vmatpush1.msra.mxu0 %v5007
        %5042 = vmatprep.subr.mxu0 0.0
        %5043 = vmatpush1.msra.mxu0 %v5008
        %5044 = vmatprep.subr.mxu0 0.0
        %5045 = vmatpush1.msra.mxu0 %v5009
        %5046 = vmatprep.subr.mxu0 0.0
        %5047 = vmatpush1.msra.mxu0 %v5010
        %5048 = vmatprep.subr.mxu0 0.0
        %5049 = vmatpush1.msra.mxu0 %v5011
        %5050 = vmatprep.subr.mxu0 0.0
        %5051 = vmatpush1.msra.mxu0 %v5012
        %5052 = vmatprep.subr.mxu0 0.0
        %5053 = vmatpush1.msra.mxu0 %v5013
        %5054 = vmatprep.subr.mxu0 0.0
        %5055 = vmatpush1.msra.mxu0 0.0
        %5056 = vmatprep.subr.mxu0 0.0
        %5057 = vmatpush1.msra.mxu0 0.0
        %5058 = vmatprep.subr.mxu0 0.0
        %5059 = vmatpush1.msra.mxu0 0.0
        %5060 = vmatprep.subr.mxu0 0.0
        %5061 = vmatpush1.msra.mxu0 0.0
        %5062 = vmatprep.subr.mxu0 0.0
        %5063 = vmatpush1.msra.mxu0 0.0
        %5064 = vmatprep.subr.mxu0 0.0
        %5065 = vmatpush1.msra.mxu0 0.0
        %5066 = vmatprep.subr.mxu0 0.0
        %5067 = vmatpush1.msra.mxu0 0.0
        %5068 = vmatprep.subr.mxu0 0.0
        %5069 = vmatpush1.msra.mxu0 0.0
        %5070 = vmatprep.subr.mxu0 0.0
        %5071 = vmatpush1.msra.mxu0 0.0
        %5072 = vmatprep.subr.mxu0 0.0
        %5073 = vmatpush1.msra.mxu0 0.0
        %5074 = vmatprep.subr.mxu0 0.0
        %5075 = vmatpush1.msra.mxu0 0.0
        %5076 = vmatprep.subr.mxu0 0.0
        %5077 = vmatpush1.msra.mxu0 0.0
        %5078 = vmatprep.subr.mxu0 0.0
        %5079 = vmatpush1.msra.mxu0 0.0
        %5080 = vmatprep.subr.mxu0 0.0
        %5081 = vmatpush1.msra.mxu0 0.0
        %5082 = vmatprep.subr.mxu0 0.0
        %5083 = vmatpush1.msra.mxu0 0.0
        %5084 = vmatprep.subr.mxu0 0.0
        %5085 = vmatpush1.msra.mxu0 0.0
        %5086 = vmatprep.mubr.f32.mxu0 0.0
        %5087 = vmatmul.mubr.f32.gmra.mrb[0].mxu0 %v4995
        %v5088 = vpop.f32.mrb[0].mxu0
        %v5089 = vadd.f32 %v5020, %v5088
        %v5090 = vpop.f32.mrb[0].mxu0
        %5091 = vmatprep.mubr.f32.mxu0 0.0
        %5092 = vmatmul.mubr.f32.gmra.mrb[0].mxu0 %v4996
        %v5093 = vpop.f32.mrb[0].mxu0
        %v5094 = vadd.f32 %v5020, %v5093
        %v5095 = vpop.f32.mrb[0].mxu0
        %5096 = vdwg.mxu0
        %v5097 = vadd.f32 %v5089, %v3110
        %v5098 = vadd.f32 %v5094, %v3111
        %s5099 = scalar_lea.vmem %s8, 1
        %v5100 = vld [vmem:[%s5099] sm:$0x1]
        %s5101 = scalar_lea.vmem %s9, 1
        %v5102 = vld [vmem:[%s5101] sm:$0x1]
        %5103 = vadd.xlane.f32.xlu0 %v5097
        %v5104 = vpop.xlane.xlu0 %5103
        %5105 = vadd.xlane.f32.xlu0 %v5098
        %v5106 = vpop.xlane.xlu0 %5105
        %v5107 = vmul.f32 %v5104, %v2764
        %v5108 = vmul.f32 %v5106, %v2764
        %v5109 = vsub.f32 %v5097, %v5107
        %v5110 = vsub.f32 %v5098, %v5108
        %v5111 = vmul.f32 %v5109, %v5109
        %v5112 = vmul.f32 %v5110, %v5110
        %5113 = vadd.xlane.f32.xlu0 %v5111
        %v5114 = vpop.xlane.xlu0 %5113
        %5115 = vadd.xlane.f32.xlu0 %v5112
        %v5116 = vpop.xlane.xlu0 %5115
        %v5117 = vmul.f32 %v5114, %v2764
        %v5118 = vmul.f32 %v5116, %v2764
        %v5119 = vadd.f32 %v5117, 1e-05
        %v5120 = vadd.f32 %v5118, 1e-05
        %v5121 = vrsqrt.pop %v5119
        %v5122 = vrsqrt.pop %v5120
        %v5123 = vmul.f32 %v5109, %v5121
        %v5124 = vmul.f32 %v5110, %v5122
        %v5126 = vlaneseq
        %v5127 = vshrl.u32 %v5126, 7
        %v5128 = vsub.s32 0, %v5127
        %v5129 = vrot.slane %v5100, %v5128
        %v5131 = vmul.f32 %v5123, %v5129
        %v5132 = vmul.f32 %v5124, %v5129
        %v5134 = vlaneseq
        %v5135 = vshrl.u32 %v5134, 7
        %v5136 = vsub.s32 0, %v5135
        %v5137 = vrot.slane %v5102, %v5136
        %v5139 = vadd.f32 %v5131, %v5137
        %v5140 = vadd.f32 %v5132, %v5137
        %s5141 = scalar_lea.vmem [#allocation14], 256
        %v5142 = vld [vmem:[%s5141] sm:$0xff]
        %v5143 = vld [vmem:[%s5141 + $0x8] sm:$0xff]
        %v5144 = vld [vmem:[%s5141 + $0x10] sm:$0xff]
        %v5145 = vld [vmem:[%s5141 + $0x18] sm:$0xff]
        %v5146 = vld [vmem:[%s5141 + $0x20] sm:$0xff]
        %v5147 = vld [vmem:[%s5141 + $0x28] sm:$0xff]
        %v5148 = vld [vmem:[%s5141 + $0x30] sm:$0xff]
        %v5149 = vld [vmem:[%s5141 + $0x38] sm:$0xff]
        %v5150 = vld [vmem:[%s5141 + $0x40] sm:$0xff]
        %v5151 = vld [vmem:[%s5141 + $0x48] sm:$0xff]
        %v5152 = vld [vmem:[%s5141 + $0x50] sm:$0xff]
        %v5153 = vld [vmem:[%s5141 + $0x58] sm:$0xff]
        %v5154 = vld [vmem:[%s5141 + $0x60] sm:$0xff]
        %v5155 = vld [vmem:[%s5141 + $0x68] sm:$0xff]
        %v5156 = vld [vmem:[%s5141 + $0x70] sm:$0xff]
        %v5157 = vld [vmem:[%s5141 + $0x78] sm:$0xff]
        %v5158 = vld [vmem:[%s5141 + $0x80] sm:$0xff]
        %v5159 = vld [vmem:[%s5141 + $0x88] sm:$0xff]
        %v5160 = vld [vmem:[%s5141 + $0x90] sm:$0xff]
        %v5161 = vld [vmem:[%s5141 + $0x98] sm:$0xff]
        %v5162 = vld [vmem:[%s5141 + $0xa0] sm:$0xff]
        %v5163 = vld [vmem:[%s5141 + $0xa8] sm:$0xff]
        %v5164 = vld [vmem:[%s5141 + $0xb0] sm:$0xff]
        %v5165 = vld [vmem:[%s5141 + $0xb8] sm:$0xff]
        %v5166 = vld [vmem:[%s5141 + $0xc0] sm:$0xff]
        %v5167 = vld [vmem:[%s5141 + $0xc8] sm:$0xff]
        %v5168 = vld [vmem:[%s5141 + $0xd0] sm:$0xff]
        %v5169 = vld [vmem:[%s5141 + $0xd8] sm:$0xff]
        %v5170 = vld [vmem:[%s5141 + $0xe0] sm:$0xff]
        %v5171 = vld [vmem:[%s5141 + $0xe8] sm:$0xff]
        %v5172 = vld [vmem:[%s5141 + $0xf0] sm:$0xff]
        %v5173 = vld [vmem:[%s5141 + $0xf8] sm:$0xff]
        %s5174 = scalar_lea.vmem %s11, 2
        %v5175 = vld [vmem:[%s5174] sm:$0x3]
        %v5177 = vlaneseq
        %v5178 = vshrl.u32 %v5177, 7
        %v5179 = vsub.s32 0, %v5178
        %v5180 = vrot.slane %v5175, %v5179
        %v5181 = vlaneseq
        %v5182 = vshrl.u32 %v5181, 7
        %v5183 = vsub.s32 1, %v5182
        %v5184 = vrot.slane %v5175, %v5183
        %5187 = vmatprep.subr.mxu0 %v5143
        %5188 = vmatpush1.msra.mxu0 %v5142
        %5189 = vmatprep.subr.mxu0 %v5145
        %5190 = vmatpush1.msra.mxu0 %v5144
        %5191 = vmatprep.subr.mxu0 %v5147
        %5192 = vmatpush1.msra.mxu0 %v5146
        %5193 = vmatprep.subr.mxu0 %v5149
        %5194 = vmatpush1.msra.mxu0 %v5148
        %5195 = vmatprep.subr.mxu0 %v5151
        %5196 = vmatpush1.msra.mxu0 %v5150
        %5197 = vmatprep.subr.mxu0 %v5153
        %5198 = vmatpush1.msra.mxu0 %v5152
        %5199 = vmatprep.subr.mxu0 %v5155
        %5200 = vmatpush1.msra.mxu0 %v5154
        %5201 = vmatprep.subr.mxu0 %v5157
        %5202 = vmatpush1.msra.mxu0 %v5156
        %5203 = vmatprep.subr.mxu0 %v5159
        %5204 = vmatpush1.msra.mxu0 %v5158
        %5205 = vmatprep.subr.mxu0 %v5161
        %5206 = vmatpush1.msra.mxu0 %v5160
        %5207 = vmatprep.subr.mxu0 %v5163
        %5208 = vmatpush1.msra.mxu0 %v5162
        %5209 = vmatprep.subr.mxu0 %v5165
        %5210 = vmatpush1.msra.mxu0 %v5164
        %5211 = vmatprep.subr.mxu0 %v5167
        %5212 = vmatpush1.msra.mxu0 %v5166
        %5213 = vmatprep.subr.mxu0 %v5169
        %5214 = vmatpush1.msra.mxu0 %v5168
        %5215 = vmatprep.subr.mxu0 %v5171
        %5216 = vmatpush1.msra.mxu0 %v5170
        %5217 = vmatprep.subr.mxu0 %v5173
        %5218 = vmatpush1.msra.mxu0 %v5172
        %5219 = vmatprep.subr.mxu0 0.0
        %5220 = vmatpush1.msra.mxu0 0.0
        %5221 = vmatprep.subr.mxu0 0.0
        %5222 = vmatpush1.msra.mxu0 0.0
        %5223 = vmatprep.subr.mxu0 0.0
        %5224 = vmatpush1.msra.mxu0 0.0
        %5225 = vmatprep.subr.mxu0 0.0
        %5226 = vmatpush1.msra.mxu0 0.0
        %5227 = vmatprep.subr.mxu0 0.0
        %5228 = vmatpush1.msra.mxu0 0.0
        %5229 = vmatprep.subr.mxu0 0.0
        %5230 = vmatpush1.msra.mxu0 0.0
        %5231 = vmatprep.subr.mxu0 0.0
        %5232 = vmatpush1.msra.mxu0 0.0
        %5233 = vmatprep.subr.mxu0 0.0
        %5234 = vmatpush1.msra.mxu0 0.0
        %5235 = vmatprep.subr.mxu0 0.0
        %5236 = vmatpush1.msra.mxu0 0.0
        %5237 = vmatprep.subr.mxu0 0.0
        %5238 = vmatpush1.msra.mxu0 0.0
        %5239 = vmatprep.subr.mxu0 0.0
        %5240 = vmatpush1.msra.mxu0 0.0
        %5241 = vmatprep.subr.mxu0 0.0
        %5242 = vmatpush1.msra.mxu0 0.0
        %5243 = vmatprep.subr.mxu0 0.0
        %5244 = vmatpush1.msra.mxu0 0.0
        %5245 = vmatprep.subr.mxu0 0.0
        %5246 = vmatpush1.msra.mxu0 0.0
        %5247 = vmatprep.subr.mxu0 0.0
        %5248 = vmatpush1.msra.mxu0 0.0
        %5249 = vmatprep.subr.mxu0 0.0
        %5250 = vmatpush1.msra.mxu0 0.0
        %5251 = vmatprep.mubr.f32.mxu0 0.0
        %5252 = vmatmul.mubr.f32.gmra.mrb[0].mxu0 %v5139
        %v5253 = vpop.f32.mrb[0].mxu0
        %v5254 = vadd.f32 %v5180, %v5253
        %v5255 = vpop.f32.mrb[0].mxu0
        %v5256 = vadd.f32 %v5184, %v5255
        %5257 = vmatprep.mubr.f32.mxu0 0.0
        %5258 = vmatmul.mubr.f32.gmra.mrb[0].mxu0 %v5140
        %v5259 = vpop.f32.mrb[0].mxu0
        %v5260 = vadd.f32 %v5180, %v5259
        %v5261 = vpop.f32.mrb[0].mxu0
        %v5262 = vadd.f32 %v5184, %v5261
        %5263 = vdwg.mxu0
        %v5264 = vmul.f32 %v5254, 0.5
        %v5265 = vmul.f32 %v5256, 0.5
        %v5266 = vmul.f32 %v5260, 0.5
        %v5267 = vmul.f32 %v5262, 0.5
        %v5268 = vmul.f32 %v5254, 0.044715
        %v5269 = vmul.f32 %v5256, 0.044715
        %v5270 = vmul.f32 %v5260, 0.044715
        %v5271 = vmul.f32 %v5262, 0.044715
        %v5272 = vmul.f32 %v5268, %v5254
        %v5273 = vmul.f32 %v5269, %v5256
        %v5274 = vmul.f32 %v5270, %v5260
        %v5275 = vmul.f32 %v5271, %v5262
        %v5276 = vmul.f32 %v5272, %v5254
        %v5277 = vmul.f32 %v5273, %v5256
        %v5278 = vmul.f32 %v5274, %v5260
        %v5279 = vmul.f32 %v5275, %v5262
        %v5280 = vadd.f32 %v5254, %v5276
        %v5281 = vadd.f32 %v5256, %v5277
        %v5282 = vadd.f32 %v5260, %v5278
        %v5283 = vadd.f32 %v5262, %v5279
        %v5284 = vmul.f32 %v5280, 0.7978846
        %v5285 = vmul.f32 %v5281, 0.7978846
        %v5286 = vmul.f32 %v5282, 0.7978846
        %v5287 = vmul.f32 %v5283, 0.7978846
        %v5288 = vtanh.pop %v5284
        %v5289 = vtanh.pop %v5285
        %v5290 = vtanh.pop %v5286
        %v5291 = vtanh.pop %v5287
        %v5292 = vadd.f32 %v5288, 1.0
        %v5293 = vadd.f32 %v5289, 1.0
        %v5294 = vadd.f32 %v5290, 1.0
        %v5295 = vadd.f32 %v5291, 1.0
        %v5296 = vmul.f32 %v5264, %v5292
        %v5297 = vmul.f32 %v5265, %v5293
        %v5298 = vmul.f32 %v5266, %v5294
        %v5299 = vmul.f32 %v5267, %v5295
        %s5300 = scalar_lea.vmem [#allocation15], 256
        %v5301 = vld [vmem:[%s5300] sm:$0xff]
        %v5302 = vld [vmem:[%s5300 + $0x8] sm:$0xff]
        %v5303 = vld [vmem:[%s5300 + $0x10] sm:$0xff]
        %v5304 = vld [vmem:[%s5300 + $0x18] sm:$0xff]
        %v5305 = vld [vmem:[%s5300 + $0x20] sm:$0xff]
        %v5306 = vld [vmem:[%s5300 + $0x28] sm:$0xff]
        %v5307 = vld [vmem:[%s5300 + $0x30] sm:$0xff]
        %v5308 = vld [vmem:[%s5300 + $0x38] sm:$0xff]
        %v5309 = vld [vmem:[%s5300 + $0x40] sm:$0xff]
        %v5310 = vld [vmem:[%s5300 + $0x48] sm:$0xff]
        %v5311 = vld [vmem:[%s5300 + $0x50] sm:$0xff]
        %v5312 = vld [vmem:[%s5300 + $0x58] sm:$0xff]
        %v5313 = vld [vmem:[%s5300 + $0x60] sm:$0xff]
        %v5314 = vld [vmem:[%s5300 + $0x68] sm:$0xff]
        %v5315 = vld [vmem:[%s5300 + $0x70] sm:$0xff]
        %v5316 = vld [vmem:[%s5300 + $0x78] sm:$0xff]
        %v5317 = vld [vmem:[%s5300 + $0x80] sm:$0xff]
        %v5318 = vld [vmem:[%s5300 + $0x88] sm:$0xff]
        %v5319 = vld [vmem:[%s5300 + $0x90] sm:$0xff]
        %v5320 = vld [vmem:[%s5300 + $0x98] sm:$0xff]
        %v5321 = vld [vmem:[%s5300 + $0xa0] sm:$0xff]
        %v5322 = vld [vmem:[%s5300 + $0xa8] sm:$0xff]
        %v5323 = vld [vmem:[%s5300 + $0xb0] sm:$0xff]
        %v5324 = vld [vmem:[%s5300 + $0xb8] sm:$0xff]
        %v5325 = vld [vmem:[%s5300 + $0xc0] sm:$0xff]
        %v5326 = vld [vmem:[%s5300 + $0xc8] sm:$0xff]
        %v5327 = vld [vmem:[%s5300 + $0xd0] sm:$0xff]
        %v5328 = vld [vmem:[%s5300 + $0xd8] sm:$0xff]
        %v5329 = vld [vmem:[%s5300 + $0xe0] sm:$0xff]
        %v5330 = vld [vmem:[%s5300 + $0xe8] sm:$0xff]
        %v5331 = vld [vmem:[%s5300 + $0xf0] sm:$0xff]
        %v5332 = vld [vmem:[%s5300 + $0xf8] sm:$0xff]
        %s5333 = scalar_lea.vmem %s13, 1
        %v5334 = vld [vmem:[%s5333] sm:$0x1]
        %v5336 = vlaneseq
        %v5337 = vshrl.u32 %v5336, 7
        %v5338 = vsub.s32 0, %v5337
        %v5339 = vrot.slane %v5334, %v5338
        %5341 = vmatprep.subr.mxu0 0.0
        %5342 = vmatpush1.msra.mxu0 %v5301
        %5343 = vmatprep.subr.mxu0 0.0
        %5344 = vmatpush1.msra.mxu0 %v5302
        %5345 = vmatprep.subr.mxu0 0.0
        %5346 = vmatpush1.msra.mxu0 %v5303
        %5347 = vmatprep.subr.mxu0 0.0
        %5348 = vmatpush1.msra.mxu0 %v5304
        %5349 = vmatprep.subr.mxu0 0.0
        %5350 = vmatpush1.msra.mxu0 %v5305
        %5351 = vmatprep.subr.mxu0 0.0
        %5352 = vmatpush1.msra.mxu0 %v5306
        %5353 = vmatprep.subr.mxu0 0.0
        %5354 = vmatpush1.msra.mxu0 %v5307
        %5355 = vmatprep.subr.mxu0 0.0
        %5356 = vmatpush1.msra.mxu0 %v5308
        %5357 = vmatprep.subr.mxu0 0.0
        %5358 = vmatpush1.msra.mxu0 %v5309
        %5359 = vmatprep.subr.mxu0 0.0
        %5360 = vmatpush1.msra.mxu0 %v5310
        %5361 = vmatprep.subr.mxu0 0.0
        %5362 = vmatpush1.msra.mxu0 %v5311
        %5363 = vmatprep.subr.mxu0 0.0
        %5364 = vmatpush1.msra.mxu0 %v5312
        %5365 = vmatprep.subr.mxu0 0.0
        %5366 = vmatpush1.msra.mxu0 %v5313
        %5367 = vmatprep.subr.mxu0 0.0
        %5368 = vmatpush1.msra.mxu0 %v5314
        %5369 = vmatprep.subr.mxu0 0.0
        %5370 = vmatpush1.msra.mxu0 %v5315
        %5371 = vmatprep.subr.mxu0 0.0
        %5372 = vmatpush1.msra.mxu0 %v5316
        %5373 = vmatprep.subr.mxu0 0.0
        %5374 = vmatpush1.msra.mxu0 %v5317
        %5375 = vmatprep.subr.mxu0 0.0
        %5376 = vmatpush1.msra.mxu0 %v5318
        %5377 = vmatprep.subr.mxu0 0.0
        %5378 = vmatpush1.msra.mxu0 %v5319
        %5379 = vmatprep.subr.mxu0 0.0
        %5380 = vmatpush1.msra.mxu0 %v5320
        %5381 = vmatprep.subr.mxu0 0.0
        %5382 = vmatpush1.msra.mxu0 %v5321
        %5383 = vmatprep.subr.mxu0 0.0
        %5384 = vmatpush1.msra.mxu0 %v5322
        %5385 = vmatprep.subr.mxu0 0.0
        %5386 = vmatpush1.msra.mxu0 %v5323
        %5387 = vmatprep.subr.mxu0 0.0
        %5388 = vmatpush1.msra.mxu0 %v5324
        %5389 = vmatprep.subr.mxu0 0.0
        %5390 = vmatpush1.msra.mxu0 %v5325
        %5391 = vmatprep.subr.mxu0 0.0
        %5392 = vmatpush1.msra.mxu0 %v5326
        %5393 = vmatprep.subr.mxu0 0.0
        %5394 = vmatpush1.msra.mxu0 %v5327
        %5395 = vmatprep.subr.mxu0 0.0
        %5396 = vmatpush1.msra.mxu0 %v5328
        %5397 = vmatprep.subr.mxu0 0.0
        %5398 = vmatpush1.msra.mxu0 %v5329
        %5399 = vmatprep.subr.mxu0 0.0
        %5400 = vmatpush1.msra.mxu0 %v5330
        %5401 = vmatprep.subr.mxu0 0.0
        %5402 = vmatpush1.msra.mxu0 %v5331
        %5403 = vmatprep.subr.mxu0 0.0
        %5404 = vmatpush1.msra.mxu0 %v5332
        %5405 = vmatprep.mubr.f32.mxu0 %v5297
        %5406 = vmatmul.mubr.f32.gmra.mrb[0].mxu0 %v5296
        %v5407 = vpop.f32.mrb[0].mxu0
        %v5408 = vadd.f32 %v5339, %v5407
        %v5409 = vpop.f32.mrb[0].mxu0
        %5410 = vmatprep.mubr.f32.mxu0 %v5299
        %5411 = vmatmul.mubr.f32.gmra.mrb[0].mxu0 %v5298
        %v5412 = vpop.f32.mrb[0].mxu0
        %v5413 = vadd.f32 %v5339, %v5412
        %v5414 = vpop.f32.mrb[0].mxu0
        %5415 = vdwg.mxu0
        %v5416 = vadd.f32 %v5408, %v5139
        %v5417 = vadd.f32 %v5413, %v5140
        %s5418 = scalar_lea.vmem %s14, 1
        %v5419 = vld [vmem:[%s5418] sm:$0x1]
        %s5420 = scalar_lea.vmem %s15, 1
        %v5421 = vld [vmem:[%s5420] sm:$0x1]
        %5422 = vadd.xlane.f32.xlu0 %v5416
        %v5423 = vpop.xlane.xlu0 %5422
        %5424 = vadd.xlane.f32.xlu0 %v5417
        %v5425 = vpop.xlane.xlu0 %5424
        %v5426 = vmul.f32 %v5423, %v2764
        %v5427 = vmul.f32 %v5425, %v2764
        %v5428 = vsub.f32 %v5416, %v5426
        %v5429 = vsub.f32 %v5417, %v5427
        %v5430 = vmul.f32 %v5428, %v5428
        %v5431 = vmul.f32 %v5429, %v5429
        %5432 = vadd.xlane.f32.xlu0 %v5430
        %v5433 = vpop.xlane.xlu0 %5432
        %5434 = vadd.xlane.f32.xlu0 %v5431
        %v5435 = vpop.xlane.xlu0 %5434
        %v5436 = vmul.f32 %v5433, %v2764
        %v5437 = vmul.f32 %v5435, %v2764
        %v5438 = vadd.f32 %v5436, 1e-05
        %v5439 = vadd.f32 %v5437, 1e-05
        %v5440 = vrsqrt.pop %v5438
        %v5441 = vrsqrt.pop %v5439
        %v5442 = vmul.f32 %v5428, %v5440
        %v5443 = vmul.f32 %v5429, %v5441
        %v5445 = vlaneseq
        %v5446 = vshrl.u32 %v5445, 7
        %v5447 = vsub.s32 0, %v5446
        %v5448 = vrot.slane %v5419, %v5447
        %v5450 = vmul.f32 %v5442, %v5448
        %v5451 = vmul.f32 %v5443, %v5448
        %v5453 = vlaneseq
        %v5454 = vshrl.u32 %v5453, 7
        %v5455 = vsub.s32 0, %v5454
        %v5456 = vrot.slane %v5421, %v5455
        %v5458 = vadd.f32 %v5450, %v5456
        %v5459 = vadd.f32 %v5451, %v5456
        %5460 = vst [vmem:[%s658] sm:$0xff] %v5458
        %5461 = vst [vmem:[%s658 + $0x8] sm:$0xff] %v5459
        %s5462 = sand.u32 %s393, 1
        %s5463 = scalar_lea.sflag [#allocation5], %s5462
        %s5464 = sand.u32 %s393, 1
        %s5465 = smul.addr %s5464, 16
        %s5466 = scalar_lea.vmem [#allocation17], %s5465
        // Predicated region
        $region117: #{tpu_custom_call.1} parent=83 // pred_check
          %p5467 = pneg %p403
        $region118: #{tpu_custom_call.1} parent=83 // pred_check_branch
          %5469 = sbr.rel (%p5467) target = $region120
        $region119: #{tpu_custom_call.1} parent=83 // pred_region
          %s5471 = ssub.s32 256, 256
          %5472 = vsyncadd %s5463, %s5471
          %s5473 = smul.addr %s39, 2
          %s5474 = smul.addr %s5473, 128
          %s5475 = scalar_lea.hbm %s16, %s5474
          %s5476 = sshll.u32 %s5466, 4
          %s5477 = int_to_ptr.vmem [resolvable:$true] %s5476
          %5482 = dma.vmem_to_hbm [thread:$0]  %s5477, 256, %s5475, %s5463, 128, 128, 8
        $region120: #{tpu_custom_call.1} parent=83 // pred_fallthru
          _
      $region84: #{tpu_custom_call.1} parent=5 // pred_fallthru
        _
      %p5483 = scmp.le.s32.totalorder 2, %s34
      // Predicated region
      $region121: #{tpu_custom_call.1} parent=5 // pred_check
        %p5484 = pneg %p5483
      $region122: #{tpu_custom_call.1} parent=5 // pred_check_branch
        %5486 = sbr.rel (%p5484) target = $region124
      $region123: #{tpu_custom_call.1} parent=5 // pred_region
        %s5487 = ssub.s32 %s34, 2
        // Predicated region
        $region125: #{tpu_custom_call.1} parent=123 // pred_check
          %p5488 = pneg %p409
        $region126: #{tpu_custom_call.1} parent=123 // pred_check_branch
          %5490 = sbr.rel (%p5488) target = $region128
        $region127: #{tpu_custom_call.1} parent=123 // pred_region
          %s5491 = sand.u32 %s394, 1
          %s5492 = scalar_lea.sflag [#allocation5], %s5491
          %s5493 = sand.u32 %s394, 1
          %s5494 = smul.addr %s5493, 16
          %s5495 = scalar_lea.vmem [#allocation17], %s5494
          %5496 = dma.done %s5492, 256
        $region128: #{tpu_custom_call.1} parent=123 // pred_fallthru
          _
      $region124: #{tpu_custom_call.1} parent=5 // pred_fallthru
        _
    $region6: #{tpu_custom_call.1} parent=1 // loop_footer
      %s38 = sadd.s32 1, %s34
    $region7: #{tpu_custom_call.1} parent=1 // loop_footer_branch
      %33 = sbr.rel target = $region3
    $region8: #{tpu_custom_call.1} parent=1 // loop_exit
      _
    %5497 = vsyncpa [#allocation4], 1
    %s5498 = scalar_lea.sflag [#allocation4], 1
    %5499 = vsyncpa %s5498, 1
    %5500 = vsyncpa [#allocation7], 1
    %s5501 = scalar_lea.sflag [#allocation7], 1
    %5502 = vsyncpa %s5501, 1
    %5503 = vsyncpa [#allocation10], 1
    %5504 = vsyncpa [#allocation13], 1
    %5505 = vsyncpa [#allocation16], 1
    %5506 = vsyncpa [#allocation5], 1
    %s5507 = scalar_lea.sflag [#allocation5], 1
    %5508 = vsyncpa %s5507, 1

</llo_original>
